<compile_context>
chip_gen: v7x
topology: tpu7x:2x2x1
jax: 0.10.0
libtpu: 0.0.40
codegen_flags: <defaults>
</compile_context>

<pallas_src>
import math

import numpy as np
import jax
import jax.numpy as jnp
from jax.experimental import pallas as pl
from jax.experimental.pallas import tpu as pltpu  # noqa: F401

# ------------------ configuration (small shapes consistent w/ the module) ----
ITERATIONS   = 4
D_MODEL      = 32
D_INPUT      = 16
MEMORY_LEN   = 8
HEADS        = 2
N_SYNCH_OUT  = 8
N_SYNCH_ACT  = 8
NUM_CLASSES  = 10
MEMORY_HID   = 4
VOCAB        = 32
TOKEN_EMBED  = 16
SEQ          = 8
BATCH        = 2

REP_A    = N_SYNCH_ACT * (N_SYNCH_ACT + 1) // 2     # 36
REP_O    = N_SYNCH_OUT * (N_SYNCH_OUT + 1) // 2     # 36
HEAD_DIM = D_INPUT // HEADS

PACK_W   = 32       # lanes per tick in the packed output (10 logits + 2 cert + pad)
SLAB_W   = 256      # lane width of the parameter slab


# ------------------------------ small helpers --------------------------------
def triu_selectors(n):
    """One-hot selection matrices so that pairwise_triu = (x@L) * (x@R).

    Pair ordering matches torch.triu_indices(n, n): row-major i<=j.
    """
    pairs = [(i, j) for i in range(n) for j in range(i, n)]
    L = np.zeros((n, len(pairs)), np.float32)
    R = np.zeros((n, len(pairs)), np.float32)
    for k, (i, j) in enumerate(pairs):
        L[i, k] = 1.0
        R[j, k] = 1.0
    return jnp.asarray(L), jnp.asarray(R)


def _layernorm(x, g, b, eps=1e-5):
    mu = jnp.mean(x, axis=-1, keepdims=True)
    var = jnp.mean((x - mu) ** 2, axis=-1, keepdims=True)
    return (x - mu) / jnp.sqrt(var + eps) * g + b


# ------------------------- parameter-slab layout ------------------------------
def _build_slab_layout():
    specs = [
        ('w1_bd',       MEMORY_LEN * D_MODEL, 2 * MEMORY_HID * D_MODEL),   # (256, 256)
        ('w2_bd',       MEMORY_HID * D_MODEL, 2 * D_MODEL),                # (128, 64)
        ('w_syn',       D_INPUT + D_MODEL,    2 * D_MODEL),                # (48, 64)
        ('li_a',        N_SYNCH_ACT,          REP_A),
        ('ri_a',        N_SYNCH_ACT,          REP_A),
        ('li_o',        N_SYNCH_OUT,          REP_O),
        ('ri_o',        N_SYNCH_OUT,          REP_O),
        ('w_q',         REP_A,                D_INPUT),                    # pre-composed
        ('w_ao',        D_INPUT,              D_INPUT),
        ('w_out',       REP_O,                NUM_CLASSES),
        ('r_a',         1,                    REP_A),
        ('r_o',         1,                    REP_O),
        ('start_act',   1,                    D_MODEL),
        ('start_trace', 1,                    MEMORY_LEN * D_MODEL),
        ('b_q',         1,                    D_INPUT),
        ('b_ao',        1,                    D_INPUT),
        ('b_syn',       1,                    2 * D_MODEL),
        ('ln_g',        1,                    D_MODEL),
        ('ln_b',        1,                    D_MODEL),
        ('b1',          1,                    2 * MEMORY_HID * D_MODEL),
        ('b2',          1,                    2 * D_MODEL),
        ('b_out',       1,                    NUM_CLASSES),
    ]
    layout = {}
    row = 0
    for name, nr, nc in specs:
        layout[name] = (row, nr, nc)
        row += ((nr + 7) // 8) * 8          # keep every entry 8-row (sublane) aligned
    return layout, row


SLAB_LAYOUT, SLAB_ROWS = _build_slab_layout()


def _ld(slab_ref, name):
    """Static-slice load of one packed parameter from the slab."""
    r0, nr, nc = SLAB_LAYOUT[name]
    return slab_ref[r0:r0 + nr, 0:nc]


# ------------------------------ the Pallas kernel -----------------------------
def ctm_kernel(slab_ref, k_ref, v_ref, out_ref):
    B = k_ref.shape[0]

    # ---- unpack the parameter slab once (hoisted above the unrolled loop) ----
    li_a = _ld(slab_ref, 'li_a'); ri_a = _ld(slab_ref, 'ri_a')
    li_o = _ld(slab_ref, 'li_o'); ri_o = _ld(slab_ref, 'ri_o')
    r_a = _ld(slab_ref, 'r_a');   r_o = _ld(slab_ref, 'r_o')          # (1, rep)
    w_q = _ld(slab_ref, 'w_q');   b_q = _ld(slab_ref, 'b_q')          # q_proj o in_proj(q)
    w_ao = _ld(slab_ref, 'w_ao'); b_ao = _ld(slab_ref, 'b_ao')
    w_syn = _ld(slab_ref, 'w_syn'); b_syn = _ld(slab_ref, 'b_syn')
    ln_g = _ld(slab_ref, 'ln_g'); ln_b = _ld(slab_ref, 'ln_b')
    w1 = _ld(slab_ref, 'w1_bd');  b1 = _ld(slab_ref, 'b1')            # block-diag NLM 1
    w2 = _ld(slab_ref, 'w2_bd');  b2 = _ld(slab_ref, 'b2')            # block-diag NLM 2
    w_out = _ld(slab_ref, 'w_out'); b_out = _ld(slab_ref, 'b_out')

    k = k_ref[...]                                      # (B, S, E)
    v = v_ref[...]

    # ---- recurrent state carried as values (no scratch, fully unrolled) ----
    act = jnp.broadcast_to(_ld(slab_ref, 'start_act'), (B, D_MODEL))
    trace = jnp.broadcast_to(_ld(slab_ref, 'start_trace'), (B, MEMORY_LEN * D_MODEL))

    # 'out' decays are seeded from the *start* activated state (pre-loop)
    sel0 = act[:, :N_SYNCH_OUT]
    a_o = (jnp.dot(sel0, li_o, preferred_element_type=jnp.float32)
           * jnp.dot(sel0, ri_o, preferred_element_type=jnp.float32))
    b_o = jnp.ones_like(a_o)
    # 'action' decays start at zero, so r*0 + pair == pair at tick 0
    a_a = jnp.zeros((B, REP_A), jnp.float32)
    b_a = jnp.zeros((B, REP_A), jnp.float32)

    scale = 1.0 / math.sqrt(HEAD_DIM)
    packed = []
    for _ in range(ITERATIONS):
        # ------------------------- action synchronisation ---------------------
        sel_a = act[:, D_MODEL - N_SYNCH_ACT:]
        pair_a = (jnp.dot(sel_a, li_a, preferred_element_type=jnp.float32)
                  * jnp.dot(sel_a, ri_a, preferred_element_type=jnp.float32))
        a_a = r_a * a_a + pair_a
        b_a = r_a * b_a + 1.0
        sync_a = a_a * jax.lax.rsqrt(b_a)               # (B, REP_A)

        # ---------------- attention (pre-composed query projection) -----------
        qp = jnp.dot(sync_a, w_q, preferred_element_type=jnp.float32) + b_q   # (B, E)
        attn_out = b_ao                                  # (1, E) -> broadcasts
        for h in range(HEADS):
            lo, hi = h * HEAD_DIM, (h + 1) * HEAD_DIM
            qh = qp[:, None, lo:hi]                      # (B, 1, hd)
            kh = k[:, :, lo:hi]                          # (B, S, hd)
            vh = v[:, :, lo:hi]
            s3 = jnp.einsum('bqd,bkd->bqk', qh, kh,
                            preferred_element_type=jnp.float32) * scale       # (B,1,S)
            s3 = s3 - jnp.max(s3, axis=-1, keepdims=True)
            e3 = jnp.exp(s3)
            p3 = e3 * pl.reciprocal(jnp.sum(e3, axis=-1, keepdims=True), approx=True)
            oh = jnp.einsum('bqk,bkd->bqd', p3, vh,
                            preferred_element_type=jnp.float32)[:, 0, :]      # (B, hd)
            # fold heads-concat + out-proj into per-head matmuls
            attn_out = attn_out + jnp.dot(oh, w_ao[lo:hi, :],
                                          preferred_element_type=jnp.float32)

        # --------------- synapses (concat folded into two matmuls) ------------
        syn = (jnp.dot(attn_out, w_syn[:D_INPUT, :], preferred_element_type=jnp.float32)
               + jnp.dot(act, w_syn[D_INPUT:, :], preferred_element_type=jnp.float32)
               + b_syn)                                  # (B, 2D)
        state = syn[:, :D_MODEL] * jax.nn.sigmoid(syn[:, D_MODEL:])            # GLU
        mu = jnp.mean(state, axis=-1, keepdims=True)
        var = jnp.mean((state - mu) ** 2, axis=-1, keepdims=True)
        state = (state - mu) * jax.lax.rsqrt(var + 1e-5) * ln_g + ln_b

        # -------------- FIFO trace update (flattened on the lane axis) --------
        trace = jnp.concatenate([trace[:, D_MODEL:], state], axis=-1)          # (B, M*D)

        # -------- trace processor (NLMs) as block-diagonal MXU matmuls --------
        h1 = jnp.dot(trace, w1, preferred_element_type=jnp.float32) + b1       # (B, 2*Hm*D)
        g1 = h1[:, :MEMORY_HID * D_MODEL] * jax.nn.sigmoid(h1[:, MEMORY_HID * D_MODEL:])
        h2 = jnp.dot(g1, w2, preferred_element_type=jnp.float32) + b2          # (B, 2*D)
        act = h2[:, :D_MODEL] * jax.nn.sigmoid(h2[:, D_MODEL:])                # (B, D)

        # --------------------------- out synchronisation ----------------------
        sel_o = act[:, :N_SYNCH_OUT]
        pair_o = (jnp.dot(sel_o, li_o, preferred_element_type=jnp.float32)
                  * jnp.dot(sel_o, ri_o, preferred_element_type=jnp.float32))
        a_o = r_o * a_o + pair_o
        b_o = r_o * b_o + 1.0
        sync_o = a_o * jax.lax.rsqrt(b_o)                # (B, REP_O)

        # -------------------- output projector + certainty --------------------
        logits = jnp.dot(sync_o, w_out, preferred_element_type=jnp.float32) + b_out
        m = jnp.max(logits, axis=-1, keepdims=True)
        e = jnp.exp(logits - m)
        s = jnp.sum(e, axis=-1, keepdims=True)
        probs = e * pl.reciprocal(s, approx=True)
        logp = (logits - m) - jnp.log(s)
        entropy = -jnp.sum(probs * logp, axis=-1, keepdims=True)               # (B, 1)
        ne = entropy * (1.0 / math.log(NUM_CLASSES))
        cert = jnp.concatenate([ne, 1.0 - ne], axis=-1)                        # (B, 2)
        pad = jnp.zeros((B, PACK_W - NUM_CLASSES - 2), jnp.float32)
        packed.append(jnp.concatenate([logits, cert, pad], axis=-1))           # (B, 32)

    # single lane-dense write: (B, ITERATIONS*32) == (B, 128) -> one full store
    out_ref[...] = jnp.concatenate(packed, axis=-1).astype(out_ref.dtype)


# ------------------------------- parameter init -------------------------------
def init_params(key):
    ks = jax.random.split(key, 24)
    u = lambda k, shape, s=0.1: jax.random.uniform(k, shape, jnp.float32, -s, s)
    P = {}
    P['emb']        = u(ks[0], (VOCAB, TOKEN_EMBED), 0.5)
    P['w_kv']       = u(ks[1], (TOKEN_EMBED, D_INPUT))
    P['b_kv']       = u(ks[2], (D_INPUT,))
    P['ln_kv_g']    = jnp.ones((D_INPUT,), jnp.float32)
    P['ln_kv_b']    = jnp.zeros((D_INPUT,), jnp.float32)
    P['w_q']        = u(ks[3], (REP_A, D_INPUT))
    P['b_q']        = u(ks[4], (D_INPUT,))
    P['w_qin']      = u(ks[5], (D_INPUT, D_INPUT))
    P['b_qin']      = u(ks[6], (D_INPUT,))
    P['w_kin']      = u(ks[7], (D_INPUT, D_INPUT))
    P['b_kin']      = u(ks[8], (D_INPUT,))
    P['w_vin']      = u(ks[9], (D_INPUT, D_INPUT))
    P['b_vin']      = u(ks[10], (D_INPUT,))
    P['w_ao']       = u(ks[11], (D_INPUT, D_INPUT))
    P['b_ao']       = u(ks[12], (D_INPUT,))
    P['w_syn']      = u(ks[13], (D_INPUT + D_MODEL, 2 * D_MODEL))
    P['b_syn']      = u(ks[14], (2 * D_MODEL,))
    P['ln_syn_g']   = jnp.ones((D_MODEL,), jnp.float32)
    P['ln_syn_b']   = jnp.zeros((D_MODEL,), jnp.float32)
    P['w1']         = u(ks[15], (MEMORY_LEN, 2 * MEMORY_HID, D_MODEL),
                        1.0 / math.sqrt(MEMORY_LEN + 2 * MEMORY_HID))
    P['b1']         = u(ks[16], (D_MODEL, 2 * MEMORY_HID), 0.05)   # torch layout (D,H)
    P['w2']         = u(ks[17], (MEMORY_HID, 2, D_MODEL),
                        1.0 / math.sqrt(MEMORY_HID + 2))
    P['b2']         = u(ks[18], (D_MODEL, 2), 0.05)
    P['start_act']  = u(ks[19], (D_MODEL,), math.sqrt(1.0 / D_MODEL))
    P['start_trace'] = u(ks[20], (D_MODEL, MEMORY_LEN),
                         math.sqrt(1.0 / (D_MODEL + MEMORY_LEN)))
    P['decay_a']    = jax.random.uniform(ks[21], (REP_A,), jnp.float32, 0.0, 1.0)
    P['decay_o']    = jax.random.uniform(ks[22], (REP_O,), jnp.float32, 0.0, 1.0)
    P['w_outp']     = u(ks[23], (REP_O, NUM_CLASSES))
    P['b_outp']     = jnp.zeros((NUM_CLASSES,), jnp.float32)
    return P


def compute_kv(x_tokens, P):
    emb = P['emb'][x_tokens]                                   # (B, S, TOKEN_EMBED)
    kv = emb @ P['w_kv'] + P['b_kv']
    return _layernorm(kv, P['ln_kv_g'], P['ln_kv_b'])          # (B, S, E)


# ------------------------------ Pallas wrapper --------------------------------
@jax.jit
def ctm_forward_pallas(x_tokens, P):
    B = x_tokens.shape[0]
    kv = compute_kv(x_tokens, P)
    # attention K/V projections do not depend on the tick -> hoist out of kernel
    K = kv @ P['w_kin'] + P['b_kin']                           # (B, S, E)
    V = kv @ P['w_vin'] + P['b_vin']

    li_a, ri_a = triu_selectors(N_SYNCH_ACT)
    li_o, ri_o = triu_selectors(N_SYNCH_OUT)
    r_a = jnp.exp(-jnp.clip(P['decay_a'], 0.0, 15.0)).reshape(1, REP_A)
    r_o = jnp.exp(-jnp.clip(P['decay_o'], 0.0, 15.0)).reshape(1, REP_O)

    # pre-compose q_proj with the attention query in-projection
    w_q_comb = P['w_q'] @ P['w_qin']                                     # (REP_A, E)
    b_q_comb = P['b_q'] @ P['w_qin'] + P['b_qin']                        # (E,)

    # block-diagonal NLM weights so the SuperLinear contractions hit the MXU
    eye_d = jnp.eye(D_MODEL, dtype=jnp.float32)
    w1_bd = jnp.einsum('mhd,de->mdhe', P['w1'], eye_d).reshape(
        MEMORY_LEN * D_MODEL, 2 * MEMORY_HID * D_MODEL)                  # (256, 256)
    w2_bd = jnp.einsum('mhd,de->mdhe', P['w2'], eye_d).reshape(
        MEMORY_HID * D_MODEL, 2 * D_MODEL)                               # (128, 64)

    entries = {
        'w1_bd': w1_bd,
        'w2_bd': w2_bd,
        'w_syn': P['w_syn'],
        'li_a': li_a, 'ri_a': ri_a, 'li_o': li_o, 'ri_o': ri_o,
        'w_q': w_q_comb,
        'w_ao': P['w_ao'],
        'w_out': P['w_outp'],
        'r_a': r_a, 'r_o': r_o,
        'start_act': P['start_act'].reshape(1, D_MODEL),
        'start_trace': P['start_trace'].T.reshape(1, MEMORY_LEN * D_MODEL),
        'b_q': b_q_comb.reshape(1, D_INPUT),
        'b_ao': P['b_ao'].reshape(1, D_INPUT),
        'b_syn': P['b_syn'].reshape(1, 2 * D_MODEL),
        'ln_g': P['ln_syn_g'].reshape(1, D_MODEL),
        'ln_b': P['ln_syn_b'].reshape(1, D_MODEL),
        'b1': P['b1'].T.reshape(1, 2 * MEMORY_HID * D_MODEL),
        'b2': P['b2'].T.reshape(1, 2 * D_MODEL),
        'b_out': P['b_outp'].reshape(1, NUM_CLASSES),
    }
    slab = jnp.zeros((SLAB_ROWS, SLAB_W), jnp.float32)
    for name, arr in entries.items():
        r0, nr, nc = SLAB_LAYOUT[name]
        slab = slab.at[r0:r0 + nr, :nc].set(arr.reshape(nr, nc))

    packed = pl.pallas_call(
        ctm_kernel,
        out_shape=jax.ShapeDtypeStruct((B, ITERATIONS * PACK_W), jnp.float32),
    )(slab, K, V)

    packed = packed.reshape(B, ITERATIONS, PACK_W)
    predictions = jnp.transpose(packed[:, :, :NUM_CLASSES], (0, 2, 1))   # (B, C, it)
    certainties = jnp.transpose(packed[:, :, NUM_CLASSES:NUM_CLASSES + 2], (0, 2, 1))
    return predictions, certainties


# --------------------- pure-JAX reference (mirrors the PyTorch code) ----------
def ctm_forward_reference(x_tokens, P):
    B = x_tokens.shape[0]
    kv = compute_kv(x_tokens, P)
    i_a, j_a = np.triu_indices(N_SYNCH_ACT)
    i_o, j_o = np.triu_indices(N_SYNCH_OUT)

    def pairwise(sel, ii, jj):
        outer = sel[:, :, None] * sel[:, None, :]
        return outer[:, ii, jj]

    trace = jnp.broadcast_to(P['start_trace'][None], (B, D_MODEL, MEMORY_LEN))
    act = jnp.broadcast_to(P['start_act'][None], (B, D_MODEL))
    r_a = jnp.broadcast_to(jnp.exp(-jnp.clip(P['decay_a'], 0.0, 15.0))[None], (B, REP_A))
    r_o = jnp.broadcast_to(jnp.exp(-jnp.clip(P['decay_o'], 0.0, 15.0))[None], (B, REP_O))

    a_o = pairwise(act[:, :N_SYNCH_OUT], i_o, j_o)
    b_o = jnp.ones_like(a_o)
    a_a = b_a = None

    K = kv @ P['w_kin'] + P['b_kin']
    V = kv @ P['w_vin'] + P['b_vin']

    preds, certs = [], []
    for _ in range(ITERATIONS):
        pa = pairwise(act[:, D_MODEL - N_SYNCH_ACT:], i_a, j_a)
        if a_a is None:
            a_a, b_a = pa, jnp.ones_like(pa)
        else:
            a_a = r_a * a_a + pa
            b_a = r_a * b_a + 1.0
        sync_a = a_a / jnp.sqrt(b_a)

        q = sync_a @ P['w_q'] + P['b_q']
        qp = q @ P['w_qin'] + P['b_qin']
        outs = []
        for h in range(HEADS):
            sl = slice(h * HEAD_DIM, (h + 1) * HEAD_DIM)
            sc = jnp.einsum('bd,bsd->bs', qp[:, sl], K[:, :, sl]) / math.sqrt(HEAD_DIM)
            p = jax.nn.softmax(sc, axis=-1)
            outs.append(jnp.einsum('bs,bsd->bd', p, V[:, :, sl]))
        attn = jnp.concatenate(outs, -1) @ P['w_ao'] + P['b_ao']

        pre = jnp.concatenate([attn, act], -1)
        syn = pre @ P['w_syn'] + P['b_syn']
        state = syn[:, :D_MODEL] * jax.nn.sigmoid(syn[:, D_MODEL:])
        state = _layernorm(state, P['ln_syn_g'], P['ln_syn_b'])

        trace = jnp.concatenate([trace[:, :, 1:], state[:, :, None]], -1)
        h1 = jnp.einsum('BDM,MHD->BDH', trace, P['w1']) + P['b1'][None]
        g1 = h1[..., :MEMORY_HID] * jax.nn.sigmoid(h1[..., MEMORY_HID:])
        h2 = jnp.einsum('BDM,MHD->BDH', g1, P['w2']) + P['b2'][None]
        act = h2[..., 0] * jax.nn.sigmoid(h2[..., 1])

        po = pairwise(act[:, :N_SYNCH_OUT], i_o, j_o)
        a_o = r_o * a_o + po
        b_o = r_o * b_o + 1.0
        sync_o = a_o / jnp.sqrt(b_o)

        logits = sync_o @ P['w_outp'] + P['b_outp']
        lp = jax.nn.log_softmax(logits, -1)
        ne = -jnp.sum(jnp.exp(lp) * lp, -1) / math.log(NUM_CLASSES)
        preds.append(logits)
        certs.append(jnp.stack([ne, 1.0 - ne], -1))
    return jnp.stack(preds, -1), jnp.stack(certs, -1)


# ----------------------------------- main -------------------------------------
if __name__ == "__main__":
    key = jax.random.PRNGKey(0)
    pkey, xkey = jax.random.split(key)
    params = init_params(pkey)
    x = jax.random.randint(xkey, (BATCH, SEQ), 0, VOCAB, dtype=jnp.int32)

    preds, certs = jax.block_until_ready(ctm_forward_pallas(x, params))
    ref_preds, ref_certs = jax.block_until_ready(ctm_forward_reference(x, params))

    assert preds.shape == (BATCH, NUM_CLASSES, ITERATIONS), preds.shape
    assert certs.shape == (BATCH, 2, ITERATIONS), certs.shape
    # NOTE: pl.reciprocal(approx=True) in the softmax paths shifts results by
    # O(1e-4); well inside the tolerance below.
    np.testing.assert_allclose(np.asarray(preds), np.asarray(ref_preds),
                               rtol=3e-2, atol=3e-2)
    np.testing.assert_allclose(np.asarray(certs), np.asarray(ref_certs),
                               rtol=3e-2, atol=3e-2)
    print("KERNEL_OK")
</pallas_src>

<mosaic_0001>
module attributes {stable_mosaic.version = 11 : i64} {
  func.func @ctm_kernel(%arg0: memref<656x256xf32, #tpu.memory_space<vmem>>, %arg1: memref<2x8x16xf32, #tpu.memory_space<vmem>>, %arg2: memref<2x8x16xf32, #tpu.memory_space<vmem>>, %arg3: memref<2x128xf32, #tpu.memory_space<vmem>>) attributes {dimension_semantics = [], scalar_prefetch = 0 : i64, scratch_operands = 0 : i64, tpu.core_type = #tpu.core_type<tc>} {
    %c432 = arith.constant 432 : index
    %c0 = arith.constant 0 : index
    %0 = vector.load %arg0[%c432, %c0] : memref<656x256xf32, #tpu.memory_space<vmem>>, vector<8x36xf32>
    %c440 = arith.constant 440 : index
    %c0_0 = arith.constant 0 : index
    %1 = vector.load %arg0[%c440, %c0_0] : memref<656x256xf32, #tpu.memory_space<vmem>>, vector<8x36xf32>
    %c448 = arith.constant 448 : index
    %c0_1 = arith.constant 0 : index
    %2 = vector.load %arg0[%c448, %c0_1] : memref<656x256xf32, #tpu.memory_space<vmem>>, vector<8x36xf32>
    %c456 = arith.constant 456 : index
    %c0_2 = arith.constant 0 : index
    %3 = vector.load %arg0[%c456, %c0_2] : memref<656x256xf32, #tpu.memory_space<vmem>>, vector<8x36xf32>
    %c560 = arith.constant 560 : index
    %c0_3 = arith.constant 0 : index
    %4 = vector.load %arg0[%c560, %c0_3] : memref<656x256xf32, #tpu.memory_space<vmem>>, vector<1x36xf32>
    %c568 = arith.constant 568 : index
    %c0_4 = arith.constant 0 : index
    %5 = vector.load %arg0[%c568, %c0_4] : memref<656x256xf32, #tpu.memory_space<vmem>>, vector<1x36xf32>
    %c464 = arith.constant 464 : index
    %c0_5 = arith.constant 0 : index
    %6 = vector.load %arg0[%c464, %c0_5] : memref<656x256xf32, #tpu.memory_space<vmem>>, vector<36x16xf32>
    %c592 = arith.constant 592 : index
    %c0_6 = arith.constant 0 : index
    %7 = vector.load %arg0[%c592, %c0_6] : memref<656x256xf32, #tpu.memory_space<vmem>>, vector<1x16xf32>
    %c504 = arith.constant 504 : index
    %c0_7 = arith.constant 0 : index
    %8 = vector.load %arg0[%c504, %c0_7] : memref<656x256xf32, #tpu.memory_space<vmem>>, vector<16x16xf32>
    %c600 = arith.constant 600 : index
    %c0_8 = arith.constant 0 : index
    %9 = vector.load %arg0[%c600, %c0_8] : memref<656x256xf32, #tpu.memory_space<vmem>>, vector<1x16xf32>
    %c384 = arith.constant 384 : index
    %c0_9 = arith.constant 0 : index
    %10 = vector.load %arg0[%c384, %c0_9] : memref<656x256xf32, #tpu.memory_space<vmem>>, vector<48x64xf32>
    %c608 = arith.constant 608 : index
    %c0_10 = arith.constant 0 : index
    %11 = vector.load %arg0[%c608, %c0_10] : memref<656x256xf32, #tpu.memory_space<vmem>>, vector<1x64xf32>
    %c616 = arith.constant 616 : index
    %c0_11 = arith.constant 0 : index
    %12 = vector.load %arg0[%c616, %c0_11] : memref<656x256xf32, #tpu.memory_space<vmem>>, vector<1x32xf32>
    %c624 = arith.constant 624 : index
    %c0_12 = arith.constant 0 : index
    %13 = vector.load %arg0[%c624, %c0_12] : memref<656x256xf32, #tpu.memory_space<vmem>>, vector<1x32xf32>
    %c0_13 = arith.constant 0 : index
    %c0_14 = arith.constant 0 : index
    %14 = vector.load %arg0[%c0_13, %c0_14] : memref<656x256xf32, #tpu.memory_space<vmem>>, vector<256x256xf32>
    %c632 = arith.constant 632 : index
    %c0_15 = arith.constant 0 : index
    %15 = vector.load %arg0[%c632, %c0_15] : memref<656x256xf32, #tpu.memory_space<vmem>>, vector<1x256xf32>
    %c256 = arith.constant 256 : index
    %c0_16 = arith.constant 0 : index
    %16 = vector.load %arg0[%c256, %c0_16] : memref<656x256xf32, #tpu.memory_space<vmem>>, vector<128x64xf32>
    %c640 = arith.constant 640 : index
    %c0_17 = arith.constant 0 : index
    %17 = vector.load %arg0[%c640, %c0_17] : memref<656x256xf32, #tpu.memory_space<vmem>>, vector<1x64xf32>
    %c520 = arith.constant 520 : index
    %c0_18 = arith.constant 0 : index
    %18 = vector.load %arg0[%c520, %c0_18] : memref<656x256xf32, #tpu.memory_space<vmem>>, vector<36x10xf32>
    %c648 = arith.constant 648 : index
    %c0_19 = arith.constant 0 : index
    %19 = vector.load %arg0[%c648, %c0_19] : memref<656x256xf32, #tpu.memory_space<vmem>>, vector<1x10xf32>
    %c0_20 = arith.constant 0 : index
    %c0_21 = arith.constant 0 : index
    %c0_22 = arith.constant 0 : index
    %20 = vector.load %arg1[%c0_20, %c0_21, %c0_22] : memref<2x8x16xf32, #tpu.memory_space<vmem>>, vector<2x8x16xf32>
    %c0_23 = arith.constant 0 : index
    %c0_24 = arith.constant 0 : index
    %c0_25 = arith.constant 0 : index
    %21 = vector.load %arg2[%c0_23, %c0_24, %c0_25] : memref<2x8x16xf32, #tpu.memory_space<vmem>>, vector<2x8x16xf32>
    %c576 = arith.constant 576 : index
    %c0_26 = arith.constant 0 : index
    %22 = vector.load %arg0[%c576, %c0_26] : memref<656x256xf32, #tpu.memory_space<vmem>>, vector<1x32xf32>
    %23 = vector.shape_cast %22 : vector<1x32xf32> to vector<1x32xf32>
    %24 = vector.broadcast %23 : vector<1x32xf32> to vector<2x32xf32>
    %c584 = arith.constant 584 : index
    %c0_27 = arith.constant 0 : index
    %25 = vector.load %arg0[%c584, %c0_27] : memref<656x256xf32, #tpu.memory_space<vmem>>, vector<1x256xf32>
    %26 = vector.shape_cast %25 : vector<1x256xf32> to vector<1x256xf32>
    %27 = vector.broadcast %26 : vector<1x256xf32> to vector<2x256xf32>
    %28 = vector.extract_strided_slice %24 {offsets = [0, 0], sizes = [2, 8], strides = [1, 1]} : vector<2x32xf32> to vector<2x8xf32>
    %cst = arith.constant dense<0.000000e+00> : vector<2x36xf32>
    %29 = tpu.matmul %28, %2, %cst {dimension_numbers = #tpu.dot_dimension_numbers<[1], [0], [0], [1], [0, 0, 1, 1], [], []>} : vector<2x8xf32>, vector<8x36xf32>, vector<2x36xf32> -> vector<2x36xf32>
    %cst_28 = arith.constant dense<0.000000e+00> : vector<2x36xf32>
    %30 = tpu.matmul %28, %3, %cst_28 {dimension_numbers = #tpu.dot_dimension_numbers<[1], [0], [0], [1], [0, 0, 1, 1], [], []>} : vector<2x8xf32>, vector<8x36xf32>, vector<2x36xf32> -> vector<2x36xf32>
    %31 = arith.mulf %29, %30 : vector<2x36xf32>
    %cst_29 = arith.constant 1.000000e+00 : f32
    %32 = vector.broadcast %cst_29 : f32 to vector<2x36xf32>
    %cst_30 = arith.constant 0.000000e+00 : f32
    %33 = vector.broadcast %cst_30 : f32 to vector<2x36xf32>
    %cst_31 = arith.constant 0.000000e+00 : f32
    %34 = vector.broadcast %cst_31 : f32 to vector<2x36xf32>
    %35 = vector.extract_strided_slice %24 {offsets = [0, 24], sizes = [2, 8], strides = [1, 1]} : vector<2x32xf32> to vector<2x8xf32>
    %cst_32 = arith.constant dense<0.000000e+00> : vector<2x36xf32>
    %36 = tpu.matmul %35, %0, %cst_32 {dimension_numbers = #tpu.dot_dimension_numbers<[1], [0], [0], [1], [0, 0, 1, 1], [], []>} : vector<2x8xf32>, vector<8x36xf32>, vector<2x36xf32> -> vector<2x36xf32>
    %cst_33 = arith.constant dense<0.000000e+00> : vector<2x36xf32>
    %37 = tpu.matmul %35, %1, %cst_33 {dimension_numbers = #tpu.dot_dimension_numbers<[1], [0], [0], [1], [0, 0, 1, 1], [], []>} : vector<2x8xf32>, vector<8x36xf32>, vector<2x36xf32> -> vector<2x36xf32>
    %38 = arith.mulf %36, %37 : vector<2x36xf32>
    %39 = vector.broadcast %4 : vector<1x36xf32> to vector<2x36xf32>
    %40 = arith.mulf %39, %33 : vector<2x36xf32>
    %41 = arith.addf %40, %38 : vector<2x36xf32>
    %42 = vector.broadcast %4 : vector<1x36xf32> to vector<2x36xf32>
    %43 = arith.mulf %42, %34 : vector<2x36xf32>
    %cst_34 = arith.constant 1.000000e+00 : f32
    %44 = vector.broadcast %cst_34 : f32 to vector<2x36xf32>
    %45 = arith.addf %43, %44 : vector<2x36xf32>
    %46 = math.rsqrt %45 : vector<2x36xf32>
    %47 = arith.mulf %41, %46 : vector<2x36xf32>
    %cst_35 = arith.constant dense<0.000000e+00> : vector<2x16xf32>
    %48 = tpu.matmul %47, %6, %cst_35 {dimension_numbers = #tpu.dot_dimension_numbers<[1], [0], [0], [1], [0, 0, 1, 1], [], []>} : vector<2x36xf32>, vector<36x16xf32>, vector<2x16xf32> -> vector<2x16xf32>
    %49 = vector.broadcast %7 : vector<1x16xf32> to vector<2x16xf32>
    %50 = arith.addf %48, %49 : vector<2x16xf32>
    %51 = vector.extract_strided_slice %50 {offsets = [0, 0], sizes = [2, 8], strides = [1, 1]} : vector<2x16xf32> to vector<2x8xf32>
    %52 = vector.shape_cast %51 : vector<2x8xf32> to vector<2x1x8xf32>
    %53 = vector.extract_strided_slice %20 {offsets = [0, 0, 0], sizes = [2, 8, 8], strides = [1, 1, 1]} : vector<2x8x16xf32> to vector<2x8x8xf32>
    %54 = vector.extract_strided_slice %21 {offsets = [0, 0, 0], sizes = [2, 8, 8], strides = [1, 1, 1]} : vector<2x8x16xf32> to vector<2x8x8xf32>
    "tpu.trace_start"() <{level = 10 : i32, message = "bqd,bkd->bqk"}> : () -> ()
    %cst_36 = arith.constant dense<0.000000e+00> : vector<2x1x8xf32>
    %55 = tpu.matmul %52, %53, %cst_36 {dimension_numbers = #tpu.dot_dimension_numbers<[2], [2], [1], [1], [0, 0, 0, 1, 1, 1], [0], [0]>} : vector<2x1x8xf32>, vector<2x8x8xf32>, vector<2x1x8xf32> -> vector<2x1x8xf32>
    "tpu.trace_stop"() : () -> ()
    %cst_37 = arith.constant 0.353553385 : f32
    %56 = vector.broadcast %cst_37 : f32 to vector<2x1x8xf32>
    %57 = arith.mulf %55, %56 : vector<2x1x8xf32>
    %cst_38 = arith.constant dense<0xFF800000> : vector<2x1xf32>
    %58 = vector.multi_reduction <maximumf>, %57, %cst_38 [2] : vector<2x1x8xf32> to vector<2x1xf32>
    %59 = vector.shape_cast %58 : vector<2x1xf32> to vector<2x1x1xf32>
    %60 = vector.broadcast %59 : vector<2x1x1xf32> to vector<2x1x8xf32>
    %61 = arith.subf %57, %60 : vector<2x1x8xf32>
    %62 = math.exp %61 : vector<2x1x8xf32>
    %cst_39 = arith.constant dense<0.000000e+00> : vector<2x1xf32>
    %63 = vector.multi_reduction <add>, %62, %cst_39 [2] : vector<2x1x8xf32> to vector<2x1xf32>
    %64 = vector.shape_cast %63 : vector<2x1xf32> to vector<2x1x1xf32>
    %65 = tpu.reciprocal %64 {approx = true} : vector<2x1x1xf32> -> vector<2x1x1xf32>
    %66 = vector.broadcast %65 : vector<2x1x1xf32> to vector<2x1x8xf32>
    %67 = arith.mulf %62, %66 : vector<2x1x8xf32>
    "tpu.trace_start"() <{level = 10 : i32, message = "bqk,bkd->bqd"}> : () -> ()
    %cst_40 = arith.constant dense<0.000000e+00> : vector<2x1x8xf32>
    %68 = tpu.matmul %67, %54, %cst_40 {dimension_numbers = #tpu.dot_dimension_numbers<[2], [1], [1], [2], [0, 0, 0, 1, 1, 2], [0], [0]>} : vector<2x1x8xf32>, vector<2x8x8xf32>, vector<2x1x8xf32> -> vector<2x1x8xf32>
    "tpu.trace_stop"() : () -> ()
    %69 = vector.shape_cast %68 : vector<2x1x8xf32> to vector<2x8xf32>
    %70 = vector.extract_strided_slice %8 {offsets = [0, 0], sizes = [8, 16], strides = [1, 1]} : vector<16x16xf32> to vector<8x16xf32>
    %cst_41 = arith.constant dense<0.000000e+00> : vector<2x16xf32>
    %71 = tpu.matmul %69, %70, %cst_41 {dimension_numbers = #tpu.dot_dimension_numbers<[1], [0], [0], [1], [0, 0, 1, 1], [], []>} : vector<2x8xf32>, vector<8x16xf32>, vector<2x16xf32> -> vector<2x16xf32>
    %72 = vector.broadcast %9 : vector<1x16xf32> to vector<2x16xf32>
    %73 = arith.addf %72, %71 : vector<2x16xf32>
    %74 = vector.extract_strided_slice %50 {offsets = [0, 8], sizes = [2, 8], strides = [1, 1]} : vector<2x16xf32> to vector<2x8xf32>
    %75 = vector.shape_cast %74 : vector<2x8xf32> to vector<2x1x8xf32>
    %76 = vector.extract_strided_slice %20 {offsets = [0, 0, 8], sizes = [2, 8, 8], strides = [1, 1, 1]} : vector<2x8x16xf32> to vector<2x8x8xf32>
    %77 = vector.extract_strided_slice %21 {offsets = [0, 0, 8], sizes = [2, 8, 8], strides = [1, 1, 1]} : vector<2x8x16xf32> to vector<2x8x8xf32>
    "tpu.trace_start"() <{level = 10 : i32, message = "bqd,bkd->bqk"}> : () -> ()
    %cst_42 = arith.constant dense<0.000000e+00> : vector<2x1x8xf32>
    %78 = tpu.matmul %75, %76, %cst_42 {dimension_numbers = #tpu.dot_dimension_numbers<[2], [2], [1], [1], [0, 0, 0, 1, 1, 1], [0], [0]>} : vector<2x1x8xf32>, vector<2x8x8xf32>, vector<2x1x8xf32> -> vector<2x1x8xf32>
    "tpu.trace_stop"() : () -> ()
    %cst_43 = arith.constant 0.353553385 : f32
    %79 = vector.broadcast %cst_43 : f32 to vector<2x1x8xf32>
    %80 = arith.mulf %78, %79 : vector<2x1x8xf32>
    %cst_44 = arith.constant dense<0xFF800000> : vector<2x1xf32>
    %81 = vector.multi_reduction <maximumf>, %80, %cst_44 [2] : vector<2x1x8xf32> to vector<2x1xf32>
    %82 = vector.shape_cast %81 : vector<2x1xf32> to vector<2x1x1xf32>
    %83 = vector.broadcast %82 : vector<2x1x1xf32> to vector<2x1x8xf32>
    %84 = arith.subf %80, %83 : vector<2x1x8xf32>
    %85 = math.exp %84 : vector<2x1x8xf32>
    %cst_45 = arith.constant dense<0.000000e+00> : vector<2x1xf32>
    %86 = vector.multi_reduction <add>, %85, %cst_45 [2] : vector<2x1x8xf32> to vector<2x1xf32>
    %87 = vector.shape_cast %86 : vector<2x1xf32> to vector<2x1x1xf32>
    %88 = tpu.reciprocal %87 {approx = true} : vector<2x1x1xf32> -> vector<2x1x1xf32>
    %89 = vector.broadcast %88 : vector<2x1x1xf32> to vector<2x1x8xf32>
    %90 = arith.mulf %85, %89 : vector<2x1x8xf32>
    "tpu.trace_start"() <{level = 10 : i32, message = "bqk,bkd->bqd"}> : () -> ()
    %cst_46 = arith.constant dense<0.000000e+00> : vector<2x1x8xf32>
    %91 = tpu.matmul %90, %77, %cst_46 {dimension_numbers = #tpu.dot_dimension_numbers<[2], [1], [1], [2], [0, 0, 0, 1, 1, 2], [0], [0]>} : vector<2x1x8xf32>, vector<2x8x8xf32>, vector<2x1x8xf32> -> vector<2x1x8xf32>
    "tpu.trace_stop"() : () -> ()
    %92 = vector.shape_cast %91 : vector<2x1x8xf32> to vector<2x8xf32>
    %93 = vector.extract_strided_slice %8 {offsets = [8, 0], sizes = [8, 16], strides = [1, 1]} : vector<16x16xf32> to vector<8x16xf32>
    %cst_47 = arith.constant dense<0.000000e+00> : vector<2x16xf32>
    %94 = tpu.matmul %92, %93, %cst_47 {dimension_numbers = #tpu.dot_dimension_numbers<[1], [0], [0], [1], [0, 0, 1, 1], [], []>} : vector<2x8xf32>, vector<8x16xf32>, vector<2x16xf32> -> vector<2x16xf32>
    %95 = arith.addf %73, %94 : vector<2x16xf32>
    %96 = vector.extract_strided_slice %10 {offsets = [0, 0], sizes = [16, 64], strides = [1, 1]} : vector<48x64xf32> to vector<16x64xf32>
    %cst_48 = arith.constant dense<0.000000e+00> : vector<2x64xf32>
    %97 = tpu.matmul %95, %96, %cst_48 {dimension_numbers = #tpu.dot_dimension_numbers<[1], [0], [0], [1], [0, 0, 1, 1], [], []>} : vector<2x16xf32>, vector<16x64xf32>, vector<2x64xf32> -> vector<2x64xf32>
    %98 = vector.extract_strided_slice %10 {offsets = [16, 0], sizes = [32, 64], strides = [1, 1]} : vector<48x64xf32> to vector<32x64xf32>
    %cst_49 = arith.constant dense<0.000000e+00> : vector<2x64xf32>
    %99 = tpu.matmul %24, %98, %cst_49 {dimension_numbers = #tpu.dot_dimension_numbers<[1], [0], [0], [1], [0, 0, 1, 1], [], []>} : vector<2x32xf32>, vector<32x64xf32>, vector<2x64xf32> -> vector<2x64xf32>
    %100 = arith.addf %97, %99 : vector<2x64xf32>
    %101 = vector.broadcast %11 : vector<1x64xf32> to vector<2x64xf32>
    %102 = arith.addf %100, %101 : vector<2x64xf32>
    %103 = vector.extract_strided_slice %102 {offsets = [0, 0], sizes = [2, 32], strides = [1, 1]} : vector<2x64xf32> to vector<2x32xf32>
    %104 = vector.extract_strided_slice %102 {offsets = [0, 32], sizes = [2, 32], strides = [1, 1]} : vector<2x64xf32> to vector<2x32xf32>
    %105 = arith.negf %104 : vector<2x32xf32>
    %106 = math.exp %105 : vector<2x32xf32>
    %cst_50 = arith.constant 1.000000e+00 : f32
    %107 = vector.broadcast %cst_50 : f32 to vector<2x32xf32>
    %108 = arith.addf %107, %106 : vector<2x32xf32>
    %109 = arith.divf %107, %108 : vector<2x32xf32>
    %110 = arith.mulf %103, %109 : vector<2x32xf32>
    %cst_51 = arith.constant dense<0.000000e+00> : vector<2xf32>
    %111 = vector.multi_reduction <add>, %110, %cst_51 [1] : vector<2x32xf32> to vector<2xf32>
    %112 = vector.shape_cast %111 : vector<2xf32> to vector<2x1xf32>
    %cst_52 = arith.constant 3.200000e+01 : f32
    %113 = vector.broadcast %cst_52 : f32 to vector<2x1xf32>
    %114 = arith.divf %112, %113 : vector<2x1xf32>
    %115 = vector.broadcast %114 : vector<2x1xf32> to vector<2x32xf32>
    %116 = arith.subf %110, %115 : vector<2x32xf32>
    %117 = arith.mulf %116, %116 : vector<2x32xf32>
    %cst_53 = arith.constant dense<0.000000e+00> : vector<2xf32>
    %118 = vector.multi_reduction <add>, %117, %cst_53 [1] : vector<2x32xf32> to vector<2xf32>
    %119 = vector.shape_cast %118 : vector<2xf32> to vector<2x1xf32>
    %cst_54 = arith.constant 3.200000e+01 : f32
    %120 = vector.broadcast %cst_54 : f32 to vector<2x1xf32>
    %121 = arith.divf %119, %120 : vector<2x1xf32>
    %122 = vector.broadcast %114 : vector<2x1xf32> to vector<2x32xf32>
    %123 = arith.subf %110, %122 : vector<2x32xf32>
    %cst_55 = arith.constant 9.99999974E-6 : f32
    %124 = vector.broadcast %cst_55 : f32 to vector<2x1xf32>
    %125 = arith.addf %121, %124 : vector<2x1xf32>
    %126 = math.rsqrt %125 : vector<2x1xf32>
    %127 = vector.broadcast %126 : vector<2x1xf32> to vector<2x32xf32>
    %128 = arith.mulf %123, %127 : vector<2x32xf32>
    %129 = vector.broadcast %12 : vector<1x32xf32> to vector<2x32xf32>
    %130 = arith.mulf %128, %129 : vector<2x32xf32>
    %131 = vector.broadcast %13 : vector<1x32xf32> to vector<2x32xf32>
    %132 = arith.addf %130, %131 : vector<2x32xf32>
    %133 = vector.extract_strided_slice %27 {offsets = [0, 32], sizes = [2, 224], strides = [1, 1]} : vector<2x256xf32> to vector<2x224xf32>
    %134 = tpu.concatenate %133, %132 in 1 : vector<2x224xf32>, vector<2x32xf32> -> vector<2x256xf32>
    %cst_56 = arith.constant dense<0.000000e+00> : vector<2x256xf32>
    %135 = tpu.matmul %134, %14, %cst_56 {dimension_numbers = #tpu.dot_dimension_numbers<[1], [0], [0], [1], [0, 0, 1, 1], [], []>} : vector<2x256xf32>, vector<256x256xf32>, vector<2x256xf32> -> vector<2x256xf32>
    %136 = vector.broadcast %15 : vector<1x256xf32> to vector<2x256xf32>
    %137 = arith.addf %135, %136 : vector<2x256xf32>
    %138 = vector.extract_strided_slice %137 {offsets = [0, 0], sizes = [2, 128], strides = [1, 1]} : vector<2x256xf32> to vector<2x128xf32>
    %139 = vector.extract_strided_slice %137 {offsets = [0, 128], sizes = [2, 128], strides = [1, 1]} : vector<2x256xf32> to vector<2x128xf32>
    %140 = arith.negf %139 : vector<2x128xf32>
    %141 = math.exp %140 : vector<2x128xf32>
    %cst_57 = arith.constant 1.000000e+00 : f32
    %142 = vector.broadcast %cst_57 : f32 to vector<2x128xf32>
    %143 = arith.addf %142, %141 : vector<2x128xf32>
    %144 = arith.divf %142, %143 : vector<2x128xf32>
    %145 = arith.mulf %138, %144 : vector<2x128xf32>
    %cst_58 = arith.constant dense<0.000000e+00> : vector<2x64xf32>
    %146 = tpu.matmul %145, %16, %cst_58 {dimension_numbers = #tpu.dot_dimension_numbers<[1], [0], [0], [1], [0, 0, 1, 1], [], []>} : vector<2x128xf32>, vector<128x64xf32>, vector<2x64xf32> -> vector<2x64xf32>
    %147 = vector.broadcast %17 : vector<1x64xf32> to vector<2x64xf32>
    %148 = arith.addf %146, %147 : vector<2x64xf32>
    %149 = vector.extract_strided_slice %148 {offsets = [0, 0], sizes = [2, 32], strides = [1, 1]} : vector<2x64xf32> to vector<2x32xf32>
    %150 = vector.extract_strided_slice %148 {offsets = [0, 32], sizes = [2, 32], strides = [1, 1]} : vector<2x64xf32> to vector<2x32xf32>
    %151 = arith.negf %150 : vector<2x32xf32>
    %152 = math.exp %151 : vector<2x32xf32>
    %cst_59 = arith.constant 1.000000e+00 : f32
    %153 = vector.broadcast %cst_59 : f32 to vector<2x32xf32>
    %154 = arith.addf %153, %152 : vector<2x32xf32>
    %155 = arith.divf %153, %154 : vector<2x32xf32>
    %156 = arith.mulf %149, %155 : vector<2x32xf32>
    %157 = vector.extract_strided_slice %156 {offsets = [0, 0], sizes = [2, 8], strides = [1, 1]} : vector<2x32xf32> to vector<2x8xf32>
    %cst_60 = arith.constant dense<0.000000e+00> : vector<2x36xf32>
    %158 = tpu.matmul %157, %2, %cst_60 {dimension_numbers = #tpu.dot_dimension_numbers<[1], [0], [0], [1], [0, 0, 1, 1], [], []>} : vector<2x8xf32>, vector<8x36xf32>, vector<2x36xf32> -> vector<2x36xf32>
    %cst_61 = arith.constant dense<0.000000e+00> : vector<2x36xf32>
    %159 = tpu.matmul %157, %3, %cst_61 {dimension_numbers = #tpu.dot_dimension_numbers<[1], [0], [0], [1], [0, 0, 1, 1], [], []>} : vector<2x8xf32>, vector<8x36xf32>, vector<2x36xf32> -> vector<2x36xf32>
    %160 = arith.mulf %158, %159 : vector<2x36xf32>
    %161 = vector.broadcast %5 : vector<1x36xf32> to vector<2x36xf32>
    %162 = arith.mulf %161, %31 : vector<2x36xf32>
    %163 = arith.addf %162, %160 : vector<2x36xf32>
    %164 = vector.broadcast %5 : vector<1x36xf32> to vector<2x36xf32>
    %165 = arith.mulf %164, %32 : vector<2x36xf32>
    %cst_62 = arith.constant 1.000000e+00 : f32
    %166 = vector.broadcast %cst_62 : f32 to vector<2x36xf32>
    %167 = arith.addf %165, %166 : vector<2x36xf32>
    %168 = math.rsqrt %167 : vector<2x36xf32>
    %169 = arith.mulf %163, %168 : vector<2x36xf32>
    %cst_63 = arith.constant dense<0.000000e+00> : vector<2x10xf32>
    %170 = tpu.matmul %169, %18, %cst_63 {dimension_numbers = #tpu.dot_dimension_numbers<[1], [0], [0], [1], [0, 0, 1, 1], [], []>} : vector<2x36xf32>, vector<36x10xf32>, vector<2x10xf32> -> vector<2x10xf32>
    %171 = vector.broadcast %19 : vector<1x10xf32> to vector<2x10xf32>
    %172 = arith.addf %170, %171 : vector<2x10xf32>
    %cst_64 = arith.constant dense<0xFF800000> : vector<2xf32>
    %173 = vector.multi_reduction <maximumf>, %172, %cst_64 [1] : vector<2x10xf32> to vector<2xf32>
    %174 = vector.shape_cast %173 : vector<2xf32> to vector<2x1xf32>
    %175 = vector.broadcast %174 : vector<2x1xf32> to vector<2x10xf32>
    %176 = arith.subf %172, %175 : vector<2x10xf32>
    %177 = math.exp %176 : vector<2x10xf32>
    %cst_65 = arith.constant dense<0.000000e+00> : vector<2xf32>
    %178 = vector.multi_reduction <add>, %177, %cst_65 [1] : vector<2x10xf32> to vector<2xf32>
    %179 = vector.shape_cast %178 : vector<2xf32> to vector<2x1xf32>
    %180 = tpu.reciprocal %179 {approx = true} : vector<2x1xf32> -> vector<2x1xf32>
    %181 = vector.broadcast %180 : vector<2x1xf32> to vector<2x10xf32>
    %182 = arith.mulf %177, %181 : vector<2x10xf32>
    %183 = vector.broadcast %174 : vector<2x1xf32> to vector<2x10xf32>
    %184 = arith.subf %172, %183 : vector<2x10xf32>
    %185 = math.log %179 : vector<2x1xf32>
    %186 = vector.broadcast %185 : vector<2x1xf32> to vector<2x10xf32>
    %187 = arith.subf %184, %186 : vector<2x10xf32>
    %188 = arith.mulf %182, %187 : vector<2x10xf32>
    %cst_66 = arith.constant dense<0.000000e+00> : vector<2xf32>
    %189 = vector.multi_reduction <add>, %188, %cst_66 [1] : vector<2x10xf32> to vector<2xf32>
    %190 = vector.shape_cast %189 : vector<2xf32> to vector<2x1xf32>
    %cst_67 = arith.constant 0.000000e+00 : f32
    %191 = vector.broadcast %cst_67 : f32 to vector<2x1xf32>
    %192 = arith.subf %191, %190 : vector<2x1xf32>
    %cst_68 = arith.constant 0.434294492 : f32
    %193 = vector.broadcast %cst_68 : f32 to vector<2x1xf32>
    %194 = arith.mulf %192, %193 : vector<2x1xf32>
    %cst_69 = arith.constant 1.000000e+00 : f32
    %195 = vector.broadcast %cst_69 : f32 to vector<2x1xf32>
    %196 = arith.subf %195, %194 : vector<2x1xf32>
    %197 = tpu.concatenate %194, %196 in 1 : vector<2x1xf32>, vector<2x1xf32> -> vector<2x2xf32>
    %cst_70 = arith.constant 0.000000e+00 : f32
    %198 = vector.broadcast %cst_70 : f32 to vector<2x20xf32>
    %199 = tpu.concatenate %172, %197, %198 in 1 : vector<2x10xf32>, vector<2x2xf32>, vector<2x20xf32> -> vector<2x32xf32>
    %200 = vector.extract_strided_slice %156 {offsets = [0, 24], sizes = [2, 8], strides = [1, 1]} : vector<2x32xf32> to vector<2x8xf32>
    %cst_71 = arith.constant dense<0.000000e+00> : vector<2x36xf32>
    %201 = tpu.matmul %200, %0, %cst_71 {dimension_numbers = #tpu.dot_dimension_numbers<[1], [0], [0], [1], [0, 0, 1, 1], [], []>} : vector<2x8xf32>, vector<8x36xf32>, vector<2x36xf32> -> vector<2x36xf32>
    %cst_72 = arith.constant dense<0.000000e+00> : vector<2x36xf32>
    %202 = tpu.matmul %200, %1, %cst_72 {dimension_numbers = #tpu.dot_dimension_numbers<[1], [0], [0], [1], [0, 0, 1, 1], [], []>} : vector<2x8xf32>, vector<8x36xf32>, vector<2x36xf32> -> vector<2x36xf32>
    %203 = arith.mulf %201, %202 : vector<2x36xf32>
    %204 = vector.broadcast %4 : vector<1x36xf32> to vector<2x36xf32>
    %205 = arith.mulf %204, %41 : vector<2x36xf32>
    %206 = arith.addf %205, %203 : vector<2x36xf32>
    %207 = vector.broadcast %4 : vector<1x36xf32> to vector<2x36xf32>
    %208 = arith.mulf %207, %45 : vector<2x36xf32>
    %cst_73 = arith.constant 1.000000e+00 : f32
    %209 = vector.broadcast %cst_73 : f32 to vector<2x36xf32>
    %210 = arith.addf %208, %209 : vector<2x36xf32>
    %211 = math.rsqrt %210 : vector<2x36xf32>
    %212 = arith.mulf %206, %211 : vector<2x36xf32>
    %cst_74 = arith.constant dense<0.000000e+00> : vector<2x16xf32>
    %213 = tpu.matmul %212, %6, %cst_74 {dimension_numbers = #tpu.dot_dimension_numbers<[1], [0], [0], [1], [0, 0, 1, 1], [], []>} : vector<2x36xf32>, vector<36x16xf32>, vector<2x16xf32> -> vector<2x16xf32>
    %214 = vector.broadcast %7 : vector<1x16xf32> to vector<2x16xf32>
    %215 = arith.addf %213, %214 : vector<2x16xf32>
    %216 = vector.extract_strided_slice %215 {offsets = [0, 0], sizes = [2, 8], strides = [1, 1]} : vector<2x16xf32> to vector<2x8xf32>
    %217 = vector.shape_cast %216 : vector<2x8xf32> to vector<2x1x8xf32>
    %218 = vector.extract_strided_slice %20 {offsets = [0, 0, 0], sizes = [2, 8, 8], strides = [1, 1, 1]} : vector<2x8x16xf32> to vector<2x8x8xf32>
    %219 = vector.extract_strided_slice %21 {offsets = [0, 0, 0], sizes = [2, 8, 8], strides = [1, 1, 1]} : vector<2x8x16xf32> to vector<2x8x8xf32>
    "tpu.trace_start"() <{level = 10 : i32, message = "bqd,bkd->bqk"}> : () -> ()
    %cst_75 = arith.constant dense<0.000000e+00> : vector<2x1x8xf32>
    %220 = tpu.matmul %217, %218, %cst_75 {dimension_numbers = #tpu.dot_dimension_numbers<[2], [2], [1], [1], [0, 0, 0, 1, 1, 1], [0], [0]>} : vector<2x1x8xf32>, vector<2x8x8xf32>, vector<2x1x8xf32> -> vector<2x1x8xf32>
    "tpu.trace_stop"() : () -> ()
    %cst_76 = arith.constant 0.353553385 : f32
    %221 = vector.broadcast %cst_76 : f32 to vector<2x1x8xf32>
    %222 = arith.mulf %220, %221 : vector<2x1x8xf32>
    %cst_77 = arith.constant dense<0xFF800000> : vector<2x1xf32>
    %223 = vector.multi_reduction <maximumf>, %222, %cst_77 [2] : vector<2x1x8xf32> to vector<2x1xf32>
    %224 = vector.shape_cast %223 : vector<2x1xf32> to vector<2x1x1xf32>
    %225 = vector.broadcast %224 : vector<2x1x1xf32> to vector<2x1x8xf32>
    %226 = arith.subf %222, %225 : vector<2x1x8xf32>
    %227 = math.exp %226 : vector<2x1x8xf32>
    %cst_78 = arith.constant dense<0.000000e+00> : vector<2x1xf32>
    %228 = vector.multi_reduction <add>, %227, %cst_78 [2] : vector<2x1x8xf32> to vector<2x1xf32>
    %229 = vector.shape_cast %228 : vector<2x1xf32> to vector<2x1x1xf32>
    %230 = tpu.reciprocal %229 {approx = true} : vector<2x1x1xf32> -> vector<2x1x1xf32>
    %231 = vector.broadcast %230 : vector<2x1x1xf32> to vector<2x1x8xf32>
    %232 = arith.mulf %227, %231 : vector<2x1x8xf32>
    "tpu.trace_start"() <{level = 10 : i32, message = "bqk,bkd->bqd"}> : () -> ()
    %cst_79 = arith.constant dense<0.000000e+00> : vector<2x1x8xf32>
    %233 = tpu.matmul %232, %219, %cst_79 {dimension_numbers = #tpu.dot_dimension_numbers<[2], [1], [1], [2], [0, 0, 0, 1, 1, 2], [0], [0]>} : vector<2x1x8xf32>, vector<2x8x8xf32>, vector<2x1x8xf32> -> vector<2x1x8xf32>
    "tpu.trace_stop"() : () -> ()
    %234 = vector.shape_cast %233 : vector<2x1x8xf32> to vector<2x8xf32>
    %235 = vector.extract_strided_slice %8 {offsets = [0, 0], sizes = [8, 16], strides = [1, 1]} : vector<16x16xf32> to vector<8x16xf32>
    %cst_80 = arith.constant dense<0.000000e+00> : vector<2x16xf32>
    %236 = tpu.matmul %234, %235, %cst_80 {dimension_numbers = #tpu.dot_dimension_numbers<[1], [0], [0], [1], [0, 0, 1, 1], [], []>} : vector<2x8xf32>, vector<8x16xf32>, vector<2x16xf32> -> vector<2x16xf32>
    %237 = vector.broadcast %9 : vector<1x16xf32> to vector<2x16xf32>
    %238 = arith.addf %237, %236 : vector<2x16xf32>
    %239 = vector.extract_strided_slice %215 {offsets = [0, 8], sizes = [2, 8], strides = [1, 1]} : vector<2x16xf32> to vector<2x8xf32>
    %240 = vector.shape_cast %239 : vector<2x8xf32> to vector<2x1x8xf32>
    %241 = vector.extract_strided_slice %20 {offsets = [0, 0, 8], sizes = [2, 8, 8], strides = [1, 1, 1]} : vector<2x8x16xf32> to vector<2x8x8xf32>
    %242 = vector.extract_strided_slice %21 {offsets = [0, 0, 8], sizes = [2, 8, 8], strides = [1, 1, 1]} : vector<2x8x16xf32> to vector<2x8x8xf32>
    "tpu.trace_start"() <{level = 10 : i32, message = "bqd,bkd->bqk"}> : () -> ()
    %cst_81 = arith.constant dense<0.000000e+00> : vector<2x1x8xf32>
    %243 = tpu.matmul %240, %241, %cst_81 {dimension_numbers = #tpu.dot_dimension_numbers<[2], [2], [1], [1], [0, 0, 0, 1, 1, 1], [0], [0]>} : vector<2x1x8xf32>, vector<2x8x8xf32>, vector<2x1x8xf32> -> vector<2x1x8xf32>
    "tpu.trace_stop"() : () -> ()
    %cst_82 = arith.constant 0.353553385 : f32
    %244 = vector.broadcast %cst_82 : f32 to vector<2x1x8xf32>
    %245 = arith.mulf %243, %244 : vector<2x1x8xf32>
    %cst_83 = arith.constant dense<0xFF800000> : vector<2x1xf32>
    %246 = vector.multi_reduction <maximumf>, %245, %cst_83 [2] : vector<2x1x8xf32> to vector<2x1xf32>
    %247 = vector.shape_cast %246 : vector<2x1xf32> to vector<2x1x1xf32>
    %248 = vector.broadcast %247 : vector<2x1x1xf32> to vector<2x1x8xf32>
    %249 = arith.subf %245, %248 : vector<2x1x8xf32>
    %250 = math.exp %249 : vector<2x1x8xf32>
    %cst_84 = arith.constant dense<0.000000e+00> : vector<2x1xf32>
    %251 = vector.multi_reduction <add>, %250, %cst_84 [2] : vector<2x1x8xf32> to vector<2x1xf32>
    %252 = vector.shape_cast %251 : vector<2x1xf32> to vector<2x1x1xf32>
    %253 = tpu.reciprocal %252 {approx = true} : vector<2x1x1xf32> -> vector<2x1x1xf32>
    %254 = vector.broadcast %253 : vector<2x1x1xf32> to vector<2x1x8xf32>
    %255 = arith.mulf %250, %254 : vector<2x1x8xf32>
    "tpu.trace_start"() <{level = 10 : i32, message = "bqk,bkd->bqd"}> : () -> ()
    %cst_85 = arith.constant dense<0.000000e+00> : vector<2x1x8xf32>
    %256 = tpu.matmul %255, %242, %cst_85 {dimension_numbers = #tpu.dot_dimension_numbers<[2], [1], [1], [2], [0, 0, 0, 1, 1, 2], [0], [0]>} : vector<2x1x8xf32>, vector<2x8x8xf32>, vector<2x1x8xf32> -> vector<2x1x8xf32>
    "tpu.trace_stop"() : () -> ()
    %257 = vector.shape_cast %256 : vector<2x1x8xf32> to vector<2x8xf32>
    %258 = vector.extract_strided_slice %8 {offsets = [8, 0], sizes = [8, 16], strides = [1, 1]} : vector<16x16xf32> to vector<8x16xf32>
    %cst_86 = arith.constant dense<0.000000e+00> : vector<2x16xf32>
    %259 = tpu.matmul %257, %258, %cst_86 {dimension_numbers = #tpu.dot_dimension_numbers<[1], [0], [0], [1], [0, 0, 1, 1], [], []>} : vector<2x8xf32>, vector<8x16xf32>, vector<2x16xf32> -> vector<2x16xf32>
    %260 = arith.addf %238, %259 : vector<2x16xf32>
    %261 = vector.extract_strided_slice %10 {offsets = [0, 0], sizes = [16, 64], strides = [1, 1]} : vector<48x64xf32> to vector<16x64xf32>
    %cst_87 = arith.constant dense<0.000000e+00> : vector<2x64xf32>
    %262 = tpu.matmul %260, %261, %cst_87 {dimension_numbers = #tpu.dot_dimension_numbers<[1], [0], [0], [1], [0, 0, 1, 1], [], []>} : vector<2x16xf32>, vector<16x64xf32>, vector<2x64xf32> -> vector<2x64xf32>
    %263 = vector.extract_strided_slice %10 {offsets = [16, 0], sizes = [32, 64], strides = [1, 1]} : vector<48x64xf32> to vector<32x64xf32>
    %cst_88 = arith.constant dense<0.000000e+00> : vector<2x64xf32>
    %264 = tpu.matmul %156, %263, %cst_88 {dimension_numbers = #tpu.dot_dimension_numbers<[1], [0], [0], [1], [0, 0, 1, 1], [], []>} : vector<2x32xf32>, vector<32x64xf32>, vector<2x64xf32> -> vector<2x64xf32>
    %265 = arith.addf %262, %264 : vector<2x64xf32>
    %266 = vector.broadcast %11 : vector<1x64xf32> to vector<2x64xf32>
    %267 = arith.addf %265, %266 : vector<2x64xf32>
    %268 = vector.extract_strided_slice %267 {offsets = [0, 0], sizes = [2, 32], strides = [1, 1]} : vector<2x64xf32> to vector<2x32xf32>
    %269 = vector.extract_strided_slice %267 {offsets = [0, 32], sizes = [2, 32], strides = [1, 1]} : vector<2x64xf32> to vector<2x32xf32>
    %270 = arith.negf %269 : vector<2x32xf32>
    %271 = math.exp %270 : vector<2x32xf32>
    %cst_89 = arith.constant 1.000000e+00 : f32
    %272 = vector.broadcast %cst_89 : f32 to vector<2x32xf32>
    %273 = arith.addf %272, %271 : vector<2x32xf32>
    %274 = arith.divf %272, %273 : vector<2x32xf32>
    %275 = arith.mulf %268, %274 : vector<2x32xf32>
    %cst_90 = arith.constant dense<0.000000e+00> : vector<2xf32>
    %276 = vector.multi_reduction <add>, %275, %cst_90 [1] : vector<2x32xf32> to vector<2xf32>
    %277 = vector.shape_cast %276 : vector<2xf32> to vector<2x1xf32>
    %cst_91 = arith.constant 3.200000e+01 : f32
    %278 = vector.broadcast %cst_91 : f32 to vector<2x1xf32>
    %279 = arith.divf %277, %278 : vector<2x1xf32>
    %280 = vector.broadcast %279 : vector<2x1xf32> to vector<2x32xf32>
    %281 = arith.subf %275, %280 : vector<2x32xf32>
    %282 = arith.mulf %281, %281 : vector<2x32xf32>
    %cst_92 = arith.constant dense<0.000000e+00> : vector<2xf32>
    %283 = vector.multi_reduction <add>, %282, %cst_92 [1] : vector<2x32xf32> to vector<2xf32>
    %284 = vector.shape_cast %283 : vector<2xf32> to vector<2x1xf32>
    %cst_93 = arith.constant 3.200000e+01 : f32
    %285 = vector.broadcast %cst_93 : f32 to vector<2x1xf32>
    %286 = arith.divf %284, %285 : vector<2x1xf32>
    %287 = vector.broadcast %279 : vector<2x1xf32> to vector<2x32xf32>
    %288 = arith.subf %275, %287 : vector<2x32xf32>
    %cst_94 = arith.constant 9.99999974E-6 : f32
    %289 = vector.broadcast %cst_94 : f32 to vector<2x1xf32>
    %290 = arith.addf %286, %289 : vector<2x1xf32>
    %291 = math.rsqrt %290 : vector<2x1xf32>
    %292 = vector.broadcast %291 : vector<2x1xf32> to vector<2x32xf32>
    %293 = arith.mulf %288, %292 : vector<2x32xf32>
    %294 = vector.broadcast %12 : vector<1x32xf32> to vector<2x32xf32>
    %295 = arith.mulf %293, %294 : vector<2x32xf32>
    %296 = vector.broadcast %13 : vector<1x32xf32> to vector<2x32xf32>
    %297 = arith.addf %295, %296 : vector<2x32xf32>
    %298 = vector.extract_strided_slice %134 {offsets = [0, 32], sizes = [2, 224], strides = [1, 1]} : vector<2x256xf32> to vector<2x224xf32>
    %299 = tpu.concatenate %298, %297 in 1 : vector<2x224xf32>, vector<2x32xf32> -> vector<2x256xf32>
    %cst_95 = arith.constant dense<0.000000e+00> : vector<2x256xf32>
    %300 = tpu.matmul %299, %14, %cst_95 {dimension_numbers = #tpu.dot_dimension_numbers<[1], [0], [0], [1], [0, 0, 1, 1], [], []>} : vector<2x256xf32>, vector<256x256xf32>, vector<2x256xf32> -> vector<2x256xf32>
    %301 = vector.broadcast %15 : vector<1x256xf32> to vector<2x256xf32>
    %302 = arith.addf %300, %301 : vector<2x256xf32>
    %303 = vector.extract_strided_slice %302 {offsets = [0, 0], sizes = [2, 128], strides = [1, 1]} : vector<2x256xf32> to vector<2x128xf32>
    %304 = vector.extract_strided_slice %302 {offsets = [0, 128], sizes = [2, 128], strides = [1, 1]} : vector<2x256xf32> to vector<2x128xf32>
    %305 = arith.negf %304 : vector<2x128xf32>
    %306 = math.exp %305 : vector<2x128xf32>
    %cst_96 = arith.constant 1.000000e+00 : f32
    %307 = vector.broadcast %cst_96 : f32 to vector<2x128xf32>
    %308 = arith.addf %307, %306 : vector<2x128xf32>
    %309 = arith.divf %307, %308 : vector<2x128xf32>
    %310 = arith.mulf %303, %309 : vector<2x128xf32>
    %cst_97 = arith.constant dense<0.000000e+00> : vector<2x64xf32>
    %311 = tpu.matmul %310, %16, %cst_97 {dimension_numbers = #tpu.dot_dimension_numbers<[1], [0], [0], [1], [0, 0, 1, 1], [], []>} : vector<2x128xf32>, vector<128x64xf32>, vector<2x64xf32> -> vector<2x64xf32>
    %312 = vector.broadcast %17 : vector<1x64xf32> to vector<2x64xf32>
    %313 = arith.addf %311, %312 : vector<2x64xf32>
    %314 = vector.extract_strided_slice %313 {offsets = [0, 0], sizes = [2, 32], strides = [1, 1]} : vector<2x64xf32> to vector<2x32xf32>
    %315 = vector.extract_strided_slice %313 {offsets = [0, 32], sizes = [2, 32], strides = [1, 1]} : vector<2x64xf32> to vector<2x32xf32>
    %316 = arith.negf %315 : vector<2x32xf32>
    %317 = math.exp %316 : vector<2x32xf32>
    %cst_98 = arith.constant 1.000000e+00 : f32
    %318 = vector.broadcast %cst_98 : f32 to vector<2x32xf32>
    %319 = arith.addf %318, %317 : vector<2x32xf32>
    %320 = arith.divf %318, %319 : vector<2x32xf32>
    %321 = arith.mulf %314, %320 : vector<2x32xf32>
    %322 = vector.extract_strided_slice %321 {offsets = [0, 0], sizes = [2, 8], strides = [1, 1]} : vector<2x32xf32> to vector<2x8xf32>
    %cst_99 = arith.constant dense<0.000000e+00> : vector<2x36xf32>
    %323 = tpu.matmul %322, %2, %cst_99 {dimension_numbers = #tpu.dot_dimension_numbers<[1], [0], [0], [1], [0, 0, 1, 1], [], []>} : vector<2x8xf32>, vector<8x36xf32>, vector<2x36xf32> -> vector<2x36xf32>
    %cst_100 = arith.constant dense<0.000000e+00> : vector<2x36xf32>
    %324 = tpu.matmul %322, %3, %cst_100 {dimension_numbers = #tpu.dot_dimension_numbers<[1], [0], [0], [1], [0, 0, 1, 1], [], []>} : vector<2x8xf32>, vector<8x36xf32>, vector<2x36xf32> -> vector<2x36xf32>
    %325 = arith.mulf %323, %324 : vector<2x36xf32>
    %326 = vector.broadcast %5 : vector<1x36xf32> to vector<2x36xf32>
    %327 = arith.mulf %326, %163 : vector<2x36xf32>
    %328 = arith.addf %327, %325 : vector<2x36xf32>
    %329 = vector.broadcast %5 : vector<1x36xf32> to vector<2x36xf32>
    %330 = arith.mulf %329, %167 : vector<2x36xf32>
    %cst_101 = arith.constant 1.000000e+00 : f32
    %331 = vector.broadcast %cst_101 : f32 to vector<2x36xf32>
    %332 = arith.addf %330, %331 : vector<2x36xf32>
    %333 = math.rsqrt %332 : vector<2x36xf32>
    %334 = arith.mulf %328, %333 : vector<2x36xf32>
    %cst_102 = arith.constant dense<0.000000e+00> : vector<2x10xf32>
    %335 = tpu.matmul %334, %18, %cst_102 {dimension_numbers = #tpu.dot_dimension_numbers<[1], [0], [0], [1], [0, 0, 1, 1], [], []>} : vector<2x36xf32>, vector<36x10xf32>, vector<2x10xf32> -> vector<2x10xf32>
    %336 = vector.broadcast %19 : vector<1x10xf32> to vector<2x10xf32>
    %337 = arith.addf %335, %336 : vector<2x10xf32>
    %cst_103 = arith.constant dense<0xFF800000> : vector<2xf32>
    %338 = vector.multi_reduction <maximumf>, %337, %cst_103 [1] : vector<2x10xf32> to vector<2xf32>
    %339 = vector.shape_cast %338 : vector<2xf32> to vector<2x1xf32>
    %340 = vector.broadcast %339 : vector<2x1xf32> to vector<2x10xf32>
    %341 = arith.subf %337, %340 : vector<2x10xf32>
    %342 = math.exp %341 : vector<2x10xf32>
    %cst_104 = arith.constant dense<0.000000e+00> : vector<2xf32>
    %343 = vector.multi_reduction <add>, %342, %cst_104 [1] : vector<2x10xf32> to vector<2xf32>
    %344 = vector.shape_cast %343 : vector<2xf32> to vector<2x1xf32>
    %345 = tpu.reciprocal %344 {approx = true} : vector<2x1xf32> -> vector<2x1xf32>
    %346 = vector.broadcast %345 : vector<2x1xf32> to vector<2x10xf32>
    %347 = arith.mulf %342, %346 : vector<2x10xf32>
    %348 = vector.broadcast %339 : vector<2x1xf32> to vector<2x10xf32>
    %349 = arith.subf %337, %348 : vector<2x10xf32>
    %350 = math.log %344 : vector<2x1xf32>
    %351 = vector.broadcast %350 : vector<2x1xf32> to vector<2x10xf32>
    %352 = arith.subf %349, %351 : vector<2x10xf32>
    %353 = arith.mulf %347, %352 : vector<2x10xf32>
    %cst_105 = arith.constant dense<0.000000e+00> : vector<2xf32>
    %354 = vector.multi_reduction <add>, %353, %cst_105 [1] : vector<2x10xf32> to vector<2xf32>
    %355 = vector.shape_cast %354 : vector<2xf32> to vector<2x1xf32>
    %cst_106 = arith.constant 0.000000e+00 : f32
    %356 = vector.broadcast %cst_106 : f32 to vector<2x1xf32>
    %357 = arith.subf %356, %355 : vector<2x1xf32>
    %cst_107 = arith.constant 0.434294492 : f32
    %358 = vector.broadcast %cst_107 : f32 to vector<2x1xf32>
    %359 = arith.mulf %357, %358 : vector<2x1xf32>
    %cst_108 = arith.constant 1.000000e+00 : f32
    %360 = vector.broadcast %cst_108 : f32 to vector<2x1xf32>
    %361 = arith.subf %360, %359 : vector<2x1xf32>
    %362 = tpu.concatenate %359, %361 in 1 : vector<2x1xf32>, vector<2x1xf32> -> vector<2x2xf32>
    %cst_109 = arith.constant 0.000000e+00 : f32
    %363 = vector.broadcast %cst_109 : f32 to vector<2x20xf32>
    %364 = tpu.concatenate %337, %362, %363 in 1 : vector<2x10xf32>, vector<2x2xf32>, vector<2x20xf32> -> vector<2x32xf32>
    %365 = vector.extract_strided_slice %321 {offsets = [0, 24], sizes = [2, 8], strides = [1, 1]} : vector<2x32xf32> to vector<2x8xf32>
    %cst_110 = arith.constant dense<0.000000e+00> : vector<2x36xf32>
    %366 = tpu.matmul %365, %0, %cst_110 {dimension_numbers = #tpu.dot_dimension_numbers<[1], [0], [0], [1], [0, 0, 1, 1], [], []>} : vector<2x8xf32>, vector<8x36xf32>, vector<2x36xf32> -> vector<2x36xf32>
    %cst_111 = arith.constant dense<0.000000e+00> : vector<2x36xf32>
    %367 = tpu.matmul %365, %1, %cst_111 {dimension_numbers = #tpu.dot_dimension_numbers<[1], [0], [0], [1], [0, 0, 1, 1], [], []>} : vector<2x8xf32>, vector<8x36xf32>, vector<2x36xf32> -> vector<2x36xf32>
    %368 = arith.mulf %366, %367 : vector<2x36xf32>
    %369 = vector.broadcast %4 : vector<1x36xf32> to vector<2x36xf32>
    %370 = arith.mulf %369, %206 : vector<2x36xf32>
    %371 = arith.addf %370, %368 : vector<2x36xf32>
    %372 = vector.broadcast %4 : vector<1x36xf32> to vector<2x36xf32>
    %373 = arith.mulf %372, %210 : vector<2x36xf32>
    %cst_112 = arith.constant 1.000000e+00 : f32
    %374 = vector.broadcast %cst_112 : f32 to vector<2x36xf32>
    %375 = arith.addf %373, %374 : vector<2x36xf32>
    %376 = math.rsqrt %375 : vector<2x36xf32>
    %377 = arith.mulf %371, %376 : vector<2x36xf32>
    %cst_113 = arith.constant dense<0.000000e+00> : vector<2x16xf32>
    %378 = tpu.matmul %377, %6, %cst_113 {dimension_numbers = #tpu.dot_dimension_numbers<[1], [0], [0], [1], [0, 0, 1, 1], [], []>} : vector<2x36xf32>, vector<36x16xf32>, vector<2x16xf32> -> vector<2x16xf32>
    %379 = vector.broadcast %7 : vector<1x16xf32> to vector<2x16xf32>
    %380 = arith.addf %378, %379 : vector<2x16xf32>
    %381 = vector.extract_strided_slice %380 {offsets = [0, 0], sizes = [2, 8], strides = [1, 1]} : vector<2x16xf32> to vector<2x8xf32>
    %382 = vector.shape_cast %381 : vector<2x8xf32> to vector<2x1x8xf32>
    %383 = vector.extract_strided_slice %20 {offsets = [0, 0, 0], sizes = [2, 8, 8], strides = [1, 1, 1]} : vector<2x8x16xf32> to vector<2x8x8xf32>
    %384 = vector.extract_strided_slice %21 {offsets = [0, 0, 0], sizes = [2, 8, 8], strides = [1, 1, 1]} : vector<2x8x16xf32> to vector<2x8x8xf32>
    "tpu.trace_start"() <{level = 10 : i32, message = "bqd,bkd->bqk"}> : () -> ()
    %cst_114 = arith.constant dense<0.000000e+00> : vector<2x1x8xf32>
    %385 = tpu.matmul %382, %383, %cst_114 {dimension_numbers = #tpu.dot_dimension_numbers<[2], [2], [1], [1], [0, 0, 0, 1, 1, 1], [0], [0]>} : vector<2x1x8xf32>, vector<2x8x8xf32>, vector<2x1x8xf32> -> vector<2x1x8xf32>
    "tpu.trace_stop"() : () -> ()
    %cst_115 = arith.constant 0.353553385 : f32
    %386 = vector.broadcast %cst_115 : f32 to vector<2x1x8xf32>
    %387 = arith.mulf %385, %386 : vector<2x1x8xf32>
    %cst_116 = arith.constant dense<0xFF800000> : vector<2x1xf32>
    %388 = vector.multi_reduction <maximumf>, %387, %cst_116 [2] : vector<2x1x8xf32> to vector<2x1xf32>
    %389 = vector.shape_cast %388 : vector<2x1xf32> to vector<2x1x1xf32>
    %390 = vector.broadcast %389 : vector<2x1x1xf32> to vector<2x1x8xf32>
    %391 = arith.subf %387, %390 : vector<2x1x8xf32>
    %392 = math.exp %391 : vector<2x1x8xf32>
    %cst_117 = arith.constant dense<0.000000e+00> : vector<2x1xf32>
    %393 = vector.multi_reduction <add>, %392, %cst_117 [2] : vector<2x1x8xf32> to vector<2x1xf32>
    %394 = vector.shape_cast %393 : vector<2x1xf32> to vector<2x1x1xf32>
    %395 = tpu.reciprocal %394 {approx = true} : vector<2x1x1xf32> -> vector<2x1x1xf32>
    %396 = vector.broadcast %395 : vector<2x1x1xf32> to vector<2x1x8xf32>
    %397 = arith.mulf %392, %396 : vector<2x1x8xf32>
    "tpu.trace_start"() <{level = 10 : i32, message = "bqk,bkd->bqd"}> : () -> ()
    %cst_118 = arith.constant dense<0.000000e+00> : vector<2x1x8xf32>
    %398 = tpu.matmul %397, %384, %cst_118 {dimension_numbers = #tpu.dot_dimension_numbers<[2], [1], [1], [2], [0, 0, 0, 1, 1, 2], [0], [0]>} : vector<2x1x8xf32>, vector<2x8x8xf32>, vector<2x1x8xf32> -> vector<2x1x8xf32>
    "tpu.trace_stop"() : () -> ()
    %399 = vector.shape_cast %398 : vector<2x1x8xf32> to vector<2x8xf32>
    %400 = vector.extract_strided_slice %8 {offsets = [0, 0], sizes = [8, 16], strides = [1, 1]} : vector<16x16xf32> to vector<8x16xf32>
    %cst_119 = arith.constant dense<0.000000e+00> : vector<2x16xf32>
    %401 = tpu.matmul %399, %400, %cst_119 {dimension_numbers = #tpu.dot_dimension_numbers<[1], [0], [0], [1], [0, 0, 1, 1], [], []>} : vector<2x8xf32>, vector<8x16xf32>, vector<2x16xf32> -> vector<2x16xf32>
    %402 = vector.broadcast %9 : vector<1x16xf32> to vector<2x16xf32>
    %403 = arith.addf %402, %401 : vector<2x16xf32>
    %404 = vector.extract_strided_slice %380 {offsets = [0, 8], sizes = [2, 8], strides = [1, 1]} : vector<2x16xf32> to vector<2x8xf32>
    %405 = vector.shape_cast %404 : vector<2x8xf32> to vector<2x1x8xf32>
    %406 = vector.extract_strided_slice %20 {offsets = [0, 0, 8], sizes = [2, 8, 8], strides = [1, 1, 1]} : vector<2x8x16xf32> to vector<2x8x8xf32>
    %407 = vector.extract_strided_slice %21 {offsets = [0, 0, 8], sizes = [2, 8, 8], strides = [1, 1, 1]} : vector<2x8x16xf32> to vector<2x8x8xf32>
    "tpu.trace_start"() <{level = 10 : i32, message = "bqd,bkd->bqk"}> : () -> ()
    %cst_120 = arith.constant dense<0.000000e+00> : vector<2x1x8xf32>
    %408 = tpu.matmul %405, %406, %cst_120 {dimension_numbers = #tpu.dot_dimension_numbers<[2], [2], [1], [1], [0, 0, 0, 1, 1, 1], [0], [0]>} : vector<2x1x8xf32>, vector<2x8x8xf32>, vector<2x1x8xf32> -> vector<2x1x8xf32>
    "tpu.trace_stop"() : () -> ()
    %cst_121 = arith.constant 0.353553385 : f32
    %409 = vector.broadcast %cst_121 : f32 to vector<2x1x8xf32>
    %410 = arith.mulf %408, %409 : vector<2x1x8xf32>
    %cst_122 = arith.constant dense<0xFF800000> : vector<2x1xf32>
    %411 = vector.multi_reduction <maximumf>, %410, %cst_122 [2] : vector<2x1x8xf32> to vector<2x1xf32>
    %412 = vector.shape_cast %411 : vector<2x1xf32> to vector<2x1x1xf32>
    %413 = vector.broadcast %412 : vector<2x1x1xf32> to vector<2x1x8xf32>
    %414 = arith.subf %410, %413 : vector<2x1x8xf32>
    %415 = math.exp %414 : vector<2x1x8xf32>
    %cst_123 = arith.constant dense<0.000000e+00> : vector<2x1xf32>
    %416 = vector.multi_reduction <add>, %415, %cst_123 [2] : vector<2x1x8xf32> to vector<2x1xf32>
    %417 = vector.shape_cast %416 : vector<2x1xf32> to vector<2x1x1xf32>
    %418 = tpu.reciprocal %417 {approx = true} : vector<2x1x1xf32> -> vector<2x1x1xf32>
    %419 = vector.broadcast %418 : vector<2x1x1xf32> to vector<2x1x8xf32>
    %420 = arith.mulf %415, %419 : vector<2x1x8xf32>
    "tpu.trace_start"() <{level = 10 : i32, message = "bqk,bkd->bqd"}> : () -> ()
    %cst_124 = arith.constant dense<0.000000e+00> : vector<2x1x8xf32>
    %421 = tpu.matmul %420, %407, %cst_124 {dimension_numbers = #tpu.dot_dimension_numbers<[2], [1], [1], [2], [0, 0, 0, 1, 1, 2], [0], [0]>} : vector<2x1x8xf32>, vector<2x8x8xf32>, vector<2x1x8xf32> -> vector<2x1x8xf32>
    "tpu.trace_stop"() : () -> ()
    %422 = vector.shape_cast %421 : vector<2x1x8xf32> to vector<2x8xf32>
    %423 = vector.extract_strided_slice %8 {offsets = [8, 0], sizes = [8, 16], strides = [1, 1]} : vector<16x16xf32> to vector<8x16xf32>
    %cst_125 = arith.constant dense<0.000000e+00> : vector<2x16xf32>
    %424 = tpu.matmul %422, %423, %cst_125 {dimension_numbers = #tpu.dot_dimension_numbers<[1], [0], [0], [1], [0, 0, 1, 1], [], []>} : vector<2x8xf32>, vector<8x16xf32>, vector<2x16xf32> -> vector<2x16xf32>
    %425 = arith.addf %403, %424 : vector<2x16xf32>
    %426 = vector.extract_strided_slice %10 {offsets = [0, 0], sizes = [16, 64], strides = [1, 1]} : vector<48x64xf32> to vector<16x64xf32>
    %cst_126 = arith.constant dense<0.000000e+00> : vector<2x64xf32>
    %427 = tpu.matmul %425, %426, %cst_126 {dimension_numbers = #tpu.dot_dimension_numbers<[1], [0], [0], [1], [0, 0, 1, 1], [], []>} : vector<2x16xf32>, vector<16x64xf32>, vector<2x64xf32> -> vector<2x64xf32>
    %428 = vector.extract_strided_slice %10 {offsets = [16, 0], sizes = [32, 64], strides = [1, 1]} : vector<48x64xf32> to vector<32x64xf32>
    %cst_127 = arith.constant dense<0.000000e+00> : vector<2x64xf32>
    %429 = tpu.matmul %321, %428, %cst_127 {dimension_numbers = #tpu.dot_dimension_numbers<[1], [0], [0], [1], [0, 0, 1, 1], [], []>} : vector<2x32xf32>, vector<32x64xf32>, vector<2x64xf32> -> vector<2x64xf32>
    %430 = arith.addf %427, %429 : vector<2x64xf32>
    %431 = vector.broadcast %11 : vector<1x64xf32> to vector<2x64xf32>
    %432 = arith.addf %430, %431 : vector<2x64xf32>
    %433 = vector.extract_strided_slice %432 {offsets = [0, 0], sizes = [2, 32], strides = [1, 1]} : vector<2x64xf32> to vector<2x32xf32>
    %434 = vector.extract_strided_slice %432 {offsets = [0, 32], sizes = [2, 32], strides = [1, 1]} : vector<2x64xf32> to vector<2x32xf32>
    %435 = arith.negf %434 : vector<2x32xf32>
    %436 = math.exp %435 : vector<2x32xf32>
    %cst_128 = arith.constant 1.000000e+00 : f32
    %437 = vector.broadcast %cst_128 : f32 to vector<2x32xf32>
    %438 = arith.addf %437, %436 : vector<2x32xf32>
    %439 = arith.divf %437, %438 : vector<2x32xf32>
    %440 = arith.mulf %433, %439 : vector<2x32xf32>
    %cst_129 = arith.constant dense<0.000000e+00> : vector<2xf32>
    %441 = vector.multi_reduction <add>, %440, %cst_129 [1] : vector<2x32xf32> to vector<2xf32>
    %442 = vector.shape_cast %441 : vector<2xf32> to vector<2x1xf32>
    %cst_130 = arith.constant 3.200000e+01 : f32
    %443 = vector.broadcast %cst_130 : f32 to vector<2x1xf32>
    %444 = arith.divf %442, %443 : vector<2x1xf32>
    %445 = vector.broadcast %444 : vector<2x1xf32> to vector<2x32xf32>
    %446 = arith.subf %440, %445 : vector<2x32xf32>
    %447 = arith.mulf %446, %446 : vector<2x32xf32>
    %cst_131 = arith.constant dense<0.000000e+00> : vector<2xf32>
    %448 = vector.multi_reduction <add>, %447, %cst_131 [1] : vector<2x32xf32> to vector<2xf32>
    %449 = vector.shape_cast %448 : vector<2xf32> to vector<2x1xf32>
    %cst_132 = arith.constant 3.200000e+01 : f32
    %450 = vector.broadcast %cst_132 : f32 to vector<2x1xf32>
    %451 = arith.divf %449, %450 : vector<2x1xf32>
    %452 = vector.broadcast %444 : vector<2x1xf32> to vector<2x32xf32>
    %453 = arith.subf %440, %452 : vector<2x32xf32>
    %cst_133 = arith.constant 9.99999974E-6 : f32
    %454 = vector.broadcast %cst_133 : f32 to vector<2x1xf32>
    %455 = arith.addf %451, %454 : vector<2x1xf32>
    %456 = math.rsqrt %455 : vector<2x1xf32>
    %457 = vector.broadcast %456 : vector<2x1xf32> to vector<2x32xf32>
    %458 = arith.mulf %453, %457 : vector<2x32xf32>
    %459 = vector.broadcast %12 : vector<1x32xf32> to vector<2x32xf32>
    %460 = arith.mulf %458, %459 : vector<2x32xf32>
    %461 = vector.broadcast %13 : vector<1x32xf32> to vector<2x32xf32>
    %462 = arith.addf %460, %461 : vector<2x32xf32>
    %463 = vector.extract_strided_slice %299 {offsets = [0, 32], sizes = [2, 224], strides = [1, 1]} : vector<2x256xf32> to vector<2x224xf32>
    %464 = tpu.concatenate %463, %462 in 1 : vector<2x224xf32>, vector<2x32xf32> -> vector<2x256xf32>
    %cst_134 = arith.constant dense<0.000000e+00> : vector<2x256xf32>
    %465 = tpu.matmul %464, %14, %cst_134 {dimension_numbers = #tpu.dot_dimension_numbers<[1], [0], [0], [1], [0, 0, 1, 1], [], []>} : vector<2x256xf32>, vector<256x256xf32>, vector<2x256xf32> -> vector<2x256xf32>
    %466 = vector.broadcast %15 : vector<1x256xf32> to vector<2x256xf32>
    %467 = arith.addf %465, %466 : vector<2x256xf32>
    %468 = vector.extract_strided_slice %467 {offsets = [0, 0], sizes = [2, 128], strides = [1, 1]} : vector<2x256xf32> to vector<2x128xf32>
    %469 = vector.extract_strided_slice %467 {offsets = [0, 128], sizes = [2, 128], strides = [1, 1]} : vector<2x256xf32> to vector<2x128xf32>
    %470 = arith.negf %469 : vector<2x128xf32>
    %471 = math.exp %470 : vector<2x128xf32>
    %cst_135 = arith.constant 1.000000e+00 : f32
    %472 = vector.broadcast %cst_135 : f32 to vector<2x128xf32>
    %473 = arith.addf %472, %471 : vector<2x128xf32>
    %474 = arith.divf %472, %473 : vector<2x128xf32>
    %475 = arith.mulf %468, %474 : vector<2x128xf32>
    %cst_136 = arith.constant dense<0.000000e+00> : vector<2x64xf32>
    %476 = tpu.matmul %475, %16, %cst_136 {dimension_numbers = #tpu.dot_dimension_numbers<[1], [0], [0], [1], [0, 0, 1, 1], [], []>} : vector<2x128xf32>, vector<128x64xf32>, vector<2x64xf32> -> vector<2x64xf32>
    %477 = vector.broadcast %17 : vector<1x64xf32> to vector<2x64xf32>
    %478 = arith.addf %476, %477 : vector<2x64xf32>
    %479 = vector.extract_strided_slice %478 {offsets = [0, 0], sizes = [2, 32], strides = [1, 1]} : vector<2x64xf32> to vector<2x32xf32>
    %480 = vector.extract_strided_slice %478 {offsets = [0, 32], sizes = [2, 32], strides = [1, 1]} : vector<2x64xf32> to vector<2x32xf32>
    %481 = arith.negf %480 : vector<2x32xf32>
    %482 = math.exp %481 : vector<2x32xf32>
    %cst_137 = arith.constant 1.000000e+00 : f32
    %483 = vector.broadcast %cst_137 : f32 to vector<2x32xf32>
    %484 = arith.addf %483, %482 : vector<2x32xf32>
    %485 = arith.divf %483, %484 : vector<2x32xf32>
    %486 = arith.mulf %479, %485 : vector<2x32xf32>
    %487 = vector.extract_strided_slice %486 {offsets = [0, 0], sizes = [2, 8], strides = [1, 1]} : vector<2x32xf32> to vector<2x8xf32>
    %cst_138 = arith.constant dense<0.000000e+00> : vector<2x36xf32>
    %488 = tpu.matmul %487, %2, %cst_138 {dimension_numbers = #tpu.dot_dimension_numbers<[1], [0], [0], [1], [0, 0, 1, 1], [], []>} : vector<2x8xf32>, vector<8x36xf32>, vector<2x36xf32> -> vector<2x36xf32>
    %cst_139 = arith.constant dense<0.000000e+00> : vector<2x36xf32>
    %489 = tpu.matmul %487, %3, %cst_139 {dimension_numbers = #tpu.dot_dimension_numbers<[1], [0], [0], [1], [0, 0, 1, 1], [], []>} : vector<2x8xf32>, vector<8x36xf32>, vector<2x36xf32> -> vector<2x36xf32>
    %490 = arith.mulf %488, %489 : vector<2x36xf32>
    %491 = vector.broadcast %5 : vector<1x36xf32> to vector<2x36xf32>
    %492 = arith.mulf %491, %328 : vector<2x36xf32>
    %493 = arith.addf %492, %490 : vector<2x36xf32>
    %494 = vector.broadcast %5 : vector<1x36xf32> to vector<2x36xf32>
    %495 = arith.mulf %494, %332 : vector<2x36xf32>
    %cst_140 = arith.constant 1.000000e+00 : f32
    %496 = vector.broadcast %cst_140 : f32 to vector<2x36xf32>
    %497 = arith.addf %495, %496 : vector<2x36xf32>
    %498 = math.rsqrt %497 : vector<2x36xf32>
    %499 = arith.mulf %493, %498 : vector<2x36xf32>
    %cst_141 = arith.constant dense<0.000000e+00> : vector<2x10xf32>
    %500 = tpu.matmul %499, %18, %cst_141 {dimension_numbers = #tpu.dot_dimension_numbers<[1], [0], [0], [1], [0, 0, 1, 1], [], []>} : vector<2x36xf32>, vector<36x10xf32>, vector<2x10xf32> -> vector<2x10xf32>
    %501 = vector.broadcast %19 : vector<1x10xf32> to vector<2x10xf32>
    %502 = arith.addf %500, %501 : vector<2x10xf32>
    %cst_142 = arith.constant dense<0xFF800000> : vector<2xf32>
    %503 = vector.multi_reduction <maximumf>, %502, %cst_142 [1] : vector<2x10xf32> to vector<2xf32>
    %504 = vector.shape_cast %503 : vector<2xf32> to vector<2x1xf32>
    %505 = vector.broadcast %504 : vector<2x1xf32> to vector<2x10xf32>
    %506 = arith.subf %502, %505 : vector<2x10xf32>
    %507 = math.exp %506 : vector<2x10xf32>
    %cst_143 = arith.constant dense<0.000000e+00> : vector<2xf32>
    %508 = vector.multi_reduction <add>, %507, %cst_143 [1] : vector<2x10xf32> to vector<2xf32>
    %509 = vector.shape_cast %508 : vector<2xf32> to vector<2x1xf32>
    %510 = tpu.reciprocal %509 {approx = true} : vector<2x1xf32> -> vector<2x1xf32>
    %511 = vector.broadcast %510 : vector<2x1xf32> to vector<2x10xf32>
    %512 = arith.mulf %507, %511 : vector<2x10xf32>
    %513 = vector.broadcast %504 : vector<2x1xf32> to vector<2x10xf32>
    %514 = arith.subf %502, %513 : vector<2x10xf32>
    %515 = math.log %509 : vector<2x1xf32>
    %516 = vector.broadcast %515 : vector<2x1xf32> to vector<2x10xf32>
    %517 = arith.subf %514, %516 : vector<2x10xf32>
    %518 = arith.mulf %512, %517 : vector<2x10xf32>
    %cst_144 = arith.constant dense<0.000000e+00> : vector<2xf32>
    %519 = vector.multi_reduction <add>, %518, %cst_144 [1] : vector<2x10xf32> to vector<2xf32>
    %520 = vector.shape_cast %519 : vector<2xf32> to vector<2x1xf32>
    %cst_145 = arith.constant 0.000000e+00 : f32
    %521 = vector.broadcast %cst_145 : f32 to vector<2x1xf32>
    %522 = arith.subf %521, %520 : vector<2x1xf32>
    %cst_146 = arith.constant 0.434294492 : f32
    %523 = vector.broadcast %cst_146 : f32 to vector<2x1xf32>
    %524 = arith.mulf %522, %523 : vector<2x1xf32>
    %cst_147 = arith.constant 1.000000e+00 : f32
    %525 = vector.broadcast %cst_147 : f32 to vector<2x1xf32>
    %526 = arith.subf %525, %524 : vector<2x1xf32>
    %527 = tpu.concatenate %524, %526 in 1 : vector<2x1xf32>, vector<2x1xf32> -> vector<2x2xf32>
    %cst_148 = arith.constant 0.000000e+00 : f32
    %528 = vector.broadcast %cst_148 : f32 to vector<2x20xf32>
    %529 = tpu.concatenate %502, %527, %528 in 1 : vector<2x10xf32>, vector<2x2xf32>, vector<2x20xf32> -> vector<2x32xf32>
    %530 = vector.extract_strided_slice %486 {offsets = [0, 24], sizes = [2, 8], strides = [1, 1]} : vector<2x32xf32> to vector<2x8xf32>
    %cst_149 = arith.constant dense<0.000000e+00> : vector<2x36xf32>
    %531 = tpu.matmul %530, %0, %cst_149 {dimension_numbers = #tpu.dot_dimension_numbers<[1], [0], [0], [1], [0, 0, 1, 1], [], []>} : vector<2x8xf32>, vector<8x36xf32>, vector<2x36xf32> -> vector<2x36xf32>
    %cst_150 = arith.constant dense<0.000000e+00> : vector<2x36xf32>
    %532 = tpu.matmul %530, %1, %cst_150 {dimension_numbers = #tpu.dot_dimension_numbers<[1], [0], [0], [1], [0, 0, 1, 1], [], []>} : vector<2x8xf32>, vector<8x36xf32>, vector<2x36xf32> -> vector<2x36xf32>
    %533 = arith.mulf %531, %532 : vector<2x36xf32>
    %534 = vector.broadcast %4 : vector<1x36xf32> to vector<2x36xf32>
    %535 = arith.mulf %534, %371 : vector<2x36xf32>
    %536 = arith.addf %535, %533 : vector<2x36xf32>
    %537 = vector.broadcast %4 : vector<1x36xf32> to vector<2x36xf32>
    %538 = arith.mulf %537, %375 : vector<2x36xf32>
    %cst_151 = arith.constant 1.000000e+00 : f32
    %539 = vector.broadcast %cst_151 : f32 to vector<2x36xf32>
    %540 = arith.addf %538, %539 : vector<2x36xf32>
    %541 = math.rsqrt %540 : vector<2x36xf32>
    %542 = arith.mulf %536, %541 : vector<2x36xf32>
    %cst_152 = arith.constant dense<0.000000e+00> : vector<2x16xf32>
    %543 = tpu.matmul %542, %6, %cst_152 {dimension_numbers = #tpu.dot_dimension_numbers<[1], [0], [0], [1], [0, 0, 1, 1], [], []>} : vector<2x36xf32>, vector<36x16xf32>, vector<2x16xf32> -> vector<2x16xf32>
    %544 = vector.broadcast %7 : vector<1x16xf32> to vector<2x16xf32>
    %545 = arith.addf %543, %544 : vector<2x16xf32>
    %546 = vector.extract_strided_slice %545 {offsets = [0, 0], sizes = [2, 8], strides = [1, 1]} : vector<2x16xf32> to vector<2x8xf32>
    %547 = vector.shape_cast %546 : vector<2x8xf32> to vector<2x1x8xf32>
    %548 = vector.extract_strided_slice %20 {offsets = [0, 0, 0], sizes = [2, 8, 8], strides = [1, 1, 1]} : vector<2x8x16xf32> to vector<2x8x8xf32>
    %549 = vector.extract_strided_slice %21 {offsets = [0, 0, 0], sizes = [2, 8, 8], strides = [1, 1, 1]} : vector<2x8x16xf32> to vector<2x8x8xf32>
    "tpu.trace_start"() <{level = 10 : i32, message = "bqd,bkd->bqk"}> : () -> ()
    %cst_153 = arith.constant dense<0.000000e+00> : vector<2x1x8xf32>
    %550 = tpu.matmul %547, %548, %cst_153 {dimension_numbers = #tpu.dot_dimension_numbers<[2], [2], [1], [1], [0, 0, 0, 1, 1, 1], [0], [0]>} : vector<2x1x8xf32>, vector<2x8x8xf32>, vector<2x1x8xf32> -> vector<2x1x8xf32>
    "tpu.trace_stop"() : () -> ()
    %cst_154 = arith.constant 0.353553385 : f32
    %551 = vector.broadcast %cst_154 : f32 to vector<2x1x8xf32>
    %552 = arith.mulf %550, %551 : vector<2x1x8xf32>
    %cst_155 = arith.constant dense<0xFF800000> : vector<2x1xf32>
    %553 = vector.multi_reduction <maximumf>, %552, %cst_155 [2] : vector<2x1x8xf32> to vector<2x1xf32>
    %554 = vector.shape_cast %553 : vector<2x1xf32> to vector<2x1x1xf32>
    %555 = vector.broadcast %554 : vector<2x1x1xf32> to vector<2x1x8xf32>
    %556 = arith.subf %552, %555 : vector<2x1x8xf32>
    %557 = math.exp %556 : vector<2x1x8xf32>
    %cst_156 = arith.constant dense<0.000000e+00> : vector<2x1xf32>
    %558 = vector.multi_reduction <add>, %557, %cst_156 [2] : vector<2x1x8xf32> to vector<2x1xf32>
    %559 = vector.shape_cast %558 : vector<2x1xf32> to vector<2x1x1xf32>
    %560 = tpu.reciprocal %559 {approx = true} : vector<2x1x1xf32> -> vector<2x1x1xf32>
    %561 = vector.broadcast %560 : vector<2x1x1xf32> to vector<2x1x8xf32>
    %562 = arith.mulf %557, %561 : vector<2x1x8xf32>
    "tpu.trace_start"() <{level = 10 : i32, message = "bqk,bkd->bqd"}> : () -> ()
    %cst_157 = arith.constant dense<0.000000e+00> : vector<2x1x8xf32>
    %563 = tpu.matmul %562, %549, %cst_157 {dimension_numbers = #tpu.dot_dimension_numbers<[2], [1], [1], [2], [0, 0, 0, 1, 1, 2], [0], [0]>} : vector<2x1x8xf32>, vector<2x8x8xf32>, vector<2x1x8xf32> -> vector<2x1x8xf32>
    "tpu.trace_stop"() : () -> ()
    %564 = vector.shape_cast %563 : vector<2x1x8xf32> to vector<2x8xf32>
    %565 = vector.extract_strided_slice %8 {offsets = [0, 0], sizes = [8, 16], strides = [1, 1]} : vector<16x16xf32> to vector<8x16xf32>
    %cst_158 = arith.constant dense<0.000000e+00> : vector<2x16xf32>
    %566 = tpu.matmul %564, %565, %cst_158 {dimension_numbers = #tpu.dot_dimension_numbers<[1], [0], [0], [1], [0, 0, 1, 1], [], []>} : vector<2x8xf32>, vector<8x16xf32>, vector<2x16xf32> -> vector<2x16xf32>
    %567 = vector.broadcast %9 : vector<1x16xf32> to vector<2x16xf32>
    %568 = arith.addf %567, %566 : vector<2x16xf32>
    %569 = vector.extract_strided_slice %545 {offsets = [0, 8], sizes = [2, 8], strides = [1, 1]} : vector<2x16xf32> to vector<2x8xf32>
    %570 = vector.shape_cast %569 : vector<2x8xf32> to vector<2x1x8xf32>
    %571 = vector.extract_strided_slice %20 {offsets = [0, 0, 8], sizes = [2, 8, 8], strides = [1, 1, 1]} : vector<2x8x16xf32> to vector<2x8x8xf32>
    %572 = vector.extract_strided_slice %21 {offsets = [0, 0, 8], sizes = [2, 8, 8], strides = [1, 1, 1]} : vector<2x8x16xf32> to vector<2x8x8xf32>
    "tpu.trace_start"() <{level = 10 : i32, message = "bqd,bkd->bqk"}> : () -> ()
    %cst_159 = arith.constant dense<0.000000e+00> : vector<2x1x8xf32>
    %573 = tpu.matmul %570, %571, %cst_159 {dimension_numbers = #tpu.dot_dimension_numbers<[2], [2], [1], [1], [0, 0, 0, 1, 1, 1], [0], [0]>} : vector<2x1x8xf32>, vector<2x8x8xf32>, vector<2x1x8xf32> -> vector<2x1x8xf32>
    "tpu.trace_stop"() : () -> ()
    %cst_160 = arith.constant 0.353553385 : f32
    %574 = vector.broadcast %cst_160 : f32 to vector<2x1x8xf32>
    %575 = arith.mulf %573, %574 : vector<2x1x8xf32>
    %cst_161 = arith.constant dense<0xFF800000> : vector<2x1xf32>
    %576 = vector.multi_reduction <maximumf>, %575, %cst_161 [2] : vector<2x1x8xf32> to vector<2x1xf32>
    %577 = vector.shape_cast %576 : vector<2x1xf32> to vector<2x1x1xf32>
    %578 = vector.broadcast %577 : vector<2x1x1xf32> to vector<2x1x8xf32>
    %579 = arith.subf %575, %578 : vector<2x1x8xf32>
    %580 = math.exp %579 : vector<2x1x8xf32>
    %cst_162 = arith.constant dense<0.000000e+00> : vector<2x1xf32>
    %581 = vector.multi_reduction <add>, %580, %cst_162 [2] : vector<2x1x8xf32> to vector<2x1xf32>
    %582 = vector.shape_cast %581 : vector<2x1xf32> to vector<2x1x1xf32>
    %583 = tpu.reciprocal %582 {approx = true} : vector<2x1x1xf32> -> vector<2x1x1xf32>
    %584 = vector.broadcast %583 : vector<2x1x1xf32> to vector<2x1x8xf32>
    %585 = arith.mulf %580, %584 : vector<2x1x8xf32>
    "tpu.trace_start"() <{level = 10 : i32, message = "bqk,bkd->bqd"}> : () -> ()
    %cst_163 = arith.constant dense<0.000000e+00> : vector<2x1x8xf32>
    %586 = tpu.matmul %585, %572, %cst_163 {dimension_numbers = #tpu.dot_dimension_numbers<[2], [1], [1], [2], [0, 0, 0, 1, 1, 2], [0], [0]>} : vector<2x1x8xf32>, vector<2x8x8xf32>, vector<2x1x8xf32> -> vector<2x1x8xf32>
    "tpu.trace_stop"() : () -> ()
    %587 = vector.shape_cast %586 : vector<2x1x8xf32> to vector<2x8xf32>
    %588 = vector.extract_strided_slice %8 {offsets = [8, 0], sizes = [8, 16], strides = [1, 1]} : vector<16x16xf32> to vector<8x16xf32>
    %cst_164 = arith.constant dense<0.000000e+00> : vector<2x16xf32>
    %589 = tpu.matmul %587, %588, %cst_164 {dimension_numbers = #tpu.dot_dimension_numbers<[1], [0], [0], [1], [0, 0, 1, 1], [], []>} : vector<2x8xf32>, vector<8x16xf32>, vector<2x16xf32> -> vector<2x16xf32>
    %590 = arith.addf %568, %589 : vector<2x16xf32>
    %591 = vector.extract_strided_slice %10 {offsets = [0, 0], sizes = [16, 64], strides = [1, 1]} : vector<48x64xf32> to vector<16x64xf32>
    %cst_165 = arith.constant dense<0.000000e+00> : vector<2x64xf32>
    %592 = tpu.matmul %590, %591, %cst_165 {dimension_numbers = #tpu.dot_dimension_numbers<[1], [0], [0], [1], [0, 0, 1, 1], [], []>} : vector<2x16xf32>, vector<16x64xf32>, vector<2x64xf32> -> vector<2x64xf32>
    %593 = vector.extract_strided_slice %10 {offsets = [16, 0], sizes = [32, 64], strides = [1, 1]} : vector<48x64xf32> to vector<32x64xf32>
    %cst_166 = arith.constant dense<0.000000e+00> : vector<2x64xf32>
    %594 = tpu.matmul %486, %593, %cst_166 {dimension_numbers = #tpu.dot_dimension_numbers<[1], [0], [0], [1], [0, 0, 1, 1], [], []>} : vector<2x32xf32>, vector<32x64xf32>, vector<2x64xf32> -> vector<2x64xf32>
    %595 = arith.addf %592, %594 : vector<2x64xf32>
    %596 = vector.broadcast %11 : vector<1x64xf32> to vector<2x64xf32>
    %597 = arith.addf %595, %596 : vector<2x64xf32>
    %598 = vector.extract_strided_slice %597 {offsets = [0, 0], sizes = [2, 32], strides = [1, 1]} : vector<2x64xf32> to vector<2x32xf32>
    %599 = vector.extract_strided_slice %597 {offsets = [0, 32], sizes = [2, 32], strides = [1, 1]} : vector<2x64xf32> to vector<2x32xf32>
    %600 = arith.negf %599 : vector<2x32xf32>
    %601 = math.exp %600 : vector<2x32xf32>
    %cst_167 = arith.constant 1.000000e+00 : f32
    %602 = vector.broadcast %cst_167 : f32 to vector<2x32xf32>
    %603 = arith.addf %602, %601 : vector<2x32xf32>
    %604 = arith.divf %602, %603 : vector<2x32xf32>
    %605 = arith.mulf %598, %604 : vector<2x32xf32>
    %cst_168 = arith.constant dense<0.000000e+00> : vector<2xf32>
    %606 = vector.multi_reduction <add>, %605, %cst_168 [1] : vector<2x32xf32> to vector<2xf32>
    %607 = vector.shape_cast %606 : vector<2xf32> to vector<2x1xf32>
    %cst_169 = arith.constant 3.200000e+01 : f32
    %608 = vector.broadcast %cst_169 : f32 to vector<2x1xf32>
    %609 = arith.divf %607, %608 : vector<2x1xf32>
    %610 = vector.broadcast %609 : vector<2x1xf32> to vector<2x32xf32>
    %611 = arith.subf %605, %610 : vector<2x32xf32>
    %612 = arith.mulf %611, %611 : vector<2x32xf32>
    %cst_170 = arith.constant dense<0.000000e+00> : vector<2xf32>
    %613 = vector.multi_reduction <add>, %612, %cst_170 [1] : vector<2x32xf32> to vector<2xf32>
    %614 = vector.shape_cast %613 : vector<2xf32> to vector<2x1xf32>
    %cst_171 = arith.constant 3.200000e+01 : f32
    %615 = vector.broadcast %cst_171 : f32 to vector<2x1xf32>
    %616 = arith.divf %614, %615 : vector<2x1xf32>
    %617 = vector.broadcast %609 : vector<2x1xf32> to vector<2x32xf32>
    %618 = arith.subf %605, %617 : vector<2x32xf32>
    %cst_172 = arith.constant 9.99999974E-6 : f32
    %619 = vector.broadcast %cst_172 : f32 to vector<2x1xf32>
    %620 = arith.addf %616, %619 : vector<2x1xf32>
    %621 = math.rsqrt %620 : vector<2x1xf32>
    %622 = vector.broadcast %621 : vector<2x1xf32> to vector<2x32xf32>
    %623 = arith.mulf %618, %622 : vector<2x32xf32>
    %624 = vector.broadcast %12 : vector<1x32xf32> to vector<2x32xf32>
    %625 = arith.mulf %623, %624 : vector<2x32xf32>
    %626 = vector.broadcast %13 : vector<1x32xf32> to vector<2x32xf32>
    %627 = arith.addf %625, %626 : vector<2x32xf32>
    %628 = vector.extract_strided_slice %464 {offsets = [0, 32], sizes = [2, 224], strides = [1, 1]} : vector<2x256xf32> to vector<2x224xf32>
    %629 = tpu.concatenate %628, %627 in 1 : vector<2x224xf32>, vector<2x32xf32> -> vector<2x256xf32>
    %cst_173 = arith.constant dense<0.000000e+00> : vector<2x256xf32>
    %630 = tpu.matmul %629, %14, %cst_173 {dimension_numbers = #tpu.dot_dimension_numbers<[1], [0], [0], [1], [0, 0, 1, 1], [], []>} : vector<2x256xf32>, vector<256x256xf32>, vector<2x256xf32> -> vector<2x256xf32>
    %631 = vector.broadcast %15 : vector<1x256xf32> to vector<2x256xf32>
    %632 = arith.addf %630, %631 : vector<2x256xf32>
    %633 = vector.extract_strided_slice %632 {offsets = [0, 0], sizes = [2, 128], strides = [1, 1]} : vector<2x256xf32> to vector<2x128xf32>
    %634 = vector.extract_strided_slice %632 {offsets = [0, 128], sizes = [2, 128], strides = [1, 1]} : vector<2x256xf32> to vector<2x128xf32>
    %635 = arith.negf %634 : vector<2x128xf32>
    %636 = math.exp %635 : vector<2x128xf32>
    %cst_174 = arith.constant 1.000000e+00 : f32
    %637 = vector.broadcast %cst_174 : f32 to vector<2x128xf32>
    %638 = arith.addf %637, %636 : vector<2x128xf32>
    %639 = arith.divf %637, %638 : vector<2x128xf32>
    %640 = arith.mulf %633, %639 : vector<2x128xf32>
    %cst_175 = arith.constant dense<0.000000e+00> : vector<2x64xf32>
    %641 = tpu.matmul %640, %16, %cst_175 {dimension_numbers = #tpu.dot_dimension_numbers<[1], [0], [0], [1], [0, 0, 1, 1], [], []>} : vector<2x128xf32>, vector<128x64xf32>, vector<2x64xf32> -> vector<2x64xf32>
    %642 = vector.broadcast %17 : vector<1x64xf32> to vector<2x64xf32>
    %643 = arith.addf %641, %642 : vector<2x64xf32>
    %644 = vector.extract_strided_slice %643 {offsets = [0, 0], sizes = [2, 32], strides = [1, 1]} : vector<2x64xf32> to vector<2x32xf32>
    %645 = vector.extract_strided_slice %643 {offsets = [0, 32], sizes = [2, 32], strides = [1, 1]} : vector<2x64xf32> to vector<2x32xf32>
    %646 = arith.negf %645 : vector<2x32xf32>
    %647 = math.exp %646 : vector<2x32xf32>
    %cst_176 = arith.constant 1.000000e+00 : f32
    %648 = vector.broadcast %cst_176 : f32 to vector<2x32xf32>
    %649 = arith.addf %648, %647 : vector<2x32xf32>
    %650 = arith.divf %648, %649 : vector<2x32xf32>
    %651 = arith.mulf %644, %650 : vector<2x32xf32>
    %652 = vector.extract_strided_slice %651 {offsets = [0, 0], sizes = [2, 8], strides = [1, 1]} : vector<2x32xf32> to vector<2x8xf32>
    %cst_177 = arith.constant dense<0.000000e+00> : vector<2x36xf32>
    %653 = tpu.matmul %652, %2, %cst_177 {dimension_numbers = #tpu.dot_dimension_numbers<[1], [0], [0], [1], [0, 0, 1, 1], [], []>} : vector<2x8xf32>, vector<8x36xf32>, vector<2x36xf32> -> vector<2x36xf32>
    %cst_178 = arith.constant dense<0.000000e+00> : vector<2x36xf32>
    %654 = tpu.matmul %652, %3, %cst_178 {dimension_numbers = #tpu.dot_dimension_numbers<[1], [0], [0], [1], [0, 0, 1, 1], [], []>} : vector<2x8xf32>, vector<8x36xf32>, vector<2x36xf32> -> vector<2x36xf32>
    %655 = arith.mulf %653, %654 : vector<2x36xf32>
    %656 = vector.broadcast %5 : vector<1x36xf32> to vector<2x36xf32>
    %657 = arith.mulf %656, %493 : vector<2x36xf32>
    %658 = arith.addf %657, %655 : vector<2x36xf32>
    %659 = vector.broadcast %5 : vector<1x36xf32> to vector<2x36xf32>
    %660 = arith.mulf %659, %497 : vector<2x36xf32>
    %cst_179 = arith.constant 1.000000e+00 : f32
    %661 = vector.broadcast %cst_179 : f32 to vector<2x36xf32>
    %662 = arith.addf %660, %661 : vector<2x36xf32>
    %663 = math.rsqrt %662 : vector<2x36xf32>
    %664 = arith.mulf %658, %663 : vector<2x36xf32>
    %cst_180 = arith.constant dense<0.000000e+00> : vector<2x10xf32>
    %665 = tpu.matmul %664, %18, %cst_180 {dimension_numbers = #tpu.dot_dimension_numbers<[1], [0], [0], [1], [0, 0, 1, 1], [], []>} : vector<2x36xf32>, vector<36x10xf32>, vector<2x10xf32> -> vector<2x10xf32>
    %666 = vector.broadcast %19 : vector<1x10xf32> to vector<2x10xf32>
    %667 = arith.addf %665, %666 : vector<2x10xf32>
    %cst_181 = arith.constant dense<0xFF800000> : vector<2xf32>
    %668 = vector.multi_reduction <maximumf>, %667, %cst_181 [1] : vector<2x10xf32> to vector<2xf32>
    %669 = vector.shape_cast %668 : vector<2xf32> to vector<2x1xf32>
    %670 = vector.broadcast %669 : vector<2x1xf32> to vector<2x10xf32>
    %671 = arith.subf %667, %670 : vector<2x10xf32>
    %672 = math.exp %671 : vector<2x10xf32>
    %cst_182 = arith.constant dense<0.000000e+00> : vector<2xf32>
    %673 = vector.multi_reduction <add>, %672, %cst_182 [1] : vector<2x10xf32> to vector<2xf32>
    %674 = vector.shape_cast %673 : vector<2xf32> to vector<2x1xf32>
    %675 = tpu.reciprocal %674 {approx = true} : vector<2x1xf32> -> vector<2x1xf32>
    %676 = vector.broadcast %675 : vector<2x1xf32> to vector<2x10xf32>
    %677 = arith.mulf %672, %676 : vector<2x10xf32>
    %678 = vector.broadcast %669 : vector<2x1xf32> to vector<2x10xf32>
    %679 = arith.subf %667, %678 : vector<2x10xf32>
    %680 = math.log %674 : vector<2x1xf32>
    %681 = vector.broadcast %680 : vector<2x1xf32> to vector<2x10xf32>
    %682 = arith.subf %679, %681 : vector<2x10xf32>
    %683 = arith.mulf %677, %682 : vector<2x10xf32>
    %cst_183 = arith.constant dense<0.000000e+00> : vector<2xf32>
    %684 = vector.multi_reduction <add>, %683, %cst_183 [1] : vector<2x10xf32> to vector<2xf32>
    %685 = vector.shape_cast %684 : vector<2xf32> to vector<2x1xf32>
    %cst_184 = arith.constant 0.000000e+00 : f32
    %686 = vector.broadcast %cst_184 : f32 to vector<2x1xf32>
    %687 = arith.subf %686, %685 : vector<2x1xf32>
    %cst_185 = arith.constant 0.434294492 : f32
    %688 = vector.broadcast %cst_185 : f32 to vector<2x1xf32>
    %689 = arith.mulf %687, %688 : vector<2x1xf32>
    %cst_186 = arith.constant 1.000000e+00 : f32
    %690 = vector.broadcast %cst_186 : f32 to vector<2x1xf32>
    %691 = arith.subf %690, %689 : vector<2x1xf32>
    %692 = tpu.concatenate %689, %691 in 1 : vector<2x1xf32>, vector<2x1xf32> -> vector<2x2xf32>
    %cst_187 = arith.constant 0.000000e+00 : f32
    %693 = vector.broadcast %cst_187 : f32 to vector<2x20xf32>
    %694 = tpu.concatenate %667, %692, %693 in 1 : vector<2x10xf32>, vector<2x2xf32>, vector<2x20xf32> -> vector<2x32xf32>
    %695 = tpu.concatenate %199, %364, %529, %694 in 1 : vector<2x32xf32>, vector<2x32xf32>, vector<2x32xf32>, vector<2x32xf32> -> vector<2x128xf32>
    %c0_188 = arith.constant 0 : index
    %c0_189 = arith.constant 0 : index
    %696 = vector.load %arg3[%c0_188, %c0_189] : memref<2x128xf32, #tpu.memory_space<vmem>>, vector<2x128xf32>
    tpu.vector_store %arg3[%c0_188, %c0_189], %695 {strides = array<i32>} : memref<2x128xf32, #tpu.memory_space<vmem>>, vector<2x128xf32>,
    return
  }
}

</mosaic_0001>

<llo_original>
// kernel: ctm_forward_pallas.1
$region0: #{ctm_forward_pallas.1}
  #allocation0 [shape = 'u32[]', space=smem, size = 0x4, offset = 0x4, fixed_abs, tag = 'smem constant byte address 0x4 - core index']
  #allocation1 [shape = 'u32[144,128]{1,0:T(1,128)}', space=vmem, size = 0x12000, scoped, tag = 'internal scratch']
  %s0 = inlined_call_operand.vmem [shape: f32[656,256], index: 0, kind: input, shape index: {}]
  %s1 = inlined_call_operand.vmem [shape: f32[2,8,16], index: 1, kind: input, shape index: {}]
  %s2 = inlined_call_operand.vmem [shape: f32[2,8,16], index: 2, kind: input, shape index: {}]
  %s3 = inlined_call_operand.vmem [shape: f32[2,128], index: 3, kind: output, shape index: {}]
  %s4 = sld [smem:[#allocation0]]
  $region22: #{ctm_forward_pallas.1} parent=0
    _
  %s6 = ssub.s32 1, %s4
  %s7 = scalar_select 0, %s6, %s4
  // Predicated region
  $region2: #{ctm_forward_pallas.1} parent=0 // pred_check
    _
  $region3: #{ctm_forward_pallas.1} parent=0 // pred_check_branch
    %9 = sbr.rel (0) target = $region5
  $region4: #{ctm_forward_pallas.1} parent=0 // pred_region
    _
  $region5: #{ctm_forward_pallas.1} parent=0 // pred_fallthru
    _
  // Predicated region
  $region6: #{ctm_forward_pallas.1} parent=0 // pred_check
    _
  $region7: #{ctm_forward_pallas.1} parent=0 // pred_check_branch
    %11 = sbr.rel (0) target = $region9
  $region8: #{ctm_forward_pallas.1} parent=0 // pred_region
    _
  $region9: #{ctm_forward_pallas.1} parent=0 // pred_fallthru
    _
  // Predicated region
  $region10: #{ctm_forward_pallas.1} parent=0 // pred_check
    _
  $region11: #{ctm_forward_pallas.1} parent=0 // pred_check_branch
    %13 = sbr.rel (0) target = $region13
  $region12: #{ctm_forward_pallas.1} parent=0 // pred_region
    _
  $region13: #{ctm_forward_pallas.1} parent=0 // pred_fallthru
    _
  %v14 = vld [vmem:[%s0 + $0x360] sm:$0xff]
  %v15 = vld [vmem:[%s0 + $0x370] sm:$0xff]
  %v16 = vld [vmem:[%s0 + $0x380] sm:$0xff]
  %v17 = vld [vmem:[%s0 + $0x390] sm:$0xff]
  %v18 = vld [vmem:[%s0 + $0x460] ss:$0 sm:$0xff]
  %v19 = vld [vmem:[%s0 + $0x470] ss:$0 sm:$0xff]
  %v20 = vld [vmem:[%s0 + $0x3a0] sm:$0xff]
  %v21 = vld [vmem:[%s0 + $0x3b0] sm:$0xff]
  %v22 = vld [vmem:[%s0 + $0x3c0] sm:$0xff]
  %v23 = vld [vmem:[%s0 + $0x3d0] sm:$0xff]
  %v24 = vld [vmem:[%s0 + $0x3e0] sm:$0xf]
  %v25 = vld [vmem:[%s0 + $0x4a0] ss:$0 sm:$0xff]
  %v26 = vld [vmem:[%s0 + $0x3f0] sm:$0xff]
  %v27 = vld [vmem:[%s0 + $0x400] sm:$0xff]
  %v28 = vld [vmem:[%s0 + $0x4b0] ss:$0 sm:$0xff]
  %v29 = vld [vmem:[%s0 + $0x300] sm:$0xff]
  %v30 = vld [vmem:[%s0 + $0x310] sm:$0xff]
  %v31 = vld [vmem:[%s0 + $0x320] sm:$0xff]
  %v32 = vld [vmem:[%s0 + $0x330] sm:$0xff]
  %v33 = vld [vmem:[%s0 + $0x340] sm:$0xff]
  %v34 = vld [vmem:[%s0 + $0x350] sm:$0xff]
  %v35 = vld [vmem:[%s0 + $0x4c0] ss:$0 sm:$0xff]
  %v36 = vld [vmem:[%s0 + $0x4d0] ss:$0 sm:$0xff]
  %v37 = vld [vmem:[%s0 + $0x4e0] ss:$0 sm:$0xff]
  %v38 = vld [vmem:[%s0] sm:$0xff]
  %v39 = vld [vmem:[%s0 + $0x8] sm:$0xff]
  %v40 = vld [vmem:[%s0 + $0x10] sm:$0xff]
  %v41 = vld [vmem:[%s0 + $0x18] sm:$0xff]
  %v42 = vld [vmem:[%s0 + $0x20] sm:$0xff]
  %v43 = vld [vmem:[%s0 + $0x28] sm:$0xff]
  %v44 = vld [vmem:[%s0 + $0x30] sm:$0xff]
  %v45 = vld [vmem:[%s0 + $0x38] sm:$0xff]
  %v46 = vld [vmem:[%s0 + $0x40] sm:$0xff]
  %v47 = vld [vmem:[%s0 + $0x48] sm:$0xff]
  %v48 = vld [vmem:[%s0 + $0x50] sm:$0xff]
  %v49 = vld [vmem:[%s0 + $0x58] sm:$0xff]
  %v50 = vld [vmem:[%s0 + $0x60] sm:$0xff]
  %v51 = vld [vmem:[%s0 + $0x68] sm:$0xff]
  %v52 = vld [vmem:[%s0 + $0x70] sm:$0xff]
  %v53 = vld [vmem:[%s0 + $0x78] sm:$0xff]
  %v54 = vld [vmem:[%s0 + $0x80] sm:$0xff]
  %v55 = vld [vmem:[%s0 + $0x88] sm:$0xff]
  %v56 = vld [vmem:[%s0 + $0x90] sm:$0xff]
  %v57 = vld [vmem:[%s0 + $0x98] sm:$0xff]
  %v58 = vld [vmem:[%s0 + $0xa0] sm:$0xff]
  %v59 = vld [vmem:[%s0 + $0xa8] sm:$0xff]
  %v60 = vld [vmem:[%s0 + $0xb0] sm:$0xff]
  %v61 = vld [vmem:[%s0 + $0xb8] sm:$0xff]
  %v62 = vld [vmem:[%s0 + $0xc0] sm:$0xff]
  %v63 = vld [vmem:[%s0 + $0xc8] sm:$0xff]
  %v64 = vld [vmem:[%s0 + $0xd0] sm:$0xff]
  %v65 = vld [vmem:[%s0 + $0xd8] sm:$0xff]
  %v66 = vld [vmem:[%s0 + $0xe0] sm:$0xff]
  %v67 = vld [vmem:[%s0 + $0xe8] sm:$0xff]
  %v68 = vld [vmem:[%s0 + $0xf0] sm:$0xff]
  %v69 = vld [vmem:[%s0 + $0xf8] sm:$0xff]
  %v70 = vld [vmem:[%s0 + $0x100] sm:$0xff]
  %v71 = vld [vmem:[%s0 + $0x108] sm:$0xff]
  %v72 = vld [vmem:[%s0 + $0x110] sm:$0xff]
  %v73 = vld [vmem:[%s0 + $0x118] sm:$0xff]
  %v74 = vld [vmem:[%s0 + $0x120] sm:$0xff]
  %v75 = vld [vmem:[%s0 + $0x128] sm:$0xff]
  %v76 = vld [vmem:[%s0 + $0x130] sm:$0xff]
  %v77 = vld [vmem:[%s0 + $0x138] sm:$0xff]
  %v78 = vld [vmem:[%s0 + $0x140] sm:$0xff]
  %v79 = vld [vmem:[%s0 + $0x148] sm:$0xff]
  %v80 = vld [vmem:[%s0 + $0x150] sm:$0xff]
  %v81 = vld [vmem:[%s0 + $0x158] sm:$0xff]
  %v82 = vld [vmem:[%s0 + $0x160] sm:$0xff]
  %v83 = vld [vmem:[%s0 + $0x168] sm:$0xff]
  %v84 = vld [vmem:[%s0 + $0x170] sm:$0xff]
  %v85 = vld [vmem:[%s0 + $0x178] sm:$0xff]
  %v86 = vld [vmem:[%s0 + $0x180] sm:$0xff]
  %v87 = vld [vmem:[%s0 + $0x188] sm:$0xff]
  %v88 = vld [vmem:[%s0 + $0x190] sm:$0xff]
  %v89 = vld [vmem:[%s0 + $0x198] sm:$0xff]
  %v90 = vld [vmem:[%s0 + $0x1a0] sm:$0xff]
  %v91 = vld [vmem:[%s0 + $0x1a8] sm:$0xff]
  %v92 = vld [vmem:[%s0 + $0x1b0] sm:$0xff]
  %v93 = vld [vmem:[%s0 + $0x1b8] sm:$0xff]
  %v94 = vld [vmem:[%s0 + $0x1c0] sm:$0xff]
  %v95 = vld [vmem:[%s0 + $0x1c8] sm:$0xff]
  %v96 = vld [vmem:[%s0 + $0x1d0] sm:$0xff]
  %v97 = vld [vmem:[%s0 + $0x1d8] sm:$0xff]
  %v98 = vld [vmem:[%s0 + $0x1e0] sm:$0xff]
  %v99 = vld [vmem:[%s0 + $0x1e8] sm:$0xff]
  %v100 = vld [vmem:[%s0 + $0x1f0] sm:$0xff]
  %v101 = vld [vmem:[%s0 + $0x1f8] sm:$0xff]
  %s102 = scalar_lea.vmem %s0, 1264
  %v103 = vld [vmem:[%s102] ss:$8 sm:$0x3]
  %v104 = vld [vmem:[%s0 + $0x200] sm:$0xff]
  %v105 = vld [vmem:[%s0 + $0x210] sm:$0xff]
  %v106 = vld [vmem:[%s0 + $0x220] sm:$0xff]
  %v107 = vld [vmem:[%s0 + $0x230] sm:$0xff]
  %v108 = vld [vmem:[%s0 + $0x240] sm:$0xff]
  %v109 = vld [vmem:[%s0 + $0x250] sm:$0xff]
  %v110 = vld [vmem:[%s0 + $0x260] sm:$0xff]
  %v111 = vld [vmem:[%s0 + $0x270] sm:$0xff]
  %v112 = vld [vmem:[%s0 + $0x280] sm:$0xff]
  %v113 = vld [vmem:[%s0 + $0x290] sm:$0xff]
  %v114 = vld [vmem:[%s0 + $0x2a0] sm:$0xff]
  %v115 = vld [vmem:[%s0 + $0x2b0] sm:$0xff]
  %v116 = vld [vmem:[%s0 + $0x2c0] sm:$0xff]
  %v117 = vld [vmem:[%s0 + $0x2d0] sm:$0xff]
  %v118 = vld [vmem:[%s0 + $0x2e0] sm:$0xff]
  %v119 = vld [vmem:[%s0 + $0x2f0] sm:$0xff]
  %v120 = vld [vmem:[%s0 + $0x500] ss:$0 sm:$0xff]
  %v121 = vld [vmem:[%s0 + $0x410] sm:$0xff]
  %v122 = vld [vmem:[%s0 + $0x420] sm:$0xff]
  %v123 = vld [vmem:[%s0 + $0x430] sm:$0xff]
  %v124 = vld [vmem:[%s0 + $0x440] sm:$0xff]
  %v125 = vld [vmem:[%s0 + $0x450] sm:$0xf]
  %v126 = vld [vmem:[%s0 + $0x510] ss:$0 sm:$0xff]
  %v127 = vld [vmem:[%s1] sm:$0xff]
  %v128 = vld [vmem:[%s1 + $0x8] sm:$0xff]
  %v129 = vld [vmem:[%s2] sm:$0xff]
  %v130 = vld [vmem:[%s2 + $0x8] sm:$0xff]
  %v131 = vld [vmem:[%s0 + $0x480] ss:$0 sm:$0xff]
  %s132 = scalar_lea.vmem %s0, 1168
  %v133 = vld [vmem:[%s132] ss:$8 sm:$0x3]
  %vm134 = vcmask 64512
  %v136 = vsel %vm134, %v131, 0
  %138 = vmatprep.subr.mxu0 0.0
  %139 = vmatpush1.msra.mxu0 %v16
  %140 = vmatprep.subr.mxu0 0.0
  %141 = vmatpush1.msra.mxu0 0.0
  %142 = vmatprep.subr.mxu0 0.0
  %143 = vmatpush1.msra.mxu0 0.0
  %144 = vmatprep.subr.mxu0 0.0
  %145 = vmatpush1.msra.mxu0 0.0
  %146 = vmatprep.subr.mxu0 0.0
  %147 = vmatpush1.msra.mxu0 0.0
  %148 = vmatprep.subr.mxu0 0.0
  %149 = vmatpush1.msra.mxu0 0.0
  %150 = vmatprep.subr.mxu0 0.0
  %151 = vmatpush1.msra.mxu0 0.0
  %152 = vmatprep.subr.mxu0 0.0
  %153 = vmatpush1.msra.mxu0 0.0
  %154 = vmatprep.subr.mxu0 0.0
  %155 = vmatpush1.msra.mxu0 0.0
  %156 = vmatprep.subr.mxu0 0.0
  %157 = vmatpush1.msra.mxu0 0.0
  %158 = vmatprep.subr.mxu0 0.0
  %159 = vmatpush1.msra.mxu0 0.0
  %160 = vmatprep.subr.mxu0 0.0
  %161 = vmatpush1.msra.mxu0 0.0
  %162 = vmatprep.subr.mxu0 0.0
  %163 = vmatpush1.msra.mxu0 0.0
  %164 = vmatprep.subr.mxu0 0.0
  %165 = vmatpush1.msra.mxu0 0.0
  %166 = vmatprep.subr.mxu0 0.0
  %167 = vmatpush1.msra.mxu0 0.0
  %168 = vmatprep.subr.mxu0 0.0
  %169 = vmatpush1.msra.mxu0 0.0
  %170 = vmatprep.subr.mxu0 0.0
  %171 = vmatpush1.msra.mxu0 0.0
  %172 = vmatprep.subr.mxu0 0.0
  %173 = vmatpush1.msra.mxu0 0.0
  %174 = vmatprep.subr.mxu0 0.0
  %175 = vmatpush1.msra.mxu0 0.0
  %176 = vmatprep.subr.mxu0 0.0
  %177 = vmatpush1.msra.mxu0 0.0
  %178 = vmatprep.subr.mxu0 0.0
  %179 = vmatpush1.msra.mxu0 0.0
  %180 = vmatprep.subr.mxu0 0.0
  %181 = vmatpush1.msra.mxu0 0.0
  %182 = vmatprep.subr.mxu0 0.0
  %183 = vmatpush1.msra.mxu0 0.0
  %184 = vmatprep.subr.mxu0 0.0
  %185 = vmatpush1.msra.mxu0 0.0
  %186 = vmatprep.subr.mxu0 0.0
  %187 = vmatpush1.msra.mxu0 0.0
  %188 = vmatprep.subr.mxu0 0.0
  %189 = vmatpush1.msra.mxu0 0.0
  %190 = vmatprep.subr.mxu0 0.0
  %191 = vmatpush1.msra.mxu0 0.0
  %192 = vmatprep.subr.mxu0 0.0
  %193 = vmatpush1.msra.mxu0 0.0
  %194 = vmatprep.subr.mxu0 0.0
  %195 = vmatpush1.msra.mxu0 0.0
  %196 = vmatprep.subr.mxu0 0.0
  %197 = vmatpush1.msra.mxu0 0.0
  %198 = vmatprep.subr.mxu0 0.0
  %199 = vmatpush1.msra.mxu0 0.0
  %200 = vmatprep.subr.mxu0 0.0
  %201 = vmatpush1.msra.mxu0 0.0
  %202 = vmatprep.mubr.f32.mxu0 0.0
  %203 = vmatmul.mubr.f32.gmra.mrb[0].mxu0 %v136
  %v204 = vpop.f32.mrb[0].mxu0
  %v205 = vadd.f32 0.0, %v204
  %v206 = vpop.f32.mrb[0].mxu0
  %207 = vdwg.mxu0
  %208 = vmatprep.subr.mxu0 0.0
  %209 = vmatpush1.msra.mxu0 %v17
  %210 = vmatprep.subr.mxu0 0.0
  %211 = vmatpush1.msra.mxu0 0.0
  %212 = vmatprep.subr.mxu0 0.0
  %213 = vmatpush1.msra.mxu0 0.0
  %214 = vmatprep.subr.mxu0 0.0
  %215 = vmatpush1.msra.mxu0 0.0
  %216 = vmatprep.subr.mxu0 0.0
  %217 = vmatpush1.msra.mxu0 0.0
  %218 = vmatprep.subr.mxu0 0.0
  %219 = vmatpush1.msra.mxu0 0.0
  %220 = vmatprep.subr.mxu0 0.0
  %221 = vmatpush1.msra.mxu0 0.0
  %222 = vmatprep.subr.mxu0 0.0
  %223 = vmatpush1.msra.mxu0 0.0
  %224 = vmatprep.subr.mxu0 0.0
  %225 = vmatpush1.msra.mxu0 0.0
  %226 = vmatprep.subr.mxu0 0.0
  %227 = vmatpush1.msra.mxu0 0.0
  %228 = vmatprep.subr.mxu0 0.0
  %229 = vmatpush1.msra.mxu0 0.0
  %230 = vmatprep.subr.mxu0 0.0
  %231 = vmatpush1.msra.mxu0 0.0
  %232 = vmatprep.subr.mxu0 0.0
  %233 = vmatpush1.msra.mxu0 0.0
  %234 = vmatprep.subr.mxu0 0.0
  %235 = vmatpush1.msra.mxu0 0.0
  %236 = vmatprep.subr.mxu0 0.0
  %237 = vmatpush1.msra.mxu0 0.0
  %238 = vmatprep.subr.mxu0 0.0
  %239 = vmatpush1.msra.mxu0 0.0
  %240 = vmatprep.subr.mxu0 0.0
  %241 = vmatpush1.msra.mxu0 0.0
  %242 = vmatprep.subr.mxu0 0.0
  %243 = vmatpush1.msra.mxu0 0.0
  %244 = vmatprep.subr.mxu0 0.0
  %245 = vmatpush1.msra.mxu0 0.0
  %246 = vmatprep.subr.mxu0 0.0
  %247 = vmatpush1.msra.mxu0 0.0
  %248 = vmatprep.subr.mxu0 0.0
  %249 = vmatpush1.msra.mxu0 0.0
  %250 = vmatprep.subr.mxu0 0.0
  %251 = vmatpush1.msra.mxu0 0.0
  %252 = vmatprep.subr.mxu0 0.0
  %253 = vmatpush1.msra.mxu0 0.0
  %254 = vmatprep.subr.mxu0 0.0
  %255 = vmatpush1.msra.mxu0 0.0
  %256 = vmatprep.subr.mxu0 0.0
  %257 = vmatpush1.msra.mxu0 0.0
  %258 = vmatprep.subr.mxu0 0.0
  %259 = vmatpush1.msra.mxu0 0.0
  %260 = vmatprep.subr.mxu0 0.0
  %261 = vmatpush1.msra.mxu0 0.0
  %262 = vmatprep.subr.mxu0 0.0
  %263 = vmatpush1.msra.mxu0 0.0
  %264 = vmatprep.subr.mxu0 0.0
  %265 = vmatpush1.msra.mxu0 0.0
  %266 = vmatprep.subr.mxu0 0.0
  %267 = vmatpush1.msra.mxu0 0.0
  %268 = vmatprep.subr.mxu0 0.0
  %269 = vmatpush1.msra.mxu0 0.0
  %270 = vmatprep.subr.mxu0 0.0
  %271 = vmatpush1.msra.mxu0 0.0
  %272 = vmatprep.mubr.f32.mxu0 0.0
  %273 = vmatmul.mubr.f32.gmra.mrb[0].mxu0 %v136
  %v274 = vpop.f32.mrb[0].mxu0
  %v275 = vadd.f32 0.0, %v274
  %v276 = vpop.f32.mrb[0].mxu0
  %277 = vdwg.mxu0
  %v278 = vmul.f32 %v205, %v275
  %279 = vrot.lane.b32.xlu0 %v131, 104
  %v280 = vpop.permute.xlu0 %279
  %v281 = vsel %vm134, %v280, 0
  %283 = vmatprep.subr.mxu0 0.0
  %284 = vmatpush1.msra.mxu0 %v14
  %285 = vmatprep.subr.mxu0 0.0
  %286 = vmatpush1.msra.mxu0 0.0
  %287 = vmatprep.subr.mxu0 0.0
  %288 = vmatpush1.msra.mxu0 0.0
  %289 = vmatprep.subr.mxu0 0.0
  %290 = vmatpush1.msra.mxu0 0.0
  %291 = vmatprep.subr.mxu0 0.0
  %292 = vmatpush1.msra.mxu0 0.0
  %293 = vmatprep.subr.mxu0 0.0
  %294 = vmatpush1.msra.mxu0 0.0
  %295 = vmatprep.subr.mxu0 0.0
  %296 = vmatpush1.msra.mxu0 0.0
  %297 = vmatprep.subr.mxu0 0.0
  %298 = vmatpush1.msra.mxu0 0.0
  %299 = vmatprep.subr.mxu0 0.0
  %300 = vmatpush1.msra.mxu0 0.0
  %301 = vmatprep.subr.mxu0 0.0
  %302 = vmatpush1.msra.mxu0 0.0
  %303 = vmatprep.subr.mxu0 0.0
  %304 = vmatpush1.msra.mxu0 0.0
  %305 = vmatprep.subr.mxu0 0.0
  %306 = vmatpush1.msra.mxu0 0.0
  %307 = vmatprep.subr.mxu0 0.0
  %308 = vmatpush1.msra.mxu0 0.0
  %309 = vmatprep.subr.mxu0 0.0
  %310 = vmatpush1.msra.mxu0 0.0
  %311 = vmatprep.subr.mxu0 0.0
  %312 = vmatpush1.msra.mxu0 0.0
  %313 = vmatprep.subr.mxu0 0.0
  %314 = vmatpush1.msra.mxu0 0.0
  %315 = vmatprep.subr.mxu0 0.0
  %316 = vmatpush1.msra.mxu0 0.0
  %317 = vmatprep.subr.mxu0 0.0
  %318 = vmatpush1.msra.mxu0 0.0
  %319 = vmatprep.subr.mxu0 0.0
  %320 = vmatpush1.msra.mxu0 0.0
  %321 = vmatprep.subr.mxu0 0.0
  %322 = vmatpush1.msra.mxu0 0.0
  %323 = vmatprep.subr.mxu0 0.0
  %324 = vmatpush1.msra.mxu0 0.0
  %325 = vmatprep.subr.mxu0 0.0
  %326 = vmatpush1.msra.mxu0 0.0
  %327 = vmatprep.subr.mxu0 0.0
  %328 = vmatpush1.msra.mxu0 0.0
  %329 = vmatprep.subr.mxu0 0.0
  %330 = vmatpush1.msra.mxu0 0.0
  %331 = vmatprep.subr.mxu0 0.0
  %332 = vmatpush1.msra.mxu0 0.0
  %333 = vmatprep.subr.mxu0 0.0
  %334 = vmatpush1.msra.mxu0 0.0
  %335 = vmatprep.subr.mxu0 0.0
  %336 = vmatpush1.msra.mxu0 0.0
  %337 = vmatprep.subr.mxu0 0.0
  %338 = vmatpush1.msra.mxu0 0.0
  %339 = vmatprep.subr.mxu0 0.0
  %340 = vmatpush1.msra.mxu0 0.0
  %341 = vmatprep.subr.mxu0 0.0
  %342 = vmatpush1.msra.mxu0 0.0
  %343 = vmatprep.subr.mxu0 0.0
  %344 = vmatpush1.msra.mxu0 0.0
  %345 = vmatprep.subr.mxu0 0.0
  %346 = vmatpush1.msra.mxu0 0.0
  %347 = vmatprep.mubr.f32.mxu0 0.0
  %348 = vmatmul.mubr.f32.gmra.mrb[0].mxu0 %v281
  %v349 = vpop.f32.mrb[0].mxu0
  %v350 = vadd.f32 0.0, %v349
  %v351 = vpop.f32.mrb[0].mxu0
  %352 = vdwg.mxu0
  %353 = vmatprep.subr.mxu0 0.0
  %354 = vmatpush1.msra.mxu0 %v15
  %355 = vmatprep.subr.mxu0 0.0
  %356 = vmatpush1.msra.mxu0 0.0
  %357 = vmatprep.subr.mxu0 0.0
  %358 = vmatpush1.msra.mxu0 0.0
  %359 = vmatprep.subr.mxu0 0.0
  %360 = vmatpush1.msra.mxu0 0.0
  %361 = vmatprep.subr.mxu0 0.0
  %362 = vmatpush1.msra.mxu0 0.0
  %363 = vmatprep.subr.mxu0 0.0
  %364 = vmatpush1.msra.mxu0 0.0
  %365 = vmatprep.subr.mxu0 0.0
  %366 = vmatpush1.msra.mxu0 0.0
  %367 = vmatprep.subr.mxu0 0.0
  %368 = vmatpush1.msra.mxu0 0.0
  %369 = vmatprep.subr.mxu0 0.0
  %370 = vmatpush1.msra.mxu0 0.0
  %371 = vmatprep.subr.mxu0 0.0
  %372 = vmatpush1.msra.mxu0 0.0
  %373 = vmatprep.subr.mxu0 0.0
  %374 = vmatpush1.msra.mxu0 0.0
  %375 = vmatprep.subr.mxu0 0.0
  %376 = vmatpush1.msra.mxu0 0.0
  %377 = vmatprep.subr.mxu0 0.0
  %378 = vmatpush1.msra.mxu0 0.0
  %379 = vmatprep.subr.mxu0 0.0
  %380 = vmatpush1.msra.mxu0 0.0
  %381 = vmatprep.subr.mxu0 0.0
  %382 = vmatpush1.msra.mxu0 0.0
  %383 = vmatprep.subr.mxu0 0.0
  %384 = vmatpush1.msra.mxu0 0.0
  %385 = vmatprep.subr.mxu0 0.0
  %386 = vmatpush1.msra.mxu0 0.0
  %387 = vmatprep.subr.mxu0 0.0
  %388 = vmatpush1.msra.mxu0 0.0
  %389 = vmatprep.subr.mxu0 0.0
  %390 = vmatpush1.msra.mxu0 0.0
  %391 = vmatprep.subr.mxu0 0.0
  %392 = vmatpush1.msra.mxu0 0.0
  %393 = vmatprep.subr.mxu0 0.0
  %394 = vmatpush1.msra.mxu0 0.0
  %395 = vmatprep.subr.mxu0 0.0
  %396 = vmatpush1.msra.mxu0 0.0
  %397 = vmatprep.subr.mxu0 0.0
  %398 = vmatpush1.msra.mxu0 0.0
  %399 = vmatprep.subr.mxu0 0.0
  %400 = vmatpush1.msra.mxu0 0.0
  %401 = vmatprep.subr.mxu0 0.0
  %402 = vmatpush1.msra.mxu0 0.0
  %403 = vmatprep.subr.mxu0 0.0
  %404 = vmatpush1.msra.mxu0 0.0
  %405 = vmatprep.subr.mxu0 0.0
  %406 = vmatpush1.msra.mxu0 0.0
  %407 = vmatprep.subr.mxu0 0.0
  %408 = vmatpush1.msra.mxu0 0.0
  %409 = vmatprep.subr.mxu0 0.0
  %410 = vmatpush1.msra.mxu0 0.0
  %411 = vmatprep.subr.mxu0 0.0
  %412 = vmatpush1.msra.mxu0 0.0
  %413 = vmatprep.subr.mxu0 0.0
  %414 = vmatpush1.msra.mxu0 0.0
  %415 = vmatprep.subr.mxu0 0.0
  %416 = vmatpush1.msra.mxu0 0.0
  %417 = vmatprep.mubr.f32.mxu0 0.0
  %418 = vmatmul.mubr.f32.gmra.mrb[0].mxu0 %v281
  %v419 = vpop.f32.mrb[0].mxu0
  %v420 = vadd.f32 0.0, %v419
  %v421 = vpop.f32.mrb[0].mxu0
  %422 = vdwg.mxu0
  %v423 = vmul.f32 %v350, %v420
  %v424 = vmul.f32 %v18, 0.0
  %v425 = vadd.f32 %v424, %v423
  %v426 = vadd.f32 %v424, 1.0
  %v427 = vrsqrt.pop %v426
  %v428 = vmul.f32 %v425, %v427
  %vm429 = vcmask 293888
  %v431 = vsel %vm429, %v428, 0
  %vm433 = vcmask 1043456
  %v435 = vsel %vm433, %v24, 0
  %437 = vmatprep.subr.mxu0 0.0
  %438 = vmatpush1.msra.mxu0 %v20
  %439 = vmatprep.subr.mxu0 0.0
  %440 = vmatpush1.msra.mxu0 %v21
  %441 = vmatprep.subr.mxu0 0.0
  %442 = vmatpush1.msra.mxu0 %v22
  %443 = vmatprep.subr.mxu0 0.0
  %444 = vmatpush1.msra.mxu0 %v23
  %445 = vmatprep.subr.mxu0 0.0
  %446 = vmatpush1.msra.mxu0 %v435
  %447 = vmatprep.subr.mxu0 0.0
  %448 = vmatpush1.msra.mxu0 0.0
  %449 = vmatprep.subr.mxu0 0.0
  %450 = vmatpush1.msra.mxu0 0.0
  %451 = vmatprep.subr.mxu0 0.0
  %452 = vmatpush1.msra.mxu0 0.0
  %453 = vmatprep.subr.mxu0 0.0
  %454 = vmatpush1.msra.mxu0 0.0
  %455 = vmatprep.subr.mxu0 0.0
  %456 = vmatpush1.msra.mxu0 0.0
  %457 = vmatprep.subr.mxu0 0.0
  %458 = vmatpush1.msra.mxu0 0.0
  %459 = vmatprep.subr.mxu0 0.0
  %460 = vmatpush1.msra.mxu0 0.0
  %461 = vmatprep.subr.mxu0 0.0
  %462 = vmatpush1.msra.mxu0 0.0
  %463 = vmatprep.subr.mxu0 0.0
  %464 = vmatpush1.msra.mxu0 0.0
  %465 = vmatprep.subr.mxu0 0.0
  %466 = vmatpush1.msra.mxu0 0.0
  %467 = vmatprep.subr.mxu0 0.0
  %468 = vmatpush1.msra.mxu0 0.0
  %469 = vmatprep.subr.mxu0 0.0
  %470 = vmatpush1.msra.mxu0 0.0
  %471 = vmatprep.subr.mxu0 0.0
  %472 = vmatpush1.msra.mxu0 0.0
  %473 = vmatprep.subr.mxu0 0.0
  %474 = vmatpush1.msra.mxu0 0.0
  %475 = vmatprep.subr.mxu0 0.0
  %476 = vmatpush1.msra.mxu0 0.0
  %477 = vmatprep.subr.mxu0 0.0
  %478 = vmatpush1.msra.mxu0 0.0
  %479 = vmatprep.subr.mxu0 0.0
  %480 = vmatpush1.msra.mxu0 0.0
  %481 = vmatprep.subr.mxu0 0.0
  %482 = vmatpush1.msra.mxu0 0.0
  %483 = vmatprep.subr.mxu0 0.0
  %484 = vmatpush1.msra.mxu0 0.0
  %485 = vmatprep.subr.mxu0 0.0
  %486 = vmatpush1.msra.mxu0 0.0
  %487 = vmatprep.subr.mxu0 0.0
  %488 = vmatpush1.msra.mxu0 0.0
  %489 = vmatprep.subr.mxu0 0.0
  %490 = vmatpush1.msra.mxu0 0.0
  %491 = vmatprep.subr.mxu0 0.0
  %492 = vmatpush1.msra.mxu0 0.0
  %493 = vmatprep.subr.mxu0 0.0
  %494 = vmatpush1.msra.mxu0 0.0
  %495 = vmatprep.subr.mxu0 0.0
  %496 = vmatpush1.msra.mxu0 0.0
  %497 = vmatprep.subr.mxu0 0.0
  %498 = vmatpush1.msra.mxu0 0.0
  %499 = vmatprep.subr.mxu0 0.0
  %500 = vmatpush1.msra.mxu0 0.0
  %501 = vmatprep.mubr.f32.mxu0 0.0
  %502 = vmatmul.mubr.f32.gmra.mrb[0].mxu0 %v431
  %v503 = vpop.f32.mrb[0].mxu0
  %v504 = vadd.f32 %v25, %v503
  %v505 = vpop.f32.mrb[0].mxu0
  %506 = vdwg.mxu0
  %v509 = vunpack.c.l.s4 1966171168
  %v510 = vunpack.c.0.s8 %v509
  %v511 = vlaneseq
  %v512 = vshrl.u32 %v511, 7
  %v513 = vsub.s32 %v510, %v512
  %v514 = vrot.slane %v504, %v513
  %v515 = vcombine.high %v514, %v514
  %v517 = vunpack.c.l.s4 1966171168
  %v518 = vunpack.c.0.s8 %v517
  %v519 = vlaneseq
  %v520 = vshrl.u32 %v519, 7
  %v521 = vsub.s32 %v518, %v520
  %v522 = vrot.slane %v514, %v521
  %v524 = vunpack.c.l.s4 1966171168
  %v525 = vunpack.c.0.s8 %v524
  %v526 = vlaneseq
  %v527 = vshrl.u32 %v526, 7
  %v528 = vsub.s32 %v525, %v527
  %v529 = vrot.slane %v515, %v528
  %v530 = vsel %vm134, %v522, 0
  %v533 = vsel %vm134, %v127, 0
  %535 = vmatprep.subr.mxu0 0.0
  %536 = vmatpush1.xpose.msra.mxu0 %v533
  %537 = vmatprep.subr.mxu0 0.0
  %538 = vmatpush1.xpose.msra.mxu0 0.0
  %539 = vmatprep.subr.mxu0 0.0
  %540 = vmatpush1.xpose.msra.mxu0 0.0
  %541 = vmatprep.subr.mxu0 0.0
  %542 = vmatpush1.xpose.msra.mxu0 0.0
  %543 = vmatprep.subr.mxu0 0.0
  %544 = vmatpush1.xpose.msra.mxu0 0.0
  %545 = vmatprep.subr.mxu0 0.0
  %546 = vmatpush1.xpose.msra.mxu0 0.0
  %547 = vmatprep.subr.mxu0 0.0
  %548 = vmatpush1.xpose.msra.mxu0 0.0
  %549 = vmatprep.subr.mxu0 0.0
  %550 = vmatpush1.xpose.msra.mxu0 0.0
  %551 = vmatprep.subr.mxu0 0.0
  %552 = vmatpush1.xpose.msra.mxu0 0.0
  %553 = vmatprep.subr.mxu0 0.0
  %554 = vmatpush1.xpose.msra.mxu0 0.0
  %555 = vmatprep.subr.mxu0 0.0
  %556 = vmatpush1.xpose.msra.mxu0 0.0
  %557 = vmatprep.subr.mxu0 0.0
  %558 = vmatpush1.xpose.msra.mxu0 0.0
  %559 = vmatprep.subr.mxu0 0.0
  %560 = vmatpush1.xpose.msra.mxu0 0.0
  %561 = vmatprep.subr.mxu0 0.0
  %562 = vmatpush1.xpose.msra.mxu0 0.0
  %563 = vmatprep.subr.mxu0 0.0
  %564 = vmatpush1.xpose.msra.mxu0 0.0
  %565 = vmatprep.subr.mxu0 0.0
  %566 = vmatpush1.xpose.msra.mxu0 0.0
  %567 = vmatprep.subr.mxu0 0.0
  %568 = vmatpush1.xpose.msra.mxu0 0.0
  %569 = vmatprep.subr.mxu0 0.0
  %570 = vmatpush1.xpose.msra.mxu0 0.0
  %571 = vmatprep.subr.mxu0 0.0
  %572 = vmatpush1.xpose.msra.mxu0 0.0
  %573 = vmatprep.subr.mxu0 0.0
  %574 = vmatpush1.xpose.msra.mxu0 0.0
  %575 = vmatprep.subr.mxu0 0.0
  %576 = vmatpush1.xpose.msra.mxu0 0.0
  %577 = vmatprep.subr.mxu0 0.0
  %578 = vmatpush1.xpose.msra.mxu0 0.0
  %579 = vmatprep.subr.mxu0 0.0
  %580 = vmatpush1.xpose.msra.mxu0 0.0
  %581 = vmatprep.subr.mxu0 0.0
  %582 = vmatpush1.xpose.msra.mxu0 0.0
  %583 = vmatprep.subr.mxu0 0.0
  %584 = vmatpush1.xpose.msra.mxu0 0.0
  %585 = vmatprep.subr.mxu0 0.0
  %586 = vmatpush1.xpose.msra.mxu0 0.0
  %587 = vmatprep.subr.mxu0 0.0
  %588 = vmatpush1.xpose.msra.mxu0 0.0
  %589 = vmatprep.subr.mxu0 0.0
  %590 = vmatpush1.xpose.msra.mxu0 0.0
  %591 = vmatprep.subr.mxu0 0.0
  %592 = vmatpush1.xpose.msra.mxu0 0.0
  %593 = vmatprep.subr.mxu0 0.0
  %594 = vmatpush1.xpose.msra.mxu0 0.0
  %595 = vmatprep.subr.mxu0 0.0
  %596 = vmatpush1.xpose.msra.mxu0 0.0
  %597 = vmatprep.subr.mxu0 0.0
  %598 = vmatpush1.xpose.msra.mxu0 0.0
  %599 = vmatprep.mubr.f32.mxu0 0.0
  %600 = vmatmul.mubr.f32.gmra.mrb[0].mxu0 %v530
  %v601 = vpop.f32.mrb[0].mxu0
  %v602 = vadd.f32 0.0, %v601
  %v603 = vpop.f32.mrb[0].mxu0
  %604 = vdwg.mxu0
  %v605 = vsel %vm134, %v529, 0
  %v608 = vsel %vm134, %v128, 0
  %610 = vmatprep.subr.mxu0 0.0
  %611 = vmatpush1.xpose.msra.mxu0 %v608
  %612 = vmatprep.subr.mxu0 0.0
  %613 = vmatpush1.xpose.msra.mxu0 0.0
  %614 = vmatprep.subr.mxu0 0.0
  %615 = vmatpush1.xpose.msra.mxu0 0.0
  %616 = vmatprep.subr.mxu0 0.0
  %617 = vmatpush1.xpose.msra.mxu0 0.0
  %618 = vmatprep.subr.mxu0 0.0
  %619 = vmatpush1.xpose.msra.mxu0 0.0
  %620 = vmatprep.subr.mxu0 0.0
  %621 = vmatpush1.xpose.msra.mxu0 0.0
  %622 = vmatprep.subr.mxu0 0.0
  %623 = vmatpush1.xpose.msra.mxu0 0.0
  %624 = vmatprep.subr.mxu0 0.0
  %625 = vmatpush1.xpose.msra.mxu0 0.0
  %626 = vmatprep.subr.mxu0 0.0
  %627 = vmatpush1.xpose.msra.mxu0 0.0
  %628 = vmatprep.subr.mxu0 0.0
  %629 = vmatpush1.xpose.msra.mxu0 0.0
  %630 = vmatprep.subr.mxu0 0.0
  %631 = vmatpush1.xpose.msra.mxu0 0.0
  %632 = vmatprep.subr.mxu0 0.0
  %633 = vmatpush1.xpose.msra.mxu0 0.0
  %634 = vmatprep.subr.mxu0 0.0
  %635 = vmatpush1.xpose.msra.mxu0 0.0
  %636 = vmatprep.subr.mxu0 0.0
  %637 = vmatpush1.xpose.msra.mxu0 0.0
  %638 = vmatprep.subr.mxu0 0.0
  %639 = vmatpush1.xpose.msra.mxu0 0.0
  %640 = vmatprep.subr.mxu0 0.0
  %641 = vmatpush1.xpose.msra.mxu0 0.0
  %642 = vmatprep.subr.mxu0 0.0
  %643 = vmatpush1.xpose.msra.mxu0 0.0
  %644 = vmatprep.subr.mxu0 0.0
  %645 = vmatpush1.xpose.msra.mxu0 0.0
  %646 = vmatprep.subr.mxu0 0.0
  %647 = vmatpush1.xpose.msra.mxu0 0.0
  %648 = vmatprep.subr.mxu0 0.0
  %649 = vmatpush1.xpose.msra.mxu0 0.0
  %650 = vmatprep.subr.mxu0 0.0
  %651 = vmatpush1.xpose.msra.mxu0 0.0
  %652 = vmatprep.subr.mxu0 0.0
  %653 = vmatpush1.xpose.msra.mxu0 0.0
  %654 = vmatprep.subr.mxu0 0.0
  %655 = vmatpush1.xpose.msra.mxu0 0.0
  %656 = vmatprep.subr.mxu0 0.0
  %657 = vmatpush1.xpose.msra.mxu0 0.0
  %658 = vmatprep.subr.mxu0 0.0
  %659 = vmatpush1.xpose.msra.mxu0 0.0
  %660 = vmatprep.subr.mxu0 0.0
  %661 = vmatpush1.xpose.msra.mxu0 0.0
  %662 = vmatprep.subr.mxu0 0.0
  %663 = vmatpush1.xpose.msra.mxu0 0.0
  %664 = vmatprep.subr.mxu0 0.0
  %665 = vmatpush1.xpose.msra.mxu0 0.0
  %666 = vmatprep.subr.mxu0 0.0
  %667 = vmatpush1.xpose.msra.mxu0 0.0
  %668 = vmatprep.subr.mxu0 0.0
  %669 = vmatpush1.xpose.msra.mxu0 0.0
  %670 = vmatprep.subr.mxu0 0.0
  %671 = vmatpush1.xpose.msra.mxu0 0.0
  %672 = vmatprep.subr.mxu0 0.0
  %673 = vmatpush1.xpose.msra.mxu0 0.0
  %674 = vmatprep.mubr.f32.mxu0 0.0
  %675 = vmatmul.mubr.f32.gmra.mrb[0].mxu0 %v605
  %v676 = vpop.f32.mrb[0].mxu0
  %v677 = vadd.f32 0.0, %v676
  %v678 = vpop.f32.mrb[0].mxu0
  %679 = vdwg.mxu0
  %v680 = vmul.f32 %v602, 0.35355338
  %v681 = vmul.f32 %v677, 0.35355338
  %vm682 = vcmask 57344
  %v683 = vsel %vm682, %v680, -inf
  %684 = vmax.xlane.f32.xlu0 %v683
  %v685 = vpop.xlane.xlu0 %684
  %v686 = vsel %vm682, %v681, -inf
  %687 = vmax.xlane.f32.xlu0 %v686
  %v688 = vpop.xlane.xlu0 %687
  %v689 = vsub.f32 %v680, %v685
  %v690 = vsub.f32 %v681, %v688
  %v691 = vmul.f32 %v689, 1.442695
  %v692 = vpow.pop %v691
  %v693 = vmul.f32 %v690, 1.442695
  %v694 = vpow.pop %v693
  %v695 = vsel %vm682, %v692, 0.0
  %696 = vadd.xlane.f32.xlu0 %v695
  %v697 = vpop.xlane.xlu0 %696
  %v698 = vsel %vm682, %v694, 0.0
  %699 = vadd.xlane.f32.xlu0 %v698
  %v700 = vpop.xlane.xlu0 %699
  %v701 = vrcp.pop %v697
  %v702 = vrcp.pop %v700
  %v703 = vmul.f32 %v692, %v701
  %v704 = vmul.f32 %v694, %v702
  %v706 = vsel %vm134, %v703, 0
  %708 = vmatprep.subr.mxu0 0.0
  %709 = vmatpush1.msra.mxu0 %v129
  %710 = vmatprep.subr.mxu0 0.0
  %711 = vmatpush1.msra.mxu0 0.0
  %712 = vmatprep.subr.mxu0 0.0
  %713 = vmatpush1.msra.mxu0 0.0
  %714 = vmatprep.subr.mxu0 0.0
  %715 = vmatpush1.msra.mxu0 0.0
  %716 = vmatprep.subr.mxu0 0.0
  %717 = vmatpush1.msra.mxu0 0.0
  %718 = vmatprep.subr.mxu0 0.0
  %719 = vmatpush1.msra.mxu0 0.0
  %720 = vmatprep.subr.mxu0 0.0
  %721 = vmatpush1.msra.mxu0 0.0
  %722 = vmatprep.subr.mxu0 0.0
  %723 = vmatpush1.msra.mxu0 0.0
  %724 = vmatprep.subr.mxu0 0.0
  %725 = vmatpush1.msra.mxu0 0.0
  %726 = vmatprep.subr.mxu0 0.0
  %727 = vmatpush1.msra.mxu0 0.0
  %728 = vmatprep.subr.mxu0 0.0
  %729 = vmatpush1.msra.mxu0 0.0
  %730 = vmatprep.subr.mxu0 0.0
  %731 = vmatpush1.msra.mxu0 0.0
  %732 = vmatprep.subr.mxu0 0.0
  %733 = vmatpush1.msra.mxu0 0.0
  %734 = vmatprep.subr.mxu0 0.0
  %735 = vmatpush1.msra.mxu0 0.0
  %736 = vmatprep.subr.mxu0 0.0
  %737 = vmatpush1.msra.mxu0 0.0
  %738 = vmatprep.subr.mxu0 0.0
  %739 = vmatpush1.msra.mxu0 0.0
  %740 = vmatprep.subr.mxu0 0.0
  %741 = vmatpush1.msra.mxu0 0.0
  %742 = vmatprep.subr.mxu0 0.0
  %743 = vmatpush1.msra.mxu0 0.0
  %744 = vmatprep.subr.mxu0 0.0
  %745 = vmatpush1.msra.mxu0 0.0
  %746 = vmatprep.subr.mxu0 0.0
  %747 = vmatpush1.msra.mxu0 0.0
  %748 = vmatprep.subr.mxu0 0.0
  %749 = vmatpush1.msra.mxu0 0.0
  %750 = vmatprep.subr.mxu0 0.0
  %751 = vmatpush1.msra.mxu0 0.0
  %752 = vmatprep.subr.mxu0 0.0
  %753 = vmatpush1.msra.mxu0 0.0
  %754 = vmatprep.subr.mxu0 0.0
  %755 = vmatpush1.msra.mxu0 0.0
  %756 = vmatprep.subr.mxu0 0.0
  %757 = vmatpush1.msra.mxu0 0.0
  %758 = vmatprep.subr.mxu0 0.0
  %759 = vmatpush1.msra.mxu0 0.0
  %760 = vmatprep.subr.mxu0 0.0
  %761 = vmatpush1.msra.mxu0 0.0
  %762 = vmatprep.subr.mxu0 0.0
  %763 = vmatpush1.msra.mxu0 0.0
  %764 = vmatprep.subr.mxu0 0.0
  %765 = vmatpush1.msra.mxu0 0.0
  %766 = vmatprep.subr.mxu0 0.0
  %767 = vmatpush1.msra.mxu0 0.0
  %768 = vmatprep.subr.mxu0 0.0
  %769 = vmatpush1.msra.mxu0 0.0
  %770 = vmatprep.subr.mxu0 0.0
  %771 = vmatpush1.msra.mxu0 0.0
  %772 = vmatprep.mubr.f32.mxu0 0.0
  %773 = vmatmul.mubr.f32.gmra.mrb[0].mxu0 %v706
  %v774 = vpop.f32.mrb[0].mxu0
  %v775 = vadd.f32 0.0, %v774
  %v776 = vpop.f32.mrb[0].mxu0
  %777 = vdwg.mxu0
  %v779 = vsel %vm134, %v704, 0
  %781 = vmatprep.subr.mxu0 0.0
  %782 = vmatpush1.msra.mxu0 %v130
  %783 = vmatprep.subr.mxu0 0.0
  %784 = vmatpush1.msra.mxu0 0.0
  %785 = vmatprep.subr.mxu0 0.0
  %786 = vmatpush1.msra.mxu0 0.0
  %787 = vmatprep.subr.mxu0 0.0
  %788 = vmatpush1.msra.mxu0 0.0
  %789 = vmatprep.subr.mxu0 0.0
  %790 = vmatpush1.msra.mxu0 0.0
  %791 = vmatprep.subr.mxu0 0.0
  %792 = vmatpush1.msra.mxu0 0.0
  %793 = vmatprep.subr.mxu0 0.0
  %794 = vmatpush1.msra.mxu0 0.0
  %795 = vmatprep.subr.mxu0 0.0
  %796 = vmatpush1.msra.mxu0 0.0
  %797 = vmatprep.subr.mxu0 0.0
  %798 = vmatpush1.msra.mxu0 0.0
  %799 = vmatprep.subr.mxu0 0.0
  %800 = vmatpush1.msra.mxu0 0.0
  %801 = vmatprep.subr.mxu0 0.0
  %802 = vmatpush1.msra.mxu0 0.0
  %803 = vmatprep.subr.mxu0 0.0
  %804 = vmatpush1.msra.mxu0 0.0
  %805 = vmatprep.subr.mxu0 0.0
  %806 = vmatpush1.msra.mxu0 0.0
  %807 = vmatprep.subr.mxu0 0.0
  %808 = vmatpush1.msra.mxu0 0.0
  %809 = vmatprep.subr.mxu0 0.0
  %810 = vmatpush1.msra.mxu0 0.0
  %811 = vmatprep.subr.mxu0 0.0
  %812 = vmatpush1.msra.mxu0 0.0
  %813 = vmatprep.subr.mxu0 0.0
  %814 = vmatpush1.msra.mxu0 0.0
  %815 = vmatprep.subr.mxu0 0.0
  %816 = vmatpush1.msra.mxu0 0.0
  %817 = vmatprep.subr.mxu0 0.0
  %818 = vmatpush1.msra.mxu0 0.0
  %819 = vmatprep.subr.mxu0 0.0
  %820 = vmatpush1.msra.mxu0 0.0
  %821 = vmatprep.subr.mxu0 0.0
  %822 = vmatpush1.msra.mxu0 0.0
  %823 = vmatprep.subr.mxu0 0.0
  %824 = vmatpush1.msra.mxu0 0.0
  %825 = vmatprep.subr.mxu0 0.0
  %826 = vmatpush1.msra.mxu0 0.0
  %827 = vmatprep.subr.mxu0 0.0
  %828 = vmatpush1.msra.mxu0 0.0
  %829 = vmatprep.subr.mxu0 0.0
  %830 = vmatpush1.msra.mxu0 0.0
  %831 = vmatprep.subr.mxu0 0.0
  %832 = vmatpush1.msra.mxu0 0.0
  %833 = vmatprep.subr.mxu0 0.0
  %834 = vmatpush1.msra.mxu0 0.0
  %835 = vmatprep.subr.mxu0 0.0
  %836 = vmatpush1.msra.mxu0 0.0
  %837 = vmatprep.subr.mxu0 0.0
  %838 = vmatpush1.msra.mxu0 0.0
  %839 = vmatprep.subr.mxu0 0.0
  %840 = vmatpush1.msra.mxu0 0.0
  %841 = vmatprep.subr.mxu0 0.0
  %842 = vmatpush1.msra.mxu0 0.0
  %843 = vmatprep.subr.mxu0 0.0
  %844 = vmatpush1.msra.mxu0 0.0
  %845 = vmatprep.mubr.f32.mxu0 0.0
  %846 = vmatmul.mubr.f32.gmra.mrb[0].mxu0 %v779
  %v847 = vpop.f32.mrb[0].mxu0
  %v848 = vadd.f32 0.0, %v847
  %v849 = vpop.f32.mrb[0].mxu0
  %850 = vdwg.mxu0
  %v853 = vrot.slane %v848, 7
  %vm854 = vcmask 1041409
  %v855 = vsel %vm854, %v853, %v775
  %v856 = vsel %vm134, %v855, 0
  %858 = vmatprep.subr.mxu0 0.0
  %859 = vmatpush1.msra.mxu0 %v26
  %860 = vmatprep.subr.mxu0 0.0
  %861 = vmatpush1.msra.mxu0 0.0
  %862 = vmatprep.subr.mxu0 0.0
  %863 = vmatpush1.msra.mxu0 0.0
  %864 = vmatprep.subr.mxu0 0.0
  %865 = vmatpush1.msra.mxu0 0.0
  %866 = vmatprep.subr.mxu0 0.0
  %867 = vmatpush1.msra.mxu0 0.0
  %868 = vmatprep.subr.mxu0 0.0
  %869 = vmatpush1.msra.mxu0 0.0
  %870 = vmatprep.subr.mxu0 0.0
  %871 = vmatpush1.msra.mxu0 0.0
  %872 = vmatprep.subr.mxu0 0.0
  %873 = vmatpush1.msra.mxu0 0.0
  %874 = vmatprep.subr.mxu0 0.0
  %875 = vmatpush1.msra.mxu0 0.0
  %876 = vmatprep.subr.mxu0 0.0
  %877 = vmatpush1.msra.mxu0 0.0
  %878 = vmatprep.subr.mxu0 0.0
  %879 = vmatpush1.msra.mxu0 0.0
  %880 = vmatprep.subr.mxu0 0.0
  %881 = vmatpush1.msra.mxu0 0.0
  %882 = vmatprep.subr.mxu0 0.0
  %883 = vmatpush1.msra.mxu0 0.0
  %884 = vmatprep.subr.mxu0 0.0
  %885 = vmatpush1.msra.mxu0 0.0
  %886 = vmatprep.subr.mxu0 0.0
  %887 = vmatpush1.msra.mxu0 0.0
  %888 = vmatprep.subr.mxu0 0.0
  %889 = vmatpush1.msra.mxu0 0.0
  %890 = vmatprep.subr.mxu0 0.0
  %891 = vmatpush1.msra.mxu0 0.0
  %892 = vmatprep.subr.mxu0 0.0
  %893 = vmatpush1.msra.mxu0 0.0
  %894 = vmatprep.subr.mxu0 0.0
  %895 = vmatpush1.msra.mxu0 0.0
  %896 = vmatprep.subr.mxu0 0.0
  %897 = vmatpush1.msra.mxu0 0.0
  %898 = vmatprep.subr.mxu0 0.0
  %899 = vmatpush1.msra.mxu0 0.0
  %900 = vmatprep.subr.mxu0 0.0
  %901 = vmatpush1.msra.mxu0 0.0
  %902 = vmatprep.subr.mxu0 0.0
  %903 = vmatpush1.msra.mxu0 0.0
  %904 = vmatprep.subr.mxu0 0.0
  %905 = vmatpush1.msra.mxu0 0.0
  %906 = vmatprep.subr.mxu0 0.0
  %907 = vmatpush1.msra.mxu0 0.0
  %908 = vmatprep.subr.mxu0 0.0
  %909 = vmatpush1.msra.mxu0 0.0
  %910 = vmatprep.subr.mxu0 0.0
  %911 = vmatpush1.msra.mxu0 0.0
  %912 = vmatprep.subr.mxu0 0.0
  %913 = vmatpush1.msra.mxu0 0.0
  %914 = vmatprep.subr.mxu0 0.0
  %915 = vmatpush1.msra.mxu0 0.0
  %916 = vmatprep.subr.mxu0 0.0
  %917 = vmatpush1.msra.mxu0 0.0
  %918 = vmatprep.subr.mxu0 0.0
  %919 = vmatpush1.msra.mxu0 0.0
  %920 = vmatprep.subr.mxu0 0.0
  %921 = vmatpush1.msra.mxu0 0.0
  %922 = vmatprep.mubr.f32.mxu0 0.0
  %923 = vmatmul.mubr.f32.gmra.mrb[0].mxu0 %v856
  %v924 = vpop.f32.mrb[0].mxu0
  %v925 = vadd.f32 0.0, %v924
  %v926 = vpop.f32.mrb[0].mxu0
  %927 = vdwg.mxu0
  %v928 = vadd.f32 %v28, %v925
  %v929 = vlaneseq
  %v930 = vshrl.u32 %v929, 7
  %v931 = vsub.s32 0, %v930
  %v932 = vrot.slane %v522, %v931
  %933 = vrot.lane.b32.xlu0 %v932, 120
  %v934 = vpop.permute.xlu0 %933
  %935 = vrot.lane.b32.xlu0 %v127, 120
  %v936 = vpop.permute.xlu0 %935
  %v937 = vsel %vm134, %v934, 0
  %v939 = vsel %vm134, %v936, 0
  %941 = vmatprep.subr.mxu0 0.0
  %942 = vmatpush1.xpose.msra.mxu0 %v939
  %943 = vmatprep.subr.mxu0 0.0
  %944 = vmatpush1.xpose.msra.mxu0 0.0
  %945 = vmatprep.subr.mxu0 0.0
  %946 = vmatpush1.xpose.msra.mxu0 0.0
  %947 = vmatprep.subr.mxu0 0.0
  %948 = vmatpush1.xpose.msra.mxu0 0.0
  %949 = vmatprep.subr.mxu0 0.0
  %950 = vmatpush1.xpose.msra.mxu0 0.0
  %951 = vmatprep.subr.mxu0 0.0
  %952 = vmatpush1.xpose.msra.mxu0 0.0
  %953 = vmatprep.subr.mxu0 0.0
  %954 = vmatpush1.xpose.msra.mxu0 0.0
  %955 = vmatprep.subr.mxu0 0.0
  %956 = vmatpush1.xpose.msra.mxu0 0.0
  %957 = vmatprep.subr.mxu0 0.0
  %958 = vmatpush1.xpose.msra.mxu0 0.0
  %959 = vmatprep.subr.mxu0 0.0
  %960 = vmatpush1.xpose.msra.mxu0 0.0
  %961 = vmatprep.subr.mxu0 0.0
  %962 = vmatpush1.xpose.msra.mxu0 0.0
  %963 = vmatprep.subr.mxu0 0.0
  %964 = vmatpush1.xpose.msra.mxu0 0.0
  %965 = vmatprep.subr.mxu0 0.0
  %966 = vmatpush1.xpose.msra.mxu0 0.0
  %967 = vmatprep.subr.mxu0 0.0
  %968 = vmatpush1.xpose.msra.mxu0 0.0
  %969 = vmatprep.subr.mxu0 0.0
  %970 = vmatpush1.xpose.msra.mxu0 0.0
  %971 = vmatprep.subr.mxu0 0.0
  %972 = vmatpush1.xpose.msra.mxu0 0.0
  %973 = vmatprep.subr.mxu0 0.0
  %974 = vmatpush1.xpose.msra.mxu0 0.0
  %975 = vmatprep.subr.mxu0 0.0
  %976 = vmatpush1.xpose.msra.mxu0 0.0
  %977 = vmatprep.subr.mxu0 0.0
  %978 = vmatpush1.xpose.msra.mxu0 0.0
  %979 = vmatprep.subr.mxu0 0.0
  %980 = vmatpush1.xpose.msra.mxu0 0.0
  %981 = vmatprep.subr.mxu0 0.0
  %982 = vmatpush1.xpose.msra.mxu0 0.0
  %983 = vmatprep.subr.mxu0 0.0
  %984 = vmatpush1.xpose.msra.mxu0 0.0
  %985 = vmatprep.subr.mxu0 0.0
  %986 = vmatpush1.xpose.msra.mxu0 0.0
  %987 = vmatprep.subr.mxu0 0.0
  %988 = vmatpush1.xpose.msra.mxu0 0.0
  %989 = vmatprep.subr.mxu0 0.0
  %990 = vmatpush1.xpose.msra.mxu0 0.0
  %991 = vmatprep.subr.mxu0 0.0
  %992 = vmatpush1.xpose.msra.mxu0 0.0
  %993 = vmatprep.subr.mxu0 0.0
  %994 = vmatpush1.xpose.msra.mxu0 0.0
  %995 = vmatprep.subr.mxu0 0.0
  %996 = vmatpush1.xpose.msra.mxu0 0.0
  %997 = vmatprep.subr.mxu0 0.0
  %998 = vmatpush1.xpose.msra.mxu0 0.0
  %999 = vmatprep.subr.mxu0 0.0
  %1000 = vmatpush1.xpose.msra.mxu0 0.0
  %1001 = vmatprep.subr.mxu0 0.0
  %1002 = vmatpush1.xpose.msra.mxu0 0.0
  %1003 = vmatprep.subr.mxu0 0.0
  %1004 = vmatpush1.xpose.msra.mxu0 0.0
  %1005 = vmatprep.mubr.f32.mxu0 0.0
  %1006 = vmatmul.mubr.f32.gmra.mrb[0].mxu0 %v937
  %v1007 = vpop.f32.mrb[0].mxu0
  %v1008 = vadd.f32 0.0, %v1007
  %v1009 = vpop.f32.mrb[0].mxu0
  %1010 = vdwg.mxu0
  %v1011 = vlaneseq
  %v1012 = vshrl.u32 %v1011, 7
  %v1013 = vsub.s32 0, %v1012
  %v1014 = vrot.slane %v529, %v1013
  %1015 = vrot.lane.b32.xlu0 %v1014, 120
  %v1016 = vpop.permute.xlu0 %1015
  %1017 = vrot.lane.b32.xlu0 %v128, 120
  %v1018 = vpop.permute.xlu0 %1017
  %v1019 = vsel %vm134, %v1016, 0
  %v1021 = vsel %vm134, %v1018, 0
  %1023 = vmatprep.subr.mxu0 0.0
  %1024 = vmatpush1.xpose.msra.mxu0 %v1021
  %1025 = vmatprep.subr.mxu0 0.0
  %1026 = vmatpush1.xpose.msra.mxu0 0.0
  %1027 = vmatprep.subr.mxu0 0.0
  %1028 = vmatpush1.xpose.msra.mxu0 0.0
  %1029 = vmatprep.subr.mxu0 0.0
  %1030 = vmatpush1.xpose.msra.mxu0 0.0
  %1031 = vmatprep.subr.mxu0 0.0
  %1032 = vmatpush1.xpose.msra.mxu0 0.0
  %1033 = vmatprep.subr.mxu0 0.0
  %1034 = vmatpush1.xpose.msra.mxu0 0.0
  %1035 = vmatprep.subr.mxu0 0.0
  %1036 = vmatpush1.xpose.msra.mxu0 0.0
  %1037 = vmatprep.subr.mxu0 0.0
  %1038 = vmatpush1.xpose.msra.mxu0 0.0
  %1039 = vmatprep.subr.mxu0 0.0
  %1040 = vmatpush1.xpose.msra.mxu0 0.0
  %1041 = vmatprep.subr.mxu0 0.0
  %1042 = vmatpush1.xpose.msra.mxu0 0.0
  %1043 = vmatprep.subr.mxu0 0.0
  %1044 = vmatpush1.xpose.msra.mxu0 0.0
  %1045 = vmatprep.subr.mxu0 0.0
  %1046 = vmatpush1.xpose.msra.mxu0 0.0
  %1047 = vmatprep.subr.mxu0 0.0
  %1048 = vmatpush1.xpose.msra.mxu0 0.0
  %1049 = vmatprep.subr.mxu0 0.0
  %1050 = vmatpush1.xpose.msra.mxu0 0.0
  %1051 = vmatprep.subr.mxu0 0.0
  %1052 = vmatpush1.xpose.msra.mxu0 0.0
  %1053 = vmatprep.subr.mxu0 0.0
  %1054 = vmatpush1.xpose.msra.mxu0 0.0
  %1055 = vmatprep.subr.mxu0 0.0
  %1056 = vmatpush1.xpose.msra.mxu0 0.0
  %1057 = vmatprep.subr.mxu0 0.0
  %1058 = vmatpush1.xpose.msra.mxu0 0.0
  %1059 = vmatprep.subr.mxu0 0.0
  %1060 = vmatpush1.xpose.msra.mxu0 0.0
  %1061 = vmatprep.subr.mxu0 0.0
  %1062 = vmatpush1.xpose.msra.mxu0 0.0
  %1063 = vmatprep.subr.mxu0 0.0
  %1064 = vmatpush1.xpose.msra.mxu0 0.0
  %1065 = vmatprep.subr.mxu0 0.0
  %1066 = vmatpush1.xpose.msra.mxu0 0.0
  %1067 = vmatprep.subr.mxu0 0.0
  %1068 = vmatpush1.xpose.msra.mxu0 0.0
  %1069 = vmatprep.subr.mxu0 0.0
  %1070 = vmatpush1.xpose.msra.mxu0 0.0
  %1071 = vmatprep.subr.mxu0 0.0
  %1072 = vmatpush1.xpose.msra.mxu0 0.0
  %1073 = vmatprep.subr.mxu0 0.0
  %1074 = vmatpush1.xpose.msra.mxu0 0.0
  %1075 = vmatprep.subr.mxu0 0.0
  %1076 = vmatpush1.xpose.msra.mxu0 0.0
  %1077 = vmatprep.subr.mxu0 0.0
  %1078 = vmatpush1.xpose.msra.mxu0 0.0
  %1079 = vmatprep.subr.mxu0 0.0
  %1080 = vmatpush1.xpose.msra.mxu0 0.0
  %1081 = vmatprep.subr.mxu0 0.0
  %1082 = vmatpush1.xpose.msra.mxu0 0.0
  %1083 = vmatprep.subr.mxu0 0.0
  %1084 = vmatpush1.xpose.msra.mxu0 0.0
  %1085 = vmatprep.subr.mxu0 0.0
  %1086 = vmatpush1.xpose.msra.mxu0 0.0
  %1087 = vmatprep.mubr.f32.mxu0 0.0
  %1088 = vmatmul.mubr.f32.gmra.mrb[0].mxu0 %v1019
  %v1089 = vpop.f32.mrb[0].mxu0
  %v1090 = vadd.f32 0.0, %v1089
  %v1091 = vpop.f32.mrb[0].mxu0
  %1092 = vdwg.mxu0
  %v1093 = vmul.f32 %v1008, 0.35355338
  %v1094 = vmul.f32 %v1090, 0.35355338
  %v1095 = vsel %vm682, %v1093, -inf
  %1096 = vmax.xlane.f32.xlu0 %v1095
  %v1097 = vpop.xlane.xlu0 %1096
  %v1098 = vsel %vm682, %v1094, -inf
  %1099 = vmax.xlane.f32.xlu0 %v1098
  %v1100 = vpop.xlane.xlu0 %1099
  %v1101 = vsub.f32 %v1093, %v1097
  %v1102 = vsub.f32 %v1094, %v1100
  %v1103 = vmul.f32 %v1101, 1.442695
  %v1104 = vpow.pop %v1103
  %v1105 = vmul.f32 %v1102, 1.442695
  %v1106 = vpow.pop %v1105
  %v1107 = vsel %vm682, %v1104, 0.0
  %1108 = vadd.xlane.f32.xlu0 %v1107
  %v1109 = vpop.xlane.xlu0 %1108
  %v1110 = vsel %vm682, %v1106, 0.0
  %1111 = vadd.xlane.f32.xlu0 %v1110
  %v1112 = vpop.xlane.xlu0 %1111
  %v1113 = vrcp.pop %v1109
  %v1114 = vrcp.pop %v1112
  %v1115 = vmul.f32 %v1104, %v1113
  %v1116 = vmul.f32 %v1106, %v1114
  %1118 = vrot.lane.b32.xlu0 %v129, 120
  %v1119 = vpop.permute.xlu0 %1118
  %v1122 = vsel %vm134, %v1115, 0
  %1124 = vmatprep.subr.mxu0 0.0
  %1125 = vmatpush1.msra.mxu0 %v1119
  %1126 = vmatprep.subr.mxu0 0.0
  %1127 = vmatpush1.msra.mxu0 0.0
  %1128 = vmatprep.subr.mxu0 0.0
  %1129 = vmatpush1.msra.mxu0 0.0
  %1130 = vmatprep.subr.mxu0 0.0
  %1131 = vmatpush1.msra.mxu0 0.0
  %1132 = vmatprep.subr.mxu0 0.0
  %1133 = vmatpush1.msra.mxu0 0.0
  %1134 = vmatprep.subr.mxu0 0.0
  %1135 = vmatpush1.msra.mxu0 0.0
  %1136 = vmatprep.subr.mxu0 0.0
  %1137 = vmatpush1.msra.mxu0 0.0
  %1138 = vmatprep.subr.mxu0 0.0
  %1139 = vmatpush1.msra.mxu0 0.0
  %1140 = vmatprep.subr.mxu0 0.0
  %1141 = vmatpush1.msra.mxu0 0.0
  %1142 = vmatprep.subr.mxu0 0.0
  %1143 = vmatpush1.msra.mxu0 0.0
  %1144 = vmatprep.subr.mxu0 0.0
  %1145 = vmatpush1.msra.mxu0 0.0
  %1146 = vmatprep.subr.mxu0 0.0
  %1147 = vmatpush1.msra.mxu0 0.0
  %1148 = vmatprep.subr.mxu0 0.0
  %1149 = vmatpush1.msra.mxu0 0.0
  %1150 = vmatprep.subr.mxu0 0.0
  %1151 = vmatpush1.msra.mxu0 0.0
  %1152 = vmatprep.subr.mxu0 0.0
  %1153 = vmatpush1.msra.mxu0 0.0
  %1154 = vmatprep.subr.mxu0 0.0
  %1155 = vmatpush1.msra.mxu0 0.0
  %1156 = vmatprep.subr.mxu0 0.0
  %1157 = vmatpush1.msra.mxu0 0.0
  %1158 = vmatprep.subr.mxu0 0.0
  %1159 = vmatpush1.msra.mxu0 0.0
  %1160 = vmatprep.subr.mxu0 0.0
  %1161 = vmatpush1.msra.mxu0 0.0
  %1162 = vmatprep.subr.mxu0 0.0
  %1163 = vmatpush1.msra.mxu0 0.0
  %1164 = vmatprep.subr.mxu0 0.0
  %1165 = vmatpush1.msra.mxu0 0.0
  %1166 = vmatprep.subr.mxu0 0.0
  %1167 = vmatpush1.msra.mxu0 0.0
  %1168 = vmatprep.subr.mxu0 0.0
  %1169 = vmatpush1.msra.mxu0 0.0
  %1170 = vmatprep.subr.mxu0 0.0
  %1171 = vmatpush1.msra.mxu0 0.0
  %1172 = vmatprep.subr.mxu0 0.0
  %1173 = vmatpush1.msra.mxu0 0.0
  %1174 = vmatprep.subr.mxu0 0.0
  %1175 = vmatpush1.msra.mxu0 0.0
  %1176 = vmatprep.subr.mxu0 0.0
  %1177 = vmatpush1.msra.mxu0 0.0
  %1178 = vmatprep.subr.mxu0 0.0
  %1179 = vmatpush1.msra.mxu0 0.0
  %1180 = vmatprep.subr.mxu0 0.0
  %1181 = vmatpush1.msra.mxu0 0.0
  %1182 = vmatprep.subr.mxu0 0.0
  %1183 = vmatpush1.msra.mxu0 0.0
  %1184 = vmatprep.subr.mxu0 0.0
  %1185 = vmatpush1.msra.mxu0 0.0
  %1186 = vmatprep.subr.mxu0 0.0
  %1187 = vmatpush1.msra.mxu0 0.0
  %1188 = vmatprep.mubr.f32.mxu0 0.0
  %1189 = vmatmul.mubr.f32.gmra.mrb[0].mxu0 %v1122
  %v1190 = vpop.f32.mrb[0].mxu0
  %v1191 = vadd.f32 0.0, %v1190
  %v1192 = vpop.f32.mrb[0].mxu0
  %1193 = vdwg.mxu0
  %1195 = vrot.lane.b32.xlu0 %v130, 120
  %v1196 = vpop.permute.xlu0 %1195
  %v1199 = vsel %vm134, %v1116, 0
  %1201 = vmatprep.subr.mxu0 0.0
  %1202 = vmatpush1.msra.mxu0 %v1196
  %1203 = vmatprep.subr.mxu0 0.0
  %1204 = vmatpush1.msra.mxu0 0.0
  %1205 = vmatprep.subr.mxu0 0.0
  %1206 = vmatpush1.msra.mxu0 0.0
  %1207 = vmatprep.subr.mxu0 0.0
  %1208 = vmatpush1.msra.mxu0 0.0
  %1209 = vmatprep.subr.mxu0 0.0
  %1210 = vmatpush1.msra.mxu0 0.0
  %1211 = vmatprep.subr.mxu0 0.0
  %1212 = vmatpush1.msra.mxu0 0.0
  %1213 = vmatprep.subr.mxu0 0.0
  %1214 = vmatpush1.msra.mxu0 0.0
  %1215 = vmatprep.subr.mxu0 0.0
  %1216 = vmatpush1.msra.mxu0 0.0
  %1217 = vmatprep.subr.mxu0 0.0
  %1218 = vmatpush1.msra.mxu0 0.0
  %1219 = vmatprep.subr.mxu0 0.0
  %1220 = vmatpush1.msra.mxu0 0.0
  %1221 = vmatprep.subr.mxu0 0.0
  %1222 = vmatpush1.msra.mxu0 0.0
  %1223 = vmatprep.subr.mxu0 0.0
  %1224 = vmatpush1.msra.mxu0 0.0
  %1225 = vmatprep.subr.mxu0 0.0
  %1226 = vmatpush1.msra.mxu0 0.0
  %1227 = vmatprep.subr.mxu0 0.0
  %1228 = vmatpush1.msra.mxu0 0.0
  %1229 = vmatprep.subr.mxu0 0.0
  %1230 = vmatpush1.msra.mxu0 0.0
  %1231 = vmatprep.subr.mxu0 0.0
  %1232 = vmatpush1.msra.mxu0 0.0
  %1233 = vmatprep.subr.mxu0 0.0
  %1234 = vmatpush1.msra.mxu0 0.0
  %1235 = vmatprep.subr.mxu0 0.0
  %1236 = vmatpush1.msra.mxu0 0.0
  %1237 = vmatprep.subr.mxu0 0.0
  %1238 = vmatpush1.msra.mxu0 0.0
  %1239 = vmatprep.subr.mxu0 0.0
  %1240 = vmatpush1.msra.mxu0 0.0
  %1241 = vmatprep.subr.mxu0 0.0
  %1242 = vmatpush1.msra.mxu0 0.0
  %1243 = vmatprep.subr.mxu0 0.0
  %1244 = vmatpush1.msra.mxu0 0.0
  %1245 = vmatprep.subr.mxu0 0.0
  %1246 = vmatpush1.msra.mxu0 0.0
  %1247 = vmatprep.subr.mxu0 0.0
  %1248 = vmatpush1.msra.mxu0 0.0
  %1249 = vmatprep.subr.mxu0 0.0
  %1250 = vmatpush1.msra.mxu0 0.0
  %1251 = vmatprep.subr.mxu0 0.0
  %1252 = vmatpush1.msra.mxu0 0.0
  %1253 = vmatprep.subr.mxu0 0.0
  %1254 = vmatpush1.msra.mxu0 0.0
  %1255 = vmatprep.subr.mxu0 0.0
  %1256 = vmatpush1.msra.mxu0 0.0
  %1257 = vmatprep.subr.mxu0 0.0
  %1258 = vmatpush1.msra.mxu0 0.0
  %1259 = vmatprep.subr.mxu0 0.0
  %1260 = vmatpush1.msra.mxu0 0.0
  %1261 = vmatprep.subr.mxu0 0.0
  %1262 = vmatpush1.msra.mxu0 0.0
  %1263 = vmatprep.subr.mxu0 0.0
  %1264 = vmatpush1.msra.mxu0 0.0
  %1265 = vmatprep.mubr.f32.mxu0 0.0
  %1266 = vmatmul.mubr.f32.gmra.mrb[0].mxu0 %v1199
  %v1267 = vpop.f32.mrb[0].mxu0
  %v1268 = vadd.f32 0.0, %v1267
  %v1269 = vpop.f32.mrb[0].mxu0
  %1270 = vdwg.mxu0
  %v1273 = vrot.slane %v1268, 7
  %v1274 = vsel %vm854, %v1273, %v1191
  %v1275 = vsel %vm134, %v1274, 0
  %1277 = vmatprep.subr.mxu0 0.0
  %1278 = vmatpush1.msra.mxu0 %v27
  %1279 = vmatprep.subr.mxu0 0.0
  %1280 = vmatpush1.msra.mxu0 0.0
  %1281 = vmatprep.subr.mxu0 0.0
  %1282 = vmatpush1.msra.mxu0 0.0
  %1283 = vmatprep.subr.mxu0 0.0
  %1284 = vmatpush1.msra.mxu0 0.0
  %1285 = vmatprep.subr.mxu0 0.0
  %1286 = vmatpush1.msra.mxu0 0.0
  %1287 = vmatprep.subr.mxu0 0.0
  %1288 = vmatpush1.msra.mxu0 0.0
  %1289 = vmatprep.subr.mxu0 0.0
  %1290 = vmatpush1.msra.mxu0 0.0
  %1291 = vmatprep.subr.mxu0 0.0
  %1292 = vmatpush1.msra.mxu0 0.0
  %1293 = vmatprep.subr.mxu0 0.0
  %1294 = vmatpush1.msra.mxu0 0.0
  %1295 = vmatprep.subr.mxu0 0.0
  %1296 = vmatpush1.msra.mxu0 0.0
  %1297 = vmatprep.subr.mxu0 0.0
  %1298 = vmatpush1.msra.mxu0 0.0
  %1299 = vmatprep.subr.mxu0 0.0
  %1300 = vmatpush1.msra.mxu0 0.0
  %1301 = vmatprep.subr.mxu0 0.0
  %1302 = vmatpush1.msra.mxu0 0.0
  %1303 = vmatprep.subr.mxu0 0.0
  %1304 = vmatpush1.msra.mxu0 0.0
  %1305 = vmatprep.subr.mxu0 0.0
  %1306 = vmatpush1.msra.mxu0 0.0
  %1307 = vmatprep.subr.mxu0 0.0
  %1308 = vmatpush1.msra.mxu0 0.0
  %1309 = vmatprep.subr.mxu0 0.0
  %1310 = vmatpush1.msra.mxu0 0.0
  %1311 = vmatprep.subr.mxu0 0.0
  %1312 = vmatpush1.msra.mxu0 0.0
  %1313 = vmatprep.subr.mxu0 0.0
  %1314 = vmatpush1.msra.mxu0 0.0
  %1315 = vmatprep.subr.mxu0 0.0
  %1316 = vmatpush1.msra.mxu0 0.0
  %1317 = vmatprep.subr.mxu0 0.0
  %1318 = vmatpush1.msra.mxu0 0.0
  %1319 = vmatprep.subr.mxu0 0.0
  %1320 = vmatpush1.msra.mxu0 0.0
  %1321 = vmatprep.subr.mxu0 0.0
  %1322 = vmatpush1.msra.mxu0 0.0
  %1323 = vmatprep.subr.mxu0 0.0
  %1324 = vmatpush1.msra.mxu0 0.0
  %1325 = vmatprep.subr.mxu0 0.0
  %1326 = vmatpush1.msra.mxu0 0.0
  %1327 = vmatprep.subr.mxu0 0.0
  %1328 = vmatpush1.msra.mxu0 0.0
  %1329 = vmatprep.subr.mxu0 0.0
  %1330 = vmatpush1.msra.mxu0 0.0
  %1331 = vmatprep.subr.mxu0 0.0
  %1332 = vmatpush1.msra.mxu0 0.0
  %1333 = vmatprep.subr.mxu0 0.0
  %1334 = vmatpush1.msra.mxu0 0.0
  %1335 = vmatprep.subr.mxu0 0.0
  %1336 = vmatpush1.msra.mxu0 0.0
  %1337 = vmatprep.subr.mxu0 0.0
  %1338 = vmatpush1.msra.mxu0 0.0
  %1339 = vmatprep.subr.mxu0 0.0
  %1340 = vmatpush1.msra.mxu0 0.0
  %1341 = vmatprep.mubr.f32.mxu0 0.0
  %1342 = vmatmul.mubr.f32.gmra.mrb[0].mxu0 %v1275
  %v1343 = vpop.f32.mrb[0].mxu0
  %v1344 = vadd.f32 0.0, %v1343
  %v1345 = vpop.f32.mrb[0].mxu0
  %1346 = vdwg.mxu0
  %v1347 = vadd.f32 %v928, %v1344
  %vm1348 = vcmask 261120
  %v1349 = vsel %vm1348, %v131, 0
  %1351 = vmatprep.subr.mxu0 0.0
  %1352 = vmatpush1.msra.mxu0 %v31
  %1353 = vmatprep.subr.mxu0 0.0
  %1354 = vmatpush1.msra.mxu0 %v32
  %1355 = vmatprep.subr.mxu0 0.0
  %1356 = vmatpush1.msra.mxu0 %v33
  %1357 = vmatprep.subr.mxu0 0.0
  %1358 = vmatpush1.msra.mxu0 %v34
  %1359 = vmatprep.subr.mxu0 0.0
  %1360 = vmatpush1.msra.mxu0 0.0
  %1361 = vmatprep.subr.mxu0 0.0
  %1362 = vmatpush1.msra.mxu0 0.0
  %1363 = vmatprep.subr.mxu0 0.0
  %1364 = vmatpush1.msra.mxu0 0.0
  %1365 = vmatprep.subr.mxu0 0.0
  %1366 = vmatpush1.msra.mxu0 0.0
  %1367 = vmatprep.subr.mxu0 0.0
  %1368 = vmatpush1.msra.mxu0 0.0
  %1369 = vmatprep.subr.mxu0 0.0
  %1370 = vmatpush1.msra.mxu0 0.0
  %1371 = vmatprep.subr.mxu0 0.0
  %1372 = vmatpush1.msra.mxu0 0.0
  %1373 = vmatprep.subr.mxu0 0.0
  %1374 = vmatpush1.msra.mxu0 0.0
  %1375 = vmatprep.subr.mxu0 0.0
  %1376 = vmatpush1.msra.mxu0 0.0
  %1377 = vmatprep.subr.mxu0 0.0
  %1378 = vmatpush1.msra.mxu0 0.0
  %1379 = vmatprep.subr.mxu0 0.0
  %1380 = vmatpush1.msra.mxu0 0.0
  %1381 = vmatprep.subr.mxu0 0.0
  %1382 = vmatpush1.msra.mxu0 0.0
  %1383 = vmatprep.subr.mxu0 0.0
  %1384 = vmatpush1.msra.mxu0 0.0
  %1385 = vmatprep.subr.mxu0 0.0
  %1386 = vmatpush1.msra.mxu0 0.0
  %1387 = vmatprep.subr.mxu0 0.0
  %1388 = vmatpush1.msra.mxu0 0.0
  %1389 = vmatprep.subr.mxu0 0.0
  %1390 = vmatpush1.msra.mxu0 0.0
  %1391 = vmatprep.subr.mxu0 0.0
  %1392 = vmatpush1.msra.mxu0 0.0
  %1393 = vmatprep.subr.mxu0 0.0
  %1394 = vmatpush1.msra.mxu0 0.0
  %1395 = vmatprep.subr.mxu0 0.0
  %1396 = vmatpush1.msra.mxu0 0.0
  %1397 = vmatprep.subr.mxu0 0.0
  %1398 = vmatpush1.msra.mxu0 0.0
  %1399 = vmatprep.subr.mxu0 0.0
  %1400 = vmatpush1.msra.mxu0 0.0
  %1401 = vmatprep.subr.mxu0 0.0
  %1402 = vmatpush1.msra.mxu0 0.0
  %1403 = vmatprep.subr.mxu0 0.0
  %1404 = vmatpush1.msra.mxu0 0.0
  %1405 = vmatprep.subr.mxu0 0.0
  %1406 = vmatpush1.msra.mxu0 0.0
  %1407 = vmatprep.subr.mxu0 0.0
  %1408 = vmatpush1.msra.mxu0 0.0
  %1409 = vmatprep.subr.mxu0 0.0
  %1410 = vmatpush1.msra.mxu0 0.0
  %1411 = vmatprep.subr.mxu0 0.0
  %1412 = vmatpush1.msra.mxu0 0.0
  %1413 = vmatprep.subr.mxu0 0.0
  %1414 = vmatpush1.msra.mxu0 0.0
  %1415 = vmatprep.mubr.f32.mxu0 0.0
  %1416 = vmatmul.mubr.f32.gmra.mrb[0].mxu0 %v1349
  %v1417 = vpop.f32.mrb[0].mxu0
  %v1418 = vadd.f32 0.0, %v1417
  %v1419 = vpop.f32.mrb[0].mxu0
  %1420 = vdwg.mxu0
  %vm1421 = vcmask 130048
  %v1423 = vsel %vm1421, %v1347, 0
  %1425 = vmatprep.subr.mxu0 0.0
  %1426 = vmatpush1.msra.mxu0 %v29
  %1427 = vmatprep.subr.mxu0 0.0
  %1428 = vmatpush1.msra.mxu0 %v30
  %1429 = vmatprep.subr.mxu0 0.0
  %1430 = vmatpush1.msra.mxu0 0.0
  %1431 = vmatprep.subr.mxu0 0.0
  %1432 = vmatpush1.msra.mxu0 0.0
  %1433 = vmatprep.subr.mxu0 0.0
  %1434 = vmatpush1.msra.mxu0 0.0
  %1435 = vmatprep.subr.mxu0 0.0
  %1436 = vmatpush1.msra.mxu0 0.0
  %1437 = vmatprep.subr.mxu0 0.0
  %1438 = vmatpush1.msra.mxu0 0.0
  %1439 = vmatprep.subr.mxu0 0.0
  %1440 = vmatpush1.msra.mxu0 0.0
  %1441 = vmatprep.subr.mxu0 0.0
  %1442 = vmatpush1.msra.mxu0 0.0
  %1443 = vmatprep.subr.mxu0 0.0
  %1444 = vmatpush1.msra.mxu0 0.0
  %1445 = vmatprep.subr.mxu0 0.0
  %1446 = vmatpush1.msra.mxu0 0.0
  %1447 = vmatprep.subr.mxu0 0.0
  %1448 = vmatpush1.msra.mxu0 0.0
  %1449 = vmatprep.subr.mxu0 0.0
  %1450 = vmatpush1.msra.mxu0 0.0
  %1451 = vmatprep.subr.mxu0 0.0
  %1452 = vmatpush1.msra.mxu0 0.0
  %1453 = vmatprep.subr.mxu0 0.0
  %1454 = vmatpush1.msra.mxu0 0.0
  %1455 = vmatprep.subr.mxu0 0.0
  %1456 = vmatpush1.msra.mxu0 0.0
  %1457 = vmatprep.subr.mxu0 0.0
  %1458 = vmatpush1.msra.mxu0 0.0
  %1459 = vmatprep.subr.mxu0 0.0
  %1460 = vmatpush1.msra.mxu0 0.0
  %1461 = vmatprep.subr.mxu0 0.0
  %1462 = vmatpush1.msra.mxu0 0.0
  %1463 = vmatprep.subr.mxu0 0.0
  %1464 = vmatpush1.msra.mxu0 0.0
  %1465 = vmatprep.subr.mxu0 0.0
  %1466 = vmatpush1.msra.mxu0 0.0
  %1467 = vmatprep.subr.mxu0 0.0
  %1468 = vmatpush1.msra.mxu0 0.0
  %1469 = vmatprep.subr.mxu0 0.0
  %1470 = vmatpush1.msra.mxu0 0.0
  %1471 = vmatprep.subr.mxu0 0.0
  %1472 = vmatpush1.msra.mxu0 0.0
  %1473 = vmatprep.subr.mxu0 0.0
  %1474 = vmatpush1.msra.mxu0 0.0
  %1475 = vmatprep.subr.mxu0 0.0
  %1476 = vmatpush1.msra.mxu0 0.0
  %1477 = vmatprep.subr.mxu0 0.0
  %1478 = vmatpush1.msra.mxu0 0.0
  %1479 = vmatprep.subr.mxu0 0.0
  %1480 = vmatpush1.msra.mxu0 0.0
  %1481 = vmatprep.subr.mxu0 0.0
  %1482 = vmatpush1.msra.mxu0 0.0
  %1483 = vmatprep.subr.mxu0 0.0
  %1484 = vmatpush1.msra.mxu0 0.0
  %1485 = vmatprep.subr.mxu0 0.0
  %1486 = vmatpush1.msra.mxu0 0.0
  %1487 = vmatprep.subr.mxu0 0.0
  %1488 = vmatpush1.msra.mxu0 0.0
  %1489 = vmatprep.mubr.f32.mxu0 0.0
  %1490 = vmatmul.mubr.f32.gmra.mrb[0].mxu0 %v1423
  %v1491 = vpop.f32.mrb[0].mxu0
  %v1492 = vadd.f32 %v1418, %v1491
  %v1493 = vpop.f32.mrb[0].mxu0
  %1494 = vdwg.mxu0
  %v1495 = vadd.f32 %v1492, %v35
  %v1496 = vxor.u32 %v1495, 2147483648
  %v1497 = vmul.f32 %v1496, 1.442695
  %v1498 = vpow.pop %v1497
  %v1499 = vadd.f32 %v1498, 1.0
  %v1500 = vrcp.pop %v1499
  %v1501 = vmul.f32 1.0, %v1500
  %1503 = vrot.lane.b32.xlu0 %v1501, 96
  %v1504 = vpop.permute.xlu0 %1503
  %v1506 = vmul.f32 %v1495, %v1504
  %vm1507 = vcmask 254976
  %v1508 = vsel %vm1507, %v1506, 0.0
  %1509 = vadd.xlane.f32.xlu0 %v1508
  %v1510 = vpop.xlane.xlu0 %1509
  %v1511 = vrcp.pop 32.0
  %v1512 = vmul.f32 %v1510, %v1511
  %v1513 = vsub.f32 %v1506, %v1512
  %v1514 = vmul.f32 %v1513, %v1513
  %v1515 = vsel %vm1507, %v1514, 0.0
  %1516 = vadd.xlane.f32.xlu0 %v1515
  %v1517 = vpop.xlane.xlu0 %1516
  %v1518 = vmul.f32 %v1517, %v1511
  %v1519 = vadd.f32 %v1518, 1e-05
  %v1520 = vrsqrt.pop %v1519
  %v1521 = vmul.f32 %v1513, %v1520
  %v1522 = vmul.f32 %v1521, %v36
  %v1523 = vadd.f32 %v1522, %v37
  %v1525 = vlaneseq
  %v1526 = vshrl.u32 %v1525, 7
  %v1527 = vsub.s32 0, %v1526
  %v1528 = vrot.slane %v133, %v1527
  %v1529 = vlaneseq
  %v1530 = vshrl.u32 %v1529, 7
  %v1531 = vsub.s32 1, %v1530
  %v1532 = vrot.slane %v133, %v1531
  %1533 = vrot.lane.b32.xlu0 %v1528, 96
  %v1534 = vpop.permute.xlu0 %1533
  %1535 = vrot.lane.b32.xlu0 %v1532, 96
  %v1536 = vpop.permute.xlu0 %1535
  %vm1537 = vcmask 785408
  %v1538 = vsel %vm1537, %v1534, %v1536
  %1542 = vrot.lane.b32.xlu0 %v1523, 96
  %v1543 = vpop.permute.xlu0 %1542
  %v1545 = vsel %vm1537, %v1536, %v1543
  %v1547 = vlaneseq
  %v1548 = vshrl.u32 %v1547, 7
  %v1549 = vsub.s32 0, %v1548
  %v1550 = vrot.slane %v103, %v1549
  %v1551 = vlaneseq
  %v1552 = vshrl.u32 %v1551, 7
  %v1553 = vsub.s32 1, %v1552
  %v1554 = vrot.slane %v103, %v1553
  %1557 = vmatprep.subr.mxu0 %v39
  %1558 = vmatpush1.msra.mxu0 %v38
  %1559 = vmatprep.subr.mxu0 %v41
  %1560 = vmatpush1.msra.mxu0 %v40
  %1561 = vmatprep.subr.mxu0 %v43
  %1562 = vmatpush1.msra.mxu0 %v42
  %1563 = vmatprep.subr.mxu0 %v45
  %1564 = vmatpush1.msra.mxu0 %v44
  %1565 = vmatprep.subr.mxu0 %v47
  %1566 = vmatpush1.msra.mxu0 %v46
  %1567 = vmatprep.subr.mxu0 %v49
  %1568 = vmatpush1.msra.mxu0 %v48
  %1569 = vmatprep.subr.mxu0 %v51
  %1570 = vmatpush1.msra.mxu0 %v50
  %1571 = vmatprep.subr.mxu0 %v53
  %1572 = vmatpush1.msra.mxu0 %v52
  %1573 = vmatprep.subr.mxu0 %v55
  %1574 = vmatpush1.msra.mxu0 %v54
  %1575 = vmatprep.subr.mxu0 %v57
  %1576 = vmatpush1.msra.mxu0 %v56
  %1577 = vmatprep.subr.mxu0 %v59
  %1578 = vmatpush1.msra.mxu0 %v58
  %1579 = vmatprep.subr.mxu0 %v61
  %1580 = vmatpush1.msra.mxu0 %v60
  %1581 = vmatprep.subr.mxu0 %v63
  %1582 = vmatpush1.msra.mxu0 %v62
  %1583 = vmatprep.subr.mxu0 %v65
  %1584 = vmatpush1.msra.mxu0 %v64
  %1585 = vmatprep.subr.mxu0 %v67
  %1586 = vmatpush1.msra.mxu0 %v66
  %1587 = vmatprep.subr.mxu0 %v69
  %1588 = vmatpush1.msra.mxu0 %v68
  %1589 = vmatprep.subr.mxu0 %v71
  %1590 = vmatpush1.msra.mxu0 %v70
  %1591 = vmatprep.subr.mxu0 %v73
  %1592 = vmatpush1.msra.mxu0 %v72
  %1593 = vmatprep.subr.mxu0 %v75
  %1594 = vmatpush1.msra.mxu0 %v74
  %1595 = vmatprep.subr.mxu0 %v77
  %1596 = vmatpush1.msra.mxu0 %v76
  %1597 = vmatprep.subr.mxu0 %v79
  %1598 = vmatpush1.msra.mxu0 %v78
  %1599 = vmatprep.subr.mxu0 %v81
  %1600 = vmatpush1.msra.mxu0 %v80
  %1601 = vmatprep.subr.mxu0 %v83
  %1602 = vmatpush1.msra.mxu0 %v82
  %1603 = vmatprep.subr.mxu0 %v85
  %1604 = vmatpush1.msra.mxu0 %v84
  %1605 = vmatprep.subr.mxu0 %v87
  %1606 = vmatpush1.msra.mxu0 %v86
  %1607 = vmatprep.subr.mxu0 %v89
  %1608 = vmatpush1.msra.mxu0 %v88
  %1609 = vmatprep.subr.mxu0 %v91
  %1610 = vmatpush1.msra.mxu0 %v90
  %1611 = vmatprep.subr.mxu0 %v93
  %1612 = vmatpush1.msra.mxu0 %v92
  %1613 = vmatprep.subr.mxu0 %v95
  %1614 = vmatpush1.msra.mxu0 %v94
  %1615 = vmatprep.subr.mxu0 %v97
  %1616 = vmatpush1.msra.mxu0 %v96
  %1617 = vmatprep.subr.mxu0 %v99
  %1618 = vmatpush1.msra.mxu0 %v98
  %1619 = vmatprep.subr.mxu0 %v101
  %1620 = vmatpush1.msra.mxu0 %v100
  %1621 = vmatprep.mubr.f32.mxu0 %v1545
  %1622 = vmatmul.mubr.f32.gmra.mrb[0].mxu0 %v1538
  %v1623 = vpop.f32.mrb[0].mxu0
  %v1624 = vadd.f32 %v1550, %v1623
  %v1625 = vpop.f32.mrb[0].mxu0
  %v1626 = vadd.f32 %v1554, %v1625
  %1627 = vdwg.mxu0
  %v1628 = vxor.u32 %v1626, 2147483648
  %v1629 = vmul.f32 %v1628, 1.442695
  %v1630 = vpow.pop %v1629
  %v1631 = vadd.f32 %v1630, 1.0
  %v1632 = vrcp.pop %v1631
  %v1633 = vmul.f32 1.0, %v1632
  %v1634 = vmul.f32 %v1624, %v1633
  %1635 = vmatprep.subr.mxu0 0.0
  %1636 = vmatpush1.msra.mxu0 %v104
  %1637 = vmatprep.subr.mxu0 0.0
  %1638 = vmatpush1.msra.mxu0 %v105
  %1639 = vmatprep.subr.mxu0 0.0
  %1640 = vmatpush1.msra.mxu0 %v106
  %1641 = vmatprep.subr.mxu0 0.0
  %1642 = vmatpush1.msra.mxu0 %v107
  %1643 = vmatprep.subr.mxu0 0.0
  %1644 = vmatpush1.msra.mxu0 %v108
  %1645 = vmatprep.subr.mxu0 0.0
  %1646 = vmatpush1.msra.mxu0 %v109
  %1647 = vmatprep.subr.mxu0 0.0
  %1648 = vmatpush1.msra.mxu0 %v110
  %1649 = vmatprep.subr.mxu0 0.0
  %1650 = vmatpush1.msra.mxu0 %v111
  %1651 = vmatprep.subr.mxu0 0.0
  %1652 = vmatpush1.msra.mxu0 %v112
  %1653 = vmatprep.subr.mxu0 0.0
  %1654 = vmatpush1.msra.mxu0 %v113
  %1655 = vmatprep.subr.mxu0 0.0
  %1656 = vmatpush1.msra.mxu0 %v114
  %1657 = vmatprep.subr.mxu0 0.0
  %1658 = vmatpush1.msra.mxu0 %v115
  %1659 = vmatprep.subr.mxu0 0.0
  %1660 = vmatpush1.msra.mxu0 %v116
  %1661 = vmatprep.subr.mxu0 0.0
  %1662 = vmatpush1.msra.mxu0 %v117
  %1663 = vmatprep.subr.mxu0 0.0
  %1664 = vmatpush1.msra.mxu0 %v118
  %1665 = vmatprep.subr.mxu0 0.0
  %1666 = vmatpush1.msra.mxu0 %v119
  %1667 = vmatprep.subr.mxu0 0.0
  %1668 = vmatpush1.msra.mxu0 0.0
  %1669 = vmatprep.subr.mxu0 0.0
  %1670 = vmatpush1.msra.mxu0 0.0
  %1671 = vmatprep.subr.mxu0 0.0
  %1672 = vmatpush1.msra.mxu0 0.0
  %1673 = vmatprep.subr.mxu0 0.0
  %1674 = vmatpush1.msra.mxu0 0.0
  %1675 = vmatprep.subr.mxu0 0.0
  %1676 = vmatpush1.msra.mxu0 0.0
  %1677 = vmatprep.subr.mxu0 0.0
  %1678 = vmatpush1.msra.mxu0 0.0
  %1679 = vmatprep.subr.mxu0 0.0
  %1680 = vmatpush1.msra.mxu0 0.0
  %1681 = vmatprep.subr.mxu0 0.0
  %1682 = vmatpush1.msra.mxu0 0.0
  %1683 = vmatprep.subr.mxu0 0.0
  %1684 = vmatpush1.msra.mxu0 0.0
  %1685 = vmatprep.subr.mxu0 0.0
  %1686 = vmatpush1.msra.mxu0 0.0
  %1687 = vmatprep.subr.mxu0 0.0
  %1688 = vmatpush1.msra.mxu0 0.0
  %1689 = vmatprep.subr.mxu0 0.0
  %1690 = vmatpush1.msra.mxu0 0.0
  %1691 = vmatprep.subr.mxu0 0.0
  %1692 = vmatpush1.msra.mxu0 0.0
  %1693 = vmatprep.subr.mxu0 0.0
  %1694 = vmatpush1.msra.mxu0 0.0
  %1695 = vmatprep.subr.mxu0 0.0
  %1696 = vmatpush1.msra.mxu0 0.0
  %1697 = vmatprep.subr.mxu0 0.0
  %1698 = vmatpush1.msra.mxu0 0.0
  %1699 = vmatprep.mubr.f32.mxu0 0.0
  %1700 = vmatmul.mubr.f32.gmra.mrb[0].mxu0 %v1634
  %v1701 = vpop.f32.mrb[0].mxu0
  %v1702 = vadd.f32 %v120, %v1701
  %v1703 = vpop.f32.mrb[0].mxu0
  %1704 = vdwg.mxu0
  %v1705 = vxor.u32 %v1702, 2147483648
  %v1706 = vmul.f32 %v1705, 1.442695
  %v1707 = vpow.pop %v1706
  %v1708 = vadd.f32 %v1707, 1.0
  %v1709 = vrcp.pop %v1708
  %v1710 = vmul.f32 1.0, %v1709
  %1712 = vrot.lane.b32.xlu0 %v1710, 96
  %v1713 = vpop.permute.xlu0 %1712
  %v1715 = vmul.f32 %v1702, %v1713
  %v1717 = vsel %vm134, %v1715, 0
  %1719 = vmatprep.subr.mxu0 0.0
  %1720 = vmatpush1.msra.mxu0 %v16
  %1721 = vmatprep.subr.mxu0 0.0
  %1722 = vmatpush1.msra.mxu0 0.0
  %1723 = vmatprep.subr.mxu0 0.0
  %1724 = vmatpush1.msra.mxu0 0.0
  %1725 = vmatprep.subr.mxu0 0.0
  %1726 = vmatpush1.msra.mxu0 0.0
  %1727 = vmatprep.subr.mxu0 0.0
  %1728 = vmatpush1.msra.mxu0 0.0
  %1729 = vmatprep.subr.mxu0 0.0
  %1730 = vmatpush1.msra.mxu0 0.0
  %1731 = vmatprep.subr.mxu0 0.0
  %1732 = vmatpush1.msra.mxu0 0.0
  %1733 = vmatprep.subr.mxu0 0.0
  %1734 = vmatpush1.msra.mxu0 0.0
  %1735 = vmatprep.subr.mxu0 0.0
  %1736 = vmatpush1.msra.mxu0 0.0
  %1737 = vmatprep.subr.mxu0 0.0
  %1738 = vmatpush1.msra.mxu0 0.0
  %1739 = vmatprep.subr.mxu0 0.0
  %1740 = vmatpush1.msra.mxu0 0.0
  %1741 = vmatprep.subr.mxu0 0.0
  %1742 = vmatpush1.msra.mxu0 0.0
  %1743 = vmatprep.subr.mxu0 0.0
  %1744 = vmatpush1.msra.mxu0 0.0
  %1745 = vmatprep.subr.mxu0 0.0
  %1746 = vmatpush1.msra.mxu0 0.0
  %1747 = vmatprep.subr.mxu0 0.0
  %1748 = vmatpush1.msra.mxu0 0.0
  %1749 = vmatprep.subr.mxu0 0.0
  %1750 = vmatpush1.msra.mxu0 0.0
  %1751 = vmatprep.subr.mxu0 0.0
  %1752 = vmatpush1.msra.mxu0 0.0
  %1753 = vmatprep.subr.mxu0 0.0
  %1754 = vmatpush1.msra.mxu0 0.0
  %1755 = vmatprep.subr.mxu0 0.0
  %1756 = vmatpush1.msra.mxu0 0.0
  %1757 = vmatprep.subr.mxu0 0.0
  %1758 = vmatpush1.msra.mxu0 0.0
  %1759 = vmatprep.subr.mxu0 0.0
  %1760 = vmatpush1.msra.mxu0 0.0
  %1761 = vmatprep.subr.mxu0 0.0
  %1762 = vmatpush1.msra.mxu0 0.0
  %1763 = vmatprep.subr.mxu0 0.0
  %1764 = vmatpush1.msra.mxu0 0.0
  %1765 = vmatprep.subr.mxu0 0.0
  %1766 = vmatpush1.msra.mxu0 0.0
  %1767 = vmatprep.subr.mxu0 0.0
  %1768 = vmatpush1.msra.mxu0 0.0
  %1769 = vmatprep.subr.mxu0 0.0
  %1770 = vmatpush1.msra.mxu0 0.0
  %1771 = vmatprep.subr.mxu0 0.0
  %1772 = vmatpush1.msra.mxu0 0.0
  %1773 = vmatprep.subr.mxu0 0.0
  %1774 = vmatpush1.msra.mxu0 0.0
  %1775 = vmatprep.subr.mxu0 0.0
  %1776 = vmatpush1.msra.mxu0 0.0
  %1777 = vmatprep.subr.mxu0 0.0
  %1778 = vmatpush1.msra.mxu0 0.0
  %1779 = vmatprep.subr.mxu0 0.0
  %1780 = vmatpush1.msra.mxu0 0.0
  %1781 = vmatprep.subr.mxu0 0.0
  %1782 = vmatpush1.msra.mxu0 0.0
  %1783 = vmatprep.mubr.f32.mxu0 0.0
  %1784 = vmatmul.mubr.f32.gmra.mrb[0].mxu0 %v1717
  %v1785 = vpop.f32.mrb[0].mxu0
  %v1786 = vadd.f32 0.0, %v1785
  %v1787 = vpop.f32.mrb[0].mxu0
  %1788 = vdwg.mxu0
  %1789 = vmatprep.subr.mxu0 0.0
  %1790 = vmatpush1.msra.mxu0 %v17
  %1791 = vmatprep.subr.mxu0 0.0
  %1792 = vmatpush1.msra.mxu0 0.0
  %1793 = vmatprep.subr.mxu0 0.0
  %1794 = vmatpush1.msra.mxu0 0.0
  %1795 = vmatprep.subr.mxu0 0.0
  %1796 = vmatpush1.msra.mxu0 0.0
  %1797 = vmatprep.subr.mxu0 0.0
  %1798 = vmatpush1.msra.mxu0 0.0
  %1799 = vmatprep.subr.mxu0 0.0
  %1800 = vmatpush1.msra.mxu0 0.0
  %1801 = vmatprep.subr.mxu0 0.0
  %1802 = vmatpush1.msra.mxu0 0.0
  %1803 = vmatprep.subr.mxu0 0.0
  %1804 = vmatpush1.msra.mxu0 0.0
  %1805 = vmatprep.subr.mxu0 0.0
  %1806 = vmatpush1.msra.mxu0 0.0
  %1807 = vmatprep.subr.mxu0 0.0
  %1808 = vmatpush1.msra.mxu0 0.0
  %1809 = vmatprep.subr.mxu0 0.0
  %1810 = vmatpush1.msra.mxu0 0.0
  %1811 = vmatprep.subr.mxu0 0.0
  %1812 = vmatpush1.msra.mxu0 0.0
  %1813 = vmatprep.subr.mxu0 0.0
  %1814 = vmatpush1.msra.mxu0 0.0
  %1815 = vmatprep.subr.mxu0 0.0
  %1816 = vmatpush1.msra.mxu0 0.0
  %1817 = vmatprep.subr.mxu0 0.0
  %1818 = vmatpush1.msra.mxu0 0.0
  %1819 = vmatprep.subr.mxu0 0.0
  %1820 = vmatpush1.msra.mxu0 0.0
  %1821 = vmatprep.subr.mxu0 0.0
  %1822 = vmatpush1.msra.mxu0 0.0
  %1823 = vmatprep.subr.mxu0 0.0
  %1824 = vmatpush1.msra.mxu0 0.0
  %1825 = vmatprep.subr.mxu0 0.0
  %1826 = vmatpush1.msra.mxu0 0.0
  %1827 = vmatprep.subr.mxu0 0.0
  %1828 = vmatpush1.msra.mxu0 0.0
  %1829 = vmatprep.subr.mxu0 0.0
  %1830 = vmatpush1.msra.mxu0 0.0
  %1831 = vmatprep.subr.mxu0 0.0
  %1832 = vmatpush1.msra.mxu0 0.0
  %1833 = vmatprep.subr.mxu0 0.0
  %1834 = vmatpush1.msra.mxu0 0.0
  %1835 = vmatprep.subr.mxu0 0.0
  %1836 = vmatpush1.msra.mxu0 0.0
  %1837 = vmatprep.subr.mxu0 0.0
  %1838 = vmatpush1.msra.mxu0 0.0
  %1839 = vmatprep.subr.mxu0 0.0
  %1840 = vmatpush1.msra.mxu0 0.0
  %1841 = vmatprep.subr.mxu0 0.0
  %1842 = vmatpush1.msra.mxu0 0.0
  %1843 = vmatprep.subr.mxu0 0.0
  %1844 = vmatpush1.msra.mxu0 0.0
  %1845 = vmatprep.subr.mxu0 0.0
  %1846 = vmatpush1.msra.mxu0 0.0
  %1847 = vmatprep.subr.mxu0 0.0
  %1848 = vmatpush1.msra.mxu0 0.0
  %1849 = vmatprep.subr.mxu0 0.0
  %1850 = vmatpush1.msra.mxu0 0.0
  %1851 = vmatprep.subr.mxu0 0.0
  %1852 = vmatpush1.msra.mxu0 0.0
  %1853 = vmatprep.mubr.f32.mxu0 0.0
  %1854 = vmatmul.mubr.f32.gmra.mrb[0].mxu0 %v1717
  %v1855 = vpop.f32.mrb[0].mxu0
  %v1856 = vadd.f32 0.0, %v1855
  %v1857 = vpop.f32.mrb[0].mxu0
  %1858 = vdwg.mxu0
  %v1859 = vmul.f32 %v1786, %v1856
  %v1860 = vmul.f32 %v19, %v278
  %v1861 = vadd.f32 %v1860, %v1859
  %v1862 = vadd.f32 %v19, 1.0
  %v1863 = vrsqrt.pop %v1862
  %v1864 = vmul.f32 %v1861, %v1863
  %v1866 = vsel %vm429, %v1864, 0
  %v1869 = vsel %vm433, %v125, 0
  %1871 = vmatprep.subr.mxu0 0.0
  %1872 = vmatpush1.msra.mxu0 %v121
  %1873 = vmatprep.subr.mxu0 0.0
  %1874 = vmatpush1.msra.mxu0 %v122
  %1875 = vmatprep.subr.mxu0 0.0
  %1876 = vmatpush1.msra.mxu0 %v123
  %1877 = vmatprep.subr.mxu0 0.0
  %1878 = vmatpush1.msra.mxu0 %v124
  %1879 = vmatprep.subr.mxu0 0.0
  %1880 = vmatpush1.msra.mxu0 %v1869
  %1881 = vmatprep.subr.mxu0 0.0
  %1882 = vmatpush1.msra.mxu0 0.0
  %1883 = vmatprep.subr.mxu0 0.0
  %1884 = vmatpush1.msra.mxu0 0.0
  %1885 = vmatprep.subr.mxu0 0.0
  %1886 = vmatpush1.msra.mxu0 0.0
  %1887 = vmatprep.subr.mxu0 0.0
  %1888 = vmatpush1.msra.mxu0 0.0
  %1889 = vmatprep.subr.mxu0 0.0
  %1890 = vmatpush1.msra.mxu0 0.0
  %1891 = vmatprep.subr.mxu0 0.0
  %1892 = vmatpush1.msra.mxu0 0.0
  %1893 = vmatprep.subr.mxu0 0.0
  %1894 = vmatpush1.msra.mxu0 0.0
  %1895 = vmatprep.subr.mxu0 0.0
  %1896 = vmatpush1.msra.mxu0 0.0
  %1897 = vmatprep.subr.mxu0 0.0
  %1898 = vmatpush1.msra.mxu0 0.0
  %1899 = vmatprep.subr.mxu0 0.0
  %1900 = vmatpush1.msra.mxu0 0.0
  %1901 = vmatprep.subr.mxu0 0.0
  %1902 = vmatpush1.msra.mxu0 0.0
  %1903 = vmatprep.subr.mxu0 0.0
  %1904 = vmatpush1.msra.mxu0 0.0
  %1905 = vmatprep.subr.mxu0 0.0
  %1906 = vmatpush1.msra.mxu0 0.0
  %1907 = vmatprep.subr.mxu0 0.0
  %1908 = vmatpush1.msra.mxu0 0.0
  %1909 = vmatprep.subr.mxu0 0.0
  %1910 = vmatpush1.msra.mxu0 0.0
  %1911 = vmatprep.subr.mxu0 0.0
  %1912 = vmatpush1.msra.mxu0 0.0
  %1913 = vmatprep.subr.mxu0 0.0
  %1914 = vmatpush1.msra.mxu0 0.0
  %1915 = vmatprep.subr.mxu0 0.0
  %1916 = vmatpush1.msra.mxu0 0.0
  %1917 = vmatprep.subr.mxu0 0.0
  %1918 = vmatpush1.msra.mxu0 0.0
  %1919 = vmatprep.subr.mxu0 0.0
  %1920 = vmatpush1.msra.mxu0 0.0
  %1921 = vmatprep.subr.mxu0 0.0
  %1922 = vmatpush1.msra.mxu0 0.0
  %1923 = vmatprep.subr.mxu0 0.0
  %1924 = vmatpush1.msra.mxu0 0.0
  %1925 = vmatprep.subr.mxu0 0.0
  %1926 = vmatpush1.msra.mxu0 0.0
  %1927 = vmatprep.subr.mxu0 0.0
  %1928 = vmatpush1.msra.mxu0 0.0
  %1929 = vmatprep.subr.mxu0 0.0
  %1930 = vmatpush1.msra.mxu0 0.0
  %1931 = vmatprep.subr.mxu0 0.0
  %1932 = vmatpush1.msra.mxu0 0.0
  %1933 = vmatprep.subr.mxu0 0.0
  %1934 = vmatpush1.msra.mxu0 0.0
  %1935 = vmatprep.mubr.f32.mxu0 0.0
  %1936 = vmatmul.mubr.f32.gmra.mrb[0].mxu0 %v1866
  %v1937 = vpop.f32.mrb[0].mxu0
  %v1938 = vadd.f32 %v126, %v1937
  %v1939 = vpop.f32.mrb[0].mxu0
  %1940 = vdwg.mxu0
  %vm1941 = vcmask 74752
  %v1942 = vsel %vm1941, %v1938, -inf
  %1943 = vmax.xlane.f32.xlu0 %v1942
  %v1944 = vpop.xlane.xlu0 %1943
  %v1945 = vsub.f32 %v1938, %v1944
  %v1946 = vmul.f32 %v1945, 1.442695
  %v1947 = vpow.pop %v1946
  %v1948 = vsel %vm1941, %v1947, 0.0
  %1949 = vadd.xlane.f32.xlu0 %v1948
  %v1950 = vpop.xlane.xlu0 %1949
  %v1951 = vrcp.pop %v1950
  %v1952 = vmul.f32 %v1947, %v1951
  %v1953 = vlog2.pop %v1950
  %v1954 = vmul.f32 %v1953, 0.6931472
  %v1955 = vsub.f32 %v1945, %v1954
  %v1956 = vmul.f32 %v1952, %v1955
  %v1957 = vsel %vm1941, %v1956, 0.0
  %1958 = vadd.xlane.f32.xlu0 %v1957
  %v1959 = vpop.xlane.xlu0 %1958
  %v1960 = vsub.f32 0.0, %v1959
  %v1961 = vmul.f32 %v1960, 0.4342945
  %v1962 = vsub.f32 1.0, %v1961
  %vm1963 = vcmask 7168
  %v1964 = vsel %vm1963, %v1961, %v1962
  %1966 = vrot.lane.b32.xlu0 %v1964, 10
  %v1967 = vpop.permute.xlu0 %1966
  %vm1969 = vcmask 80896
  %v1970 = vsel %vm1969, %v1938, %v1967
  %vm1971 = vcmask 97280
  %v1972 = vsel %vm1971, %v1970, 0.0
  %1973 = vrot.lane.b32.xlu0 %v1715, 104
  %v1974 = vpop.permute.xlu0 %1973
  %v1975 = vsel %vm134, %v1974, 0
  %1977 = vmatprep.subr.mxu0 0.0
  %1978 = vmatpush1.msra.mxu0 %v14
  %1979 = vmatprep.subr.mxu0 0.0
  %1980 = vmatpush1.msra.mxu0 0.0
  %1981 = vmatprep.subr.mxu0 0.0
  %1982 = vmatpush1.msra.mxu0 0.0
  %1983 = vmatprep.subr.mxu0 0.0
  %1984 = vmatpush1.msra.mxu0 0.0
  %1985 = vmatprep.subr.mxu0 0.0
  %1986 = vmatpush1.msra.mxu0 0.0
  %1987 = vmatprep.subr.mxu0 0.0
  %1988 = vmatpush1.msra.mxu0 0.0
  %1989 = vmatprep.subr.mxu0 0.0
  %1990 = vmatpush1.msra.mxu0 0.0
  %1991 = vmatprep.subr.mxu0 0.0
  %1992 = vmatpush1.msra.mxu0 0.0
  %1993 = vmatprep.subr.mxu0 0.0
  %1994 = vmatpush1.msra.mxu0 0.0
  %1995 = vmatprep.subr.mxu0 0.0
  %1996 = vmatpush1.msra.mxu0 0.0
  %1997 = vmatprep.subr.mxu0 0.0
  %1998 = vmatpush1.msra.mxu0 0.0
  %1999 = vmatprep.subr.mxu0 0.0
  %2000 = vmatpush1.msra.mxu0 0.0
  %2001 = vmatprep.subr.mxu0 0.0
  %2002 = vmatpush1.msra.mxu0 0.0
  %2003 = vmatprep.subr.mxu0 0.0
  %2004 = vmatpush1.msra.mxu0 0.0
  %2005 = vmatprep.subr.mxu0 0.0
  %2006 = vmatpush1.msra.mxu0 0.0
  %2007 = vmatprep.subr.mxu0 0.0
  %2008 = vmatpush1.msra.mxu0 0.0
  %2009 = vmatprep.subr.mxu0 0.0
  %2010 = vmatpush1.msra.mxu0 0.0
  %2011 = vmatprep.subr.mxu0 0.0
  %2012 = vmatpush1.msra.mxu0 0.0
  %2013 = vmatprep.subr.mxu0 0.0
  %2014 = vmatpush1.msra.mxu0 0.0
  %2015 = vmatprep.subr.mxu0 0.0
  %2016 = vmatpush1.msra.mxu0 0.0
  %2017 = vmatprep.subr.mxu0 0.0
  %2018 = vmatpush1.msra.mxu0 0.0
  %2019 = vmatprep.subr.mxu0 0.0
  %2020 = vmatpush1.msra.mxu0 0.0
  %2021 = vmatprep.subr.mxu0 0.0
  %2022 = vmatpush1.msra.mxu0 0.0
  %2023 = vmatprep.subr.mxu0 0.0
  %2024 = vmatpush1.msra.mxu0 0.0
  %2025 = vmatprep.subr.mxu0 0.0
  %2026 = vmatpush1.msra.mxu0 0.0
  %2027 = vmatprep.subr.mxu0 0.0
  %2028 = vmatpush1.msra.mxu0 0.0
  %2029 = vmatprep.subr.mxu0 0.0
  %2030 = vmatpush1.msra.mxu0 0.0
  %2031 = vmatprep.subr.mxu0 0.0
  %2032 = vmatpush1.msra.mxu0 0.0
  %2033 = vmatprep.subr.mxu0 0.0
  %2034 = vmatpush1.msra.mxu0 0.0
  %2035 = vmatprep.subr.mxu0 0.0
  %2036 = vmatpush1.msra.mxu0 0.0
  %2037 = vmatprep.subr.mxu0 0.0
  %2038 = vmatpush1.msra.mxu0 0.0
  %2039 = vmatprep.subr.mxu0 0.0
  %2040 = vmatpush1.msra.mxu0 0.0
  %2041 = vmatprep.mubr.f32.mxu0 0.0
  %2042 = vmatmul.mubr.f32.gmra.mrb[0].mxu0 %v1975
  %v2043 = vpop.f32.mrb[0].mxu0
  %v2044 = vadd.f32 0.0, %v2043
  %v2045 = vpop.f32.mrb[0].mxu0
  %2046 = vdwg.mxu0
  %2047 = vmatprep.subr.mxu0 0.0
  %2048 = vmatpush1.msra.mxu0 %v15
  %2049 = vmatprep.subr.mxu0 0.0
  %2050 = vmatpush1.msra.mxu0 0.0
  %2051 = vmatprep.subr.mxu0 0.0
  %2052 = vmatpush1.msra.mxu0 0.0
  %2053 = vmatprep.subr.mxu0 0.0
  %2054 = vmatpush1.msra.mxu0 0.0
  %2055 = vmatprep.subr.mxu0 0.0
  %2056 = vmatpush1.msra.mxu0 0.0
  %2057 = vmatprep.subr.mxu0 0.0
  %2058 = vmatpush1.msra.mxu0 0.0
  %2059 = vmatprep.subr.mxu0 0.0
  %2060 = vmatpush1.msra.mxu0 0.0
  %2061 = vmatprep.subr.mxu0 0.0
  %2062 = vmatpush1.msra.mxu0 0.0
  %2063 = vmatprep.subr.mxu0 0.0
  %2064 = vmatpush1.msra.mxu0 0.0
  %2065 = vmatprep.subr.mxu0 0.0
  %2066 = vmatpush1.msra.mxu0 0.0
  %2067 = vmatprep.subr.mxu0 0.0
  %2068 = vmatpush1.msra.mxu0 0.0
  %2069 = vmatprep.subr.mxu0 0.0
  %2070 = vmatpush1.msra.mxu0 0.0
  %2071 = vmatprep.subr.mxu0 0.0
  %2072 = vmatpush1.msra.mxu0 0.0
  %2073 = vmatprep.subr.mxu0 0.0
  %2074 = vmatpush1.msra.mxu0 0.0
  %2075 = vmatprep.subr.mxu0 0.0
  %2076 = vmatpush1.msra.mxu0 0.0
  %2077 = vmatprep.subr.mxu0 0.0
  %2078 = vmatpush1.msra.mxu0 0.0
  %2079 = vmatprep.subr.mxu0 0.0
  %2080 = vmatpush1.msra.mxu0 0.0
  %2081 = vmatprep.subr.mxu0 0.0
  %2082 = vmatpush1.msra.mxu0 0.0
  %2083 = vmatprep.subr.mxu0 0.0
  %2084 = vmatpush1.msra.mxu0 0.0
  %2085 = vmatprep.subr.mxu0 0.0
  %2086 = vmatpush1.msra.mxu0 0.0
  %2087 = vmatprep.subr.mxu0 0.0
  %2088 = vmatpush1.msra.mxu0 0.0
  %2089 = vmatprep.subr.mxu0 0.0
  %2090 = vmatpush1.msra.mxu0 0.0
  %2091 = vmatprep.subr.mxu0 0.0
  %2092 = vmatpush1.msra.mxu0 0.0
  %2093 = vmatprep.subr.mxu0 0.0
  %2094 = vmatpush1.msra.mxu0 0.0
  %2095 = vmatprep.subr.mxu0 0.0
  %2096 = vmatpush1.msra.mxu0 0.0
  %2097 = vmatprep.subr.mxu0 0.0
  %2098 = vmatpush1.msra.mxu0 0.0
  %2099 = vmatprep.subr.mxu0 0.0
  %2100 = vmatpush1.msra.mxu0 0.0
  %2101 = vmatprep.subr.mxu0 0.0
  %2102 = vmatpush1.msra.mxu0 0.0
  %2103 = vmatprep.subr.mxu0 0.0
  %2104 = vmatpush1.msra.mxu0 0.0
  %2105 = vmatprep.subr.mxu0 0.0
  %2106 = vmatpush1.msra.mxu0 0.0
  %2107 = vmatprep.subr.mxu0 0.0
  %2108 = vmatpush1.msra.mxu0 0.0
  %2109 = vmatprep.subr.mxu0 0.0
  %2110 = vmatpush1.msra.mxu0 0.0
  %2111 = vmatprep.mubr.f32.mxu0 0.0
  %2112 = vmatmul.mubr.f32.gmra.mrb[0].mxu0 %v1975
  %v2113 = vpop.f32.mrb[0].mxu0
  %v2114 = vadd.f32 0.0, %v2113
  %v2115 = vpop.f32.mrb[0].mxu0
  %2116 = vdwg.mxu0
  %v2117 = vmul.f32 %v2044, %v2114
  %v2118 = vmul.f32 %v18, %v425
  %v2119 = vadd.f32 %v2118, %v2117
  %v2120 = vmul.f32 %v18, %v426
  %v2121 = vadd.f32 %v2120, 1.0
  %v2122 = vrsqrt.pop %v2121
  %v2123 = vmul.f32 %v2119, %v2122
  %v2125 = vsel %vm429, %v2123, 0
  %2127 = vmatprep.subr.mxu0 0.0
  %2128 = vmatpush1.msra.mxu0 %v20
  %2129 = vmatprep.subr.mxu0 0.0
  %2130 = vmatpush1.msra.mxu0 %v21
  %2131 = vmatprep.subr.mxu0 0.0
  %2132 = vmatpush1.msra.mxu0 %v22
  %2133 = vmatprep.subr.mxu0 0.0
  %2134 = vmatpush1.msra.mxu0 %v23
  %2135 = vmatprep.subr.mxu0 0.0
  %2136 = vmatpush1.msra.mxu0 %v435
  %2137 = vmatprep.subr.mxu0 0.0
  %2138 = vmatpush1.msra.mxu0 0.0
  %2139 = vmatprep.subr.mxu0 0.0
  %2140 = vmatpush1.msra.mxu0 0.0
  %2141 = vmatprep.subr.mxu0 0.0
  %2142 = vmatpush1.msra.mxu0 0.0
  %2143 = vmatprep.subr.mxu0 0.0
  %2144 = vmatpush1.msra.mxu0 0.0
  %2145 = vmatprep.subr.mxu0 0.0
  %2146 = vmatpush1.msra.mxu0 0.0
  %2147 = vmatprep.subr.mxu0 0.0
  %2148 = vmatpush1.msra.mxu0 0.0
  %2149 = vmatprep.subr.mxu0 0.0
  %2150 = vmatpush1.msra.mxu0 0.0
  %2151 = vmatprep.subr.mxu0 0.0
  %2152 = vmatpush1.msra.mxu0 0.0
  %2153 = vmatprep.subr.mxu0 0.0
  %2154 = vmatpush1.msra.mxu0 0.0
  %2155 = vmatprep.subr.mxu0 0.0
  %2156 = vmatpush1.msra.mxu0 0.0
  %2157 = vmatprep.subr.mxu0 0.0
  %2158 = vmatpush1.msra.mxu0 0.0
  %2159 = vmatprep.subr.mxu0 0.0
  %2160 = vmatpush1.msra.mxu0 0.0
  %2161 = vmatprep.subr.mxu0 0.0
  %2162 = vmatpush1.msra.mxu0 0.0
  %2163 = vmatprep.subr.mxu0 0.0
  %2164 = vmatpush1.msra.mxu0 0.0
  %2165 = vmatprep.subr.mxu0 0.0
  %2166 = vmatpush1.msra.mxu0 0.0
  %2167 = vmatprep.subr.mxu0 0.0
  %2168 = vmatpush1.msra.mxu0 0.0
  %2169 = vmatprep.subr.mxu0 0.0
  %2170 = vmatpush1.msra.mxu0 0.0
  %2171 = vmatprep.subr.mxu0 0.0
  %2172 = vmatpush1.msra.mxu0 0.0
  %2173 = vmatprep.subr.mxu0 0.0
  %2174 = vmatpush1.msra.mxu0 0.0
  %2175 = vmatprep.subr.mxu0 0.0
  %2176 = vmatpush1.msra.mxu0 0.0
  %2177 = vmatprep.subr.mxu0 0.0
  %2178 = vmatpush1.msra.mxu0 0.0
  %2179 = vmatprep.subr.mxu0 0.0
  %2180 = vmatpush1.msra.mxu0 0.0
  %2181 = vmatprep.subr.mxu0 0.0
  %2182 = vmatpush1.msra.mxu0 0.0
  %2183 = vmatprep.subr.mxu0 0.0
  %2184 = vmatpush1.msra.mxu0 0.0
  %2185 = vmatprep.subr.mxu0 0.0
  %2186 = vmatpush1.msra.mxu0 0.0
  %2187 = vmatprep.subr.mxu0 0.0
  %2188 = vmatpush1.msra.mxu0 0.0
  %2189 = vmatprep.subr.mxu0 0.0
  %2190 = vmatpush1.msra.mxu0 0.0
  %2191 = vmatprep.mubr.f32.mxu0 0.0
  %2192 = vmatmul.mubr.f32.gmra.mrb[0].mxu0 %v2125
  %v2193 = vpop.f32.mrb[0].mxu0
  %v2194 = vadd.f32 %v25, %v2193
  %v2195 = vpop.f32.mrb[0].mxu0
  %2196 = vdwg.mxu0
  %v2199 = vunpack.c.l.s4 1966171168
  %v2200 = vunpack.c.0.s8 %v2199
  %v2201 = vlaneseq
  %v2202 = vshrl.u32 %v2201, 7
  %v2203 = vsub.s32 %v2200, %v2202
  %v2204 = vrot.slane %v2194, %v2203
  %v2205 = vcombine.high %v2204, %v2204
  %v2207 = vunpack.c.l.s4 1966171168
  %v2208 = vunpack.c.0.s8 %v2207
  %v2209 = vlaneseq
  %v2210 = vshrl.u32 %v2209, 7
  %v2211 = vsub.s32 %v2208, %v2210
  %v2212 = vrot.slane %v2204, %v2211
  %v2214 = vunpack.c.l.s4 1966171168
  %v2215 = vunpack.c.0.s8 %v2214
  %v2216 = vlaneseq
  %v2217 = vshrl.u32 %v2216, 7
  %v2218 = vsub.s32 %v2215, %v2217
  %v2219 = vrot.slane %v2205, %v2218
  %v2220 = vsel %vm134, %v2212, 0
  %2222 = vmatprep.subr.mxu0 0.0
  %2223 = vmatpush1.xpose.msra.mxu0 %v533
  %2224 = vmatprep.subr.mxu0 0.0
  %2225 = vmatpush1.xpose.msra.mxu0 0.0
  %2226 = vmatprep.subr.mxu0 0.0
  %2227 = vmatpush1.xpose.msra.mxu0 0.0
  %2228 = vmatprep.subr.mxu0 0.0
  %2229 = vmatpush1.xpose.msra.mxu0 0.0
  %2230 = vmatprep.subr.mxu0 0.0
  %2231 = vmatpush1.xpose.msra.mxu0 0.0
  %2232 = vmatprep.subr.mxu0 0.0
  %2233 = vmatpush1.xpose.msra.mxu0 0.0
  %2234 = vmatprep.subr.mxu0 0.0
  %2235 = vmatpush1.xpose.msra.mxu0 0.0
  %2236 = vmatprep.subr.mxu0 0.0
  %2237 = vmatpush1.xpose.msra.mxu0 0.0
  %2238 = vmatprep.subr.mxu0 0.0
  %2239 = vmatpush1.xpose.msra.mxu0 0.0
  %2240 = vmatprep.subr.mxu0 0.0
  %2241 = vmatpush1.xpose.msra.mxu0 0.0
  %2242 = vmatprep.subr.mxu0 0.0
  %2243 = vmatpush1.xpose.msra.mxu0 0.0
  %2244 = vmatprep.subr.mxu0 0.0
  %2245 = vmatpush1.xpose.msra.mxu0 0.0
  %2246 = vmatprep.subr.mxu0 0.0
  %2247 = vmatpush1.xpose.msra.mxu0 0.0
  %2248 = vmatprep.subr.mxu0 0.0
  %2249 = vmatpush1.xpose.msra.mxu0 0.0
  %2250 = vmatprep.subr.mxu0 0.0
  %2251 = vmatpush1.xpose.msra.mxu0 0.0
  %2252 = vmatprep.subr.mxu0 0.0
  %2253 = vmatpush1.xpose.msra.mxu0 0.0
  %2254 = vmatprep.subr.mxu0 0.0
  %2255 = vmatpush1.xpose.msra.mxu0 0.0
  %2256 = vmatprep.subr.mxu0 0.0
  %2257 = vmatpush1.xpose.msra.mxu0 0.0
  %2258 = vmatprep.subr.mxu0 0.0
  %2259 = vmatpush1.xpose.msra.mxu0 0.0
  %2260 = vmatprep.subr.mxu0 0.0
  %2261 = vmatpush1.xpose.msra.mxu0 0.0
  %2262 = vmatprep.subr.mxu0 0.0
  %2263 = vmatpush1.xpose.msra.mxu0 0.0
  %2264 = vmatprep.subr.mxu0 0.0
  %2265 = vmatpush1.xpose.msra.mxu0 0.0
  %2266 = vmatprep.subr.mxu0 0.0
  %2267 = vmatpush1.xpose.msra.mxu0 0.0
  %2268 = vmatprep.subr.mxu0 0.0
  %2269 = vmatpush1.xpose.msra.mxu0 0.0
  %2270 = vmatprep.subr.mxu0 0.0
  %2271 = vmatpush1.xpose.msra.mxu0 0.0
  %2272 = vmatprep.subr.mxu0 0.0
  %2273 = vmatpush1.xpose.msra.mxu0 0.0
  %2274 = vmatprep.subr.mxu0 0.0
  %2275 = vmatpush1.xpose.msra.mxu0 0.0
  %2276 = vmatprep.subr.mxu0 0.0
  %2277 = vmatpush1.xpose.msra.mxu0 0.0
  %2278 = vmatprep.subr.mxu0 0.0
  %2279 = vmatpush1.xpose.msra.mxu0 0.0
  %2280 = vmatprep.subr.mxu0 0.0
  %2281 = vmatpush1.xpose.msra.mxu0 0.0
  %2282 = vmatprep.subr.mxu0 0.0
  %2283 = vmatpush1.xpose.msra.mxu0 0.0
  %2284 = vmatprep.subr.mxu0 0.0
  %2285 = vmatpush1.xpose.msra.mxu0 0.0
  %2286 = vmatprep.mubr.f32.mxu0 0.0
  %2287 = vmatmul.mubr.f32.gmra.mrb[0].mxu0 %v2220
  %v2288 = vpop.f32.mrb[0].mxu0
  %v2289 = vadd.f32 0.0, %v2288
  %v2290 = vpop.f32.mrb[0].mxu0
  %2291 = vdwg.mxu0
  %v2292 = vsel %vm134, %v2219, 0
  %2294 = vmatprep.subr.mxu0 0.0
  %2295 = vmatpush1.xpose.msra.mxu0 %v608
  %2296 = vmatprep.subr.mxu0 0.0
  %2297 = vmatpush1.xpose.msra.mxu0 0.0
  %2298 = vmatprep.subr.mxu0 0.0
  %2299 = vmatpush1.xpose.msra.mxu0 0.0
  %2300 = vmatprep.subr.mxu0 0.0
  %2301 = vmatpush1.xpose.msra.mxu0 0.0
  %2302 = vmatprep.subr.mxu0 0.0
  %2303 = vmatpush1.xpose.msra.mxu0 0.0
  %2304 = vmatprep.subr.mxu0 0.0
  %2305 = vmatpush1.xpose.msra.mxu0 0.0
  %2306 = vmatprep.subr.mxu0 0.0
  %2307 = vmatpush1.xpose.msra.mxu0 0.0
  %2308 = vmatprep.subr.mxu0 0.0
  %2309 = vmatpush1.xpose.msra.mxu0 0.0
  %2310 = vmatprep.subr.mxu0 0.0
  %2311 = vmatpush1.xpose.msra.mxu0 0.0
  %2312 = vmatprep.subr.mxu0 0.0
  %2313 = vmatpush1.xpose.msra.mxu0 0.0
  %2314 = vmatprep.subr.mxu0 0.0
  %2315 = vmatpush1.xpose.msra.mxu0 0.0
  %2316 = vmatprep.subr.mxu0 0.0
  %2317 = vmatpush1.xpose.msra.mxu0 0.0
  %2318 = vmatprep.subr.mxu0 0.0
  %2319 = vmatpush1.xpose.msra.mxu0 0.0
  %2320 = vmatprep.subr.mxu0 0.0
  %2321 = vmatpush1.xpose.msra.mxu0 0.0
  %2322 = vmatprep.subr.mxu0 0.0
  %2323 = vmatpush1.xpose.msra.mxu0 0.0
  %2324 = vmatprep.subr.mxu0 0.0
  %2325 = vmatpush1.xpose.msra.mxu0 0.0
  %2326 = vmatprep.subr.mxu0 0.0
  %2327 = vmatpush1.xpose.msra.mxu0 0.0
  %2328 = vmatprep.subr.mxu0 0.0
  %2329 = vmatpush1.xpose.msra.mxu0 0.0
  %2330 = vmatprep.subr.mxu0 0.0
  %2331 = vmatpush1.xpose.msra.mxu0 0.0
  %2332 = vmatprep.subr.mxu0 0.0
  %2333 = vmatpush1.xpose.msra.mxu0 0.0
  %2334 = vmatprep.subr.mxu0 0.0
  %2335 = vmatpush1.xpose.msra.mxu0 0.0
  %2336 = vmatprep.subr.mxu0 0.0
  %2337 = vmatpush1.xpose.msra.mxu0 0.0
  %2338 = vmatprep.subr.mxu0 0.0
  %2339 = vmatpush1.xpose.msra.mxu0 0.0
  %2340 = vmatprep.subr.mxu0 0.0
  %2341 = vmatpush1.xpose.msra.mxu0 0.0
  %2342 = vmatprep.subr.mxu0 0.0
  %2343 = vmatpush1.xpose.msra.mxu0 0.0
  %2344 = vmatprep.subr.mxu0 0.0
  %2345 = vmatpush1.xpose.msra.mxu0 0.0
  %2346 = vmatprep.subr.mxu0 0.0
  %2347 = vmatpush1.xpose.msra.mxu0 0.0
  %2348 = vmatprep.subr.mxu0 0.0
  %2349 = vmatpush1.xpose.msra.mxu0 0.0
  %2350 = vmatprep.subr.mxu0 0.0
  %2351 = vmatpush1.xpose.msra.mxu0 0.0
  %2352 = vmatprep.subr.mxu0 0.0
  %2353 = vmatpush1.xpose.msra.mxu0 0.0
  %2354 = vmatprep.subr.mxu0 0.0
  %2355 = vmatpush1.xpose.msra.mxu0 0.0
  %2356 = vmatprep.subr.mxu0 0.0
  %2357 = vmatpush1.xpose.msra.mxu0 0.0
  %2358 = vmatprep.mubr.f32.mxu0 0.0
  %2359 = vmatmul.mubr.f32.gmra.mrb[0].mxu0 %v2292
  %v2360 = vpop.f32.mrb[0].mxu0
  %v2361 = vadd.f32 0.0, %v2360
  %v2362 = vpop.f32.mrb[0].mxu0
  %2363 = vdwg.mxu0
  %v2364 = vmul.f32 %v2289, 0.35355338
  %v2365 = vmul.f32 %v2361, 0.35355338
  %v2366 = vsel %vm682, %v2364, -inf
  %2367 = vmax.xlane.f32.xlu0 %v2366
  %v2368 = vpop.xlane.xlu0 %2367
  %v2369 = vsel %vm682, %v2365, -inf
  %2370 = vmax.xlane.f32.xlu0 %v2369
  %v2371 = vpop.xlane.xlu0 %2370
  %v2372 = vsub.f32 %v2364, %v2368
  %v2373 = vsub.f32 %v2365, %v2371
  %v2374 = vmul.f32 %v2372, 1.442695
  %v2375 = vpow.pop %v2374
  %v2376 = vmul.f32 %v2373, 1.442695
  %v2377 = vpow.pop %v2376
  %v2378 = vsel %vm682, %v2375, 0.0
  %2379 = vadd.xlane.f32.xlu0 %v2378
  %v2380 = vpop.xlane.xlu0 %2379
  %v2381 = vsel %vm682, %v2377, 0.0
  %2382 = vadd.xlane.f32.xlu0 %v2381
  %v2383 = vpop.xlane.xlu0 %2382
  %v2384 = vrcp.pop %v2380
  %v2385 = vrcp.pop %v2383
  %v2386 = vmul.f32 %v2375, %v2384
  %v2387 = vmul.f32 %v2377, %v2385
  %v2389 = vsel %vm134, %v2386, 0
  %2391 = vmatprep.subr.mxu0 0.0
  %2392 = vmatpush1.msra.mxu0 %v129
  %2393 = vmatprep.subr.mxu0 0.0
  %2394 = vmatpush1.msra.mxu0 0.0
  %2395 = vmatprep.subr.mxu0 0.0
  %2396 = vmatpush1.msra.mxu0 0.0
  %2397 = vmatprep.subr.mxu0 0.0
  %2398 = vmatpush1.msra.mxu0 0.0
  %2399 = vmatprep.subr.mxu0 0.0
  %2400 = vmatpush1.msra.mxu0 0.0
  %2401 = vmatprep.subr.mxu0 0.0
  %2402 = vmatpush1.msra.mxu0 0.0
  %2403 = vmatprep.subr.mxu0 0.0
  %2404 = vmatpush1.msra.mxu0 0.0
  %2405 = vmatprep.subr.mxu0 0.0
  %2406 = vmatpush1.msra.mxu0 0.0
  %2407 = vmatprep.subr.mxu0 0.0
  %2408 = vmatpush1.msra.mxu0 0.0
  %2409 = vmatprep.subr.mxu0 0.0
  %2410 = vmatpush1.msra.mxu0 0.0
  %2411 = vmatprep.subr.mxu0 0.0
  %2412 = vmatpush1.msra.mxu0 0.0
  %2413 = vmatprep.subr.mxu0 0.0
  %2414 = vmatpush1.msra.mxu0 0.0
  %2415 = vmatprep.subr.mxu0 0.0
  %2416 = vmatpush1.msra.mxu0 0.0
  %2417 = vmatprep.subr.mxu0 0.0
  %2418 = vmatpush1.msra.mxu0 0.0
  %2419 = vmatprep.subr.mxu0 0.0
  %2420 = vmatpush1.msra.mxu0 0.0
  %2421 = vmatprep.subr.mxu0 0.0
  %2422 = vmatpush1.msra.mxu0 0.0
  %2423 = vmatprep.subr.mxu0 0.0
  %2424 = vmatpush1.msra.mxu0 0.0
  %2425 = vmatprep.subr.mxu0 0.0
  %2426 = vmatpush1.msra.mxu0 0.0
  %2427 = vmatprep.subr.mxu0 0.0
  %2428 = vmatpush1.msra.mxu0 0.0
  %2429 = vmatprep.subr.mxu0 0.0
  %2430 = vmatpush1.msra.mxu0 0.0
  %2431 = vmatprep.subr.mxu0 0.0
  %2432 = vmatpush1.msra.mxu0 0.0
  %2433 = vmatprep.subr.mxu0 0.0
  %2434 = vmatpush1.msra.mxu0 0.0
  %2435 = vmatprep.subr.mxu0 0.0
  %2436 = vmatpush1.msra.mxu0 0.0
  %2437 = vmatprep.subr.mxu0 0.0
  %2438 = vmatpush1.msra.mxu0 0.0
  %2439 = vmatprep.subr.mxu0 0.0
  %2440 = vmatpush1.msra.mxu0 0.0
  %2441 = vmatprep.subr.mxu0 0.0
  %2442 = vmatpush1.msra.mxu0 0.0
  %2443 = vmatprep.subr.mxu0 0.0
  %2444 = vmatpush1.msra.mxu0 0.0
  %2445 = vmatprep.subr.mxu0 0.0
  %2446 = vmatpush1.msra.mxu0 0.0
  %2447 = vmatprep.subr.mxu0 0.0
  %2448 = vmatpush1.msra.mxu0 0.0
  %2449 = vmatprep.subr.mxu0 0.0
  %2450 = vmatpush1.msra.mxu0 0.0
  %2451 = vmatprep.subr.mxu0 0.0
  %2452 = vmatpush1.msra.mxu0 0.0
  %2453 = vmatprep.subr.mxu0 0.0
  %2454 = vmatpush1.msra.mxu0 0.0
  %2455 = vmatprep.mubr.f32.mxu0 0.0
  %2456 = vmatmul.mubr.f32.gmra.mrb[0].mxu0 %v2389
  %v2457 = vpop.f32.mrb[0].mxu0
  %v2458 = vadd.f32 0.0, %v2457
  %v2459 = vpop.f32.mrb[0].mxu0
  %2460 = vdwg.mxu0
  %v2462 = vsel %vm134, %v2387, 0
  %2464 = vmatprep.subr.mxu0 0.0
  %2465 = vmatpush1.msra.mxu0 %v130
  %2466 = vmatprep.subr.mxu0 0.0
  %2467 = vmatpush1.msra.mxu0 0.0
  %2468 = vmatprep.subr.mxu0 0.0
  %2469 = vmatpush1.msra.mxu0 0.0
  %2470 = vmatprep.subr.mxu0 0.0
  %2471 = vmatpush1.msra.mxu0 0.0
  %2472 = vmatprep.subr.mxu0 0.0
  %2473 = vmatpush1.msra.mxu0 0.0
  %2474 = vmatprep.subr.mxu0 0.0
  %2475 = vmatpush1.msra.mxu0 0.0
  %2476 = vmatprep.subr.mxu0 0.0
  %2477 = vmatpush1.msra.mxu0 0.0
  %2478 = vmatprep.subr.mxu0 0.0
  %2479 = vmatpush1.msra.mxu0 0.0
  %2480 = vmatprep.subr.mxu0 0.0
  %2481 = vmatpush1.msra.mxu0 0.0
  %2482 = vmatprep.subr.mxu0 0.0
  %2483 = vmatpush1.msra.mxu0 0.0
  %2484 = vmatprep.subr.mxu0 0.0
  %2485 = vmatpush1.msra.mxu0 0.0
  %2486 = vmatprep.subr.mxu0 0.0
  %2487 = vmatpush1.msra.mxu0 0.0
  %2488 = vmatprep.subr.mxu0 0.0
  %2489 = vmatpush1.msra.mxu0 0.0
  %2490 = vmatprep.subr.mxu0 0.0
  %2491 = vmatpush1.msra.mxu0 0.0
  %2492 = vmatprep.subr.mxu0 0.0
  %2493 = vmatpush1.msra.mxu0 0.0
  %2494 = vmatprep.subr.mxu0 0.0
  %2495 = vmatpush1.msra.mxu0 0.0
  %2496 = vmatprep.subr.mxu0 0.0
  %2497 = vmatpush1.msra.mxu0 0.0
  %2498 = vmatprep.subr.mxu0 0.0
  %2499 = vmatpush1.msra.mxu0 0.0
  %2500 = vmatprep.subr.mxu0 0.0
  %2501 = vmatpush1.msra.mxu0 0.0
  %2502 = vmatprep.subr.mxu0 0.0
  %2503 = vmatpush1.msra.mxu0 0.0
  %2504 = vmatprep.subr.mxu0 0.0
  %2505 = vmatpush1.msra.mxu0 0.0
  %2506 = vmatprep.subr.mxu0 0.0
  %2507 = vmatpush1.msra.mxu0 0.0
  %2508 = vmatprep.subr.mxu0 0.0
  %2509 = vmatpush1.msra.mxu0 0.0
  %2510 = vmatprep.subr.mxu0 0.0
  %2511 = vmatpush1.msra.mxu0 0.0
  %2512 = vmatprep.subr.mxu0 0.0
  %2513 = vmatpush1.msra.mxu0 0.0
  %2514 = vmatprep.subr.mxu0 0.0
  %2515 = vmatpush1.msra.mxu0 0.0
  %2516 = vmatprep.subr.mxu0 0.0
  %2517 = vmatpush1.msra.mxu0 0.0
  %2518 = vmatprep.subr.mxu0 0.0
  %2519 = vmatpush1.msra.mxu0 0.0
  %2520 = vmatprep.subr.mxu0 0.0
  %2521 = vmatpush1.msra.mxu0 0.0
  %2522 = vmatprep.subr.mxu0 0.0
  %2523 = vmatpush1.msra.mxu0 0.0
  %2524 = vmatprep.subr.mxu0 0.0
  %2525 = vmatpush1.msra.mxu0 0.0
  %2526 = vmatprep.subr.mxu0 0.0
  %2527 = vmatpush1.msra.mxu0 0.0
  %2528 = vmatprep.mubr.f32.mxu0 0.0
  %2529 = vmatmul.mubr.f32.gmra.mrb[0].mxu0 %v2462
  %v2530 = vpop.f32.mrb[0].mxu0
  %v2531 = vadd.f32 0.0, %v2530
  %v2532 = vpop.f32.mrb[0].mxu0
  %2533 = vdwg.mxu0
  %v2536 = vrot.slane %v2531, 7
  %v2537 = vsel %vm854, %v2536, %v2458
  %v2538 = vsel %vm134, %v2537, 0
  %2540 = vmatprep.subr.mxu0 0.0
  %2541 = vmatpush1.msra.mxu0 %v26
  %2542 = vmatprep.subr.mxu0 0.0
  %2543 = vmatpush1.msra.mxu0 0.0
  %2544 = vmatprep.subr.mxu0 0.0
  %2545 = vmatpush1.msra.mxu0 0.0
  %2546 = vmatprep.subr.mxu0 0.0
  %2547 = vmatpush1.msra.mxu0 0.0
  %2548 = vmatprep.subr.mxu0 0.0
  %2549 = vmatpush1.msra.mxu0 0.0
  %2550 = vmatprep.subr.mxu0 0.0
  %2551 = vmatpush1.msra.mxu0 0.0
  %2552 = vmatprep.subr.mxu0 0.0
  %2553 = vmatpush1.msra.mxu0 0.0
  %2554 = vmatprep.subr.mxu0 0.0
  %2555 = vmatpush1.msra.mxu0 0.0
  %2556 = vmatprep.subr.mxu0 0.0
  %2557 = vmatpush1.msra.mxu0 0.0
  %2558 = vmatprep.subr.mxu0 0.0
  %2559 = vmatpush1.msra.mxu0 0.0
  %2560 = vmatprep.subr.mxu0 0.0
  %2561 = vmatpush1.msra.mxu0 0.0
  %2562 = vmatprep.subr.mxu0 0.0
  %2563 = vmatpush1.msra.mxu0 0.0
  %2564 = vmatprep.subr.mxu0 0.0
  %2565 = vmatpush1.msra.mxu0 0.0
  %2566 = vmatprep.subr.mxu0 0.0
  %2567 = vmatpush1.msra.mxu0 0.0
  %2568 = vmatprep.subr.mxu0 0.0
  %2569 = vmatpush1.msra.mxu0 0.0
  %2570 = vmatprep.subr.mxu0 0.0
  %2571 = vmatpush1.msra.mxu0 0.0
  %2572 = vmatprep.subr.mxu0 0.0
  %2573 = vmatpush1.msra.mxu0 0.0
  %2574 = vmatprep.subr.mxu0 0.0
  %2575 = vmatpush1.msra.mxu0 0.0
  %2576 = vmatprep.subr.mxu0 0.0
  %2577 = vmatpush1.msra.mxu0 0.0
  %2578 = vmatprep.subr.mxu0 0.0
  %2579 = vmatpush1.msra.mxu0 0.0
  %2580 = vmatprep.subr.mxu0 0.0
  %2581 = vmatpush1.msra.mxu0 0.0
  %2582 = vmatprep.subr.mxu0 0.0
  %2583 = vmatpush1.msra.mxu0 0.0
  %2584 = vmatprep.subr.mxu0 0.0
  %2585 = vmatpush1.msra.mxu0 0.0
  %2586 = vmatprep.subr.mxu0 0.0
  %2587 = vmatpush1.msra.mxu0 0.0
  %2588 = vmatprep.subr.mxu0 0.0
  %2589 = vmatpush1.msra.mxu0 0.0
  %2590 = vmatprep.subr.mxu0 0.0
  %2591 = vmatpush1.msra.mxu0 0.0
  %2592 = vmatprep.subr.mxu0 0.0
  %2593 = vmatpush1.msra.mxu0 0.0
  %2594 = vmatprep.subr.mxu0 0.0
  %2595 = vmatpush1.msra.mxu0 0.0
  %2596 = vmatprep.subr.mxu0 0.0
  %2597 = vmatpush1.msra.mxu0 0.0
  %2598 = vmatprep.subr.mxu0 0.0
  %2599 = vmatpush1.msra.mxu0 0.0
  %2600 = vmatprep.subr.mxu0 0.0
  %2601 = vmatpush1.msra.mxu0 0.0
  %2602 = vmatprep.subr.mxu0 0.0
  %2603 = vmatpush1.msra.mxu0 0.0
  %2604 = vmatprep.mubr.f32.mxu0 0.0
  %2605 = vmatmul.mubr.f32.gmra.mrb[0].mxu0 %v2538
  %v2606 = vpop.f32.mrb[0].mxu0
  %v2607 = vadd.f32 0.0, %v2606
  %v2608 = vpop.f32.mrb[0].mxu0
  %2609 = vdwg.mxu0
  %v2610 = vadd.f32 %v28, %v2607
  %v2611 = vlaneseq
  %v2612 = vshrl.u32 %v2611, 7
  %v2613 = vsub.s32 0, %v2612
  %v2614 = vrot.slane %v2212, %v2613
  %2615 = vrot.lane.b32.xlu0 %v2614, 120
  %v2616 = vpop.permute.xlu0 %2615
  %v2617 = vsel %vm134, %v2616, 0
  %2619 = vmatprep.subr.mxu0 0.0
  %2620 = vmatpush1.xpose.msra.mxu0 %v939
  %2621 = vmatprep.subr.mxu0 0.0
  %2622 = vmatpush1.xpose.msra.mxu0 0.0
  %2623 = vmatprep.subr.mxu0 0.0
  %2624 = vmatpush1.xpose.msra.mxu0 0.0
  %2625 = vmatprep.subr.mxu0 0.0
  %2626 = vmatpush1.xpose.msra.mxu0 0.0
  %2627 = vmatprep.subr.mxu0 0.0
  %2628 = vmatpush1.xpose.msra.mxu0 0.0
  %2629 = vmatprep.subr.mxu0 0.0
  %2630 = vmatpush1.xpose.msra.mxu0 0.0
  %2631 = vmatprep.subr.mxu0 0.0
  %2632 = vmatpush1.xpose.msra.mxu0 0.0
  %2633 = vmatprep.subr.mxu0 0.0
  %2634 = vmatpush1.xpose.msra.mxu0 0.0
  %2635 = vmatprep.subr.mxu0 0.0
  %2636 = vmatpush1.xpose.msra.mxu0 0.0
  %2637 = vmatprep.subr.mxu0 0.0
  %2638 = vmatpush1.xpose.msra.mxu0 0.0
  %2639 = vmatprep.subr.mxu0 0.0
  %2640 = vmatpush1.xpose.msra.mxu0 0.0
  %2641 = vmatprep.subr.mxu0 0.0
  %2642 = vmatpush1.xpose.msra.mxu0 0.0
  %2643 = vmatprep.subr.mxu0 0.0
  %2644 = vmatpush1.xpose.msra.mxu0 0.0
  %2645 = vmatprep.subr.mxu0 0.0
  %2646 = vmatpush1.xpose.msra.mxu0 0.0
  %2647 = vmatprep.subr.mxu0 0.0
  %2648 = vmatpush1.xpose.msra.mxu0 0.0
  %2649 = vmatprep.subr.mxu0 0.0
  %2650 = vmatpush1.xpose.msra.mxu0 0.0
  %2651 = vmatprep.subr.mxu0 0.0
  %2652 = vmatpush1.xpose.msra.mxu0 0.0
  %2653 = vmatprep.subr.mxu0 0.0
  %2654 = vmatpush1.xpose.msra.mxu0 0.0
  %2655 = vmatprep.subr.mxu0 0.0
  %2656 = vmatpush1.xpose.msra.mxu0 0.0
  %2657 = vmatprep.subr.mxu0 0.0
  %2658 = vmatpush1.xpose.msra.mxu0 0.0
  %2659 = vmatprep.subr.mxu0 0.0
  %2660 = vmatpush1.xpose.msra.mxu0 0.0
  %2661 = vmatprep.subr.mxu0 0.0
  %2662 = vmatpush1.xpose.msra.mxu0 0.0
  %2663 = vmatprep.subr.mxu0 0.0
  %2664 = vmatpush1.xpose.msra.mxu0 0.0
  %2665 = vmatprep.subr.mxu0 0.0
  %2666 = vmatpush1.xpose.msra.mxu0 0.0
  %2667 = vmatprep.subr.mxu0 0.0
  %2668 = vmatpush1.xpose.msra.mxu0 0.0
  %2669 = vmatprep.subr.mxu0 0.0
  %2670 = vmatpush1.xpose.msra.mxu0 0.0
  %2671 = vmatprep.subr.mxu0 0.0
  %2672 = vmatpush1.xpose.msra.mxu0 0.0
  %2673 = vmatprep.subr.mxu0 0.0
  %2674 = vmatpush1.xpose.msra.mxu0 0.0
  %2675 = vmatprep.subr.mxu0 0.0
  %2676 = vmatpush1.xpose.msra.mxu0 0.0
  %2677 = vmatprep.subr.mxu0 0.0
  %2678 = vmatpush1.xpose.msra.mxu0 0.0
  %2679 = vmatprep.subr.mxu0 0.0
  %2680 = vmatpush1.xpose.msra.mxu0 0.0
  %2681 = vmatprep.subr.mxu0 0.0
  %2682 = vmatpush1.xpose.msra.mxu0 0.0
  %2683 = vmatprep.mubr.f32.mxu0 0.0
  %2684 = vmatmul.mubr.f32.gmra.mrb[0].mxu0 %v2617
  %v2685 = vpop.f32.mrb[0].mxu0
  %v2686 = vadd.f32 0.0, %v2685
  %v2687 = vpop.f32.mrb[0].mxu0
  %2688 = vdwg.mxu0
  %v2689 = vlaneseq
  %v2690 = vshrl.u32 %v2689, 7
  %v2691 = vsub.s32 0, %v2690
  %v2692 = vrot.slane %v2219, %v2691
  %2693 = vrot.lane.b32.xlu0 %v2692, 120
  %v2694 = vpop.permute.xlu0 %2693
  %v2695 = vsel %vm134, %v2694, 0
  %2697 = vmatprep.subr.mxu0 0.0
  %2698 = vmatpush1.xpose.msra.mxu0 %v1021
  %2699 = vmatprep.subr.mxu0 0.0
  %2700 = vmatpush1.xpose.msra.mxu0 0.0
  %2701 = vmatprep.subr.mxu0 0.0
  %2702 = vmatpush1.xpose.msra.mxu0 0.0
  %2703 = vmatprep.subr.mxu0 0.0
  %2704 = vmatpush1.xpose.msra.mxu0 0.0
  %2705 = vmatprep.subr.mxu0 0.0
  %2706 = vmatpush1.xpose.msra.mxu0 0.0
  %2707 = vmatprep.subr.mxu0 0.0
  %2708 = vmatpush1.xpose.msra.mxu0 0.0
  %2709 = vmatprep.subr.mxu0 0.0
  %2710 = vmatpush1.xpose.msra.mxu0 0.0
  %2711 = vmatprep.subr.mxu0 0.0
  %2712 = vmatpush1.xpose.msra.mxu0 0.0
  %2713 = vmatprep.subr.mxu0 0.0
  %2714 = vmatpush1.xpose.msra.mxu0 0.0
  %2715 = vmatprep.subr.mxu0 0.0
  %2716 = vmatpush1.xpose.msra.mxu0 0.0
  %2717 = vmatprep.subr.mxu0 0.0
  %2718 = vmatpush1.xpose.msra.mxu0 0.0
  %2719 = vmatprep.subr.mxu0 0.0
  %2720 = vmatpush1.xpose.msra.mxu0 0.0
  %2721 = vmatprep.subr.mxu0 0.0
  %2722 = vmatpush1.xpose.msra.mxu0 0.0
  %2723 = vmatprep.subr.mxu0 0.0
  %2724 = vmatpush1.xpose.msra.mxu0 0.0
  %2725 = vmatprep.subr.mxu0 0.0
  %2726 = vmatpush1.xpose.msra.mxu0 0.0
  %2727 = vmatprep.subr.mxu0 0.0
  %2728 = vmatpush1.xpose.msra.mxu0 0.0
  %2729 = vmatprep.subr.mxu0 0.0
  %2730 = vmatpush1.xpose.msra.mxu0 0.0
  %2731 = vmatprep.subr.mxu0 0.0
  %2732 = vmatpush1.xpose.msra.mxu0 0.0
  %2733 = vmatprep.subr.mxu0 0.0
  %2734 = vmatpush1.xpose.msra.mxu0 0.0
  %2735 = vmatprep.subr.mxu0 0.0
  %2736 = vmatpush1.xpose.msra.mxu0 0.0
  %2737 = vmatprep.subr.mxu0 0.0
  %2738 = vmatpush1.xpose.msra.mxu0 0.0
  %2739 = vmatprep.subr.mxu0 0.0
  %2740 = vmatpush1.xpose.msra.mxu0 0.0
  %2741 = vmatprep.subr.mxu0 0.0
  %2742 = vmatpush1.xpose.msra.mxu0 0.0
  %2743 = vmatprep.subr.mxu0 0.0
  %2744 = vmatpush1.xpose.msra.mxu0 0.0
  %2745 = vmatprep.subr.mxu0 0.0
  %2746 = vmatpush1.xpose.msra.mxu0 0.0
  %2747 = vmatprep.subr.mxu0 0.0
  %2748 = vmatpush1.xpose.msra.mxu0 0.0
  %2749 = vmatprep.subr.mxu0 0.0
  %2750 = vmatpush1.xpose.msra.mxu0 0.0
  %2751 = vmatprep.subr.mxu0 0.0
  %2752 = vmatpush1.xpose.msra.mxu0 0.0
  %2753 = vmatprep.subr.mxu0 0.0
  %2754 = vmatpush1.xpose.msra.mxu0 0.0
  %2755 = vmatprep.subr.mxu0 0.0
  %2756 = vmatpush1.xpose.msra.mxu0 0.0
  %2757 = vmatprep.subr.mxu0 0.0
  %2758 = vmatpush1.xpose.msra.mxu0 0.0
  %2759 = vmatprep.subr.mxu0 0.0
  %2760 = vmatpush1.xpose.msra.mxu0 0.0
  %2761 = vmatprep.mubr.f32.mxu0 0.0
  %2762 = vmatmul.mubr.f32.gmra.mrb[0].mxu0 %v2695
  %v2763 = vpop.f32.mrb[0].mxu0
  %v2764 = vadd.f32 0.0, %v2763
  %v2765 = vpop.f32.mrb[0].mxu0
  %2766 = vdwg.mxu0
  %v2767 = vmul.f32 %v2686, 0.35355338
  %v2768 = vmul.f32 %v2764, 0.35355338
  %v2769 = vsel %vm682, %v2767, -inf
  %2770 = vmax.xlane.f32.xlu0 %v2769
  %v2771 = vpop.xlane.xlu0 %2770
  %v2772 = vsel %vm682, %v2768, -inf
  %2773 = vmax.xlane.f32.xlu0 %v2772
  %v2774 = vpop.xlane.xlu0 %2773
  %v2775 = vsub.f32 %v2767, %v2771
  %v2776 = vsub.f32 %v2768, %v2774
  %v2777 = vmul.f32 %v2775, 1.442695
  %v2778 = vpow.pop %v2777
  %v2779 = vmul.f32 %v2776, 1.442695
  %v2780 = vpow.pop %v2779
  %v2781 = vsel %vm682, %v2778, 0.0
  %2782 = vadd.xlane.f32.xlu0 %v2781
  %v2783 = vpop.xlane.xlu0 %2782
  %v2784 = vsel %vm682, %v2780, 0.0
  %2785 = vadd.xlane.f32.xlu0 %v2784
  %v2786 = vpop.xlane.xlu0 %2785
  %v2787 = vrcp.pop %v2783
  %v2788 = vrcp.pop %v2786
  %v2789 = vmul.f32 %v2778, %v2787
  %v2790 = vmul.f32 %v2780, %v2788
  %v2792 = vsel %vm134, %v2789, 0
  %2794 = vmatprep.subr.mxu0 0.0
  %2795 = vmatpush1.msra.mxu0 %v1119
  %2796 = vmatprep.subr.mxu0 0.0
  %2797 = vmatpush1.msra.mxu0 0.0
  %2798 = vmatprep.subr.mxu0 0.0
  %2799 = vmatpush1.msra.mxu0 0.0
  %2800 = vmatprep.subr.mxu0 0.0
  %2801 = vmatpush1.msra.mxu0 0.0
  %2802 = vmatprep.subr.mxu0 0.0
  %2803 = vmatpush1.msra.mxu0 0.0
  %2804 = vmatprep.subr.mxu0 0.0
  %2805 = vmatpush1.msra.mxu0 0.0
  %2806 = vmatprep.subr.mxu0 0.0
  %2807 = vmatpush1.msra.mxu0 0.0
  %2808 = vmatprep.subr.mxu0 0.0
  %2809 = vmatpush1.msra.mxu0 0.0
  %2810 = vmatprep.subr.mxu0 0.0
  %2811 = vmatpush1.msra.mxu0 0.0
  %2812 = vmatprep.subr.mxu0 0.0
  %2813 = vmatpush1.msra.mxu0 0.0
  %2814 = vmatprep.subr.mxu0 0.0
  %2815 = vmatpush1.msra.mxu0 0.0
  %2816 = vmatprep.subr.mxu0 0.0
  %2817 = vmatpush1.msra.mxu0 0.0
  %2818 = vmatprep.subr.mxu0 0.0
  %2819 = vmatpush1.msra.mxu0 0.0
  %2820 = vmatprep.subr.mxu0 0.0
  %2821 = vmatpush1.msra.mxu0 0.0
  %2822 = vmatprep.subr.mxu0 0.0
  %2823 = vmatpush1.msra.mxu0 0.0
  %2824 = vmatprep.subr.mxu0 0.0
  %2825 = vmatpush1.msra.mxu0 0.0
  %2826 = vmatprep.subr.mxu0 0.0
  %2827 = vmatpush1.msra.mxu0 0.0
  %2828 = vmatprep.subr.mxu0 0.0
  %2829 = vmatpush1.msra.mxu0 0.0
  %2830 = vmatprep.subr.mxu0 0.0
  %2831 = vmatpush1.msra.mxu0 0.0
  %2832 = vmatprep.subr.mxu0 0.0
  %2833 = vmatpush1.msra.mxu0 0.0
  %2834 = vmatprep.subr.mxu0 0.0
  %2835 = vmatpush1.msra.mxu0 0.0
  %2836 = vmatprep.subr.mxu0 0.0
  %2837 = vmatpush1.msra.mxu0 0.0
  %2838 = vmatprep.subr.mxu0 0.0
  %2839 = vmatpush1.msra.mxu0 0.0
  %2840 = vmatprep.subr.mxu0 0.0
  %2841 = vmatpush1.msra.mxu0 0.0
  %2842 = vmatprep.subr.mxu0 0.0
  %2843 = vmatpush1.msra.mxu0 0.0
  %2844 = vmatprep.subr.mxu0 0.0
  %2845 = vmatpush1.msra.mxu0 0.0
  %2846 = vmatprep.subr.mxu0 0.0
  %2847 = vmatpush1.msra.mxu0 0.0
  %2848 = vmatprep.subr.mxu0 0.0
  %2849 = vmatpush1.msra.mxu0 0.0
  %2850 = vmatprep.subr.mxu0 0.0
  %2851 = vmatpush1.msra.mxu0 0.0
  %2852 = vmatprep.subr.mxu0 0.0
  %2853 = vmatpush1.msra.mxu0 0.0
  %2854 = vmatprep.subr.mxu0 0.0
  %2855 = vmatpush1.msra.mxu0 0.0
  %2856 = vmatprep.subr.mxu0 0.0
  %2857 = vmatpush1.msra.mxu0 0.0
  %2858 = vmatprep.mubr.f32.mxu0 0.0
  %2859 = vmatmul.mubr.f32.gmra.mrb[0].mxu0 %v2792
  %v2860 = vpop.f32.mrb[0].mxu0
  %v2861 = vadd.f32 0.0, %v2860
  %v2862 = vpop.f32.mrb[0].mxu0
  %2863 = vdwg.mxu0
  %v2865 = vsel %vm134, %v2790, 0
  %2867 = vmatprep.subr.mxu0 0.0
  %2868 = vmatpush1.msra.mxu0 %v1196
  %2869 = vmatprep.subr.mxu0 0.0
  %2870 = vmatpush1.msra.mxu0 0.0
  %2871 = vmatprep.subr.mxu0 0.0
  %2872 = vmatpush1.msra.mxu0 0.0
  %2873 = vmatprep.subr.mxu0 0.0
  %2874 = vmatpush1.msra.mxu0 0.0
  %2875 = vmatprep.subr.mxu0 0.0
  %2876 = vmatpush1.msra.mxu0 0.0
  %2877 = vmatprep.subr.mxu0 0.0
  %2878 = vmatpush1.msra.mxu0 0.0
  %2879 = vmatprep.subr.mxu0 0.0
  %2880 = vmatpush1.msra.mxu0 0.0
  %2881 = vmatprep.subr.mxu0 0.0
  %2882 = vmatpush1.msra.mxu0 0.0
  %2883 = vmatprep.subr.mxu0 0.0
  %2884 = vmatpush1.msra.mxu0 0.0
  %2885 = vmatprep.subr.mxu0 0.0
  %2886 = vmatpush1.msra.mxu0 0.0
  %2887 = vmatprep.subr.mxu0 0.0
  %2888 = vmatpush1.msra.mxu0 0.0
  %2889 = vmatprep.subr.mxu0 0.0
  %2890 = vmatpush1.msra.mxu0 0.0
  %2891 = vmatprep.subr.mxu0 0.0
  %2892 = vmatpush1.msra.mxu0 0.0
  %2893 = vmatprep.subr.mxu0 0.0
  %2894 = vmatpush1.msra.mxu0 0.0
  %2895 = vmatprep.subr.mxu0 0.0
  %2896 = vmatpush1.msra.mxu0 0.0
  %2897 = vmatprep.subr.mxu0 0.0
  %2898 = vmatpush1.msra.mxu0 0.0
  %2899 = vmatprep.subr.mxu0 0.0
  %2900 = vmatpush1.msra.mxu0 0.0
  %2901 = vmatprep.subr.mxu0 0.0
  %2902 = vmatpush1.msra.mxu0 0.0
  %2903 = vmatprep.subr.mxu0 0.0
  %2904 = vmatpush1.msra.mxu0 0.0
  %2905 = vmatprep.subr.mxu0 0.0
  %2906 = vmatpush1.msra.mxu0 0.0
  %2907 = vmatprep.subr.mxu0 0.0
  %2908 = vmatpush1.msra.mxu0 0.0
  %2909 = vmatprep.subr.mxu0 0.0
  %2910 = vmatpush1.msra.mxu0 0.0
  %2911 = vmatprep.subr.mxu0 0.0
  %2912 = vmatpush1.msra.mxu0 0.0
  %2913 = vmatprep.subr.mxu0 0.0
  %2914 = vmatpush1.msra.mxu0 0.0
  %2915 = vmatprep.subr.mxu0 0.0
  %2916 = vmatpush1.msra.mxu0 0.0
  %2917 = vmatprep.subr.mxu0 0.0
  %2918 = vmatpush1.msra.mxu0 0.0
  %2919 = vmatprep.subr.mxu0 0.0
  %2920 = vmatpush1.msra.mxu0 0.0
  %2921 = vmatprep.subr.mxu0 0.0
  %2922 = vmatpush1.msra.mxu0 0.0
  %2923 = vmatprep.subr.mxu0 0.0
  %2924 = vmatpush1.msra.mxu0 0.0
  %2925 = vmatprep.subr.mxu0 0.0
  %2926 = vmatpush1.msra.mxu0 0.0
  %2927 = vmatprep.subr.mxu0 0.0
  %2928 = vmatpush1.msra.mxu0 0.0
  %2929 = vmatprep.subr.mxu0 0.0
  %2930 = vmatpush1.msra.mxu0 0.0
  %2931 = vmatprep.mubr.f32.mxu0 0.0
  %2932 = vmatmul.mubr.f32.gmra.mrb[0].mxu0 %v2865
  %v2933 = vpop.f32.mrb[0].mxu0
  %v2934 = vadd.f32 0.0, %v2933
  %v2935 = vpop.f32.mrb[0].mxu0
  %2936 = vdwg.mxu0
  %v2939 = vrot.slane %v2934, 7
  %v2940 = vsel %vm854, %v2939, %v2861
  %v2941 = vsel %vm134, %v2940, 0
  %2943 = vmatprep.subr.mxu0 0.0
  %2944 = vmatpush1.msra.mxu0 %v27
  %2945 = vmatprep.subr.mxu0 0.0
  %2946 = vmatpush1.msra.mxu0 0.0
  %2947 = vmatprep.subr.mxu0 0.0
  %2948 = vmatpush1.msra.mxu0 0.0
  %2949 = vmatprep.subr.mxu0 0.0
  %2950 = vmatpush1.msra.mxu0 0.0
  %2951 = vmatprep.subr.mxu0 0.0
  %2952 = vmatpush1.msra.mxu0 0.0
  %2953 = vmatprep.subr.mxu0 0.0
  %2954 = vmatpush1.msra.mxu0 0.0
  %2955 = vmatprep.subr.mxu0 0.0
  %2956 = vmatpush1.msra.mxu0 0.0
  %2957 = vmatprep.subr.mxu0 0.0
  %2958 = vmatpush1.msra.mxu0 0.0
  %2959 = vmatprep.subr.mxu0 0.0
  %2960 = vmatpush1.msra.mxu0 0.0
  %2961 = vmatprep.subr.mxu0 0.0
  %2962 = vmatpush1.msra.mxu0 0.0
  %2963 = vmatprep.subr.mxu0 0.0
  %2964 = vmatpush1.msra.mxu0 0.0
  %2965 = vmatprep.subr.mxu0 0.0
  %2966 = vmatpush1.msra.mxu0 0.0
  %2967 = vmatprep.subr.mxu0 0.0
  %2968 = vmatpush1.msra.mxu0 0.0
  %2969 = vmatprep.subr.mxu0 0.0
  %2970 = vmatpush1.msra.mxu0 0.0
  %2971 = vmatprep.subr.mxu0 0.0
  %2972 = vmatpush1.msra.mxu0 0.0
  %2973 = vmatprep.subr.mxu0 0.0
  %2974 = vmatpush1.msra.mxu0 0.0
  %2975 = vmatprep.subr.mxu0 0.0
  %2976 = vmatpush1.msra.mxu0 0.0
  %2977 = vmatprep.subr.mxu0 0.0
  %2978 = vmatpush1.msra.mxu0 0.0
  %2979 = vmatprep.subr.mxu0 0.0
  %2980 = vmatpush1.msra.mxu0 0.0
  %2981 = vmatprep.subr.mxu0 0.0
  %2982 = vmatpush1.msra.mxu0 0.0
  %2983 = vmatprep.subr.mxu0 0.0
  %2984 = vmatpush1.msra.mxu0 0.0
  %2985 = vmatprep.subr.mxu0 0.0
  %2986 = vmatpush1.msra.mxu0 0.0
  %2987 = vmatprep.subr.mxu0 0.0
  %2988 = vmatpush1.msra.mxu0 0.0
  %2989 = vmatprep.subr.mxu0 0.0
  %2990 = vmatpush1.msra.mxu0 0.0
  %2991 = vmatprep.subr.mxu0 0.0
  %2992 = vmatpush1.msra.mxu0 0.0
  %2993 = vmatprep.subr.mxu0 0.0
  %2994 = vmatpush1.msra.mxu0 0.0
  %2995 = vmatprep.subr.mxu0 0.0
  %2996 = vmatpush1.msra.mxu0 0.0
  %2997 = vmatprep.subr.mxu0 0.0
  %2998 = vmatpush1.msra.mxu0 0.0
  %2999 = vmatprep.subr.mxu0 0.0
  %3000 = vmatpush1.msra.mxu0 0.0
  %3001 = vmatprep.subr.mxu0 0.0
  %3002 = vmatpush1.msra.mxu0 0.0
  %3003 = vmatprep.subr.mxu0 0.0
  %3004 = vmatpush1.msra.mxu0 0.0
  %3005 = vmatprep.subr.mxu0 0.0
  %3006 = vmatpush1.msra.mxu0 0.0
  %3007 = vmatprep.mubr.f32.mxu0 0.0
  %3008 = vmatmul.mubr.f32.gmra.mrb[0].mxu0 %v2941
  %v3009 = vpop.f32.mrb[0].mxu0
  %v3010 = vadd.f32 0.0, %v3009
  %v3011 = vpop.f32.mrb[0].mxu0
  %3012 = vdwg.mxu0
  %v3013 = vadd.f32 %v2610, %v3010
  %v3014 = vsel %vm1348, %v1715, 0
  %3016 = vmatprep.subr.mxu0 0.0
  %3017 = vmatpush1.msra.mxu0 %v31
  %3018 = vmatprep.subr.mxu0 0.0
  %3019 = vmatpush1.msra.mxu0 %v32
  %3020 = vmatprep.subr.mxu0 0.0
  %3021 = vmatpush1.msra.mxu0 %v33
  %3022 = vmatprep.subr.mxu0 0.0
  %3023 = vmatpush1.msra.mxu0 %v34
  %3024 = vmatprep.subr.mxu0 0.0
  %3025 = vmatpush1.msra.mxu0 0.0
  %3026 = vmatprep.subr.mxu0 0.0
  %3027 = vmatpush1.msra.mxu0 0.0
  %3028 = vmatprep.subr.mxu0 0.0
  %3029 = vmatpush1.msra.mxu0 0.0
  %3030 = vmatprep.subr.mxu0 0.0
  %3031 = vmatpush1.msra.mxu0 0.0
  %3032 = vmatprep.subr.mxu0 0.0
  %3033 = vmatpush1.msra.mxu0 0.0
  %3034 = vmatprep.subr.mxu0 0.0
  %3035 = vmatpush1.msra.mxu0 0.0
  %3036 = vmatprep.subr.mxu0 0.0
  %3037 = vmatpush1.msra.mxu0 0.0
  %3038 = vmatprep.subr.mxu0 0.0
  %3039 = vmatpush1.msra.mxu0 0.0
  %3040 = vmatprep.subr.mxu0 0.0
  %3041 = vmatpush1.msra.mxu0 0.0
  %3042 = vmatprep.subr.mxu0 0.0
  %3043 = vmatpush1.msra.mxu0 0.0
  %3044 = vmatprep.subr.mxu0 0.0
  %3045 = vmatpush1.msra.mxu0 0.0
  %3046 = vmatprep.subr.mxu0 0.0
  %3047 = vmatpush1.msra.mxu0 0.0
  %3048 = vmatprep.subr.mxu0 0.0
  %3049 = vmatpush1.msra.mxu0 0.0
  %3050 = vmatprep.subr.mxu0 0.0
  %3051 = vmatpush1.msra.mxu0 0.0
  %3052 = vmatprep.subr.mxu0 0.0
  %3053 = vmatpush1.msra.mxu0 0.0
  %3054 = vmatprep.subr.mxu0 0.0
  %3055 = vmatpush1.msra.mxu0 0.0
  %3056 = vmatprep.subr.mxu0 0.0
  %3057 = vmatpush1.msra.mxu0 0.0
  %3058 = vmatprep.subr.mxu0 0.0
  %3059 = vmatpush1.msra.mxu0 0.0
  %3060 = vmatprep.subr.mxu0 0.0
  %3061 = vmatpush1.msra.mxu0 0.0
  %3062 = vmatprep.subr.mxu0 0.0
  %3063 = vmatpush1.msra.mxu0 0.0
  %3064 = vmatprep.subr.mxu0 0.0
  %3065 = vmatpush1.msra.mxu0 0.0
  %3066 = vmatprep.subr.mxu0 0.0
  %3067 = vmatpush1.msra.mxu0 0.0
  %3068 = vmatprep.subr.mxu0 0.0
  %3069 = vmatpush1.msra.mxu0 0.0
  %3070 = vmatprep.subr.mxu0 0.0
  %3071 = vmatpush1.msra.mxu0 0.0
  %3072 = vmatprep.subr.mxu0 0.0
  %3073 = vmatpush1.msra.mxu0 0.0
  %3074 = vmatprep.subr.mxu0 0.0
  %3075 = vmatpush1.msra.mxu0 0.0
  %3076 = vmatprep.subr.mxu0 0.0
  %3077 = vmatpush1.msra.mxu0 0.0
  %3078 = vmatprep.subr.mxu0 0.0
  %3079 = vmatpush1.msra.mxu0 0.0
  %3080 = vmatprep.mubr.f32.mxu0 0.0
  %3081 = vmatmul.mubr.f32.gmra.mrb[0].mxu0 %v3014
  %v3082 = vpop.f32.mrb[0].mxu0
  %v3083 = vadd.f32 0.0, %v3082
  %v3084 = vpop.f32.mrb[0].mxu0
  %3085 = vdwg.mxu0
  %v3087 = vsel %vm1421, %v3013, 0
  %3089 = vmatprep.subr.mxu0 0.0
  %3090 = vmatpush1.msra.mxu0 %v29
  %3091 = vmatprep.subr.mxu0 0.0
  %3092 = vmatpush1.msra.mxu0 %v30
  %3093 = vmatprep.subr.mxu0 0.0
  %3094 = vmatpush1.msra.mxu0 0.0
  %3095 = vmatprep.subr.mxu0 0.0
  %3096 = vmatpush1.msra.mxu0 0.0
  %3097 = vmatprep.subr.mxu0 0.0
  %3098 = vmatpush1.msra.mxu0 0.0
  %3099 = vmatprep.subr.mxu0 0.0
  %3100 = vmatpush1.msra.mxu0 0.0
  %3101 = vmatprep.subr.mxu0 0.0
  %3102 = vmatpush1.msra.mxu0 0.0
  %3103 = vmatprep.subr.mxu0 0.0
  %3104 = vmatpush1.msra.mxu0 0.0
  %3105 = vmatprep.subr.mxu0 0.0
  %3106 = vmatpush1.msra.mxu0 0.0
  %3107 = vmatprep.subr.mxu0 0.0
  %3108 = vmatpush1.msra.mxu0 0.0
  %3109 = vmatprep.subr.mxu0 0.0
  %3110 = vmatpush1.msra.mxu0 0.0
  %3111 = vmatprep.subr.mxu0 0.0
  %3112 = vmatpush1.msra.mxu0 0.0
  %3113 = vmatprep.subr.mxu0 0.0
  %3114 = vmatpush1.msra.mxu0 0.0
  %3115 = vmatprep.subr.mxu0 0.0
  %3116 = vmatpush1.msra.mxu0 0.0
  %3117 = vmatprep.subr.mxu0 0.0
  %3118 = vmatpush1.msra.mxu0 0.0
  %3119 = vmatprep.subr.mxu0 0.0
  %3120 = vmatpush1.msra.mxu0 0.0
  %3121 = vmatprep.subr.mxu0 0.0
  %3122 = vmatpush1.msra.mxu0 0.0
  %3123 = vmatprep.subr.mxu0 0.0
  %3124 = vmatpush1.msra.mxu0 0.0
  %3125 = vmatprep.subr.mxu0 0.0
  %3126 = vmatpush1.msra.mxu0 0.0
  %3127 = vmatprep.subr.mxu0 0.0
  %3128 = vmatpush1.msra.mxu0 0.0
  %3129 = vmatprep.subr.mxu0 0.0
  %3130 = vmatpush1.msra.mxu0 0.0
  %3131 = vmatprep.subr.mxu0 0.0
  %3132 = vmatpush1.msra.mxu0 0.0
  %3133 = vmatprep.subr.mxu0 0.0
  %3134 = vmatpush1.msra.mxu0 0.0
  %3135 = vmatprep.subr.mxu0 0.0
  %3136 = vmatpush1.msra.mxu0 0.0
  %3137 = vmatprep.subr.mxu0 0.0
  %3138 = vmatpush1.msra.mxu0 0.0
  %3139 = vmatprep.subr.mxu0 0.0
  %3140 = vmatpush1.msra.mxu0 0.0
  %3141 = vmatprep.subr.mxu0 0.0
  %3142 = vmatpush1.msra.mxu0 0.0
  %3143 = vmatprep.subr.mxu0 0.0
  %3144 = vmatpush1.msra.mxu0 0.0
  %3145 = vmatprep.subr.mxu0 0.0
  %3146 = vmatpush1.msra.mxu0 0.0
  %3147 = vmatprep.subr.mxu0 0.0
  %3148 = vmatpush1.msra.mxu0 0.0
  %3149 = vmatprep.subr.mxu0 0.0
  %3150 = vmatpush1.msra.mxu0 0.0
  %3151 = vmatprep.subr.mxu0 0.0
  %3152 = vmatpush1.msra.mxu0 0.0
  %3153 = vmatprep.mubr.f32.mxu0 0.0
  %3154 = vmatmul.mubr.f32.gmra.mrb[0].mxu0 %v3087
  %v3155 = vpop.f32.mrb[0].mxu0
  %v3156 = vadd.f32 %v3083, %v3155
  %v3157 = vpop.f32.mrb[0].mxu0
  %3158 = vdwg.mxu0
  %v3159 = vadd.f32 %v3156, %v35
  %v3160 = vxor.u32 %v3159, 2147483648
  %v3161 = vmul.f32 %v3160, 1.442695
  %v3162 = vpow.pop %v3161
  %v3163 = vadd.f32 %v3162, 1.0
  %v3164 = vrcp.pop %v3163
  %v3165 = vmul.f32 1.0, %v3164
  %3167 = vrot.lane.b32.xlu0 %v3165, 96
  %v3168 = vpop.permute.xlu0 %3167
  %v3170 = vmul.f32 %v3159, %v3168
  %v3171 = vsel %vm1507, %v3170, 0.0
  %3172 = vadd.xlane.f32.xlu0 %v3171
  %v3173 = vpop.xlane.xlu0 %3172
  %v3174 = vmul.f32 %v3173, %v1511
  %v3175 = vsub.f32 %v3170, %v3174
  %v3176 = vmul.f32 %v3175, %v3175
  %v3177 = vsel %vm1507, %v3176, 0.0
  %3178 = vadd.xlane.f32.xlu0 %v3177
  %v3179 = vpop.xlane.xlu0 %3178
  %v3180 = vmul.f32 %v3179, %v1511
  %v3181 = vadd.f32 %v3180, 1e-05
  %v3182 = vrsqrt.pop %v3181
  %v3183 = vmul.f32 %v3175, %v3182
  %v3184 = vmul.f32 %v3183, %v36
  %v3185 = vadd.f32 %v3184, %v37
  %3187 = vrot.lane.b32.xlu0 %v1538, 96
  %v3188 = vpop.permute.xlu0 %3187
  %3189 = vrot.lane.b32.xlu0 %v1545, 96
  %v3190 = vpop.permute.xlu0 %3189
  %v3191 = vsel %vm1537, %v3188, %v3190
  %3195 = vrot.lane.b32.xlu0 %v3185, 96
  %v3196 = vpop.permute.xlu0 %3195
  %v3198 = vsel %vm1537, %v3190, %v3196
  %3199 = vmatprep.subr.mxu0 %v39
  %3200 = vmatpush1.msra.mxu0 %v38
  %3201 = vmatprep.subr.mxu0 %v41
  %3202 = vmatpush1.msra.mxu0 %v40
  %3203 = vmatprep.subr.mxu0 %v43
  %3204 = vmatpush1.msra.mxu0 %v42
  %3205 = vmatprep.subr.mxu0 %v45
  %3206 = vmatpush1.msra.mxu0 %v44
  %3207 = vmatprep.subr.mxu0 %v47
  %3208 = vmatpush1.msra.mxu0 %v46
  %3209 = vmatprep.subr.mxu0 %v49
  %3210 = vmatpush1.msra.mxu0 %v48
  %3211 = vmatprep.subr.mxu0 %v51
  %3212 = vmatpush1.msra.mxu0 %v50
  %3213 = vmatprep.subr.mxu0 %v53
  %3214 = vmatpush1.msra.mxu0 %v52
  %3215 = vmatprep.subr.mxu0 %v55
  %3216 = vmatpush1.msra.mxu0 %v54
  %3217 = vmatprep.subr.mxu0 %v57
  %3218 = vmatpush1.msra.mxu0 %v56
  %3219 = vmatprep.subr.mxu0 %v59
  %3220 = vmatpush1.msra.mxu0 %v58
  %3221 = vmatprep.subr.mxu0 %v61
  %3222 = vmatpush1.msra.mxu0 %v60
  %3223 = vmatprep.subr.mxu0 %v63
  %3224 = vmatpush1.msra.mxu0 %v62
  %3225 = vmatprep.subr.mxu0 %v65
  %3226 = vmatpush1.msra.mxu0 %v64
  %3227 = vmatprep.subr.mxu0 %v67
  %3228 = vmatpush1.msra.mxu0 %v66
  %3229 = vmatprep.subr.mxu0 %v69
  %3230 = vmatpush1.msra.mxu0 %v68
  %3231 = vmatprep.subr.mxu0 %v71
  %3232 = vmatpush1.msra.mxu0 %v70
  %3233 = vmatprep.subr.mxu0 %v73
  %3234 = vmatpush1.msra.mxu0 %v72
  %3235 = vmatprep.subr.mxu0 %v75
  %3236 = vmatpush1.msra.mxu0 %v74
  %3237 = vmatprep.subr.mxu0 %v77
  %3238 = vmatpush1.msra.mxu0 %v76
  %3239 = vmatprep.subr.mxu0 %v79
  %3240 = vmatpush1.msra.mxu0 %v78
  %3241 = vmatprep.subr.mxu0 %v81
  %3242 = vmatpush1.msra.mxu0 %v80
  %3243 = vmatprep.subr.mxu0 %v83
  %3244 = vmatpush1.msra.mxu0 %v82
  %3245 = vmatprep.subr.mxu0 %v85
  %3246 = vmatpush1.msra.mxu0 %v84
  %3247 = vmatprep.subr.mxu0 %v87
  %3248 = vmatpush1.msra.mxu0 %v86
  %3249 = vmatprep.subr.mxu0 %v89
  %3250 = vmatpush1.msra.mxu0 %v88
  %3251 = vmatprep.subr.mxu0 %v91
  %3252 = vmatpush1.msra.mxu0 %v90
  %3253 = vmatprep.subr.mxu0 %v93
  %3254 = vmatpush1.msra.mxu0 %v92
  %3255 = vmatprep.subr.mxu0 %v95
  %3256 = vmatpush1.msra.mxu0 %v94
  %3257 = vmatprep.subr.mxu0 %v97
  %3258 = vmatpush1.msra.mxu0 %v96
  %3259 = vmatprep.subr.mxu0 %v99
  %3260 = vmatpush1.msra.mxu0 %v98
  %3261 = vmatprep.subr.mxu0 %v101
  %3262 = vmatpush1.msra.mxu0 %v100
  %3263 = vmatprep.mubr.f32.mxu0 %v3198
  %3264 = vmatmul.mubr.f32.gmra.mrb[0].mxu0 %v3191
  %v3265 = vpop.f32.mrb[0].mxu0
  %v3266 = vadd.f32 %v1550, %v3265
  %v3267 = vpop.f32.mrb[0].mxu0
  %v3268 = vadd.f32 %v1554, %v3267
  %3269 = vdwg.mxu0
  %v3270 = vxor.u32 %v3268, 2147483648
  %v3271 = vmul.f32 %v3270, 1.442695
  %v3272 = vpow.pop %v3271
  %v3273 = vadd.f32 %v3272, 1.0
  %v3274 = vrcp.pop %v3273
  %v3275 = vmul.f32 1.0, %v3274
  %v3276 = vmul.f32 %v3266, %v3275
  %3277 = vmatprep.subr.mxu0 0.0
  %3278 = vmatpush1.msra.mxu0 %v104
  %3279 = vmatprep.subr.mxu0 0.0
  %3280 = vmatpush1.msra.mxu0 %v105
  %3281 = vmatprep.subr.mxu0 0.0
  %3282 = vmatpush1.msra.mxu0 %v106
  %3283 = vmatprep.subr.mxu0 0.0
  %3284 = vmatpush1.msra.mxu0 %v107
  %3285 = vmatprep.subr.mxu0 0.0
  %3286 = vmatpush1.msra.mxu0 %v108
  %3287 = vmatprep.subr.mxu0 0.0
  %3288 = vmatpush1.msra.mxu0 %v109
  %3289 = vmatprep.subr.mxu0 0.0
  %3290 = vmatpush1.msra.mxu0 %v110
  %3291 = vmatprep.subr.mxu0 0.0
  %3292 = vmatpush1.msra.mxu0 %v111
  %3293 = vmatprep.subr.mxu0 0.0
  %3294 = vmatpush1.msra.mxu0 %v112
  %3295 = vmatprep.subr.mxu0 0.0
  %3296 = vmatpush1.msra.mxu0 %v113
  %3297 = vmatprep.subr.mxu0 0.0
  %3298 = vmatpush1.msra.mxu0 %v114
  %3299 = vmatprep.subr.mxu0 0.0
  %3300 = vmatpush1.msra.mxu0 %v115
  %3301 = vmatprep.subr.mxu0 0.0
  %3302 = vmatpush1.msra.mxu0 %v116
  %3303 = vmatprep.subr.mxu0 0.0
  %3304 = vmatpush1.msra.mxu0 %v117
  %3305 = vmatprep.subr.mxu0 0.0
  %3306 = vmatpush1.msra.mxu0 %v118
  %3307 = vmatprep.subr.mxu0 0.0
  %3308 = vmatpush1.msra.mxu0 %v119
  %3309 = vmatprep.subr.mxu0 0.0
  %3310 = vmatpush1.msra.mxu0 0.0
  %3311 = vmatprep.subr.mxu0 0.0
  %3312 = vmatpush1.msra.mxu0 0.0
  %3313 = vmatprep.subr.mxu0 0.0
  %3314 = vmatpush1.msra.mxu0 0.0
  %3315 = vmatprep.subr.mxu0 0.0
  %3316 = vmatpush1.msra.mxu0 0.0
  %3317 = vmatprep.subr.mxu0 0.0
  %3318 = vmatpush1.msra.mxu0 0.0
  %3319 = vmatprep.subr.mxu0 0.0
  %3320 = vmatpush1.msra.mxu0 0.0
  %3321 = vmatprep.subr.mxu0 0.0
  %3322 = vmatpush1.msra.mxu0 0.0
  %3323 = vmatprep.subr.mxu0 0.0
  %3324 = vmatpush1.msra.mxu0 0.0
  %3325 = vmatprep.subr.mxu0 0.0
  %3326 = vmatpush1.msra.mxu0 0.0
  %3327 = vmatprep.subr.mxu0 0.0
  %3328 = vmatpush1.msra.mxu0 0.0
  %3329 = vmatprep.subr.mxu0 0.0
  %3330 = vmatpush1.msra.mxu0 0.0
  %3331 = vmatprep.subr.mxu0 0.0
  %3332 = vmatpush1.msra.mxu0 0.0
  %3333 = vmatprep.subr.mxu0 0.0
  %3334 = vmatpush1.msra.mxu0 0.0
  %3335 = vmatprep.subr.mxu0 0.0
  %3336 = vmatpush1.msra.mxu0 0.0
  %3337 = vmatprep.subr.mxu0 0.0
  %3338 = vmatpush1.msra.mxu0 0.0
  %3339 = vmatprep.subr.mxu0 0.0
  %3340 = vmatpush1.msra.mxu0 0.0
  %3341 = vmatprep.mubr.f32.mxu0 0.0
  %3342 = vmatmul.mubr.f32.gmra.mrb[0].mxu0 %v3276
  %v3343 = vpop.f32.mrb[0].mxu0
  %v3344 = vadd.f32 %v120, %v3343
  %v3345 = vpop.f32.mrb[0].mxu0
  %3346 = vdwg.mxu0
  %v3347 = vxor.u32 %v3344, 2147483648
  %v3348 = vmul.f32 %v3347, 1.442695
  %v3349 = vpow.pop %v3348
  %v3350 = vadd.f32 %v3349, 1.0
  %v3351 = vrcp.pop %v3350
  %v3352 = vmul.f32 1.0, %v3351
  %3354 = vrot.lane.b32.xlu0 %v3352, 96
  %v3355 = vpop.permute.xlu0 %3354
  %v3357 = vmul.f32 %v3344, %v3355
  %v3359 = vsel %vm134, %v3357, 0
  %3361 = vmatprep.subr.mxu0 0.0
  %3362 = vmatpush1.msra.mxu0 %v16
  %3363 = vmatprep.subr.mxu0 0.0
  %3364 = vmatpush1.msra.mxu0 0.0
  %3365 = vmatprep.subr.mxu0 0.0
  %3366 = vmatpush1.msra.mxu0 0.0
  %3367 = vmatprep.subr.mxu0 0.0
  %3368 = vmatpush1.msra.mxu0 0.0
  %3369 = vmatprep.subr.mxu0 0.0
  %3370 = vmatpush1.msra.mxu0 0.0
  %3371 = vmatprep.subr.mxu0 0.0
  %3372 = vmatpush1.msra.mxu0 0.0
  %3373 = vmatprep.subr.mxu0 0.0
  %3374 = vmatpush1.msra.mxu0 0.0
  %3375 = vmatprep.subr.mxu0 0.0
  %3376 = vmatpush1.msra.mxu0 0.0
  %3377 = vmatprep.subr.mxu0 0.0
  %3378 = vmatpush1.msra.mxu0 0.0
  %3379 = vmatprep.subr.mxu0 0.0
  %3380 = vmatpush1.msra.mxu0 0.0
  %3381 = vmatprep.subr.mxu0 0.0
  %3382 = vmatpush1.msra.mxu0 0.0
  %3383 = vmatprep.subr.mxu0 0.0
  %3384 = vmatpush1.msra.mxu0 0.0
  %3385 = vmatprep.subr.mxu0 0.0
  %3386 = vmatpush1.msra.mxu0 0.0
  %3387 = vmatprep.subr.mxu0 0.0
  %3388 = vmatpush1.msra.mxu0 0.0
  %3389 = vmatprep.subr.mxu0 0.0
  %3390 = vmatpush1.msra.mxu0 0.0
  %3391 = vmatprep.subr.mxu0 0.0
  %3392 = vmatpush1.msra.mxu0 0.0
  %3393 = vmatprep.subr.mxu0 0.0
  %3394 = vmatpush1.msra.mxu0 0.0
  %3395 = vmatprep.subr.mxu0 0.0
  %3396 = vmatpush1.msra.mxu0 0.0
  %3397 = vmatprep.subr.mxu0 0.0
  %3398 = vmatpush1.msra.mxu0 0.0
  %3399 = vmatprep.subr.mxu0 0.0
  %3400 = vmatpush1.msra.mxu0 0.0
  %3401 = vmatprep.subr.mxu0 0.0
  %3402 = vmatpush1.msra.mxu0 0.0
  %3403 = vmatprep.subr.mxu0 0.0
  %3404 = vmatpush1.msra.mxu0 0.0
  %3405 = vmatprep.subr.mxu0 0.0
  %3406 = vmatpush1.msra.mxu0 0.0
  %3407 = vmatprep.subr.mxu0 0.0
  %3408 = vmatpush1.msra.mxu0 0.0
  %3409 = vmatprep.subr.mxu0 0.0
  %3410 = vmatpush1.msra.mxu0 0.0
  %3411 = vmatprep.subr.mxu0 0.0
  %3412 = vmatpush1.msra.mxu0 0.0
  %3413 = vmatprep.subr.mxu0 0.0
  %3414 = vmatpush1.msra.mxu0 0.0
  %3415 = vmatprep.subr.mxu0 0.0
  %3416 = vmatpush1.msra.mxu0 0.0
  %3417 = vmatprep.subr.mxu0 0.0
  %3418 = vmatpush1.msra.mxu0 0.0
  %3419 = vmatprep.subr.mxu0 0.0
  %3420 = vmatpush1.msra.mxu0 0.0
  %3421 = vmatprep.subr.mxu0 0.0
  %3422 = vmatpush1.msra.mxu0 0.0
  %3423 = vmatprep.subr.mxu0 0.0
  %3424 = vmatpush1.msra.mxu0 0.0
  %3425 = vmatprep.mubr.f32.mxu0 0.0
  %3426 = vmatmul.mubr.f32.gmra.mrb[0].mxu0 %v3359
  %v3427 = vpop.f32.mrb[0].mxu0
  %v3428 = vadd.f32 0.0, %v3427
  %v3429 = vpop.f32.mrb[0].mxu0
  %3430 = vdwg.mxu0
  %3431 = vmatprep.subr.mxu0 0.0
  %3432 = vmatpush1.msra.mxu0 %v17
  %3433 = vmatprep.subr.mxu0 0.0
  %3434 = vmatpush1.msra.mxu0 0.0
  %3435 = vmatprep.subr.mxu0 0.0
  %3436 = vmatpush1.msra.mxu0 0.0
  %3437 = vmatprep.subr.mxu0 0.0
  %3438 = vmatpush1.msra.mxu0 0.0
  %3439 = vmatprep.subr.mxu0 0.0
  %3440 = vmatpush1.msra.mxu0 0.0
  %3441 = vmatprep.subr.mxu0 0.0
  %3442 = vmatpush1.msra.mxu0 0.0
  %3443 = vmatprep.subr.mxu0 0.0
  %3444 = vmatpush1.msra.mxu0 0.0
  %3445 = vmatprep.subr.mxu0 0.0
  %3446 = vmatpush1.msra.mxu0 0.0
  %3447 = vmatprep.subr.mxu0 0.0
  %3448 = vmatpush1.msra.mxu0 0.0
  %3449 = vmatprep.subr.mxu0 0.0
  %3450 = vmatpush1.msra.mxu0 0.0
  %3451 = vmatprep.subr.mxu0 0.0
  %3452 = vmatpush1.msra.mxu0 0.0
  %3453 = vmatprep.subr.mxu0 0.0
  %3454 = vmatpush1.msra.mxu0 0.0
  %3455 = vmatprep.subr.mxu0 0.0
  %3456 = vmatpush1.msra.mxu0 0.0
  %3457 = vmatprep.subr.mxu0 0.0
  %3458 = vmatpush1.msra.mxu0 0.0
  %3459 = vmatprep.subr.mxu0 0.0
  %3460 = vmatpush1.msra.mxu0 0.0
  %3461 = vmatprep.subr.mxu0 0.0
  %3462 = vmatpush1.msra.mxu0 0.0
  %3463 = vmatprep.subr.mxu0 0.0
  %3464 = vmatpush1.msra.mxu0 0.0
  %3465 = vmatprep.subr.mxu0 0.0
  %3466 = vmatpush1.msra.mxu0 0.0
  %3467 = vmatprep.subr.mxu0 0.0
  %3468 = vmatpush1.msra.mxu0 0.0
  %3469 = vmatprep.subr.mxu0 0.0
  %3470 = vmatpush1.msra.mxu0 0.0
  %3471 = vmatprep.subr.mxu0 0.0
  %3472 = vmatpush1.msra.mxu0 0.0
  %3473 = vmatprep.subr.mxu0 0.0
  %3474 = vmatpush1.msra.mxu0 0.0
  %3475 = vmatprep.subr.mxu0 0.0
  %3476 = vmatpush1.msra.mxu0 0.0
  %3477 = vmatprep.subr.mxu0 0.0
  %3478 = vmatpush1.msra.mxu0 0.0
  %3479 = vmatprep.subr.mxu0 0.0
  %3480 = vmatpush1.msra.mxu0 0.0
  %3481 = vmatprep.subr.mxu0 0.0
  %3482 = vmatpush1.msra.mxu0 0.0
  %3483 = vmatprep.subr.mxu0 0.0
  %3484 = vmatpush1.msra.mxu0 0.0
  %3485 = vmatprep.subr.mxu0 0.0
  %3486 = vmatpush1.msra.mxu0 0.0
  %3487 = vmatprep.subr.mxu0 0.0
  %3488 = vmatpush1.msra.mxu0 0.0
  %3489 = vmatprep.subr.mxu0 0.0
  %3490 = vmatpush1.msra.mxu0 0.0
  %3491 = vmatprep.subr.mxu0 0.0
  %3492 = vmatpush1.msra.mxu0 0.0
  %3493 = vmatprep.subr.mxu0 0.0
  %3494 = vmatpush1.msra.mxu0 0.0
  %3495 = vmatprep.mubr.f32.mxu0 0.0
  %3496 = vmatmul.mubr.f32.gmra.mrb[0].mxu0 %v3359
  %v3497 = vpop.f32.mrb[0].mxu0
  %v3498 = vadd.f32 0.0, %v3497
  %v3499 = vpop.f32.mrb[0].mxu0
  %3500 = vdwg.mxu0
  %v3501 = vmul.f32 %v3428, %v3498
  %v3502 = vmul.f32 %v19, %v1861
  %v3503 = vadd.f32 %v3502, %v3501
  %v3504 = vmul.f32 %v19, %v1862
  %v3505 = vadd.f32 %v3504, 1.0
  %v3506 = vrsqrt.pop %v3505
  %v3507 = vmul.f32 %v3503, %v3506
  %v3509 = vsel %vm429, %v3507, 0
  %3511 = vmatprep.subr.mxu0 0.0
  %3512 = vmatpush1.msra.mxu0 %v121
  %3513 = vmatprep.subr.mxu0 0.0
  %3514 = vmatpush1.msra.mxu0 %v122
  %3515 = vmatprep.subr.mxu0 0.0
  %3516 = vmatpush1.msra.mxu0 %v123
  %3517 = vmatprep.subr.mxu0 0.0
  %3518 = vmatpush1.msra.mxu0 %v124
  %3519 = vmatprep.subr.mxu0 0.0
  %3520 = vmatpush1.msra.mxu0 %v1869
  %3521 = vmatprep.subr.mxu0 0.0
  %3522 = vmatpush1.msra.mxu0 0.0
  %3523 = vmatprep.subr.mxu0 0.0
  %3524 = vmatpush1.msra.mxu0 0.0
  %3525 = vmatprep.subr.mxu0 0.0
  %3526 = vmatpush1.msra.mxu0 0.0
  %3527 = vmatprep.subr.mxu0 0.0
  %3528 = vmatpush1.msra.mxu0 0.0
  %3529 = vmatprep.subr.mxu0 0.0
  %3530 = vmatpush1.msra.mxu0 0.0
  %3531 = vmatprep.subr.mxu0 0.0
  %3532 = vmatpush1.msra.mxu0 0.0
  %3533 = vmatprep.subr.mxu0 0.0
  %3534 = vmatpush1.msra.mxu0 0.0
  %3535 = vmatprep.subr.mxu0 0.0
  %3536 = vmatpush1.msra.mxu0 0.0
  %3537 = vmatprep.subr.mxu0 0.0
  %3538 = vmatpush1.msra.mxu0 0.0
  %3539 = vmatprep.subr.mxu0 0.0
  %3540 = vmatpush1.msra.mxu0 0.0
  %3541 = vmatprep.subr.mxu0 0.0
  %3542 = vmatpush1.msra.mxu0 0.0
  %3543 = vmatprep.subr.mxu0 0.0
  %3544 = vmatpush1.msra.mxu0 0.0
  %3545 = vmatprep.subr.mxu0 0.0
  %3546 = vmatpush1.msra.mxu0 0.0
  %3547 = vmatprep.subr.mxu0 0.0
  %3548 = vmatpush1.msra.mxu0 0.0
  %3549 = vmatprep.subr.mxu0 0.0
  %3550 = vmatpush1.msra.mxu0 0.0
  %3551 = vmatprep.subr.mxu0 0.0
  %3552 = vmatpush1.msra.mxu0 0.0
  %3553 = vmatprep.subr.mxu0 0.0
  %3554 = vmatpush1.msra.mxu0 0.0
  %3555 = vmatprep.subr.mxu0 0.0
  %3556 = vmatpush1.msra.mxu0 0.0
  %3557 = vmatprep.subr.mxu0 0.0
  %3558 = vmatpush1.msra.mxu0 0.0
  %3559 = vmatprep.subr.mxu0 0.0
  %3560 = vmatpush1.msra.mxu0 0.0
  %3561 = vmatprep.subr.mxu0 0.0
  %3562 = vmatpush1.msra.mxu0 0.0
  %3563 = vmatprep.subr.mxu0 0.0
  %3564 = vmatpush1.msra.mxu0 0.0
  %3565 = vmatprep.subr.mxu0 0.0
  %3566 = vmatpush1.msra.mxu0 0.0
  %3567 = vmatprep.subr.mxu0 0.0
  %3568 = vmatpush1.msra.mxu0 0.0
  %3569 = vmatprep.subr.mxu0 0.0
  %3570 = vmatpush1.msra.mxu0 0.0
  %3571 = vmatprep.subr.mxu0 0.0
  %3572 = vmatpush1.msra.mxu0 0.0
  %3573 = vmatprep.subr.mxu0 0.0
  %3574 = vmatpush1.msra.mxu0 0.0
  %3575 = vmatprep.mubr.f32.mxu0 0.0
  %3576 = vmatmul.mubr.f32.gmra.mrb[0].mxu0 %v3509
  %v3577 = vpop.f32.mrb[0].mxu0
  %v3578 = vadd.f32 %v126, %v3577
  %v3579 = vpop.f32.mrb[0].mxu0
  %3580 = vdwg.mxu0
  %v3581 = vsel %vm1941, %v3578, -inf
  %3582 = vmax.xlane.f32.xlu0 %v3581
  %v3583 = vpop.xlane.xlu0 %3582
  %v3584 = vsub.f32 %v3578, %v3583
  %v3585 = vmul.f32 %v3584, 1.442695
  %v3586 = vpow.pop %v3585
  %v3587 = vsel %vm1941, %v3586, 0.0
  %3588 = vadd.xlane.f32.xlu0 %v3587
  %v3589 = vpop.xlane.xlu0 %3588
  %v3590 = vrcp.pop %v3589
  %v3591 = vmul.f32 %v3586, %v3590
  %v3592 = vlog2.pop %v3589
  %v3593 = vmul.f32 %v3592, 0.6931472
  %v3594 = vsub.f32 %v3584, %v3593
  %v3595 = vmul.f32 %v3591, %v3594
  %v3596 = vsel %vm1941, %v3595, 0.0
  %3597 = vadd.xlane.f32.xlu0 %v3596
  %v3598 = vpop.xlane.xlu0 %3597
  %v3599 = vsub.f32 0.0, %v3598
  %v3600 = vmul.f32 %v3599, 0.4342945
  %v3601 = vsub.f32 1.0, %v3600
  %v3602 = vsel %vm1963, %v3600, %v3601
  %3604 = vrot.lane.b32.xlu0 %v3602, 10
  %v3605 = vpop.permute.xlu0 %3604
  %v3607 = vsel %vm1969, %v3578, %v3605
  %v3608 = vsel %vm1971, %v3607, 0.0
  %3609 = vrot.lane.b32.xlu0 %v3357, 104
  %v3610 = vpop.permute.xlu0 %3609
  %v3611 = vsel %vm134, %v3610, 0
  %3613 = vmatprep.subr.mxu0 0.0
  %3614 = vmatpush1.msra.mxu0 %v14
  %3615 = vmatprep.subr.mxu0 0.0
  %3616 = vmatpush1.msra.mxu0 0.0
  %3617 = vmatprep.subr.mxu0 0.0
  %3618 = vmatpush1.msra.mxu0 0.0
  %3619 = vmatprep.subr.mxu0 0.0
  %3620 = vmatpush1.msra.mxu0 0.0
  %3621 = vmatprep.subr.mxu0 0.0
  %3622 = vmatpush1.msra.mxu0 0.0
  %3623 = vmatprep.subr.mxu0 0.0
  %3624 = vmatpush1.msra.mxu0 0.0
  %3625 = vmatprep.subr.mxu0 0.0
  %3626 = vmatpush1.msra.mxu0 0.0
  %3627 = vmatprep.subr.mxu0 0.0
  %3628 = vmatpush1.msra.mxu0 0.0
  %3629 = vmatprep.subr.mxu0 0.0
  %3630 = vmatpush1.msra.mxu0 0.0
  %3631 = vmatprep.subr.mxu0 0.0
  %3632 = vmatpush1.msra.mxu0 0.0
  %3633 = vmatprep.subr.mxu0 0.0
  %3634 = vmatpush1.msra.mxu0 0.0
  %3635 = vmatprep.subr.mxu0 0.0
  %3636 = vmatpush1.msra.mxu0 0.0
  %3637 = vmatprep.subr.mxu0 0.0
  %3638 = vmatpush1.msra.mxu0 0.0
  %3639 = vmatprep.subr.mxu0 0.0
  %3640 = vmatpush1.msra.mxu0 0.0
  %3641 = vmatprep.subr.mxu0 0.0
  %3642 = vmatpush1.msra.mxu0 0.0
  %3643 = vmatprep.subr.mxu0 0.0
  %3644 = vmatpush1.msra.mxu0 0.0
  %3645 = vmatprep.subr.mxu0 0.0
  %3646 = vmatpush1.msra.mxu0 0.0
  %3647 = vmatprep.subr.mxu0 0.0
  %3648 = vmatpush1.msra.mxu0 0.0
  %3649 = vmatprep.subr.mxu0 0.0
  %3650 = vmatpush1.msra.mxu0 0.0
  %3651 = vmatprep.subr.mxu0 0.0
  %3652 = vmatpush1.msra.mxu0 0.0
  %3653 = vmatprep.subr.mxu0 0.0
  %3654 = vmatpush1.msra.mxu0 0.0
  %3655 = vmatprep.subr.mxu0 0.0
  %3656 = vmatpush1.msra.mxu0 0.0
  %3657 = vmatprep.subr.mxu0 0.0
  %3658 = vmatpush1.msra.mxu0 0.0
  %3659 = vmatprep.subr.mxu0 0.0
  %3660 = vmatpush1.msra.mxu0 0.0
  %3661 = vmatprep.subr.mxu0 0.0
  %3662 = vmatpush1.msra.mxu0 0.0
  %3663 = vmatprep.subr.mxu0 0.0
  %3664 = vmatpush1.msra.mxu0 0.0
  %3665 = vmatprep.subr.mxu0 0.0
  %3666 = vmatpush1.msra.mxu0 0.0
  %3667 = vmatprep.subr.mxu0 0.0
  %3668 = vmatpush1.msra.mxu0 0.0
  %3669 = vmatprep.subr.mxu0 0.0
  %3670 = vmatpush1.msra.mxu0 0.0
  %3671 = vmatprep.subr.mxu0 0.0
  %3672 = vmatpush1.msra.mxu0 0.0
  %3673 = vmatprep.subr.mxu0 0.0
  %3674 = vmatpush1.msra.mxu0 0.0
  %3675 = vmatprep.subr.mxu0 0.0
  %3676 = vmatpush1.msra.mxu0 0.0
  %3677 = vmatprep.mubr.f32.mxu0 0.0
  %3678 = vmatmul.mubr.f32.gmra.mrb[0].mxu0 %v3611
  %v3679 = vpop.f32.mrb[0].mxu0
  %v3680 = vadd.f32 0.0, %v3679
  %v3681 = vpop.f32.mrb[0].mxu0
  %3682 = vdwg.mxu0
  %3683 = vmatprep.subr.mxu0 0.0
  %3684 = vmatpush1.msra.mxu0 %v15
  %3685 = vmatprep.subr.mxu0 0.0
  %3686 = vmatpush1.msra.mxu0 0.0
  %3687 = vmatprep.subr.mxu0 0.0
  %3688 = vmatpush1.msra.mxu0 0.0
  %3689 = vmatprep.subr.mxu0 0.0
  %3690 = vmatpush1.msra.mxu0 0.0
  %3691 = vmatprep.subr.mxu0 0.0
  %3692 = vmatpush1.msra.mxu0 0.0
  %3693 = vmatprep.subr.mxu0 0.0
  %3694 = vmatpush1.msra.mxu0 0.0
  %3695 = vmatprep.subr.mxu0 0.0
  %3696 = vmatpush1.msra.mxu0 0.0
  %3697 = vmatprep.subr.mxu0 0.0
  %3698 = vmatpush1.msra.mxu0 0.0
  %3699 = vmatprep.subr.mxu0 0.0
  %3700 = vmatpush1.msra.mxu0 0.0
  %3701 = vmatprep.subr.mxu0 0.0
  %3702 = vmatpush1.msra.mxu0 0.0
  %3703 = vmatprep.subr.mxu0 0.0
  %3704 = vmatpush1.msra.mxu0 0.0
  %3705 = vmatprep.subr.mxu0 0.0
  %3706 = vmatpush1.msra.mxu0 0.0
  %3707 = vmatprep.subr.mxu0 0.0
  %3708 = vmatpush1.msra.mxu0 0.0
  %3709 = vmatprep.subr.mxu0 0.0
  %3710 = vmatpush1.msra.mxu0 0.0
  %3711 = vmatprep.subr.mxu0 0.0
  %3712 = vmatpush1.msra.mxu0 0.0
  %3713 = vmatprep.subr.mxu0 0.0
  %3714 = vmatpush1.msra.mxu0 0.0
  %3715 = vmatprep.subr.mxu0 0.0
  %3716 = vmatpush1.msra.mxu0 0.0
  %3717 = vmatprep.subr.mxu0 0.0
  %3718 = vmatpush1.msra.mxu0 0.0
  %3719 = vmatprep.subr.mxu0 0.0
  %3720 = vmatpush1.msra.mxu0 0.0
  %3721 = vmatprep.subr.mxu0 0.0
  %3722 = vmatpush1.msra.mxu0 0.0
  %3723 = vmatprep.subr.mxu0 0.0
  %3724 = vmatpush1.msra.mxu0 0.0
  %3725 = vmatprep.subr.mxu0 0.0
  %3726 = vmatpush1.msra.mxu0 0.0
  %3727 = vmatprep.subr.mxu0 0.0
  %3728 = vmatpush1.msra.mxu0 0.0
  %3729 = vmatprep.subr.mxu0 0.0
  %3730 = vmatpush1.msra.mxu0 0.0
  %3731 = vmatprep.subr.mxu0 0.0
  %3732 = vmatpush1.msra.mxu0 0.0
  %3733 = vmatprep.subr.mxu0 0.0
  %3734 = vmatpush1.msra.mxu0 0.0
  %3735 = vmatprep.subr.mxu0 0.0
  %3736 = vmatpush1.msra.mxu0 0.0
  %3737 = vmatprep.subr.mxu0 0.0
  %3738 = vmatpush1.msra.mxu0 0.0
  %3739 = vmatprep.subr.mxu0 0.0
  %3740 = vmatpush1.msra.mxu0 0.0
  %3741 = vmatprep.subr.mxu0 0.0
  %3742 = vmatpush1.msra.mxu0 0.0
  %3743 = vmatprep.subr.mxu0 0.0
  %3744 = vmatpush1.msra.mxu0 0.0
  %3745 = vmatprep.subr.mxu0 0.0
  %3746 = vmatpush1.msra.mxu0 0.0
  %3747 = vmatprep.mubr.f32.mxu0 0.0
  %3748 = vmatmul.mubr.f32.gmra.mrb[0].mxu0 %v3611
  %v3749 = vpop.f32.mrb[0].mxu0
  %v3750 = vadd.f32 0.0, %v3749
  %v3751 = vpop.f32.mrb[0].mxu0
  %3752 = vdwg.mxu0
  %v3753 = vmul.f32 %v3680, %v3750
  %v3754 = vmul.f32 %v18, %v2119
  %v3755 = vadd.f32 %v3754, %v3753
  %v3756 = vmul.f32 %v18, %v2121
  %v3757 = vadd.f32 %v3756, 1.0
  %v3758 = vrsqrt.pop %v3757
  %v3759 = vmul.f32 %v3755, %v3758
  %v3761 = vsel %vm429, %v3759, 0
  %3763 = vmatprep.subr.mxu0 0.0
  %3764 = vmatpush1.msra.mxu0 %v20
  %3765 = vmatprep.subr.mxu0 0.0
  %3766 = vmatpush1.msra.mxu0 %v21
  %3767 = vmatprep.subr.mxu0 0.0
  %3768 = vmatpush1.msra.mxu0 %v22
  %3769 = vmatprep.subr.mxu0 0.0
  %3770 = vmatpush1.msra.mxu0 %v23
  %3771 = vmatprep.subr.mxu0 0.0
  %3772 = vmatpush1.msra.mxu0 %v435
  %3773 = vmatprep.subr.mxu0 0.0
  %3774 = vmatpush1.msra.mxu0 0.0
  %3775 = vmatprep.subr.mxu0 0.0
  %3776 = vmatpush1.msra.mxu0 0.0
  %3777 = vmatprep.subr.mxu0 0.0
  %3778 = vmatpush1.msra.mxu0 0.0
  %3779 = vmatprep.subr.mxu0 0.0
  %3780 = vmatpush1.msra.mxu0 0.0
  %3781 = vmatprep.subr.mxu0 0.0
  %3782 = vmatpush1.msra.mxu0 0.0
  %3783 = vmatprep.subr.mxu0 0.0
  %3784 = vmatpush1.msra.mxu0 0.0
  %3785 = vmatprep.subr.mxu0 0.0
  %3786 = vmatpush1.msra.mxu0 0.0
  %3787 = vmatprep.subr.mxu0 0.0
  %3788 = vmatpush1.msra.mxu0 0.0
  %3789 = vmatprep.subr.mxu0 0.0
  %3790 = vmatpush1.msra.mxu0 0.0
  %3791 = vmatprep.subr.mxu0 0.0
  %3792 = vmatpush1.msra.mxu0 0.0
  %3793 = vmatprep.subr.mxu0 0.0
  %3794 = vmatpush1.msra.mxu0 0.0
  %3795 = vmatprep.subr.mxu0 0.0
  %3796 = vmatpush1.msra.mxu0 0.0
  %3797 = vmatprep.subr.mxu0 0.0
  %3798 = vmatpush1.msra.mxu0 0.0
  %3799 = vmatprep.subr.mxu0 0.0
  %3800 = vmatpush1.msra.mxu0 0.0
  %3801 = vmatprep.subr.mxu0 0.0
  %3802 = vmatpush1.msra.mxu0 0.0
  %3803 = vmatprep.subr.mxu0 0.0
  %3804 = vmatpush1.msra.mxu0 0.0
  %3805 = vmatprep.subr.mxu0 0.0
  %3806 = vmatpush1.msra.mxu0 0.0
  %3807 = vmatprep.subr.mxu0 0.0
  %3808 = vmatpush1.msra.mxu0 0.0
  %3809 = vmatprep.subr.mxu0 0.0
  %3810 = vmatpush1.msra.mxu0 0.0
  %3811 = vmatprep.subr.mxu0 0.0
  %3812 = vmatpush1.msra.mxu0 0.0
  %3813 = vmatprep.subr.mxu0 0.0
  %3814 = vmatpush1.msra.mxu0 0.0
  %3815 = vmatprep.subr.mxu0 0.0
  %3816 = vmatpush1.msra.mxu0 0.0
  %3817 = vmatprep.subr.mxu0 0.0
  %3818 = vmatpush1.msra.mxu0 0.0
  %3819 = vmatprep.subr.mxu0 0.0
  %3820 = vmatpush1.msra.mxu0 0.0
  %3821 = vmatprep.subr.mxu0 0.0
  %3822 = vmatpush1.msra.mxu0 0.0
  %3823 = vmatprep.subr.mxu0 0.0
  %3824 = vmatpush1.msra.mxu0 0.0
  %3825 = vmatprep.subr.mxu0 0.0
  %3826 = vmatpush1.msra.mxu0 0.0
  %3827 = vmatprep.mubr.f32.mxu0 0.0
  %3828 = vmatmul.mubr.f32.gmra.mrb[0].mxu0 %v3761
  %v3829 = vpop.f32.mrb[0].mxu0
  %v3830 = vadd.f32 %v25, %v3829
  %v3831 = vpop.f32.mrb[0].mxu0
  %3832 = vdwg.mxu0
  %v3835 = vunpack.c.l.s4 1966171168
  %v3836 = vunpack.c.0.s8 %v3835
  %v3837 = vlaneseq
  %v3838 = vshrl.u32 %v3837, 7
  %v3839 = vsub.s32 %v3836, %v3838
  %v3840 = vrot.slane %v3830, %v3839
  %v3841 = vcombine.high %v3840, %v3840
  %v3843 = vunpack.c.l.s4 1966171168
  %v3844 = vunpack.c.0.s8 %v3843
  %v3845 = vlaneseq
  %v3846 = vshrl.u32 %v3845, 7
  %v3847 = vsub.s32 %v3844, %v3846
  %v3848 = vrot.slane %v3840, %v3847
  %v3850 = vunpack.c.l.s4 1966171168
  %v3851 = vunpack.c.0.s8 %v3850
  %v3852 = vlaneseq
  %v3853 = vshrl.u32 %v3852, 7
  %v3854 = vsub.s32 %v3851, %v3853
  %v3855 = vrot.slane %v3841, %v3854
  %v3856 = vsel %vm134, %v3848, 0
  %3858 = vmatprep.subr.mxu0 0.0
  %3859 = vmatpush1.xpose.msra.mxu0 %v533
  %3860 = vmatprep.subr.mxu0 0.0
  %3861 = vmatpush1.xpose.msra.mxu0 0.0
  %3862 = vmatprep.subr.mxu0 0.0
  %3863 = vmatpush1.xpose.msra.mxu0 0.0
  %3864 = vmatprep.subr.mxu0 0.0
  %3865 = vmatpush1.xpose.msra.mxu0 0.0
  %3866 = vmatprep.subr.mxu0 0.0
  %3867 = vmatpush1.xpose.msra.mxu0 0.0
  %3868 = vmatprep.subr.mxu0 0.0
  %3869 = vmatpush1.xpose.msra.mxu0 0.0
  %3870 = vmatprep.subr.mxu0 0.0
  %3871 = vmatpush1.xpose.msra.mxu0 0.0
  %3872 = vmatprep.subr.mxu0 0.0
  %3873 = vmatpush1.xpose.msra.mxu0 0.0
  %3874 = vmatprep.subr.mxu0 0.0
  %3875 = vmatpush1.xpose.msra.mxu0 0.0
  %3876 = vmatprep.subr.mxu0 0.0
  %3877 = vmatpush1.xpose.msra.mxu0 0.0
  %3878 = vmatprep.subr.mxu0 0.0
  %3879 = vmatpush1.xpose.msra.mxu0 0.0
  %3880 = vmatprep.subr.mxu0 0.0
  %3881 = vmatpush1.xpose.msra.mxu0 0.0
  %3882 = vmatprep.subr.mxu0 0.0
  %3883 = vmatpush1.xpose.msra.mxu0 0.0
  %3884 = vmatprep.subr.mxu0 0.0
  %3885 = vmatpush1.xpose.msra.mxu0 0.0
  %3886 = vmatprep.subr.mxu0 0.0
  %3887 = vmatpush1.xpose.msra.mxu0 0.0
  %3888 = vmatprep.subr.mxu0 0.0
  %3889 = vmatpush1.xpose.msra.mxu0 0.0
  %3890 = vmatprep.subr.mxu0 0.0
  %3891 = vmatpush1.xpose.msra.mxu0 0.0
  %3892 = vmatprep.subr.mxu0 0.0
  %3893 = vmatpush1.xpose.msra.mxu0 0.0
  %3894 = vmatprep.subr.mxu0 0.0
  %3895 = vmatpush1.xpose.msra.mxu0 0.0
  %3896 = vmatprep.subr.mxu0 0.0
  %3897 = vmatpush1.xpose.msra.mxu0 0.0
  %3898 = vmatprep.subr.mxu0 0.0
  %3899 = vmatpush1.xpose.msra.mxu0 0.0
  %3900 = vmatprep.subr.mxu0 0.0
  %3901 = vmatpush1.xpose.msra.mxu0 0.0
  %3902 = vmatprep.subr.mxu0 0.0
  %3903 = vmatpush1.xpose.msra.mxu0 0.0
  %3904 = vmatprep.subr.mxu0 0.0
  %3905 = vmatpush1.xpose.msra.mxu0 0.0
  %3906 = vmatprep.subr.mxu0 0.0
  %3907 = vmatpush1.xpose.msra.mxu0 0.0
  %3908 = vmatprep.subr.mxu0 0.0
  %3909 = vmatpush1.xpose.msra.mxu0 0.0
  %3910 = vmatprep.subr.mxu0 0.0
  %3911 = vmatpush1.xpose.msra.mxu0 0.0
  %3912 = vmatprep.subr.mxu0 0.0
  %3913 = vmatpush1.xpose.msra.mxu0 0.0
  %3914 = vmatprep.subr.mxu0 0.0
  %3915 = vmatpush1.xpose.msra.mxu0 0.0
  %3916 = vmatprep.subr.mxu0 0.0
  %3917 = vmatpush1.xpose.msra.mxu0 0.0
  %3918 = vmatprep.subr.mxu0 0.0
  %3919 = vmatpush1.xpose.msra.mxu0 0.0
  %3920 = vmatprep.subr.mxu0 0.0
  %3921 = vmatpush1.xpose.msra.mxu0 0.0
  %3922 = vmatprep.mubr.f32.mxu0 0.0
  %3923 = vmatmul.mubr.f32.gmra.mrb[0].mxu0 %v3856
  %v3924 = vpop.f32.mrb[0].mxu0
  %v3925 = vadd.f32 0.0, %v3924
  %v3926 = vpop.f32.mrb[0].mxu0
  %3927 = vdwg.mxu0
  %v3928 = vsel %vm134, %v3855, 0
  %3930 = vmatprep.subr.mxu0 0.0
  %3931 = vmatpush1.xpose.msra.mxu0 %v608
  %3932 = vmatprep.subr.mxu0 0.0
  %3933 = vmatpush1.xpose.msra.mxu0 0.0
  %3934 = vmatprep.subr.mxu0 0.0
  %3935 = vmatpush1.xpose.msra.mxu0 0.0
  %3936 = vmatprep.subr.mxu0 0.0
  %3937 = vmatpush1.xpose.msra.mxu0 0.0
  %3938 = vmatprep.subr.mxu0 0.0
  %3939 = vmatpush1.xpose.msra.mxu0 0.0
  %3940 = vmatprep.subr.mxu0 0.0
  %3941 = vmatpush1.xpose.msra.mxu0 0.0
  %3942 = vmatprep.subr.mxu0 0.0
  %3943 = vmatpush1.xpose.msra.mxu0 0.0
  %3944 = vmatprep.subr.mxu0 0.0
  %3945 = vmatpush1.xpose.msra.mxu0 0.0
  %3946 = vmatprep.subr.mxu0 0.0
  %3947 = vmatpush1.xpose.msra.mxu0 0.0
  %3948 = vmatprep.subr.mxu0 0.0
  %3949 = vmatpush1.xpose.msra.mxu0 0.0
  %3950 = vmatprep.subr.mxu0 0.0
  %3951 = vmatpush1.xpose.msra.mxu0 0.0
  %3952 = vmatprep.subr.mxu0 0.0
  %3953 = vmatpush1.xpose.msra.mxu0 0.0
  %3954 = vmatprep.subr.mxu0 0.0
  %3955 = vmatpush1.xpose.msra.mxu0 0.0
  %3956 = vmatprep.subr.mxu0 0.0
  %3957 = vmatpush1.xpose.msra.mxu0 0.0
  %3958 = vmatprep.subr.mxu0 0.0
  %3959 = vmatpush1.xpose.msra.mxu0 0.0
  %3960 = vmatprep.subr.mxu0 0.0
  %3961 = vmatpush1.xpose.msra.mxu0 0.0
  %3962 = vmatprep.subr.mxu0 0.0
  %3963 = vmatpush1.xpose.msra.mxu0 0.0
  %3964 = vmatprep.subr.mxu0 0.0
  %3965 = vmatpush1.xpose.msra.mxu0 0.0
  %3966 = vmatprep.subr.mxu0 0.0
  %3967 = vmatpush1.xpose.msra.mxu0 0.0
  %3968 = vmatprep.subr.mxu0 0.0
  %3969 = vmatpush1.xpose.msra.mxu0 0.0
  %3970 = vmatprep.subr.mxu0 0.0
  %3971 = vmatpush1.xpose.msra.mxu0 0.0
  %3972 = vmatprep.subr.mxu0 0.0
  %3973 = vmatpush1.xpose.msra.mxu0 0.0
  %3974 = vmatprep.subr.mxu0 0.0
  %3975 = vmatpush1.xpose.msra.mxu0 0.0
  %3976 = vmatprep.subr.mxu0 0.0
  %3977 = vmatpush1.xpose.msra.mxu0 0.0
  %3978 = vmatprep.subr.mxu0 0.0
  %3979 = vmatpush1.xpose.msra.mxu0 0.0
  %3980 = vmatprep.subr.mxu0 0.0
  %3981 = vmatpush1.xpose.msra.mxu0 0.0
  %3982 = vmatprep.subr.mxu0 0.0
  %3983 = vmatpush1.xpose.msra.mxu0 0.0
  %3984 = vmatprep.subr.mxu0 0.0
  %3985 = vmatpush1.xpose.msra.mxu0 0.0
  %3986 = vmatprep.subr.mxu0 0.0
  %3987 = vmatpush1.xpose.msra.mxu0 0.0
  %3988 = vmatprep.subr.mxu0 0.0
  %3989 = vmatpush1.xpose.msra.mxu0 0.0
  %3990 = vmatprep.subr.mxu0 0.0
  %3991 = vmatpush1.xpose.msra.mxu0 0.0
  %3992 = vmatprep.subr.mxu0 0.0
  %3993 = vmatpush1.xpose.msra.mxu0 0.0
  %3994 = vmatprep.mubr.f32.mxu0 0.0
  %3995 = vmatmul.mubr.f32.gmra.mrb[0].mxu0 %v3928
  %v3996 = vpop.f32.mrb[0].mxu0
  %v3997 = vadd.f32 0.0, %v3996
  %v3998 = vpop.f32.mrb[0].mxu0
  %3999 = vdwg.mxu0
  %v4000 = vmul.f32 %v3925, 0.35355338
  %v4001 = vmul.f32 %v3997, 0.35355338
  %v4002 = vsel %vm682, %v4000, -inf
  %4003 = vmax.xlane.f32.xlu0 %v4002
  %v4004 = vpop.xlane.xlu0 %4003
  %v4005 = vsel %vm682, %v4001, -inf
  %4006 = vmax.xlane.f32.xlu0 %v4005
  %v4007 = vpop.xlane.xlu0 %4006
  %v4008 = vsub.f32 %v4000, %v4004
  %v4009 = vsub.f32 %v4001, %v4007
  %v4010 = vmul.f32 %v4008, 1.442695
  %v4011 = vpow.pop %v4010
  %v4012 = vmul.f32 %v4009, 1.442695
  %v4013 = vpow.pop %v4012
  %v4014 = vsel %vm682, %v4011, 0.0
  %4015 = vadd.xlane.f32.xlu0 %v4014
  %v4016 = vpop.xlane.xlu0 %4015
  %v4017 = vsel %vm682, %v4013, 0.0
  %4018 = vadd.xlane.f32.xlu0 %v4017
  %v4019 = vpop.xlane.xlu0 %4018
  %v4020 = vrcp.pop %v4016
  %v4021 = vrcp.pop %v4019
  %v4022 = vmul.f32 %v4011, %v4020
  %v4023 = vmul.f32 %v4013, %v4021
  %v4025 = vsel %vm134, %v4022, 0
  %4027 = vmatprep.subr.mxu0 0.0
  %4028 = vmatpush1.msra.mxu0 %v129
  %4029 = vmatprep.subr.mxu0 0.0
  %4030 = vmatpush1.msra.mxu0 0.0
  %4031 = vmatprep.subr.mxu0 0.0
  %4032 = vmatpush1.msra.mxu0 0.0
  %4033 = vmatprep.subr.mxu0 0.0
  %4034 = vmatpush1.msra.mxu0 0.0
  %4035 = vmatprep.subr.mxu0 0.0
  %4036 = vmatpush1.msra.mxu0 0.0
  %4037 = vmatprep.subr.mxu0 0.0
  %4038 = vmatpush1.msra.mxu0 0.0
  %4039 = vmatprep.subr.mxu0 0.0
  %4040 = vmatpush1.msra.mxu0 0.0
  %4041 = vmatprep.subr.mxu0 0.0
  %4042 = vmatpush1.msra.mxu0 0.0
  %4043 = vmatprep.subr.mxu0 0.0
  %4044 = vmatpush1.msra.mxu0 0.0
  %4045 = vmatprep.subr.mxu0 0.0
  %4046 = vmatpush1.msra.mxu0 0.0
  %4047 = vmatprep.subr.mxu0 0.0
  %4048 = vmatpush1.msra.mxu0 0.0
  %4049 = vmatprep.subr.mxu0 0.0
  %4050 = vmatpush1.msra.mxu0 0.0
  %4051 = vmatprep.subr.mxu0 0.0
  %4052 = vmatpush1.msra.mxu0 0.0
  %4053 = vmatprep.subr.mxu0 0.0
  %4054 = vmatpush1.msra.mxu0 0.0
  %4055 = vmatprep.subr.mxu0 0.0
  %4056 = vmatpush1.msra.mxu0 0.0
  %4057 = vmatprep.subr.mxu0 0.0
  %4058 = vmatpush1.msra.mxu0 0.0
  %4059 = vmatprep.subr.mxu0 0.0
  %4060 = vmatpush1.msra.mxu0 0.0
  %4061 = vmatprep.subr.mxu0 0.0
  %4062 = vmatpush1.msra.mxu0 0.0
  %4063 = vmatprep.subr.mxu0 0.0
  %4064 = vmatpush1.msra.mxu0 0.0
  %4065 = vmatprep.subr.mxu0 0.0
  %4066 = vmatpush1.msra.mxu0 0.0
  %4067 = vmatprep.subr.mxu0 0.0
  %4068 = vmatpush1.msra.mxu0 0.0
  %4069 = vmatprep.subr.mxu0 0.0
  %4070 = vmatpush1.msra.mxu0 0.0
  %4071 = vmatprep.subr.mxu0 0.0
  %4072 = vmatpush1.msra.mxu0 0.0
  %4073 = vmatprep.subr.mxu0 0.0
  %4074 = vmatpush1.msra.mxu0 0.0
  %4075 = vmatprep.subr.mxu0 0.0
  %4076 = vmatpush1.msra.mxu0 0.0
  %4077 = vmatprep.subr.mxu0 0.0
  %4078 = vmatpush1.msra.mxu0 0.0
  %4079 = vmatprep.subr.mxu0 0.0
  %4080 = vmatpush1.msra.mxu0 0.0
  %4081 = vmatprep.subr.mxu0 0.0
  %4082 = vmatpush1.msra.mxu0 0.0
  %4083 = vmatprep.subr.mxu0 0.0
  %4084 = vmatpush1.msra.mxu0 0.0
  %4085 = vmatprep.subr.mxu0 0.0
  %4086 = vmatpush1.msra.mxu0 0.0
  %4087 = vmatprep.subr.mxu0 0.0
  %4088 = vmatpush1.msra.mxu0 0.0
  %4089 = vmatprep.subr.mxu0 0.0
  %4090 = vmatpush1.msra.mxu0 0.0
  %4091 = vmatprep.mubr.f32.mxu0 0.0
  %4092 = vmatmul.mubr.f32.gmra.mrb[0].mxu0 %v4025
  %v4093 = vpop.f32.mrb[0].mxu0
  %v4094 = vadd.f32 0.0, %v4093
  %v4095 = vpop.f32.mrb[0].mxu0
  %4096 = vdwg.mxu0
  %v4098 = vsel %vm134, %v4023, 0
  %4100 = vmatprep.subr.mxu0 0.0
  %4101 = vmatpush1.msra.mxu0 %v130
  %4102 = vmatprep.subr.mxu0 0.0
  %4103 = vmatpush1.msra.mxu0 0.0
  %4104 = vmatprep.subr.mxu0 0.0
  %4105 = vmatpush1.msra.mxu0 0.0
  %4106 = vmatprep.subr.mxu0 0.0
  %4107 = vmatpush1.msra.mxu0 0.0
  %4108 = vmatprep.subr.mxu0 0.0
  %4109 = vmatpush1.msra.mxu0 0.0
  %4110 = vmatprep.subr.mxu0 0.0
  %4111 = vmatpush1.msra.mxu0 0.0
  %4112 = vmatprep.subr.mxu0 0.0
  %4113 = vmatpush1.msra.mxu0 0.0
  %4114 = vmatprep.subr.mxu0 0.0
  %4115 = vmatpush1.msra.mxu0 0.0
  %4116 = vmatprep.subr.mxu0 0.0
  %4117 = vmatpush1.msra.mxu0 0.0
  %4118 = vmatprep.subr.mxu0 0.0
  %4119 = vmatpush1.msra.mxu0 0.0
  %4120 = vmatprep.subr.mxu0 0.0
  %4121 = vmatpush1.msra.mxu0 0.0
  %4122 = vmatprep.subr.mxu0 0.0
  %4123 = vmatpush1.msra.mxu0 0.0
  %4124 = vmatprep.subr.mxu0 0.0
  %4125 = vmatpush1.msra.mxu0 0.0
  %4126 = vmatprep.subr.mxu0 0.0
  %4127 = vmatpush1.msra.mxu0 0.0
  %4128 = vmatprep.subr.mxu0 0.0
  %4129 = vmatpush1.msra.mxu0 0.0
  %4130 = vmatprep.subr.mxu0 0.0
  %4131 = vmatpush1.msra.mxu0 0.0
  %4132 = vmatprep.subr.mxu0 0.0
  %4133 = vmatpush1.msra.mxu0 0.0
  %4134 = vmatprep.subr.mxu0 0.0
  %4135 = vmatpush1.msra.mxu0 0.0
  %4136 = vmatprep.subr.mxu0 0.0
  %4137 = vmatpush1.msra.mxu0 0.0
  %4138 = vmatprep.subr.mxu0 0.0
  %4139 = vmatpush1.msra.mxu0 0.0
  %4140 = vmatprep.subr.mxu0 0.0
  %4141 = vmatpush1.msra.mxu0 0.0
  %4142 = vmatprep.subr.mxu0 0.0
  %4143 = vmatpush1.msra.mxu0 0.0
  %4144 = vmatprep.subr.mxu0 0.0
  %4145 = vmatpush1.msra.mxu0 0.0
  %4146 = vmatprep.subr.mxu0 0.0
  %4147 = vmatpush1.msra.mxu0 0.0
  %4148 = vmatprep.subr.mxu0 0.0
  %4149 = vmatpush1.msra.mxu0 0.0
  %4150 = vmatprep.subr.mxu0 0.0
  %4151 = vmatpush1.msra.mxu0 0.0
  %4152 = vmatprep.subr.mxu0 0.0
  %4153 = vmatpush1.msra.mxu0 0.0
  %4154 = vmatprep.subr.mxu0 0.0
  %4155 = vmatpush1.msra.mxu0 0.0
  %4156 = vmatprep.subr.mxu0 0.0
  %4157 = vmatpush1.msra.mxu0 0.0
  %4158 = vmatprep.subr.mxu0 0.0
  %4159 = vmatpush1.msra.mxu0 0.0
  %4160 = vmatprep.subr.mxu0 0.0
  %4161 = vmatpush1.msra.mxu0 0.0
  %4162 = vmatprep.subr.mxu0 0.0
  %4163 = vmatpush1.msra.mxu0 0.0
  %4164 = vmatprep.mubr.f32.mxu0 0.0
  %4165 = vmatmul.mubr.f32.gmra.mrb[0].mxu0 %v4098
  %v4166 = vpop.f32.mrb[0].mxu0
  %v4167 = vadd.f32 0.0, %v4166
  %v4168 = vpop.f32.mrb[0].mxu0
  %4169 = vdwg.mxu0
  %v4172 = vrot.slane %v4167, 7
  %v4173 = vsel %vm854, %v4172, %v4094
  %v4174 = vsel %vm134, %v4173, 0
  %4176 = vmatprep.subr.mxu0 0.0
  %4177 = vmatpush1.msra.mxu0 %v26
  %4178 = vmatprep.subr.mxu0 0.0
  %4179 = vmatpush1.msra.mxu0 0.0
  %4180 = vmatprep.subr.mxu0 0.0
  %4181 = vmatpush1.msra.mxu0 0.0
  %4182 = vmatprep.subr.mxu0 0.0
  %4183 = vmatpush1.msra.mxu0 0.0
  %4184 = vmatprep.subr.mxu0 0.0
  %4185 = vmatpush1.msra.mxu0 0.0
  %4186 = vmatprep.subr.mxu0 0.0
  %4187 = vmatpush1.msra.mxu0 0.0
  %4188 = vmatprep.subr.mxu0 0.0
  %4189 = vmatpush1.msra.mxu0 0.0
  %4190 = vmatprep.subr.mxu0 0.0
  %4191 = vmatpush1.msra.mxu0 0.0
  %4192 = vmatprep.subr.mxu0 0.0
  %4193 = vmatpush1.msra.mxu0 0.0
  %4194 = vmatprep.subr.mxu0 0.0
  %4195 = vmatpush1.msra.mxu0 0.0
  %4196 = vmatprep.subr.mxu0 0.0
  %4197 = vmatpush1.msra.mxu0 0.0
  %4198 = vmatprep.subr.mxu0 0.0
  %4199 = vmatpush1.msra.mxu0 0.0
  %4200 = vmatprep.subr.mxu0 0.0
  %4201 = vmatpush1.msra.mxu0 0.0
  %4202 = vmatprep.subr.mxu0 0.0
  %4203 = vmatpush1.msra.mxu0 0.0
  %4204 = vmatprep.subr.mxu0 0.0
  %4205 = vmatpush1.msra.mxu0 0.0
  %4206 = vmatprep.subr.mxu0 0.0
  %4207 = vmatpush1.msra.mxu0 0.0
  %4208 = vmatprep.subr.mxu0 0.0
  %4209 = vmatpush1.msra.mxu0 0.0
  %4210 = vmatprep.subr.mxu0 0.0
  %4211 = vmatpush1.msra.mxu0 0.0
  %4212 = vmatprep.subr.mxu0 0.0
  %4213 = vmatpush1.msra.mxu0 0.0
  %4214 = vmatprep.subr.mxu0 0.0
  %4215 = vmatpush1.msra.mxu0 0.0
  %4216 = vmatprep.subr.mxu0 0.0
  %4217 = vmatpush1.msra.mxu0 0.0
  %4218 = vmatprep.subr.mxu0 0.0
  %4219 = vmatpush1.msra.mxu0 0.0
  %4220 = vmatprep.subr.mxu0 0.0
  %4221 = vmatpush1.msra.mxu0 0.0
  %4222 = vmatprep.subr.mxu0 0.0
  %4223 = vmatpush1.msra.mxu0 0.0
  %4224 = vmatprep.subr.mxu0 0.0
  %4225 = vmatpush1.msra.mxu0 0.0
  %4226 = vmatprep.subr.mxu0 0.0
  %4227 = vmatpush1.msra.mxu0 0.0
  %4228 = vmatprep.subr.mxu0 0.0
  %4229 = vmatpush1.msra.mxu0 0.0
  %4230 = vmatprep.subr.mxu0 0.0
  %4231 = vmatpush1.msra.mxu0 0.0
  %4232 = vmatprep.subr.mxu0 0.0
  %4233 = vmatpush1.msra.mxu0 0.0
  %4234 = vmatprep.subr.mxu0 0.0
  %4235 = vmatpush1.msra.mxu0 0.0
  %4236 = vmatprep.subr.mxu0 0.0
  %4237 = vmatpush1.msra.mxu0 0.0
  %4238 = vmatprep.subr.mxu0 0.0
  %4239 = vmatpush1.msra.mxu0 0.0
  %4240 = vmatprep.mubr.f32.mxu0 0.0
  %4241 = vmatmul.mubr.f32.gmra.mrb[0].mxu0 %v4174
  %v4242 = vpop.f32.mrb[0].mxu0
  %v4243 = vadd.f32 0.0, %v4242
  %v4244 = vpop.f32.mrb[0].mxu0
  %4245 = vdwg.mxu0
  %v4246 = vadd.f32 %v28, %v4243
  %v4247 = vlaneseq
  %v4248 = vshrl.u32 %v4247, 7
  %v4249 = vsub.s32 0, %v4248
  %v4250 = vrot.slane %v3848, %v4249
  %4251 = vrot.lane.b32.xlu0 %v4250, 120
  %v4252 = vpop.permute.xlu0 %4251
  %v4253 = vsel %vm134, %v4252, 0
  %4255 = vmatprep.subr.mxu0 0.0
  %4256 = vmatpush1.xpose.msra.mxu0 %v939
  %4257 = vmatprep.subr.mxu0 0.0
  %4258 = vmatpush1.xpose.msra.mxu0 0.0
  %4259 = vmatprep.subr.mxu0 0.0
  %4260 = vmatpush1.xpose.msra.mxu0 0.0
  %4261 = vmatprep.subr.mxu0 0.0
  %4262 = vmatpush1.xpose.msra.mxu0 0.0
  %4263 = vmatprep.subr.mxu0 0.0
  %4264 = vmatpush1.xpose.msra.mxu0 0.0
  %4265 = vmatprep.subr.mxu0 0.0
  %4266 = vmatpush1.xpose.msra.mxu0 0.0
  %4267 = vmatprep.subr.mxu0 0.0
  %4268 = vmatpush1.xpose.msra.mxu0 0.0
  %4269 = vmatprep.subr.mxu0 0.0
  %4270 = vmatpush1.xpose.msra.mxu0 0.0
  %4271 = vmatprep.subr.mxu0 0.0
  %4272 = vmatpush1.xpose.msra.mxu0 0.0
  %4273 = vmatprep.subr.mxu0 0.0
  %4274 = vmatpush1.xpose.msra.mxu0 0.0
  %4275 = vmatprep.subr.mxu0 0.0
  %4276 = vmatpush1.xpose.msra.mxu0 0.0
  %4277 = vmatprep.subr.mxu0 0.0
  %4278 = vmatpush1.xpose.msra.mxu0 0.0
  %4279 = vmatprep.subr.mxu0 0.0
  %4280 = vmatpush1.xpose.msra.mxu0 0.0
  %4281 = vmatprep.subr.mxu0 0.0
  %4282 = vmatpush1.xpose.msra.mxu0 0.0
  %4283 = vmatprep.subr.mxu0 0.0
  %4284 = vmatpush1.xpose.msra.mxu0 0.0
  %4285 = vmatprep.subr.mxu0 0.0
  %4286 = vmatpush1.xpose.msra.mxu0 0.0
  %4287 = vmatprep.subr.mxu0 0.0
  %4288 = vmatpush1.xpose.msra.mxu0 0.0
  %4289 = vmatprep.subr.mxu0 0.0
  %4290 = vmatpush1.xpose.msra.mxu0 0.0
  %4291 = vmatprep.subr.mxu0 0.0
  %4292 = vmatpush1.xpose.msra.mxu0 0.0
  %4293 = vmatprep.subr.mxu0 0.0
  %4294 = vmatpush1.xpose.msra.mxu0 0.0
  %4295 = vmatprep.subr.mxu0 0.0
  %4296 = vmatpush1.xpose.msra.mxu0 0.0
  %4297 = vmatprep.subr.mxu0 0.0
  %4298 = vmatpush1.xpose.msra.mxu0 0.0
  %4299 = vmatprep.subr.mxu0 0.0
  %4300 = vmatpush1.xpose.msra.mxu0 0.0
  %4301 = vmatprep.subr.mxu0 0.0
  %4302 = vmatpush1.xpose.msra.mxu0 0.0
  %4303 = vmatprep.subr.mxu0 0.0
  %4304 = vmatpush1.xpose.msra.mxu0 0.0
  %4305 = vmatprep.subr.mxu0 0.0
  %4306 = vmatpush1.xpose.msra.mxu0 0.0
  %4307 = vmatprep.subr.mxu0 0.0
  %4308 = vmatpush1.xpose.msra.mxu0 0.0
  %4309 = vmatprep.subr.mxu0 0.0
  %4310 = vmatpush1.xpose.msra.mxu0 0.0
  %4311 = vmatprep.subr.mxu0 0.0
  %4312 = vmatpush1.xpose.msra.mxu0 0.0
  %4313 = vmatprep.subr.mxu0 0.0
  %4314 = vmatpush1.xpose.msra.mxu0 0.0
  %4315 = vmatprep.subr.mxu0 0.0
  %4316 = vmatpush1.xpose.msra.mxu0 0.0
  %4317 = vmatprep.subr.mxu0 0.0
  %4318 = vmatpush1.xpose.msra.mxu0 0.0
  %4319 = vmatprep.mubr.f32.mxu0 0.0
  %4320 = vmatmul.mubr.f32.gmra.mrb[0].mxu0 %v4253
  %v4321 = vpop.f32.mrb[0].mxu0
  %v4322 = vadd.f32 0.0, %v4321
  %v4323 = vpop.f32.mrb[0].mxu0
  %4324 = vdwg.mxu0
  %v4325 = vlaneseq
  %v4326 = vshrl.u32 %v4325, 7
  %v4327 = vsub.s32 0, %v4326
  %v4328 = vrot.slane %v3855, %v4327
  %4329 = vrot.lane.b32.xlu0 %v4328, 120
  %v4330 = vpop.permute.xlu0 %4329
  %v4331 = vsel %vm134, %v4330, 0
  %4333 = vmatprep.subr.mxu0 0.0
  %4334 = vmatpush1.xpose.msra.mxu0 %v1021
  %4335 = vmatprep.subr.mxu0 0.0
  %4336 = vmatpush1.xpose.msra.mxu0 0.0
  %4337 = vmatprep.subr.mxu0 0.0
  %4338 = vmatpush1.xpose.msra.mxu0 0.0
  %4339 = vmatprep.subr.mxu0 0.0
  %4340 = vmatpush1.xpose.msra.mxu0 0.0
  %4341 = vmatprep.subr.mxu0 0.0
  %4342 = vmatpush1.xpose.msra.mxu0 0.0
  %4343 = vmatprep.subr.mxu0 0.0
  %4344 = vmatpush1.xpose.msra.mxu0 0.0
  %4345 = vmatprep.subr.mxu0 0.0
  %4346 = vmatpush1.xpose.msra.mxu0 0.0
  %4347 = vmatprep.subr.mxu0 0.0
  %4348 = vmatpush1.xpose.msra.mxu0 0.0
  %4349 = vmatprep.subr.mxu0 0.0
  %4350 = vmatpush1.xpose.msra.mxu0 0.0
  %4351 = vmatprep.subr.mxu0 0.0
  %4352 = vmatpush1.xpose.msra.mxu0 0.0
  %4353 = vmatprep.subr.mxu0 0.0
  %4354 = vmatpush1.xpose.msra.mxu0 0.0
  %4355 = vmatprep.subr.mxu0 0.0
  %4356 = vmatpush1.xpose.msra.mxu0 0.0
  %4357 = vmatprep.subr.mxu0 0.0
  %4358 = vmatpush1.xpose.msra.mxu0 0.0
  %4359 = vmatprep.subr.mxu0 0.0
  %4360 = vmatpush1.xpose.msra.mxu0 0.0
  %4361 = vmatprep.subr.mxu0 0.0
  %4362 = vmatpush1.xpose.msra.mxu0 0.0
  %4363 = vmatprep.subr.mxu0 0.0
  %4364 = vmatpush1.xpose.msra.mxu0 0.0
  %4365 = vmatprep.subr.mxu0 0.0
  %4366 = vmatpush1.xpose.msra.mxu0 0.0
  %4367 = vmatprep.subr.mxu0 0.0
  %4368 = vmatpush1.xpose.msra.mxu0 0.0
  %4369 = vmatprep.subr.mxu0 0.0
  %4370 = vmatpush1.xpose.msra.mxu0 0.0
  %4371 = vmatprep.subr.mxu0 0.0
  %4372 = vmatpush1.xpose.msra.mxu0 0.0
  %4373 = vmatprep.subr.mxu0 0.0
  %4374 = vmatpush1.xpose.msra.mxu0 0.0
  %4375 = vmatprep.subr.mxu0 0.0
  %4376 = vmatpush1.xpose.msra.mxu0 0.0
  %4377 = vmatprep.subr.mxu0 0.0
  %4378 = vmatpush1.xpose.msra.mxu0 0.0
  %4379 = vmatprep.subr.mxu0 0.0
  %4380 = vmatpush1.xpose.msra.mxu0 0.0
  %4381 = vmatprep.subr.mxu0 0.0
  %4382 = vmatpush1.xpose.msra.mxu0 0.0
  %4383 = vmatprep.subr.mxu0 0.0
  %4384 = vmatpush1.xpose.msra.mxu0 0.0
  %4385 = vmatprep.subr.mxu0 0.0
  %4386 = vmatpush1.xpose.msra.mxu0 0.0
  %4387 = vmatprep.subr.mxu0 0.0
  %4388 = vmatpush1.xpose.msra.mxu0 0.0
  %4389 = vmatprep.subr.mxu0 0.0
  %4390 = vmatpush1.xpose.msra.mxu0 0.0
  %4391 = vmatprep.subr.mxu0 0.0
  %4392 = vmatpush1.xpose.msra.mxu0 0.0
  %4393 = vmatprep.subr.mxu0 0.0
  %4394 = vmatpush1.xpose.msra.mxu0 0.0
  %4395 = vmatprep.subr.mxu0 0.0
  %4396 = vmatpush1.xpose.msra.mxu0 0.0
  %4397 = vmatprep.mubr.f32.mxu0 0.0
  %4398 = vmatmul.mubr.f32.gmra.mrb[0].mxu0 %v4331
  %v4399 = vpop.f32.mrb[0].mxu0
  %v4400 = vadd.f32 0.0, %v4399
  %v4401 = vpop.f32.mrb[0].mxu0
  %4402 = vdwg.mxu0
  %v4403 = vmul.f32 %v4322, 0.35355338
  %v4404 = vmul.f32 %v4400, 0.35355338
  %v4405 = vsel %vm682, %v4403, -inf
  %4406 = vmax.xlane.f32.xlu0 %v4405
  %v4407 = vpop.xlane.xlu0 %4406
  %v4408 = vsel %vm682, %v4404, -inf
  %4409 = vmax.xlane.f32.xlu0 %v4408
  %v4410 = vpop.xlane.xlu0 %4409
  %v4411 = vsub.f32 %v4403, %v4407
  %v4412 = vsub.f32 %v4404, %v4410
  %v4413 = vmul.f32 %v4411, 1.442695
  %v4414 = vpow.pop %v4413
  %v4415 = vmul.f32 %v4412, 1.442695
  %v4416 = vpow.pop %v4415
  %v4417 = vsel %vm682, %v4414, 0.0
  %4418 = vadd.xlane.f32.xlu0 %v4417
  %v4419 = vpop.xlane.xlu0 %4418
  %v4420 = vsel %vm682, %v4416, 0.0
  %4421 = vadd.xlane.f32.xlu0 %v4420
  %v4422 = vpop.xlane.xlu0 %4421
  %v4423 = vrcp.pop %v4419
  %v4424 = vrcp.pop %v4422
  %v4425 = vmul.f32 %v4414, %v4423
  %v4426 = vmul.f32 %v4416, %v4424
  %v4428 = vsel %vm134, %v4425, 0
  %4430 = vmatprep.subr.mxu0 0.0
  %4431 = vmatpush1.msra.mxu0 %v1119
  %4432 = vmatprep.subr.mxu0 0.0
  %4433 = vmatpush1.msra.mxu0 0.0
  %4434 = vmatprep.subr.mxu0 0.0
  %4435 = vmatpush1.msra.mxu0 0.0
  %4436 = vmatprep.subr.mxu0 0.0
  %4437 = vmatpush1.msra.mxu0 0.0
  %4438 = vmatprep.subr.mxu0 0.0
  %4439 = vmatpush1.msra.mxu0 0.0
  %4440 = vmatprep.subr.mxu0 0.0
  %4441 = vmatpush1.msra.mxu0 0.0
  %4442 = vmatprep.subr.mxu0 0.0
  %4443 = vmatpush1.msra.mxu0 0.0
  %4444 = vmatprep.subr.mxu0 0.0
  %4445 = vmatpush1.msra.mxu0 0.0
  %4446 = vmatprep.subr.mxu0 0.0
  %4447 = vmatpush1.msra.mxu0 0.0
  %4448 = vmatprep.subr.mxu0 0.0
  %4449 = vmatpush1.msra.mxu0 0.0
  %4450 = vmatprep.subr.mxu0 0.0
  %4451 = vmatpush1.msra.mxu0 0.0
  %4452 = vmatprep.subr.mxu0 0.0
  %4453 = vmatpush1.msra.mxu0 0.0
  %4454 = vmatprep.subr.mxu0 0.0
  %4455 = vmatpush1.msra.mxu0 0.0
  %4456 = vmatprep.subr.mxu0 0.0
  %4457 = vmatpush1.msra.mxu0 0.0
  %4458 = vmatprep.subr.mxu0 0.0
  %4459 = vmatpush1.msra.mxu0 0.0
  %4460 = vmatprep.subr.mxu0 0.0
  %4461 = vmatpush1.msra.mxu0 0.0
  %4462 = vmatprep.subr.mxu0 0.0
  %4463 = vmatpush1.msra.mxu0 0.0
  %4464 = vmatprep.subr.mxu0 0.0
  %4465 = vmatpush1.msra.mxu0 0.0
  %4466 = vmatprep.subr.mxu0 0.0
  %4467 = vmatpush1.msra.mxu0 0.0
  %4468 = vmatprep.subr.mxu0 0.0
  %4469 = vmatpush1.msra.mxu0 0.0
  %4470 = vmatprep.subr.mxu0 0.0
  %4471 = vmatpush1.msra.mxu0 0.0
  %4472 = vmatprep.subr.mxu0 0.0
  %4473 = vmatpush1.msra.mxu0 0.0
  %4474 = vmatprep.subr.mxu0 0.0
  %4475 = vmatpush1.msra.mxu0 0.0
  %4476 = vmatprep.subr.mxu0 0.0
  %4477 = vmatpush1.msra.mxu0 0.0
  %4478 = vmatprep.subr.mxu0 0.0
  %4479 = vmatpush1.msra.mxu0 0.0
  %4480 = vmatprep.subr.mxu0 0.0
  %4481 = vmatpush1.msra.mxu0 0.0
  %4482 = vmatprep.subr.mxu0 0.0
  %4483 = vmatpush1.msra.mxu0 0.0
  %4484 = vmatprep.subr.mxu0 0.0
  %4485 = vmatpush1.msra.mxu0 0.0
  %4486 = vmatprep.subr.mxu0 0.0
  %4487 = vmatpush1.msra.mxu0 0.0
  %4488 = vmatprep.subr.mxu0 0.0
  %4489 = vmatpush1.msra.mxu0 0.0
  %4490 = vmatprep.subr.mxu0 0.0
  %4491 = vmatpush1.msra.mxu0 0.0
  %4492 = vmatprep.subr.mxu0 0.0
  %4493 = vmatpush1.msra.mxu0 0.0
  %4494 = vmatprep.mubr.f32.mxu0 0.0
  %4495 = vmatmul.mubr.f32.gmra.mrb[0].mxu0 %v4428
  %v4496 = vpop.f32.mrb[0].mxu0
  %v4497 = vadd.f32 0.0, %v4496
  %v4498 = vpop.f32.mrb[0].mxu0
  %4499 = vdwg.mxu0
  %v4501 = vsel %vm134, %v4426, 0
  %4503 = vmatprep.subr.mxu0 0.0
  %4504 = vmatpush1.msra.mxu0 %v1196
  %4505 = vmatprep.subr.mxu0 0.0
  %4506 = vmatpush1.msra.mxu0 0.0
  %4507 = vmatprep.subr.mxu0 0.0
  %4508 = vmatpush1.msra.mxu0 0.0
  %4509 = vmatprep.subr.mxu0 0.0
  %4510 = vmatpush1.msra.mxu0 0.0
  %4511 = vmatprep.subr.mxu0 0.0
  %4512 = vmatpush1.msra.mxu0 0.0
  %4513 = vmatprep.subr.mxu0 0.0
  %4514 = vmatpush1.msra.mxu0 0.0
  %4515 = vmatprep.subr.mxu0 0.0
  %4516 = vmatpush1.msra.mxu0 0.0
  %4517 = vmatprep.subr.mxu0 0.0
  %4518 = vmatpush1.msra.mxu0 0.0
  %4519 = vmatprep.subr.mxu0 0.0
  %4520 = vmatpush1.msra.mxu0 0.0
  %4521 = vmatprep.subr.mxu0 0.0
  %4522 = vmatpush1.msra.mxu0 0.0
  %4523 = vmatprep.subr.mxu0 0.0
  %4524 = vmatpush1.msra.mxu0 0.0
  %4525 = vmatprep.subr.mxu0 0.0
  %4526 = vmatpush1.msra.mxu0 0.0
  %4527 = vmatprep.subr.mxu0 0.0
  %4528 = vmatpush1.msra.mxu0 0.0
  %4529 = vmatprep.subr.mxu0 0.0
  %4530 = vmatpush1.msra.mxu0 0.0
  %4531 = vmatprep.subr.mxu0 0.0
  %4532 = vmatpush1.msra.mxu0 0.0
  %4533 = vmatprep.subr.mxu0 0.0
  %4534 = vmatpush1.msra.mxu0 0.0
  %4535 = vmatprep.subr.mxu0 0.0
  %4536 = vmatpush1.msra.mxu0 0.0
  %4537 = vmatprep.subr.mxu0 0.0
  %4538 = vmatpush1.msra.mxu0 0.0
  %4539 = vmatprep.subr.mxu0 0.0
  %4540 = vmatpush1.msra.mxu0 0.0
  %4541 = vmatprep.subr.mxu0 0.0
  %4542 = vmatpush1.msra.mxu0 0.0
  %4543 = vmatprep.subr.mxu0 0.0
  %4544 = vmatpush1.msra.mxu0 0.0
  %4545 = vmatprep.subr.mxu0 0.0
  %4546 = vmatpush1.msra.mxu0 0.0
  %4547 = vmatprep.subr.mxu0 0.0
  %4548 = vmatpush1.msra.mxu0 0.0
  %4549 = vmatprep.subr.mxu0 0.0
  %4550 = vmatpush1.msra.mxu0 0.0
  %4551 = vmatprep.subr.mxu0 0.0
  %4552 = vmatpush1.msra.mxu0 0.0
  %4553 = vmatprep.subr.mxu0 0.0
  %4554 = vmatpush1.msra.mxu0 0.0
  %4555 = vmatprep.subr.mxu0 0.0
  %4556 = vmatpush1.msra.mxu0 0.0
  %4557 = vmatprep.subr.mxu0 0.0
  %4558 = vmatpush1.msra.mxu0 0.0
  %4559 = vmatprep.subr.mxu0 0.0
  %4560 = vmatpush1.msra.mxu0 0.0
  %4561 = vmatprep.subr.mxu0 0.0
  %4562 = vmatpush1.msra.mxu0 0.0
  %4563 = vmatprep.subr.mxu0 0.0
  %4564 = vmatpush1.msra.mxu0 0.0
  %4565 = vmatprep.subr.mxu0 0.0
  %4566 = vmatpush1.msra.mxu0 0.0
  %4567 = vmatprep.mubr.f32.mxu0 0.0
  %4568 = vmatmul.mubr.f32.gmra.mrb[0].mxu0 %v4501
  %v4569 = vpop.f32.mrb[0].mxu0
  %v4570 = vadd.f32 0.0, %v4569
  %v4571 = vpop.f32.mrb[0].mxu0
  %4572 = vdwg.mxu0
  %v4575 = vrot.slane %v4570, 7
  %v4576 = vsel %vm854, %v4575, %v4497
  %v4577 = vsel %vm134, %v4576, 0
  %4579 = vmatprep.subr.mxu0 0.0
  %4580 = vmatpush1.msra.mxu0 %v27
  %4581 = vmatprep.subr.mxu0 0.0
  %4582 = vmatpush1.msra.mxu0 0.0
  %4583 = vmatprep.subr.mxu0 0.0
  %4584 = vmatpush1.msra.mxu0 0.0
  %4585 = vmatprep.subr.mxu0 0.0
  %4586 = vmatpush1.msra.mxu0 0.0
  %4587 = vmatprep.subr.mxu0 0.0
  %4588 = vmatpush1.msra.mxu0 0.0
  %4589 = vmatprep.subr.mxu0 0.0
  %4590 = vmatpush1.msra.mxu0 0.0
  %4591 = vmatprep.subr.mxu0 0.0
  %4592 = vmatpush1.msra.mxu0 0.0
  %4593 = vmatprep.subr.mxu0 0.0
  %4594 = vmatpush1.msra.mxu0 0.0
  %4595 = vmatprep.subr.mxu0 0.0
  %4596 = vmatpush1.msra.mxu0 0.0
  %4597 = vmatprep.subr.mxu0 0.0
  %4598 = vmatpush1.msra.mxu0 0.0
  %4599 = vmatprep.subr.mxu0 0.0
  %4600 = vmatpush1.msra.mxu0 0.0
  %4601 = vmatprep.subr.mxu0 0.0
  %4602 = vmatpush1.msra.mxu0 0.0
  %4603 = vmatprep.subr.mxu0 0.0
  %4604 = vmatpush1.msra.mxu0 0.0
  %4605 = vmatprep.subr.mxu0 0.0
  %4606 = vmatpush1.msra.mxu0 0.0
  %4607 = vmatprep.subr.mxu0 0.0
  %4608 = vmatpush1.msra.mxu0 0.0
  %4609 = vmatprep.subr.mxu0 0.0
  %4610 = vmatpush1.msra.mxu0 0.0
  %4611 = vmatprep.subr.mxu0 0.0
  %4612 = vmatpush1.msra.mxu0 0.0
  %4613 = vmatprep.subr.mxu0 0.0
  %4614 = vmatpush1.msra.mxu0 0.0
  %4615 = vmatprep.subr.mxu0 0.0
  %4616 = vmatpush1.msra.mxu0 0.0
  %4617 = vmatprep.subr.mxu0 0.0
  %4618 = vmatpush1.msra.mxu0 0.0
  %4619 = vmatprep.subr.mxu0 0.0
  %4620 = vmatpush1.msra.mxu0 0.0
  %4621 = vmatprep.subr.mxu0 0.0
  %4622 = vmatpush1.msra.mxu0 0.0
  %4623 = vmatprep.subr.mxu0 0.0
  %4624 = vmatpush1.msra.mxu0 0.0
  %4625 = vmatprep.subr.mxu0 0.0
  %4626 = vmatpush1.msra.mxu0 0.0
  %4627 = vmatprep.subr.mxu0 0.0
  %4628 = vmatpush1.msra.mxu0 0.0
  %4629 = vmatprep.subr.mxu0 0.0
  %4630 = vmatpush1.msra.mxu0 0.0
  %4631 = vmatprep.subr.mxu0 0.0
  %4632 = vmatpush1.msra.mxu0 0.0
  %4633 = vmatprep.subr.mxu0 0.0
  %4634 = vmatpush1.msra.mxu0 0.0
  %4635 = vmatprep.subr.mxu0 0.0
  %4636 = vmatpush1.msra.mxu0 0.0
  %4637 = vmatprep.subr.mxu0 0.0
  %4638 = vmatpush1.msra.mxu0 0.0
  %4639 = vmatprep.subr.mxu0 0.0
  %4640 = vmatpush1.msra.mxu0 0.0
  %4641 = vmatprep.subr.mxu0 0.0
  %4642 = vmatpush1.msra.mxu0 0.0
  %4643 = vmatprep.mubr.f32.mxu0 0.0
  %4644 = vmatmul.mubr.f32.gmra.mrb[0].mxu0 %v4577
  %v4645 = vpop.f32.mrb[0].mxu0
  %v4646 = vadd.f32 0.0, %v4645
  %v4647 = vpop.f32.mrb[0].mxu0
  %4648 = vdwg.mxu0
  %v4649 = vadd.f32 %v4246, %v4646
  %v4650 = vsel %vm1348, %v3357, 0
  %4652 = vmatprep.subr.mxu0 0.0
  %4653 = vmatpush1.msra.mxu0 %v31
  %4654 = vmatprep.subr.mxu0 0.0
  %4655 = vmatpush1.msra.mxu0 %v32
  %4656 = vmatprep.subr.mxu0 0.0
  %4657 = vmatpush1.msra.mxu0 %v33
  %4658 = vmatprep.subr.mxu0 0.0
  %4659 = vmatpush1.msra.mxu0 %v34
  %4660 = vmatprep.subr.mxu0 0.0
  %4661 = vmatpush1.msra.mxu0 0.0
  %4662 = vmatprep.subr.mxu0 0.0
  %4663 = vmatpush1.msra.mxu0 0.0
  %4664 = vmatprep.subr.mxu0 0.0
  %4665 = vmatpush1.msra.mxu0 0.0
  %4666 = vmatprep.subr.mxu0 0.0
  %4667 = vmatpush1.msra.mxu0 0.0
  %4668 = vmatprep.subr.mxu0 0.0
  %4669 = vmatpush1.msra.mxu0 0.0
  %4670 = vmatprep.subr.mxu0 0.0
  %4671 = vmatpush1.msra.mxu0 0.0
  %4672 = vmatprep.subr.mxu0 0.0
  %4673 = vmatpush1.msra.mxu0 0.0
  %4674 = vmatprep.subr.mxu0 0.0
  %4675 = vmatpush1.msra.mxu0 0.0
  %4676 = vmatprep.subr.mxu0 0.0
  %4677 = vmatpush1.msra.mxu0 0.0
  %4678 = vmatprep.subr.mxu0 0.0
  %4679 = vmatpush1.msra.mxu0 0.0
  %4680 = vmatprep.subr.mxu0 0.0
  %4681 = vmatpush1.msra.mxu0 0.0
  %4682 = vmatprep.subr.mxu0 0.0
  %4683 = vmatpush1.msra.mxu0 0.0
  %4684 = vmatprep.subr.mxu0 0.0
  %4685 = vmatpush1.msra.mxu0 0.0
  %4686 = vmatprep.subr.mxu0 0.0
  %4687 = vmatpush1.msra.mxu0 0.0
  %4688 = vmatprep.subr.mxu0 0.0
  %4689 = vmatpush1.msra.mxu0 0.0
  %4690 = vmatprep.subr.mxu0 0.0
  %4691 = vmatpush1.msra.mxu0 0.0
  %4692 = vmatprep.subr.mxu0 0.0
  %4693 = vmatpush1.msra.mxu0 0.0
  %4694 = vmatprep.subr.mxu0 0.0
  %4695 = vmatpush1.msra.mxu0 0.0
  %4696 = vmatprep.subr.mxu0 0.0
  %4697 = vmatpush1.msra.mxu0 0.0
  %4698 = vmatprep.subr.mxu0 0.0
  %4699 = vmatpush1.msra.mxu0 0.0
  %4700 = vmatprep.subr.mxu0 0.0
  %4701 = vmatpush1.msra.mxu0 0.0
  %4702 = vmatprep.subr.mxu0 0.0
  %4703 = vmatpush1.msra.mxu0 0.0
  %4704 = vmatprep.subr.mxu0 0.0
  %4705 = vmatpush1.msra.mxu0 0.0
  %4706 = vmatprep.subr.mxu0 0.0
  %4707 = vmatpush1.msra.mxu0 0.0
  %4708 = vmatprep.subr.mxu0 0.0
  %4709 = vmatpush1.msra.mxu0 0.0
  %4710 = vmatprep.subr.mxu0 0.0
  %4711 = vmatpush1.msra.mxu0 0.0
  %4712 = vmatprep.subr.mxu0 0.0
  %4713 = vmatpush1.msra.mxu0 0.0
  %4714 = vmatprep.subr.mxu0 0.0
  %4715 = vmatpush1.msra.mxu0 0.0
  %4716 = vmatprep.mubr.f32.mxu0 0.0
  %4717 = vmatmul.mubr.f32.gmra.mrb[0].mxu0 %v4650
  %v4718 = vpop.f32.mrb[0].mxu0
  %v4719 = vadd.f32 0.0, %v4718
  %v4720 = vpop.f32.mrb[0].mxu0
  %4721 = vdwg.mxu0
  %v4723 = vsel %vm1421, %v4649, 0
  %4725 = vmatprep.subr.mxu0 0.0
  %4726 = vmatpush1.msra.mxu0 %v29
  %4727 = vmatprep.subr.mxu0 0.0
  %4728 = vmatpush1.msra.mxu0 %v30
  %4729 = vmatprep.subr.mxu0 0.0
  %4730 = vmatpush1.msra.mxu0 0.0
  %4731 = vmatprep.subr.mxu0 0.0
  %4732 = vmatpush1.msra.mxu0 0.0
  %4733 = vmatprep.subr.mxu0 0.0
  %4734 = vmatpush1.msra.mxu0 0.0
  %4735 = vmatprep.subr.mxu0 0.0
  %4736 = vmatpush1.msra.mxu0 0.0
  %4737 = vmatprep.subr.mxu0 0.0
  %4738 = vmatpush1.msra.mxu0 0.0
  %4739 = vmatprep.subr.mxu0 0.0
  %4740 = vmatpush1.msra.mxu0 0.0
  %4741 = vmatprep.subr.mxu0 0.0
  %4742 = vmatpush1.msra.mxu0 0.0
  %4743 = vmatprep.subr.mxu0 0.0
  %4744 = vmatpush1.msra.mxu0 0.0
  %4745 = vmatprep.subr.mxu0 0.0
  %4746 = vmatpush1.msra.mxu0 0.0
  %4747 = vmatprep.subr.mxu0 0.0
  %4748 = vmatpush1.msra.mxu0 0.0
  %4749 = vmatprep.subr.mxu0 0.0
  %4750 = vmatpush1.msra.mxu0 0.0
  %4751 = vmatprep.subr.mxu0 0.0
  %4752 = vmatpush1.msra.mxu0 0.0
  %4753 = vmatprep.subr.mxu0 0.0
  %4754 = vmatpush1.msra.mxu0 0.0
  %4755 = vmatprep.subr.mxu0 0.0
  %4756 = vmatpush1.msra.mxu0 0.0
  %4757 = vmatprep.subr.mxu0 0.0
  %4758 = vmatpush1.msra.mxu0 0.0
  %4759 = vmatprep.subr.mxu0 0.0
  %4760 = vmatpush1.msra.mxu0 0.0
  %4761 = vmatprep.subr.mxu0 0.0
  %4762 = vmatpush1.msra.mxu0 0.0
  %4763 = vmatprep.subr.mxu0 0.0
  %4764 = vmatpush1.msra.mxu0 0.0
  %4765 = vmatprep.subr.mxu0 0.0
  %4766 = vmatpush1.msra.mxu0 0.0
  %4767 = vmatprep.subr.mxu0 0.0
  %4768 = vmatpush1.msra.mxu0 0.0
  %4769 = vmatprep.subr.mxu0 0.0
  %4770 = vmatpush1.msra.mxu0 0.0
  %4771 = vmatprep.subr.mxu0 0.0
  %4772 = vmatpush1.msra.mxu0 0.0
  %4773 = vmatprep.subr.mxu0 0.0
  %4774 = vmatpush1.msra.mxu0 0.0
  %4775 = vmatprep.subr.mxu0 0.0
  %4776 = vmatpush1.msra.mxu0 0.0
  %4777 = vmatprep.subr.mxu0 0.0
  %4778 = vmatpush1.msra.mxu0 0.0
  %4779 = vmatprep.subr.mxu0 0.0
  %4780 = vmatpush1.msra.mxu0 0.0
  %4781 = vmatprep.subr.mxu0 0.0
  %4782 = vmatpush1.msra.mxu0 0.0
  %4783 = vmatprep.subr.mxu0 0.0
  %4784 = vmatpush1.msra.mxu0 0.0
  %4785 = vmatprep.subr.mxu0 0.0
  %4786 = vmatpush1.msra.mxu0 0.0
  %4787 = vmatprep.subr.mxu0 0.0
  %4788 = vmatpush1.msra.mxu0 0.0
  %4789 = vmatprep.mubr.f32.mxu0 0.0
  %4790 = vmatmul.mubr.f32.gmra.mrb[0].mxu0 %v4723
  %v4791 = vpop.f32.mrb[0].mxu0
  %v4792 = vadd.f32 %v4719, %v4791
  %v4793 = vpop.f32.mrb[0].mxu0
  %4794 = vdwg.mxu0
  %v4795 = vadd.f32 %v4792, %v35
  %v4796 = vxor.u32 %v4795, 2147483648
  %v4797 = vmul.f32 %v4796, 1.442695
  %v4798 = vpow.pop %v4797
  %v4799 = vadd.f32 %v4798, 1.0
  %v4800 = vrcp.pop %v4799
  %v4801 = vmul.f32 1.0, %v4800
  %4803 = vrot.lane.b32.xlu0 %v4801, 96
  %v4804 = vpop.permute.xlu0 %4803
  %v4806 = vmul.f32 %v4795, %v4804
  %v4807 = vsel %vm1507, %v4806, 0.0
  %4808 = vadd.xlane.f32.xlu0 %v4807
  %v4809 = vpop.xlane.xlu0 %4808
  %v4810 = vmul.f32 %v4809, %v1511
  %v4811 = vsub.f32 %v4806, %v4810
  %v4812 = vmul.f32 %v4811, %v4811
  %v4813 = vsel %vm1507, %v4812, 0.0
  %4814 = vadd.xlane.f32.xlu0 %v4813
  %v4815 = vpop.xlane.xlu0 %4814
  %v4816 = vmul.f32 %v4815, %v1511
  %v4817 = vadd.f32 %v4816, 1e-05
  %v4818 = vrsqrt.pop %v4817
  %v4819 = vmul.f32 %v4811, %v4818
  %v4820 = vmul.f32 %v4819, %v36
  %v4821 = vadd.f32 %v4820, %v37
  %4823 = vrot.lane.b32.xlu0 %v3191, 96
  %v4824 = vpop.permute.xlu0 %4823
  %4825 = vrot.lane.b32.xlu0 %v3198, 96
  %v4826 = vpop.permute.xlu0 %4825
  %v4827 = vsel %vm1537, %v4824, %v4826
  %4831 = vrot.lane.b32.xlu0 %v4821, 96
  %v4832 = vpop.permute.xlu0 %4831
  %v4834 = vsel %vm1537, %v4826, %v4832
  %4835 = vmatprep.subr.mxu0 %v39
  %4836 = vmatpush1.msra.mxu0 %v38
  %4837 = vmatprep.subr.mxu0 %v41
  %4838 = vmatpush1.msra.mxu0 %v40
  %4839 = vmatprep.subr.mxu0 %v43
  %4840 = vmatpush1.msra.mxu0 %v42
  %4841 = vmatprep.subr.mxu0 %v45
  %4842 = vmatpush1.msra.mxu0 %v44
  %4843 = vmatprep.subr.mxu0 %v47
  %4844 = vmatpush1.msra.mxu0 %v46
  %4845 = vmatprep.subr.mxu0 %v49
  %4846 = vmatpush1.msra.mxu0 %v48
  %4847 = vmatprep.subr.mxu0 %v51
  %4848 = vmatpush1.msra.mxu0 %v50
  %4849 = vmatprep.subr.mxu0 %v53
  %4850 = vmatpush1.msra.mxu0 %v52
  %4851 = vmatprep.subr.mxu0 %v55
  %4852 = vmatpush1.msra.mxu0 %v54
  %4853 = vmatprep.subr.mxu0 %v57
  %4854 = vmatpush1.msra.mxu0 %v56
  %4855 = vmatprep.subr.mxu0 %v59
  %4856 = vmatpush1.msra.mxu0 %v58
  %4857 = vmatprep.subr.mxu0 %v61
  %4858 = vmatpush1.msra.mxu0 %v60
  %4859 = vmatprep.subr.mxu0 %v63
  %4860 = vmatpush1.msra.mxu0 %v62
  %4861 = vmatprep.subr.mxu0 %v65
  %4862 = vmatpush1.msra.mxu0 %v64
  %4863 = vmatprep.subr.mxu0 %v67
  %4864 = vmatpush1.msra.mxu0 %v66
  %4865 = vmatprep.subr.mxu0 %v69
  %4866 = vmatpush1.msra.mxu0 %v68
  %4867 = vmatprep.subr.mxu0 %v71
  %4868 = vmatpush1.msra.mxu0 %v70
  %4869 = vmatprep.subr.mxu0 %v73
  %4870 = vmatpush1.msra.mxu0 %v72
  %4871 = vmatprep.subr.mxu0 %v75
  %4872 = vmatpush1.msra.mxu0 %v74
  %4873 = vmatprep.subr.mxu0 %v77
  %4874 = vmatpush1.msra.mxu0 %v76
  %4875 = vmatprep.subr.mxu0 %v79
  %4876 = vmatpush1.msra.mxu0 %v78
  %4877 = vmatprep.subr.mxu0 %v81
  %4878 = vmatpush1.msra.mxu0 %v80
  %4879 = vmatprep.subr.mxu0 %v83
  %4880 = vmatpush1.msra.mxu0 %v82
  %4881 = vmatprep.subr.mxu0 %v85
  %4882 = vmatpush1.msra.mxu0 %v84
  %4883 = vmatprep.subr.mxu0 %v87
  %4884 = vmatpush1.msra.mxu0 %v86
  %4885 = vmatprep.subr.mxu0 %v89
  %4886 = vmatpush1.msra.mxu0 %v88
  %4887 = vmatprep.subr.mxu0 %v91
  %4888 = vmatpush1.msra.mxu0 %v90
  %4889 = vmatprep.subr.mxu0 %v93
  %4890 = vmatpush1.msra.mxu0 %v92
  %4891 = vmatprep.subr.mxu0 %v95
  %4892 = vmatpush1.msra.mxu0 %v94
  %4893 = vmatprep.subr.mxu0 %v97
  %4894 = vmatpush1.msra.mxu0 %v96
  %4895 = vmatprep.subr.mxu0 %v99
  %4896 = vmatpush1.msra.mxu0 %v98
  %4897 = vmatprep.subr.mxu0 %v101
  %4898 = vmatpush1.msra.mxu0 %v100
  %4899 = vmatprep.mubr.f32.mxu0 %v4834
  %4900 = vmatmul.mubr.f32.gmra.mrb[0].mxu0 %v4827
  %v4901 = vpop.f32.mrb[0].mxu0
  %v4902 = vadd.f32 %v1550, %v4901
  %v4903 = vpop.f32.mrb[0].mxu0
  %v4904 = vadd.f32 %v1554, %v4903
  %4905 = vdwg.mxu0
  %v4906 = vxor.u32 %v4904, 2147483648
  %v4907 = vmul.f32 %v4906, 1.442695
  %v4908 = vpow.pop %v4907
  %v4909 = vadd.f32 %v4908, 1.0
  %v4910 = vrcp.pop %v4909
  %v4911 = vmul.f32 1.0, %v4910
  %v4912 = vmul.f32 %v4902, %v4911
  %4913 = vmatprep.subr.mxu0 0.0
  %4914 = vmatpush1.msra.mxu0 %v104
  %4915 = vmatprep.subr.mxu0 0.0
  %4916 = vmatpush1.msra.mxu0 %v105
  %4917 = vmatprep.subr.mxu0 0.0
  %4918 = vmatpush1.msra.mxu0 %v106
  %4919 = vmatprep.subr.mxu0 0.0
  %4920 = vmatpush1.msra.mxu0 %v107
  %4921 = vmatprep.subr.mxu0 0.0
  %4922 = vmatpush1.msra.mxu0 %v108
  %4923 = vmatprep.subr.mxu0 0.0
  %4924 = vmatpush1.msra.mxu0 %v109
  %4925 = vmatprep.subr.mxu0 0.0
  %4926 = vmatpush1.msra.mxu0 %v110
  %4927 = vmatprep.subr.mxu0 0.0
  %4928 = vmatpush1.msra.mxu0 %v111
  %4929 = vmatprep.subr.mxu0 0.0
  %4930 = vmatpush1.msra.mxu0 %v112
  %4931 = vmatprep.subr.mxu0 0.0
  %4932 = vmatpush1.msra.mxu0 %v113
  %4933 = vmatprep.subr.mxu0 0.0
  %4934 = vmatpush1.msra.mxu0 %v114
  %4935 = vmatprep.subr.mxu0 0.0
  %4936 = vmatpush1.msra.mxu0 %v115
  %4937 = vmatprep.subr.mxu0 0.0
  %4938 = vmatpush1.msra.mxu0 %v116
  %4939 = vmatprep.subr.mxu0 0.0
  %4940 = vmatpush1.msra.mxu0 %v117
  %4941 = vmatprep.subr.mxu0 0.0
  %4942 = vmatpush1.msra.mxu0 %v118
  %4943 = vmatprep.subr.mxu0 0.0
  %4944 = vmatpush1.msra.mxu0 %v119
  %4945 = vmatprep.subr.mxu0 0.0
  %4946 = vmatpush1.msra.mxu0 0.0
  %4947 = vmatprep.subr.mxu0 0.0
  %4948 = vmatpush1.msra.mxu0 0.0
  %4949 = vmatprep.subr.mxu0 0.0
  %4950 = vmatpush1.msra.mxu0 0.0
  %4951 = vmatprep.subr.mxu0 0.0
  %4952 = vmatpush1.msra.mxu0 0.0
  %4953 = vmatprep.subr.mxu0 0.0
  %4954 = vmatpush1.msra.mxu0 0.0
  %4955 = vmatprep.subr.mxu0 0.0
  %4956 = vmatpush1.msra.mxu0 0.0
  %4957 = vmatprep.subr.mxu0 0.0
  %4958 = vmatpush1.msra.mxu0 0.0
  %4959 = vmatprep.subr.mxu0 0.0
  %4960 = vmatpush1.msra.mxu0 0.0
  %4961 = vmatprep.subr.mxu0 0.0
  %4962 = vmatpush1.msra.mxu0 0.0
  %4963 = vmatprep.subr.mxu0 0.0
  %4964 = vmatpush1.msra.mxu0 0.0
  %4965 = vmatprep.subr.mxu0 0.0
  %4966 = vmatpush1.msra.mxu0 0.0
  %4967 = vmatprep.subr.mxu0 0.0
  %4968 = vmatpush1.msra.mxu0 0.0
  %4969 = vmatprep.subr.mxu0 0.0
  %4970 = vmatpush1.msra.mxu0 0.0
  %4971 = vmatprep.subr.mxu0 0.0
  %4972 = vmatpush1.msra.mxu0 0.0
  %4973 = vmatprep.subr.mxu0 0.0
  %4974 = vmatpush1.msra.mxu0 0.0
  %4975 = vmatprep.subr.mxu0 0.0
  %4976 = vmatpush1.msra.mxu0 0.0
  %4977 = vmatprep.mubr.f32.mxu0 0.0
  %4978 = vmatmul.mubr.f32.gmra.mrb[0].mxu0 %v4912
  %v4979 = vpop.f32.mrb[0].mxu0
  %v4980 = vadd.f32 %v120, %v4979
  %v4981 = vpop.f32.mrb[0].mxu0
  %4982 = vdwg.mxu0
  %v4983 = vxor.u32 %v4980, 2147483648
  %v4984 = vmul.f32 %v4983, 1.442695
  %v4985 = vpow.pop %v4984
  %v4986 = vadd.f32 %v4985, 1.0
  %v4987 = vrcp.pop %v4986
  %v4988 = vmul.f32 1.0, %v4987
  %4990 = vrot.lane.b32.xlu0 %v4988, 96
  %v4991 = vpop.permute.xlu0 %4990
  %v4993 = vmul.f32 %v4980, %v4991
  %v4995 = vsel %vm134, %v4993, 0
  %4997 = vmatprep.subr.mxu0 0.0
  %4998 = vmatpush1.msra.mxu0 %v16
  %4999 = vmatprep.subr.mxu0 0.0
  %5000 = vmatpush1.msra.mxu0 0.0
  %5001 = vmatprep.subr.mxu0 0.0
  %5002 = vmatpush1.msra.mxu0 0.0
  %5003 = vmatprep.subr.mxu0 0.0
  %5004 = vmatpush1.msra.mxu0 0.0
  %5005 = vmatprep.subr.mxu0 0.0
  %5006 = vmatpush1.msra.mxu0 0.0
  %5007 = vmatprep.subr.mxu0 0.0
  %5008 = vmatpush1.msra.mxu0 0.0
  %5009 = vmatprep.subr.mxu0 0.0
  %5010 = vmatpush1.msra.mxu0 0.0
  %5011 = vmatprep.subr.mxu0 0.0
  %5012 = vmatpush1.msra.mxu0 0.0
  %5013 = vmatprep.subr.mxu0 0.0
  %5014 = vmatpush1.msra.mxu0 0.0
  %5015 = vmatprep.subr.mxu0 0.0
  %5016 = vmatpush1.msra.mxu0 0.0
  %5017 = vmatprep.subr.mxu0 0.0
  %5018 = vmatpush1.msra.mxu0 0.0
  %5019 = vmatprep.subr.mxu0 0.0
  %5020 = vmatpush1.msra.mxu0 0.0
  %5021 = vmatprep.subr.mxu0 0.0
  %5022 = vmatpush1.msra.mxu0 0.0
  %5023 = vmatprep.subr.mxu0 0.0
  %5024 = vmatpush1.msra.mxu0 0.0
  %5025 = vmatprep.subr.mxu0 0.0
  %5026 = vmatpush1.msra.mxu0 0.0
  %5027 = vmatprep.subr.mxu0 0.0
  %5028 = vmatpush1.msra.mxu0 0.0
  %5029 = vmatprep.subr.mxu0 0.0
  %5030 = vmatpush1.msra.mxu0 0.0
  %5031 = vmatprep.subr.mxu0 0.0
  %5032 = vmatpush1.msra.mxu0 0.0
  %5033 = vmatprep.subr.mxu0 0.0
  %5034 = vmatpush1.msra.mxu0 0.0
  %5035 = vmatprep.subr.mxu0 0.0
  %5036 = vmatpush1.msra.mxu0 0.0
  %5037 = vmatprep.subr.mxu0 0.0
  %5038 = vmatpush1.msra.mxu0 0.0
  %5039 = vmatprep.subr.mxu0 0.0
  %5040 = vmatpush1.msra.mxu0 0.0
  %5041 = vmatprep.subr.mxu0 0.0
  %5042 = vmatpush1.msra.mxu0 0.0
  %5043 = vmatprep.subr.mxu0 0.0
  %5044 = vmatpush1.msra.mxu0 0.0
  %5045 = vmatprep.subr.mxu0 0.0
  %5046 = vmatpush1.msra.mxu0 0.0
  %5047 = vmatprep.subr.mxu0 0.0
  %5048 = vmatpush1.msra.mxu0 0.0
  %5049 = vmatprep.subr.mxu0 0.0
  %5050 = vmatpush1.msra.mxu0 0.0
  %5051 = vmatprep.subr.mxu0 0.0
  %5052 = vmatpush1.msra.mxu0 0.0
  %5053 = vmatprep.subr.mxu0 0.0
  %5054 = vmatpush1.msra.mxu0 0.0
  %5055 = vmatprep.subr.mxu0 0.0
  %5056 = vmatpush1.msra.mxu0 0.0
  %5057 = vmatprep.subr.mxu0 0.0
  %5058 = vmatpush1.msra.mxu0 0.0
  %5059 = vmatprep.subr.mxu0 0.0
  %5060 = vmatpush1.msra.mxu0 0.0
  %5061 = vmatprep.mubr.f32.mxu0 0.0
  %5062 = vmatmul.mubr.f32.gmra.mrb[0].mxu0 %v4995
  %v5063 = vpop.f32.mrb[0].mxu0
  %v5064 = vadd.f32 0.0, %v5063
  %v5065 = vpop.f32.mrb[0].mxu0
  %5066 = vdwg.mxu0
  %5067 = vmatprep.subr.mxu0 0.0
  %5068 = vmatpush1.msra.mxu0 %v17
  %5069 = vmatprep.subr.mxu0 0.0
  %5070 = vmatpush1.msra.mxu0 0.0
  %5071 = vmatprep.subr.mxu0 0.0
  %5072 = vmatpush1.msra.mxu0 0.0
  %5073 = vmatprep.subr.mxu0 0.0
  %5074 = vmatpush1.msra.mxu0 0.0
  %5075 = vmatprep.subr.mxu0 0.0
  %5076 = vmatpush1.msra.mxu0 0.0
  %5077 = vmatprep.subr.mxu0 0.0
  %5078 = vmatpush1.msra.mxu0 0.0
  %5079 = vmatprep.subr.mxu0 0.0
  %5080 = vmatpush1.msra.mxu0 0.0
  %5081 = vmatprep.subr.mxu0 0.0
  %5082 = vmatpush1.msra.mxu0 0.0
  %5083 = vmatprep.subr.mxu0 0.0
  %5084 = vmatpush1.msra.mxu0 0.0
  %5085 = vmatprep.subr.mxu0 0.0
  %5086 = vmatpush1.msra.mxu0 0.0
  %5087 = vmatprep.subr.mxu0 0.0
  %5088 = vmatpush1.msra.mxu0 0.0
  %5089 = vmatprep.subr.mxu0 0.0
  %5090 = vmatpush1.msra.mxu0 0.0
  %5091 = vmatprep.subr.mxu0 0.0
  %5092 = vmatpush1.msra.mxu0 0.0
  %5093 = vmatprep.subr.mxu0 0.0
  %5094 = vmatpush1.msra.mxu0 0.0
  %5095 = vmatprep.subr.mxu0 0.0
  %5096 = vmatpush1.msra.mxu0 0.0
  %5097 = vmatprep.subr.mxu0 0.0
  %5098 = vmatpush1.msra.mxu0 0.0
  %5099 = vmatprep.subr.mxu0 0.0
  %5100 = vmatpush1.msra.mxu0 0.0
  %5101 = vmatprep.subr.mxu0 0.0
  %5102 = vmatpush1.msra.mxu0 0.0
  %5103 = vmatprep.subr.mxu0 0.0
  %5104 = vmatpush1.msra.mxu0 0.0
  %5105 = vmatprep.subr.mxu0 0.0
  %5106 = vmatpush1.msra.mxu0 0.0
  %5107 = vmatprep.subr.mxu0 0.0
  %5108 = vmatpush1.msra.mxu0 0.0
  %5109 = vmatprep.subr.mxu0 0.0
  %5110 = vmatpush1.msra.mxu0 0.0
  %5111 = vmatprep.subr.mxu0 0.0
  %5112 = vmatpush1.msra.mxu0 0.0
  %5113 = vmatprep.subr.mxu0 0.0
  %5114 = vmatpush1.msra.mxu0 0.0
  %5115 = vmatprep.subr.mxu0 0.0
  %5116 = vmatpush1.msra.mxu0 0.0
  %5117 = vmatprep.subr.mxu0 0.0
  %5118 = vmatpush1.msra.mxu0 0.0
  %5119 = vmatprep.subr.mxu0 0.0
  %5120 = vmatpush1.msra.mxu0 0.0
  %5121 = vmatprep.subr.mxu0 0.0
  %5122 = vmatpush1.msra.mxu0 0.0
  %5123 = vmatprep.subr.mxu0 0.0
  %5124 = vmatpush1.msra.mxu0 0.0
  %5125 = vmatprep.subr.mxu0 0.0
  %5126 = vmatpush1.msra.mxu0 0.0
  %5127 = vmatprep.subr.mxu0 0.0
  %5128 = vmatpush1.msra.mxu0 0.0
  %5129 = vmatprep.subr.mxu0 0.0
  %5130 = vmatpush1.msra.mxu0 0.0
  %5131 = vmatprep.mubr.f32.mxu0 0.0
  %5132 = vmatmul.mubr.f32.gmra.mrb[0].mxu0 %v4995
  %v5133 = vpop.f32.mrb[0].mxu0
  %v5134 = vadd.f32 0.0, %v5133
  %v5135 = vpop.f32.mrb[0].mxu0
  %5136 = vdwg.mxu0
  %v5137 = vmul.f32 %v5064, %v5134
  %v5138 = vmul.f32 %v19, %v3503
  %v5139 = vadd.f32 %v5138, %v5137
  %v5140 = vmul.f32 %v19, %v3505
  %v5141 = vadd.f32 %v5140, 1.0
  %v5142 = vrsqrt.pop %v5141
  %v5143 = vmul.f32 %v5139, %v5142
  %v5145 = vsel %vm429, %v5143, 0
  %5147 = vmatprep.subr.mxu0 0.0
  %5148 = vmatpush1.msra.mxu0 %v121
  %5149 = vmatprep.subr.mxu0 0.0
  %5150 = vmatpush1.msra.mxu0 %v122
  %5151 = vmatprep.subr.mxu0 0.0
  %5152 = vmatpush1.msra.mxu0 %v123
  %5153 = vmatprep.subr.mxu0 0.0
  %5154 = vmatpush1.msra.mxu0 %v124
  %5155 = vmatprep.subr.mxu0 0.0
  %5156 = vmatpush1.msra.mxu0 %v1869
  %5157 = vmatprep.subr.mxu0 0.0
  %5158 = vmatpush1.msra.mxu0 0.0
  %5159 = vmatprep.subr.mxu0 0.0
  %5160 = vmatpush1.msra.mxu0 0.0
  %5161 = vmatprep.subr.mxu0 0.0
  %5162 = vmatpush1.msra.mxu0 0.0
  %5163 = vmatprep.subr.mxu0 0.0
  %5164 = vmatpush1.msra.mxu0 0.0
  %5165 = vmatprep.subr.mxu0 0.0
  %5166 = vmatpush1.msra.mxu0 0.0
  %5167 = vmatprep.subr.mxu0 0.0
  %5168 = vmatpush1.msra.mxu0 0.0
  %5169 = vmatprep.subr.mxu0 0.0
  %5170 = vmatpush1.msra.mxu0 0.0
  %5171 = vmatprep.subr.mxu0 0.0
  %5172 = vmatpush1.msra.mxu0 0.0
  %5173 = vmatprep.subr.mxu0 0.0
  %5174 = vmatpush1.msra.mxu0 0.0
  %5175 = vmatprep.subr.mxu0 0.0
  %5176 = vmatpush1.msra.mxu0 0.0
  %5177 = vmatprep.subr.mxu0 0.0
  %5178 = vmatpush1.msra.mxu0 0.0
  %5179 = vmatprep.subr.mxu0 0.0
  %5180 = vmatpush1.msra.mxu0 0.0
  %5181 = vmatprep.subr.mxu0 0.0
  %5182 = vmatpush1.msra.mxu0 0.0
  %5183 = vmatprep.subr.mxu0 0.0
  %5184 = vmatpush1.msra.mxu0 0.0
  %5185 = vmatprep.subr.mxu0 0.0
  %5186 = vmatpush1.msra.mxu0 0.0
  %5187 = vmatprep.subr.mxu0 0.0
  %5188 = vmatpush1.msra.mxu0 0.0
  %5189 = vmatprep.subr.mxu0 0.0
  %5190 = vmatpush1.msra.mxu0 0.0
  %5191 = vmatprep.subr.mxu0 0.0
  %5192 = vmatpush1.msra.mxu0 0.0
  %5193 = vmatprep.subr.mxu0 0.0
  %5194 = vmatpush1.msra.mxu0 0.0
  %5195 = vmatprep.subr.mxu0 0.0
  %5196 = vmatpush1.msra.mxu0 0.0
  %5197 = vmatprep.subr.mxu0 0.0
  %5198 = vmatpush1.msra.mxu0 0.0
  %5199 = vmatprep.subr.mxu0 0.0
  %5200 = vmatpush1.msra.mxu0 0.0
  %5201 = vmatprep.subr.mxu0 0.0
  %5202 = vmatpush1.msra.mxu0 0.0
  %5203 = vmatprep.subr.mxu0 0.0
  %5204 = vmatpush1.msra.mxu0 0.0
  %5205 = vmatprep.subr.mxu0 0.0
  %5206 = vmatpush1.msra.mxu0 0.0
  %5207 = vmatprep.subr.mxu0 0.0
  %5208 = vmatpush1.msra.mxu0 0.0
  %5209 = vmatprep.subr.mxu0 0.0
  %5210 = vmatpush1.msra.mxu0 0.0
  %5211 = vmatprep.mubr.f32.mxu0 0.0
  %5212 = vmatmul.mubr.f32.gmra.mrb[0].mxu0 %v5145
  %v5213 = vpop.f32.mrb[0].mxu0
  %v5214 = vadd.f32 %v126, %v5213
  %v5215 = vpop.f32.mrb[0].mxu0
  %5216 = vdwg.mxu0
  %v5217 = vsel %vm1941, %v5214, -inf
  %5218 = vmax.xlane.f32.xlu0 %v5217
  %v5219 = vpop.xlane.xlu0 %5218
  %v5220 = vsub.f32 %v5214, %v5219
  %v5221 = vmul.f32 %v5220, 1.442695
  %v5222 = vpow.pop %v5221
  %v5223 = vsel %vm1941, %v5222, 0.0
  %5224 = vadd.xlane.f32.xlu0 %v5223
  %v5225 = vpop.xlane.xlu0 %5224
  %v5226 = vrcp.pop %v5225
  %v5227 = vmul.f32 %v5222, %v5226
  %v5228 = vlog2.pop %v5225
  %v5229 = vmul.f32 %v5228, 0.6931472
  %v5230 = vsub.f32 %v5220, %v5229
  %v5231 = vmul.f32 %v5227, %v5230
  %v5232 = vsel %vm1941, %v5231, 0.0
  %5233 = vadd.xlane.f32.xlu0 %v5232
  %v5234 = vpop.xlane.xlu0 %5233
  %v5235 = vsub.f32 0.0, %v5234
  %v5236 = vmul.f32 %v5235, 0.4342945
  %v5237 = vsub.f32 1.0, %v5236
  %v5238 = vsel %vm1963, %v5236, %v5237
  %5240 = vrot.lane.b32.xlu0 %v5238, 10
  %v5241 = vpop.permute.xlu0 %5240
  %v5243 = vsel %vm1969, %v5214, %v5241
  %v5244 = vsel %vm1971, %v5243, 0.0
  %5245 = vrot.lane.b32.xlu0 %v4993, 104
  %v5246 = vpop.permute.xlu0 %5245
  %v5247 = vsel %vm134, %v5246, 0
  %5249 = vmatprep.subr.mxu0 0.0
  %5250 = vmatpush1.msra.mxu0 %v14
  %5251 = vmatprep.subr.mxu0 0.0
  %5252 = vmatpush1.msra.mxu0 0.0
  %5253 = vmatprep.subr.mxu0 0.0
  %5254 = vmatpush1.msra.mxu0 0.0
  %5255 = vmatprep.subr.mxu0 0.0
  %5256 = vmatpush1.msra.mxu0 0.0
  %5257 = vmatprep.subr.mxu0 0.0
  %5258 = vmatpush1.msra.mxu0 0.0
  %5259 = vmatprep.subr.mxu0 0.0
  %5260 = vmatpush1.msra.mxu0 0.0
  %5261 = vmatprep.subr.mxu0 0.0
  %5262 = vmatpush1.msra.mxu0 0.0
  %5263 = vmatprep.subr.mxu0 0.0
  %5264 = vmatpush1.msra.mxu0 0.0
  %5265 = vmatprep.subr.mxu0 0.0
  %5266 = vmatpush1.msra.mxu0 0.0
  %5267 = vmatprep.subr.mxu0 0.0
  %5268 = vmatpush1.msra.mxu0 0.0
  %5269 = vmatprep.subr.mxu0 0.0
  %5270 = vmatpush1.msra.mxu0 0.0
  %5271 = vmatprep.subr.mxu0 0.0
  %5272 = vmatpush1.msra.mxu0 0.0
  %5273 = vmatprep.subr.mxu0 0.0
  %5274 = vmatpush1.msra.mxu0 0.0
  %5275 = vmatprep.subr.mxu0 0.0
  %5276 = vmatpush1.msra.mxu0 0.0
  %5277 = vmatprep.subr.mxu0 0.0
  %5278 = vmatpush1.msra.mxu0 0.0
  %5279 = vmatprep.subr.mxu0 0.0
  %5280 = vmatpush1.msra.mxu0 0.0
  %5281 = vmatprep.subr.mxu0 0.0
  %5282 = vmatpush1.msra.mxu0 0.0
  %5283 = vmatprep.subr.mxu0 0.0
  %5284 = vmatpush1.msra.mxu0 0.0
  %5285 = vmatprep.subr.mxu0 0.0
  %5286 = vmatpush1.msra.mxu0 0.0
  %5287 = vmatprep.subr.mxu0 0.0
  %5288 = vmatpush1.msra.mxu0 0.0
  %5289 = vmatprep.subr.mxu0 0.0
  %5290 = vmatpush1.msra.mxu0 0.0
  %5291 = vmatprep.subr.mxu0 0.0
  %5292 = vmatpush1.msra.mxu0 0.0
  %5293 = vmatprep.subr.mxu0 0.0
  %5294 = vmatpush1.msra.mxu0 0.0
  %5295 = vmatprep.subr.mxu0 0.0
  %5296 = vmatpush1.msra.mxu0 0.0
  %5297 = vmatprep.subr.mxu0 0.0
  %5298 = vmatpush1.msra.mxu0 0.0
  %5299 = vmatprep.subr.mxu0 0.0
  %5300 = vmatpush1.msra.mxu0 0.0
  %5301 = vmatprep.subr.mxu0 0.0
  %5302 = vmatpush1.msra.mxu0 0.0
  %5303 = vmatprep.subr.mxu0 0.0
  %5304 = vmatpush1.msra.mxu0 0.0
  %5305 = vmatprep.subr.mxu0 0.0
  %5306 = vmatpush1.msra.mxu0 0.0
  %5307 = vmatprep.subr.mxu0 0.0
  %5308 = vmatpush1.msra.mxu0 0.0
  %5309 = vmatprep.subr.mxu0 0.0
  %5310 = vmatpush1.msra.mxu0 0.0
  %5311 = vmatprep.subr.mxu0 0.0
  %5312 = vmatpush1.msra.mxu0 0.0
  %5313 = vmatprep.mubr.f32.mxu0 0.0
  %5314 = vmatmul.mubr.f32.gmra.mrb[0].mxu0 %v5247
  %v5315 = vpop.f32.mrb[0].mxu0
  %v5316 = vadd.f32 0.0, %v5315
  %v5317 = vpop.f32.mrb[0].mxu0
  %5318 = vdwg.mxu0
  %5319 = vmatprep.subr.mxu0 0.0
  %5320 = vmatpush1.msra.mxu0 %v15
  %5321 = vmatprep.subr.mxu0 0.0
  %5322 = vmatpush1.msra.mxu0 0.0
  %5323 = vmatprep.subr.mxu0 0.0
  %5324 = vmatpush1.msra.mxu0 0.0
  %5325 = vmatprep.subr.mxu0 0.0
  %5326 = vmatpush1.msra.mxu0 0.0
  %5327 = vmatprep.subr.mxu0 0.0
  %5328 = vmatpush1.msra.mxu0 0.0
  %5329 = vmatprep.subr.mxu0 0.0
  %5330 = vmatpush1.msra.mxu0 0.0
  %5331 = vmatprep.subr.mxu0 0.0
  %5332 = vmatpush1.msra.mxu0 0.0
  %5333 = vmatprep.subr.mxu0 0.0
  %5334 = vmatpush1.msra.mxu0 0.0
  %5335 = vmatprep.subr.mxu0 0.0
  %5336 = vmatpush1.msra.mxu0 0.0
  %5337 = vmatprep.subr.mxu0 0.0
  %5338 = vmatpush1.msra.mxu0 0.0
  %5339 = vmatprep.subr.mxu0 0.0
  %5340 = vmatpush1.msra.mxu0 0.0
  %5341 = vmatprep.subr.mxu0 0.0
  %5342 = vmatpush1.msra.mxu0 0.0
  %5343 = vmatprep.subr.mxu0 0.0
  %5344 = vmatpush1.msra.mxu0 0.0
  %5345 = vmatprep.subr.mxu0 0.0
  %5346 = vmatpush1.msra.mxu0 0.0
  %5347 = vmatprep.subr.mxu0 0.0
  %5348 = vmatpush1.msra.mxu0 0.0
  %5349 = vmatprep.subr.mxu0 0.0
  %5350 = vmatpush1.msra.mxu0 0.0
  %5351 = vmatprep.subr.mxu0 0.0
  %5352 = vmatpush1.msra.mxu0 0.0
  %5353 = vmatprep.subr.mxu0 0.0
  %5354 = vmatpush1.msra.mxu0 0.0
  %5355 = vmatprep.subr.mxu0 0.0
  %5356 = vmatpush1.msra.mxu0 0.0
  %5357 = vmatprep.subr.mxu0 0.0
  %5358 = vmatpush1.msra.mxu0 0.0
  %5359 = vmatprep.subr.mxu0 0.0
  %5360 = vmatpush1.msra.mxu0 0.0
  %5361 = vmatprep.subr.mxu0 0.0
  %5362 = vmatpush1.msra.mxu0 0.0
  %5363 = vmatprep.subr.mxu0 0.0
  %5364 = vmatpush1.msra.mxu0 0.0
  %5365 = vmatprep.subr.mxu0 0.0
  %5366 = vmatpush1.msra.mxu0 0.0
  %5367 = vmatprep.subr.mxu0 0.0
  %5368 = vmatpush1.msra.mxu0 0.0
  %5369 = vmatprep.subr.mxu0 0.0
  %5370 = vmatpush1.msra.mxu0 0.0
  %5371 = vmatprep.subr.mxu0 0.0
  %5372 = vmatpush1.msra.mxu0 0.0
  %5373 = vmatprep.subr.mxu0 0.0
  %5374 = vmatpush1.msra.mxu0 0.0
  %5375 = vmatprep.subr.mxu0 0.0
  %5376 = vmatpush1.msra.mxu0 0.0
  %5377 = vmatprep.subr.mxu0 0.0
  %5378 = vmatpush1.msra.mxu0 0.0
  %5379 = vmatprep.subr.mxu0 0.0
  %5380 = vmatpush1.msra.mxu0 0.0
  %5381 = vmatprep.subr.mxu0 0.0
  %5382 = vmatpush1.msra.mxu0 0.0
  %5383 = vmatprep.mubr.f32.mxu0 0.0
  %5384 = vmatmul.mubr.f32.gmra.mrb[0].mxu0 %v5247
  %v5385 = vpop.f32.mrb[0].mxu0
  %v5386 = vadd.f32 0.0, %v5385
  %v5387 = vpop.f32.mrb[0].mxu0
  %5388 = vdwg.mxu0
  %v5389 = vmul.f32 %v5316, %v5386
  %v5390 = vmul.f32 %v18, %v3755
  %v5391 = vadd.f32 %v5390, %v5389
  %v5392 = vmul.f32 %v18, %v3757
  %v5393 = vadd.f32 %v5392, 1.0
  %v5394 = vrsqrt.pop %v5393
  %v5395 = vmul.f32 %v5391, %v5394
  %v5397 = vsel %vm429, %v5395, 0
  %5399 = vmatprep.subr.mxu0 0.0
  %5400 = vmatpush1.msra.mxu0 %v20
  %5401 = vmatprep.subr.mxu0 0.0
  %5402 = vmatpush1.msra.mxu0 %v21
  %5403 = vmatprep.subr.mxu0 0.0
  %5404 = vmatpush1.msra.mxu0 %v22
  %5405 = vmatprep.subr.mxu0 0.0
  %5406 = vmatpush1.msra.mxu0 %v23
  %5407 = vmatprep.subr.mxu0 0.0
  %5408 = vmatpush1.msra.mxu0 %v435
  %5409 = vmatprep.subr.mxu0 0.0
  %5410 = vmatpush1.msra.mxu0 0.0
  %5411 = vmatprep.subr.mxu0 0.0
  %5412 = vmatpush1.msra.mxu0 0.0
  %5413 = vmatprep.subr.mxu0 0.0
  %5414 = vmatpush1.msra.mxu0 0.0
  %5415 = vmatprep.subr.mxu0 0.0
  %5416 = vmatpush1.msra.mxu0 0.0
  %5417 = vmatprep.subr.mxu0 0.0
  %5418 = vmatpush1.msra.mxu0 0.0
  %5419 = vmatprep.subr.mxu0 0.0
  %5420 = vmatpush1.msra.mxu0 0.0
  %5421 = vmatprep.subr.mxu0 0.0
  %5422 = vmatpush1.msra.mxu0 0.0
  %5423 = vmatprep.subr.mxu0 0.0
  %5424 = vmatpush1.msra.mxu0 0.0
  %5425 = vmatprep.subr.mxu0 0.0
  %5426 = vmatpush1.msra.mxu0 0.0
  %5427 = vmatprep.subr.mxu0 0.0
  %5428 = vmatpush1.msra.mxu0 0.0
  %5429 = vmatprep.subr.mxu0 0.0
  %5430 = vmatpush1.msra.mxu0 0.0
  %5431 = vmatprep.subr.mxu0 0.0
  %5432 = vmatpush1.msra.mxu0 0.0
  %5433 = vmatprep.subr.mxu0 0.0
  %5434 = vmatpush1.msra.mxu0 0.0
  %5435 = vmatprep.subr.mxu0 0.0
  %5436 = vmatpush1.msra.mxu0 0.0
  %5437 = vmatprep.subr.mxu0 0.0
  %5438 = vmatpush1.msra.mxu0 0.0
  %5439 = vmatprep.subr.mxu0 0.0
  %5440 = vmatpush1.msra.mxu0 0.0
  %5441 = vmatprep.subr.mxu0 0.0
  %5442 = vmatpush1.msra.mxu0 0.0
  %5443 = vmatprep.subr.mxu0 0.0
  %5444 = vmatpush1.msra.mxu0 0.0
  %5445 = vmatprep.subr.mxu0 0.0
  %5446 = vmatpush1.msra.mxu0 0.0
  %5447 = vmatprep.subr.mxu0 0.0
  %5448 = vmatpush1.msra.mxu0 0.0
  %5449 = vmatprep.subr.mxu0 0.0
  %5450 = vmatpush1.msra.mxu0 0.0
  %5451 = vmatprep.subr.mxu0 0.0
  %5452 = vmatpush1.msra.mxu0 0.0
  %5453 = vmatprep.subr.mxu0 0.0
  %5454 = vmatpush1.msra.mxu0 0.0
  %5455 = vmatprep.subr.mxu0 0.0
  %5456 = vmatpush1.msra.mxu0 0.0
  %5457 = vmatprep.subr.mxu0 0.0
  %5458 = vmatpush1.msra.mxu0 0.0
  %5459 = vmatprep.subr.mxu0 0.0
  %5460 = vmatpush1.msra.mxu0 0.0
  %5461 = vmatprep.subr.mxu0 0.0
  %5462 = vmatpush1.msra.mxu0 0.0
  %5463 = vmatprep.mubr.f32.mxu0 0.0
  %5464 = vmatmul.mubr.f32.gmra.mrb[0].mxu0 %v5397
  %v5465 = vpop.f32.mrb[0].mxu0
  %v5466 = vadd.f32 %v25, %v5465
  %v5467 = vpop.f32.mrb[0].mxu0
  %5468 = vdwg.mxu0
  %v5471 = vunpack.c.l.s4 1966171168
  %v5472 = vunpack.c.0.s8 %v5471
  %v5473 = vlaneseq
  %v5474 = vshrl.u32 %v5473, 7
  %v5475 = vsub.s32 %v5472, %v5474
  %v5476 = vrot.slane %v5466, %v5475
  %v5477 = vcombine.high %v5476, %v5476
  %v5479 = vunpack.c.l.s4 1966171168
  %v5480 = vunpack.c.0.s8 %v5479
  %v5481 = vlaneseq
  %v5482 = vshrl.u32 %v5481, 7
  %v5483 = vsub.s32 %v5480, %v5482
  %v5484 = vrot.slane %v5476, %v5483
  %v5486 = vunpack.c.l.s4 1966171168
  %v5487 = vunpack.c.0.s8 %v5486
  %v5488 = vlaneseq
  %v5489 = vshrl.u32 %v5488, 7
  %v5490 = vsub.s32 %v5487, %v5489
  %v5491 = vrot.slane %v5477, %v5490
  %v5492 = vsel %vm134, %v5484, 0
  %5494 = vmatprep.subr.mxu0 0.0
  %5495 = vmatpush1.xpose.msra.mxu0 %v533
  %5496 = vmatprep.subr.mxu0 0.0
  %5497 = vmatpush1.xpose.msra.mxu0 0.0
  %5498 = vmatprep.subr.mxu0 0.0
  %5499 = vmatpush1.xpose.msra.mxu0 0.0
  %5500 = vmatprep.subr.mxu0 0.0
  %5501 = vmatpush1.xpose.msra.mxu0 0.0
  %5502 = vmatprep.subr.mxu0 0.0
  %5503 = vmatpush1.xpose.msra.mxu0 0.0
  %5504 = vmatprep.subr.mxu0 0.0
  %5505 = vmatpush1.xpose.msra.mxu0 0.0
  %5506 = vmatprep.subr.mxu0 0.0
  %5507 = vmatpush1.xpose.msra.mxu0 0.0
  %5508 = vmatprep.subr.mxu0 0.0
  %5509 = vmatpush1.xpose.msra.mxu0 0.0
  %5510 = vmatprep.subr.mxu0 0.0
  %5511 = vmatpush1.xpose.msra.mxu0 0.0
  %5512 = vmatprep.subr.mxu0 0.0
  %5513 = vmatpush1.xpose.msra.mxu0 0.0
  %5514 = vmatprep.subr.mxu0 0.0
  %5515 = vmatpush1.xpose.msra.mxu0 0.0
  %5516 = vmatprep.subr.mxu0 0.0
  %5517 = vmatpush1.xpose.msra.mxu0 0.0
  %5518 = vmatprep.subr.mxu0 0.0
  %5519 = vmatpush1.xpose.msra.mxu0 0.0
  %5520 = vmatprep.subr.mxu0 0.0
  %5521 = vmatpush1.xpose.msra.mxu0 0.0
  %5522 = vmatprep.subr.mxu0 0.0
  %5523 = vmatpush1.xpose.msra.mxu0 0.0
  %5524 = vmatprep.subr.mxu0 0.0
  %5525 = vmatpush1.xpose.msra.mxu0 0.0
  %5526 = vmatprep.subr.mxu0 0.0
  %5527 = vmatpush1.xpose.msra.mxu0 0.0
  %5528 = vmatprep.subr.mxu0 0.0
  %5529 = vmatpush1.xpose.msra.mxu0 0.0
  %5530 = vmatprep.subr.mxu0 0.0
  %5531 = vmatpush1.xpose.msra.mxu0 0.0
  %5532 = vmatprep.subr.mxu0 0.0
  %5533 = vmatpush1.xpose.msra.mxu0 0.0
  %5534 = vmatprep.subr.mxu0 0.0
  %5535 = vmatpush1.xpose.msra.mxu0 0.0
  %5536 = vmatprep.subr.mxu0 0.0
  %5537 = vmatpush1.xpose.msra.mxu0 0.0
  %5538 = vmatprep.subr.mxu0 0.0
  %5539 = vmatpush1.xpose.msra.mxu0 0.0
  %5540 = vmatprep.subr.mxu0 0.0
  %5541 = vmatpush1.xpose.msra.mxu0 0.0
  %5542 = vmatprep.subr.mxu0 0.0
  %5543 = vmatpush1.xpose.msra.mxu0 0.0
  %5544 = vmatprep.subr.mxu0 0.0
  %5545 = vmatpush1.xpose.msra.mxu0 0.0
  %5546 = vmatprep.subr.mxu0 0.0
  %5547 = vmatpush1.xpose.msra.mxu0 0.0
  %5548 = vmatprep.subr.mxu0 0.0
  %5549 = vmatpush1.xpose.msra.mxu0 0.0
  %5550 = vmatprep.subr.mxu0 0.0
  %5551 = vmatpush1.xpose.msra.mxu0 0.0
  %5552 = vmatprep.subr.mxu0 0.0
  %5553 = vmatpush1.xpose.msra.mxu0 0.0
  %5554 = vmatprep.subr.mxu0 0.0
  %5555 = vmatpush1.xpose.msra.mxu0 0.0
  %5556 = vmatprep.subr.mxu0 0.0
  %5557 = vmatpush1.xpose.msra.mxu0 0.0
  %5558 = vmatprep.mubr.f32.mxu0 0.0
  %5559 = vmatmul.mubr.f32.gmra.mrb[0].mxu0 %v5492
  %v5560 = vpop.f32.mrb[0].mxu0
  %v5561 = vadd.f32 0.0, %v5560
  %v5562 = vpop.f32.mrb[0].mxu0
  %5563 = vdwg.mxu0
  %v5564 = vsel %vm134, %v5491, 0
  %5566 = vmatprep.subr.mxu0 0.0
  %5567 = vmatpush1.xpose.msra.mxu0 %v608
  %5568 = vmatprep.subr.mxu0 0.0
  %5569 = vmatpush1.xpose.msra.mxu0 0.0
  %5570 = vmatprep.subr.mxu0 0.0
  %5571 = vmatpush1.xpose.msra.mxu0 0.0
  %5572 = vmatprep.subr.mxu0 0.0
  %5573 = vmatpush1.xpose.msra.mxu0 0.0
  %5574 = vmatprep.subr.mxu0 0.0
  %5575 = vmatpush1.xpose.msra.mxu0 0.0
  %5576 = vmatprep.subr.mxu0 0.0
  %5577 = vmatpush1.xpose.msra.mxu0 0.0
  %5578 = vmatprep.subr.mxu0 0.0
  %5579 = vmatpush1.xpose.msra.mxu0 0.0
  %5580 = vmatprep.subr.mxu0 0.0
  %5581 = vmatpush1.xpose.msra.mxu0 0.0
  %5582 = vmatprep.subr.mxu0 0.0
  %5583 = vmatpush1.xpose.msra.mxu0 0.0
  %5584 = vmatprep.subr.mxu0 0.0
  %5585 = vmatpush1.xpose.msra.mxu0 0.0
  %5586 = vmatprep.subr.mxu0 0.0
  %5587 = vmatpush1.xpose.msra.mxu0 0.0
  %5588 = vmatprep.subr.mxu0 0.0
  %5589 = vmatpush1.xpose.msra.mxu0 0.0
  %5590 = vmatprep.subr.mxu0 0.0
  %5591 = vmatpush1.xpose.msra.mxu0 0.0
  %5592 = vmatprep.subr.mxu0 0.0
  %5593 = vmatpush1.xpose.msra.mxu0 0.0
  %5594 = vmatprep.subr.mxu0 0.0
  %5595 = vmatpush1.xpose.msra.mxu0 0.0
  %5596 = vmatprep.subr.mxu0 0.0
  %5597 = vmatpush1.xpose.msra.mxu0 0.0
  %5598 = vmatprep.subr.mxu0 0.0
  %5599 = vmatpush1.xpose.msra.mxu0 0.0
  %5600 = vmatprep.subr.mxu0 0.0
  %5601 = vmatpush1.xpose.msra.mxu0 0.0
  %5602 = vmatprep.subr.mxu0 0.0
  %5603 = vmatpush1.xpose.msra.mxu0 0.0
  %5604 = vmatprep.subr.mxu0 0.0
  %5605 = vmatpush1.xpose.msra.mxu0 0.0
  %5606 = vmatprep.subr.mxu0 0.0
  %5607 = vmatpush1.xpose.msra.mxu0 0.0
  %5608 = vmatprep.subr.mxu0 0.0
  %5609 = vmatpush1.xpose.msra.mxu0 0.0
  %5610 = vmatprep.subr.mxu0 0.0
  %5611 = vmatpush1.xpose.msra.mxu0 0.0
  %5612 = vmatprep.subr.mxu0 0.0
  %5613 = vmatpush1.xpose.msra.mxu0 0.0
  %5614 = vmatprep.subr.mxu0 0.0
  %5615 = vmatpush1.xpose.msra.mxu0 0.0
  %5616 = vmatprep.subr.mxu0 0.0
  %5617 = vmatpush1.xpose.msra.mxu0 0.0
  %5618 = vmatprep.subr.mxu0 0.0
  %5619 = vmatpush1.xpose.msra.mxu0 0.0
  %5620 = vmatprep.subr.mxu0 0.0
  %5621 = vmatpush1.xpose.msra.mxu0 0.0
  %5622 = vmatprep.subr.mxu0 0.0
  %5623 = vmatpush1.xpose.msra.mxu0 0.0
  %5624 = vmatprep.subr.mxu0 0.0
  %5625 = vmatpush1.xpose.msra.mxu0 0.0
  %5626 = vmatprep.subr.mxu0 0.0
  %5627 = vmatpush1.xpose.msra.mxu0 0.0
  %5628 = vmatprep.subr.mxu0 0.0
  %5629 = vmatpush1.xpose.msra.mxu0 0.0
  %5630 = vmatprep.mubr.f32.mxu0 0.0
  %5631 = vmatmul.mubr.f32.gmra.mrb[0].mxu0 %v5564
  %v5632 = vpop.f32.mrb[0].mxu0
  %v5633 = vadd.f32 0.0, %v5632
  %v5634 = vpop.f32.mrb[0].mxu0
  %5635 = vdwg.mxu0
  %v5636 = vmul.f32 %v5561, 0.35355338
  %v5637 = vmul.f32 %v5633, 0.35355338
  %v5638 = vsel %vm682, %v5636, -inf
  %5639 = vmax.xlane.f32.xlu0 %v5638
  %v5640 = vpop.xlane.xlu0 %5639
  %v5641 = vsel %vm682, %v5637, -inf
  %5642 = vmax.xlane.f32.xlu0 %v5641
  %v5643 = vpop.xlane.xlu0 %5642
  %v5644 = vsub.f32 %v5636, %v5640
  %v5645 = vsub.f32 %v5637, %v5643
  %v5646 = vmul.f32 %v5644, 1.442695
  %v5647 = vpow.pop %v5646
  %v5648 = vmul.f32 %v5645, 1.442695
  %v5649 = vpow.pop %v5648
  %v5650 = vsel %vm682, %v5647, 0.0
  %5651 = vadd.xlane.f32.xlu0 %v5650
  %v5652 = vpop.xlane.xlu0 %5651
  %v5653 = vsel %vm682, %v5649, 0.0
  %5654 = vadd.xlane.f32.xlu0 %v5653
  %v5655 = vpop.xlane.xlu0 %5654
  %v5656 = vrcp.pop %v5652
  %v5657 = vrcp.pop %v5655
  %v5658 = vmul.f32 %v5647, %v5656
  %v5659 = vmul.f32 %v5649, %v5657
  %v5661 = vsel %vm134, %v5658, 0
  %5663 = vmatprep.subr.mxu0 0.0
  %5664 = vmatpush1.msra.mxu0 %v129
  %5665 = vmatprep.subr.mxu0 0.0
  %5666 = vmatpush1.msra.mxu0 0.0
  %5667 = vmatprep.subr.mxu0 0.0
  %5668 = vmatpush1.msra.mxu0 0.0
  %5669 = vmatprep.subr.mxu0 0.0
  %5670 = vmatpush1.msra.mxu0 0.0
  %5671 = vmatprep.subr.mxu0 0.0
  %5672 = vmatpush1.msra.mxu0 0.0
  %5673 = vmatprep.subr.mxu0 0.0
  %5674 = vmatpush1.msra.mxu0 0.0
  %5675 = vmatprep.subr.mxu0 0.0
  %5676 = vmatpush1.msra.mxu0 0.0
  %5677 = vmatprep.subr.mxu0 0.0
  %5678 = vmatpush1.msra.mxu0 0.0
  %5679 = vmatprep.subr.mxu0 0.0
  %5680 = vmatpush1.msra.mxu0 0.0
  %5681 = vmatprep.subr.mxu0 0.0
  %5682 = vmatpush1.msra.mxu0 0.0
  %5683 = vmatprep.subr.mxu0 0.0
  %5684 = vmatpush1.msra.mxu0 0.0
  %5685 = vmatprep.subr.mxu0 0.0
  %5686 = vmatpush1.msra.mxu0 0.0
  %5687 = vmatprep.subr.mxu0 0.0
  %5688 = vmatpush1.msra.mxu0 0.0
  %5689 = vmatprep.subr.mxu0 0.0
  %5690 = vmatpush1.msra.mxu0 0.0
  %5691 = vmatprep.subr.mxu0 0.0
  %5692 = vmatpush1.msra.mxu0 0.0
  %5693 = vmatprep.subr.mxu0 0.0
  %5694 = vmatpush1.msra.mxu0 0.0
  %5695 = vmatprep.subr.mxu0 0.0
  %5696 = vmatpush1.msra.mxu0 0.0
  %5697 = vmatprep.subr.mxu0 0.0
  %5698 = vmatpush1.msra.mxu0 0.0
  %5699 = vmatprep.subr.mxu0 0.0
  %5700 = vmatpush1.msra.mxu0 0.0
  %5701 = vmatprep.subr.mxu0 0.0
  %5702 = vmatpush1.msra.mxu0 0.0
  %5703 = vmatprep.subr.mxu0 0.0
  %5704 = vmatpush1.msra.mxu0 0.0
  %5705 = vmatprep.subr.mxu0 0.0
  %5706 = vmatpush1.msra.mxu0 0.0
  %5707 = vmatprep.subr.mxu0 0.0
  %5708 = vmatpush1.msra.mxu0 0.0
  %5709 = vmatprep.subr.mxu0 0.0
  %5710 = vmatpush1.msra.mxu0 0.0
  %5711 = vmatprep.subr.mxu0 0.0
  %5712 = vmatpush1.msra.mxu0 0.0
  %5713 = vmatprep.subr.mxu0 0.0
  %5714 = vmatpush1.msra.mxu0 0.0
  %5715 = vmatprep.subr.mxu0 0.0
  %5716 = vmatpush1.msra.mxu0 0.0
  %5717 = vmatprep.subr.mxu0 0.0
  %5718 = vmatpush1.msra.mxu0 0.0
  %5719 = vmatprep.subr.mxu0 0.0
  %5720 = vmatpush1.msra.mxu0 0.0
  %5721 = vmatprep.subr.mxu0 0.0
  %5722 = vmatpush1.msra.mxu0 0.0
  %5723 = vmatprep.subr.mxu0 0.0
  %5724 = vmatpush1.msra.mxu0 0.0
  %5725 = vmatprep.subr.mxu0 0.0
  %5726 = vmatpush1.msra.mxu0 0.0
  %5727 = vmatprep.mubr.f32.mxu0 0.0
  %5728 = vmatmul.mubr.f32.gmra.mrb[0].mxu0 %v5661
  %v5729 = vpop.f32.mrb[0].mxu0
  %v5730 = vadd.f32 0.0, %v5729
  %v5731 = vpop.f32.mrb[0].mxu0
  %5732 = vdwg.mxu0
  %v5734 = vsel %vm134, %v5659, 0
  %5736 = vmatprep.subr.mxu0 0.0
  %5737 = vmatpush1.msra.mxu0 %v130
  %5738 = vmatprep.subr.mxu0 0.0
  %5739 = vmatpush1.msra.mxu0 0.0
  %5740 = vmatprep.subr.mxu0 0.0
  %5741 = vmatpush1.msra.mxu0 0.0
  %5742 = vmatprep.subr.mxu0 0.0
  %5743 = vmatpush1.msra.mxu0 0.0
  %5744 = vmatprep.subr.mxu0 0.0
  %5745 = vmatpush1.msra.mxu0 0.0
  %5746 = vmatprep.subr.mxu0 0.0
  %5747 = vmatpush1.msra.mxu0 0.0
  %5748 = vmatprep.subr.mxu0 0.0
  %5749 = vmatpush1.msra.mxu0 0.0
  %5750 = vmatprep.subr.mxu0 0.0
  %5751 = vmatpush1.msra.mxu0 0.0
  %5752 = vmatprep.subr.mxu0 0.0
  %5753 = vmatpush1.msra.mxu0 0.0
  %5754 = vmatprep.subr.mxu0 0.0
  %5755 = vmatpush1.msra.mxu0 0.0
  %5756 = vmatprep.subr.mxu0 0.0
  %5757 = vmatpush1.msra.mxu0 0.0
  %5758 = vmatprep.subr.mxu0 0.0
  %5759 = vmatpush1.msra.mxu0 0.0
  %5760 = vmatprep.subr.mxu0 0.0
  %5761 = vmatpush1.msra.mxu0 0.0
  %5762 = vmatprep.subr.mxu0 0.0
  %5763 = vmatpush1.msra.mxu0 0.0
  %5764 = vmatprep.subr.mxu0 0.0
  %5765 = vmatpush1.msra.mxu0 0.0
  %5766 = vmatprep.subr.mxu0 0.0
  %5767 = vmatpush1.msra.mxu0 0.0
  %5768 = vmatprep.subr.mxu0 0.0
  %5769 = vmatpush1.msra.mxu0 0.0
  %5770 = vmatprep.subr.mxu0 0.0
  %5771 = vmatpush1.msra.mxu0 0.0
  %5772 = vmatprep.subr.mxu0 0.0
  %5773 = vmatpush1.msra.mxu0 0.0
  %5774 = vmatprep.subr.mxu0 0.0
  %5775 = vmatpush1.msra.mxu0 0.0
  %5776 = vmatprep.subr.mxu0 0.0
  %5777 = vmatpush1.msra.mxu0 0.0
  %5778 = vmatprep.subr.mxu0 0.0
  %5779 = vmatpush1.msra.mxu0 0.0
  %5780 = vmatprep.subr.mxu0 0.0
  %5781 = vmatpush1.msra.mxu0 0.0
  %5782 = vmatprep.subr.mxu0 0.0
  %5783 = vmatpush1.msra.mxu0 0.0
  %5784 = vmatprep.subr.mxu0 0.0
  %5785 = vmatpush1.msra.mxu0 0.0
  %5786 = vmatprep.subr.mxu0 0.0
  %5787 = vmatpush1.msra.mxu0 0.0
  %5788 = vmatprep.subr.mxu0 0.0
  %5789 = vmatpush1.msra.mxu0 0.0
  %5790 = vmatprep.subr.mxu0 0.0
  %5791 = vmatpush1.msra.mxu0 0.0
  %5792 = vmatprep.subr.mxu0 0.0
  %5793 = vmatpush1.msra.mxu0 0.0
  %5794 = vmatprep.subr.mxu0 0.0
  %5795 = vmatpush1.msra.mxu0 0.0
  %5796 = vmatprep.subr.mxu0 0.0
  %5797 = vmatpush1.msra.mxu0 0.0
  %5798 = vmatprep.subr.mxu0 0.0
  %5799 = vmatpush1.msra.mxu0 0.0
  %5800 = vmatprep.mubr.f32.mxu0 0.0
  %5801 = vmatmul.mubr.f32.gmra.mrb[0].mxu0 %v5734
  %v5802 = vpop.f32.mrb[0].mxu0
  %v5803 = vadd.f32 0.0, %v5802
  %v5804 = vpop.f32.mrb[0].mxu0
  %5805 = vdwg.mxu0
  %v5808 = vrot.slane %v5803, 7
  %v5809 = vsel %vm854, %v5808, %v5730
  %v5810 = vsel %vm134, %v5809, 0
  %5812 = vmatprep.subr.mxu0 0.0
  %5813 = vmatpush1.msra.mxu0 %v26
  %5814 = vmatprep.subr.mxu0 0.0
  %5815 = vmatpush1.msra.mxu0 0.0
  %5816 = vmatprep.subr.mxu0 0.0
  %5817 = vmatpush1.msra.mxu0 0.0
  %5818 = vmatprep.subr.mxu0 0.0
  %5819 = vmatpush1.msra.mxu0 0.0
  %5820 = vmatprep.subr.mxu0 0.0
  %5821 = vmatpush1.msra.mxu0 0.0
  %5822 = vmatprep.subr.mxu0 0.0
  %5823 = vmatpush1.msra.mxu0 0.0
  %5824 = vmatprep.subr.mxu0 0.0
  %5825 = vmatpush1.msra.mxu0 0.0
  %5826 = vmatprep.subr.mxu0 0.0
  %5827 = vmatpush1.msra.mxu0 0.0
  %5828 = vmatprep.subr.mxu0 0.0
  %5829 = vmatpush1.msra.mxu0 0.0
  %5830 = vmatprep.subr.mxu0 0.0
  %5831 = vmatpush1.msra.mxu0 0.0
  %5832 = vmatprep.subr.mxu0 0.0
  %5833 = vmatpush1.msra.mxu0 0.0
  %5834 = vmatprep.subr.mxu0 0.0
  %5835 = vmatpush1.msra.mxu0 0.0
  %5836 = vmatprep.subr.mxu0 0.0
  %5837 = vmatpush1.msra.mxu0 0.0
  %5838 = vmatprep.subr.mxu0 0.0
  %5839 = vmatpush1.msra.mxu0 0.0
  %5840 = vmatprep.subr.mxu0 0.0
  %5841 = vmatpush1.msra.mxu0 0.0
  %5842 = vmatprep.subr.mxu0 0.0
  %5843 = vmatpush1.msra.mxu0 0.0
  %5844 = vmatprep.subr.mxu0 0.0
  %5845 = vmatpush1.msra.mxu0 0.0
  %5846 = vmatprep.subr.mxu0 0.0
  %5847 = vmatpush1.msra.mxu0 0.0
  %5848 = vmatprep.subr.mxu0 0.0
  %5849 = vmatpush1.msra.mxu0 0.0
  %5850 = vmatprep.subr.mxu0 0.0
  %5851 = vmatpush1.msra.mxu0 0.0
  %5852 = vmatprep.subr.mxu0 0.0
  %5853 = vmatpush1.msra.mxu0 0.0
  %5854 = vmatprep.subr.mxu0 0.0
  %5855 = vmatpush1.msra.mxu0 0.0
  %5856 = vmatprep.subr.mxu0 0.0
  %5857 = vmatpush1.msra.mxu0 0.0
  %5858 = vmatprep.subr.mxu0 0.0
  %5859 = vmatpush1.msra.mxu0 0.0
  %5860 = vmatprep.subr.mxu0 0.0
  %5861 = vmatpush1.msra.mxu0 0.0
  %5862 = vmatprep.subr.mxu0 0.0
  %5863 = vmatpush1.msra.mxu0 0.0
  %5864 = vmatprep.subr.mxu0 0.0
  %5865 = vmatpush1.msra.mxu0 0.0
  %5866 = vmatprep.subr.mxu0 0.0
  %5867 = vmatpush1.msra.mxu0 0.0
  %5868 = vmatprep.subr.mxu0 0.0
  %5869 = vmatpush1.msra.mxu0 0.0
  %5870 = vmatprep.subr.mxu0 0.0
  %5871 = vmatpush1.msra.mxu0 0.0
  %5872 = vmatprep.subr.mxu0 0.0
  %5873 = vmatpush1.msra.mxu0 0.0
  %5874 = vmatprep.subr.mxu0 0.0
  %5875 = vmatpush1.msra.mxu0 0.0
  %5876 = vmatprep.mubr.f32.mxu0 0.0
  %5877 = vmatmul.mubr.f32.gmra.mrb[0].mxu0 %v5810
  %v5878 = vpop.f32.mrb[0].mxu0
  %v5879 = vadd.f32 0.0, %v5878
  %v5880 = vpop.f32.mrb[0].mxu0
  %5881 = vdwg.mxu0
  %v5882 = vadd.f32 %v28, %v5879
  %v5883 = vlaneseq
  %v5884 = vshrl.u32 %v5883, 7
  %v5885 = vsub.s32 0, %v5884
  %v5886 = vrot.slane %v5484, %v5885
  %5887 = vrot.lane.b32.xlu0 %v5886, 120
  %v5888 = vpop.permute.xlu0 %5887
  %v5889 = vsel %vm134, %v5888, 0
  %5891 = vmatprep.subr.mxu0 0.0
  %5892 = vmatpush1.xpose.msra.mxu0 %v939
  %5893 = vmatprep.subr.mxu0 0.0
  %5894 = vmatpush1.xpose.msra.mxu0 0.0
  %5895 = vmatprep.subr.mxu0 0.0
  %5896 = vmatpush1.xpose.msra.mxu0 0.0
  %5897 = vmatprep.subr.mxu0 0.0
  %5898 = vmatpush1.xpose.msra.mxu0 0.0
  %5899 = vmatprep.subr.mxu0 0.0
  %5900 = vmatpush1.xpose.msra.mxu0 0.0
  %5901 = vmatprep.subr.mxu0 0.0
  %5902 = vmatpush1.xpose.msra.mxu0 0.0
  %5903 = vmatprep.subr.mxu0 0.0
  %5904 = vmatpush1.xpose.msra.mxu0 0.0
  %5905 = vmatprep.subr.mxu0 0.0
  %5906 = vmatpush1.xpose.msra.mxu0 0.0
  %5907 = vmatprep.subr.mxu0 0.0
  %5908 = vmatpush1.xpose.msra.mxu0 0.0
  %5909 = vmatprep.subr.mxu0 0.0
  %5910 = vmatpush1.xpose.msra.mxu0 0.0
  %5911 = vmatprep.subr.mxu0 0.0
  %5912 = vmatpush1.xpose.msra.mxu0 0.0
  %5913 = vmatprep.subr.mxu0 0.0
  %5914 = vmatpush1.xpose.msra.mxu0 0.0
  %5915 = vmatprep.subr.mxu0 0.0
  %5916 = vmatpush1.xpose.msra.mxu0 0.0
  %5917 = vmatprep.subr.mxu0 0.0
  %5918 = vmatpush1.xpose.msra.mxu0 0.0
  %5919 = vmatprep.subr.mxu0 0.0
  %5920 = vmatpush1.xpose.msra.mxu0 0.0
  %5921 = vmatprep.subr.mxu0 0.0
  %5922 = vmatpush1.xpose.msra.mxu0 0.0
  %5923 = vmatprep.subr.mxu0 0.0
  %5924 = vmatpush1.xpose.msra.mxu0 0.0
  %5925 = vmatprep.subr.mxu0 0.0
  %5926 = vmatpush1.xpose.msra.mxu0 0.0
  %5927 = vmatprep.subr.mxu0 0.0
  %5928 = vmatpush1.xpose.msra.mxu0 0.0
  %5929 = vmatprep.subr.mxu0 0.0
  %5930 = vmatpush1.xpose.msra.mxu0 0.0
  %5931 = vmatprep.subr.mxu0 0.0
  %5932 = vmatpush1.xpose.msra.mxu0 0.0
  %5933 = vmatprep.subr.mxu0 0.0
  %5934 = vmatpush1.xpose.msra.mxu0 0.0
  %5935 = vmatprep.subr.mxu0 0.0
  %5936 = vmatpush1.xpose.msra.mxu0 0.0
  %5937 = vmatprep.subr.mxu0 0.0
  %5938 = vmatpush1.xpose.msra.mxu0 0.0
  %5939 = vmatprep.subr.mxu0 0.0
  %5940 = vmatpush1.xpose.msra.mxu0 0.0
  %5941 = vmatprep.subr.mxu0 0.0
  %5942 = vmatpush1.xpose.msra.mxu0 0.0
  %5943 = vmatprep.subr.mxu0 0.0
  %5944 = vmatpush1.xpose.msra.mxu0 0.0
  %5945 = vmatprep.subr.mxu0 0.0
  %5946 = vmatpush1.xpose.msra.mxu0 0.0
  %5947 = vmatprep.subr.mxu0 0.0
  %5948 = vmatpush1.xpose.msra.mxu0 0.0
  %5949 = vmatprep.subr.mxu0 0.0
  %5950 = vmatpush1.xpose.msra.mxu0 0.0
  %5951 = vmatprep.subr.mxu0 0.0
  %5952 = vmatpush1.xpose.msra.mxu0 0.0
  %5953 = vmatprep.subr.mxu0 0.0
  %5954 = vmatpush1.xpose.msra.mxu0 0.0
  %5955 = vmatprep.mubr.f32.mxu0 0.0
  %5956 = vmatmul.mubr.f32.gmra.mrb[0].mxu0 %v5889
  %v5957 = vpop.f32.mrb[0].mxu0
  %v5958 = vadd.f32 0.0, %v5957
  %v5959 = vpop.f32.mrb[0].mxu0
  %5960 = vdwg.mxu0
  %v5961 = vlaneseq
  %v5962 = vshrl.u32 %v5961, 7
  %v5963 = vsub.s32 0, %v5962
  %v5964 = vrot.slane %v5491, %v5963
  %5965 = vrot.lane.b32.xlu0 %v5964, 120
  %v5966 = vpop.permute.xlu0 %5965
  %v5967 = vsel %vm134, %v5966, 0
  %5969 = vmatprep.subr.mxu0 0.0
  %5970 = vmatpush1.xpose.msra.mxu0 %v1021
  %5971 = vmatprep.subr.mxu0 0.0
  %5972 = vmatpush1.xpose.msra.mxu0 0.0
  %5973 = vmatprep.subr.mxu0 0.0
  %5974 = vmatpush1.xpose.msra.mxu0 0.0
  %5975 = vmatprep.subr.mxu0 0.0
  %5976 = vmatpush1.xpose.msra.mxu0 0.0
  %5977 = vmatprep.subr.mxu0 0.0
  %5978 = vmatpush1.xpose.msra.mxu0 0.0
  %5979 = vmatprep.subr.mxu0 0.0
  %5980 = vmatpush1.xpose.msra.mxu0 0.0
  %5981 = vmatprep.subr.mxu0 0.0
  %5982 = vmatpush1.xpose.msra.mxu0 0.0
  %5983 = vmatprep.subr.mxu0 0.0
  %5984 = vmatpush1.xpose.msra.mxu0 0.0
  %5985 = vmatprep.subr.mxu0 0.0
  %5986 = vmatpush1.xpose.msra.mxu0 0.0
  %5987 = vmatprep.subr.mxu0 0.0
  %5988 = vmatpush1.xpose.msra.mxu0 0.0
  %5989 = vmatprep.subr.mxu0 0.0
  %5990 = vmatpush1.xpose.msra.mxu0 0.0
  %5991 = vmatprep.subr.mxu0 0.0
  %5992 = vmatpush1.xpose.msra.mxu0 0.0
  %5993 = vmatprep.subr.mxu0 0.0
  %5994 = vmatpush1.xpose.msra.mxu0 0.0
  %5995 = vmatprep.subr.mxu0 0.0
  %5996 = vmatpush1.xpose.msra.mxu0 0.0
  %5997 = vmatprep.subr.mxu0 0.0
  %5998 = vmatpush1.xpose.msra.mxu0 0.0
  %5999 = vmatprep.subr.mxu0 0.0
  %6000 = vmatpush1.xpose.msra.mxu0 0.0
  %6001 = vmatprep.subr.mxu0 0.0
  %6002 = vmatpush1.xpose.msra.mxu0 0.0
  %6003 = vmatprep.subr.mxu0 0.0
  %6004 = vmatpush1.xpose.msra.mxu0 0.0
  %6005 = vmatprep.subr.mxu0 0.0
  %6006 = vmatpush1.xpose.msra.mxu0 0.0
  %6007 = vmatprep.subr.mxu0 0.0
  %6008 = vmatpush1.xpose.msra.mxu0 0.0
  %6009 = vmatprep.subr.mxu0 0.0
  %6010 = vmatpush1.xpose.msra.mxu0 0.0
  %6011 = vmatprep.subr.mxu0 0.0
  %6012 = vmatpush1.xpose.msra.mxu0 0.0
  %6013 = vmatprep.subr.mxu0 0.0
  %6014 = vmatpush1.xpose.msra.mxu0 0.0
  %6015 = vmatprep.subr.mxu0 0.0
  %6016 = vmatpush1.xpose.msra.mxu0 0.0
  %6017 = vmatprep.subr.mxu0 0.0
  %6018 = vmatpush1.xpose.msra.mxu0 0.0
  %6019 = vmatprep.subr.mxu0 0.0
  %6020 = vmatpush1.xpose.msra.mxu0 0.0
  %6021 = vmatprep.subr.mxu0 0.0
  %6022 = vmatpush1.xpose.msra.mxu0 0.0
  %6023 = vmatprep.subr.mxu0 0.0
  %6024 = vmatpush1.xpose.msra.mxu0 0.0
  %6025 = vmatprep.subr.mxu0 0.0
  %6026 = vmatpush1.xpose.msra.mxu0 0.0
  %6027 = vmatprep.subr.mxu0 0.0
  %6028 = vmatpush1.xpose.msra.mxu0 0.0
  %6029 = vmatprep.subr.mxu0 0.0
  %6030 = vmatpush1.xpose.msra.mxu0 0.0
  %6031 = vmatprep.subr.mxu0 0.0
  %6032 = vmatpush1.xpose.msra.mxu0 0.0
  %6033 = vmatprep.mubr.f32.mxu0 0.0
  %6034 = vmatmul.mubr.f32.gmra.mrb[0].mxu0 %v5967
  %v6035 = vpop.f32.mrb[0].mxu0
  %v6036 = vadd.f32 0.0, %v6035
  %v6037 = vpop.f32.mrb[0].mxu0
  %6038 = vdwg.mxu0
  %v6039 = vmul.f32 %v5958, 0.35355338
  %v6040 = vmul.f32 %v6036, 0.35355338
  %v6041 = vsel %vm682, %v6039, -inf
  %6042 = vmax.xlane.f32.xlu0 %v6041
  %v6043 = vpop.xlane.xlu0 %6042
  %v6044 = vsel %vm682, %v6040, -inf
  %6045 = vmax.xlane.f32.xlu0 %v6044
  %v6046 = vpop.xlane.xlu0 %6045
  %v6047 = vsub.f32 %v6039, %v6043
  %v6048 = vsub.f32 %v6040, %v6046
  %v6049 = vmul.f32 %v6047, 1.442695
  %v6050 = vpow.pop %v6049
  %v6051 = vmul.f32 %v6048, 1.442695
  %v6052 = vpow.pop %v6051
  %v6053 = vsel %vm682, %v6050, 0.0
  %6054 = vadd.xlane.f32.xlu0 %v6053
  %v6055 = vpop.xlane.xlu0 %6054
  %v6056 = vsel %vm682, %v6052, 0.0
  %6057 = vadd.xlane.f32.xlu0 %v6056
  %v6058 = vpop.xlane.xlu0 %6057
  %v6059 = vrcp.pop %v6055
  %v6060 = vrcp.pop %v6058
  %v6061 = vmul.f32 %v6050, %v6059
  %v6062 = vmul.f32 %v6052, %v6060
  %v6064 = vsel %vm134, %v6061, 0
  %6066 = vmatprep.subr.mxu0 0.0
  %6067 = vmatpush1.msra.mxu0 %v1119
  %6068 = vmatprep.subr.mxu0 0.0
  %6069 = vmatpush1.msra.mxu0 0.0
  %6070 = vmatprep.subr.mxu0 0.0
  %6071 = vmatpush1.msra.mxu0 0.0
  %6072 = vmatprep.subr.mxu0 0.0
  %6073 = vmatpush1.msra.mxu0 0.0
  %6074 = vmatprep.subr.mxu0 0.0
  %6075 = vmatpush1.msra.mxu0 0.0
  %6076 = vmatprep.subr.mxu0 0.0
  %6077 = vmatpush1.msra.mxu0 0.0
  %6078 = vmatprep.subr.mxu0 0.0
  %6079 = vmatpush1.msra.mxu0 0.0
  %6080 = vmatprep.subr.mxu0 0.0
  %6081 = vmatpush1.msra.mxu0 0.0
  %6082 = vmatprep.subr.mxu0 0.0
  %6083 = vmatpush1.msra.mxu0 0.0
  %6084 = vmatprep.subr.mxu0 0.0
  %6085 = vmatpush1.msra.mxu0 0.0
  %6086 = vmatprep.subr.mxu0 0.0
  %6087 = vmatpush1.msra.mxu0 0.0
  %6088 = vmatprep.subr.mxu0 0.0
  %6089 = vmatpush1.msra.mxu0 0.0
  %6090 = vmatprep.subr.mxu0 0.0
  %6091 = vmatpush1.msra.mxu0 0.0
  %6092 = vmatprep.subr.mxu0 0.0
  %6093 = vmatpush1.msra.mxu0 0.0
  %6094 = vmatprep.subr.mxu0 0.0
  %6095 = vmatpush1.msra.mxu0 0.0
  %6096 = vmatprep.subr.mxu0 0.0
  %6097 = vmatpush1.msra.mxu0 0.0
  %6098 = vmatprep.subr.mxu0 0.0
  %6099 = vmatpush1.msra.mxu0 0.0
  %6100 = vmatprep.subr.mxu0 0.0
  %6101 = vmatpush1.msra.mxu0 0.0
  %6102 = vmatprep.subr.mxu0 0.0
  %6103 = vmatpush1.msra.mxu0 0.0
  %6104 = vmatprep.subr.mxu0 0.0
  %6105 = vmatpush1.msra.mxu0 0.0
  %6106 = vmatprep.subr.mxu0 0.0
  %6107 = vmatpush1.msra.mxu0 0.0
  %6108 = vmatprep.subr.mxu0 0.0
  %6109 = vmatpush1.msra.mxu0 0.0
  %6110 = vmatprep.subr.mxu0 0.0
  %6111 = vmatpush1.msra.mxu0 0.0
  %6112 = vmatprep.subr.mxu0 0.0
  %6113 = vmatpush1.msra.mxu0 0.0
  %6114 = vmatprep.subr.mxu0 0.0
  %6115 = vmatpush1.msra.mxu0 0.0
  %6116 = vmatprep.subr.mxu0 0.0
  %6117 = vmatpush1.msra.mxu0 0.0
  %6118 = vmatprep.subr.mxu0 0.0
  %6119 = vmatpush1.msra.mxu0 0.0
  %6120 = vmatprep.subr.mxu0 0.0
  %6121 = vmatpush1.msra.mxu0 0.0
  %6122 = vmatprep.subr.mxu0 0.0
  %6123 = vmatpush1.msra.mxu0 0.0
  %6124 = vmatprep.subr.mxu0 0.0
  %6125 = vmatpush1.msra.mxu0 0.0
  %6126 = vmatprep.subr.mxu0 0.0
  %6127 = vmatpush1.msra.mxu0 0.0
  %6128 = vmatprep.subr.mxu0 0.0
  %6129 = vmatpush1.msra.mxu0 0.0
  %6130 = vmatprep.mubr.f32.mxu0 0.0
  %6131 = vmatmul.mubr.f32.gmra.mrb[0].mxu0 %v6064
  %v6132 = vpop.f32.mrb[0].mxu0
  %v6133 = vadd.f32 0.0, %v6132
  %v6134 = vpop.f32.mrb[0].mxu0
  %6135 = vdwg.mxu0
  %v6137 = vsel %vm134, %v6062, 0
  %6139 = vmatprep.subr.mxu0 0.0
  %6140 = vmatpush1.msra.mxu0 %v1196
  %6141 = vmatprep.subr.mxu0 0.0
  %6142 = vmatpush1.msra.mxu0 0.0
  %6143 = vmatprep.subr.mxu0 0.0
  %6144 = vmatpush1.msra.mxu0 0.0
  %6145 = vmatprep.subr.mxu0 0.0
  %6146 = vmatpush1.msra.mxu0 0.0
  %6147 = vmatprep.subr.mxu0 0.0
  %6148 = vmatpush1.msra.mxu0 0.0
  %6149 = vmatprep.subr.mxu0 0.0
  %6150 = vmatpush1.msra.mxu0 0.0
  %6151 = vmatprep.subr.mxu0 0.0
  %6152 = vmatpush1.msra.mxu0 0.0
  %6153 = vmatprep.subr.mxu0 0.0
  %6154 = vmatpush1.msra.mxu0 0.0
  %6155 = vmatprep.subr.mxu0 0.0
  %6156 = vmatpush1.msra.mxu0 0.0
  %6157 = vmatprep.subr.mxu0 0.0
  %6158 = vmatpush1.msra.mxu0 0.0
  %6159 = vmatprep.subr.mxu0 0.0
  %6160 = vmatpush1.msra.mxu0 0.0
  %6161 = vmatprep.subr.mxu0 0.0
  %6162 = vmatpush1.msra.mxu0 0.0
  %6163 = vmatprep.subr.mxu0 0.0
  %6164 = vmatpush1.msra.mxu0 0.0
  %6165 = vmatprep.subr.mxu0 0.0
  %6166 = vmatpush1.msra.mxu0 0.0
  %6167 = vmatprep.subr.mxu0 0.0
  %6168 = vmatpush1.msra.mxu0 0.0
  %6169 = vmatprep.subr.mxu0 0.0
  %6170 = vmatpush1.msra.mxu0 0.0
  %6171 = vmatprep.subr.mxu0 0.0
  %6172 = vmatpush1.msra.mxu0 0.0
  %6173 = vmatprep.subr.mxu0 0.0
  %6174 = vmatpush1.msra.mxu0 0.0
  %6175 = vmatprep.subr.mxu0 0.0
  %6176 = vmatpush1.msra.mxu0 0.0
  %6177 = vmatprep.subr.mxu0 0.0
  %6178 = vmatpush1.msra.mxu0 0.0
  %6179 = vmatprep.subr.mxu0 0.0
  %6180 = vmatpush1.msra.mxu0 0.0
  %6181 = vmatprep.subr.mxu0 0.0
  %6182 = vmatpush1.msra.mxu0 0.0
  %6183 = vmatprep.subr.mxu0 0.0
  %6184 = vmatpush1.msra.mxu0 0.0
  %6185 = vmatprep.subr.mxu0 0.0
  %6186 = vmatpush1.msra.mxu0 0.0
  %6187 = vmatprep.subr.mxu0 0.0
  %6188 = vmatpush1.msra.mxu0 0.0
  %6189 = vmatprep.subr.mxu0 0.0
  %6190 = vmatpush1.msra.mxu0 0.0
  %6191 = vmatprep.subr.mxu0 0.0
  %6192 = vmatpush1.msra.mxu0 0.0
  %6193 = vmatprep.subr.mxu0 0.0
  %6194 = vmatpush1.msra.mxu0 0.0
  %6195 = vmatprep.subr.mxu0 0.0
  %6196 = vmatpush1.msra.mxu0 0.0
  %6197 = vmatprep.subr.mxu0 0.0
  %6198 = vmatpush1.msra.mxu0 0.0
  %6199 = vmatprep.subr.mxu0 0.0
  %6200 = vmatpush1.msra.mxu0 0.0
  %6201 = vmatprep.subr.mxu0 0.0
  %6202 = vmatpush1.msra.mxu0 0.0
  %6203 = vmatprep.mubr.f32.mxu0 0.0
  %6204 = vmatmul.mubr.f32.gmra.mrb[0].mxu0 %v6137
  %v6205 = vpop.f32.mrb[0].mxu0
  %v6206 = vadd.f32 0.0, %v6205
  %v6207 = vpop.f32.mrb[0].mxu0
  %6208 = vdwg.mxu0
  %v6211 = vrot.slane %v6206, 7
  %v6212 = vsel %vm854, %v6211, %v6133
  %v6213 = vsel %vm134, %v6212, 0
  %6215 = vmatprep.subr.mxu0 0.0
  %6216 = vmatpush1.msra.mxu0 %v27
  %6217 = vmatprep.subr.mxu0 0.0
  %6218 = vmatpush1.msra.mxu0 0.0
  %6219 = vmatprep.subr.mxu0 0.0
  %6220 = vmatpush1.msra.mxu0 0.0
  %6221 = vmatprep.subr.mxu0 0.0
  %6222 = vmatpush1.msra.mxu0 0.0
  %6223 = vmatprep.subr.mxu0 0.0
  %6224 = vmatpush1.msra.mxu0 0.0
  %6225 = vmatprep.subr.mxu0 0.0
  %6226 = vmatpush1.msra.mxu0 0.0
  %6227 = vmatprep.subr.mxu0 0.0
  %6228 = vmatpush1.msra.mxu0 0.0
  %6229 = vmatprep.subr.mxu0 0.0
  %6230 = vmatpush1.msra.mxu0 0.0
  %6231 = vmatprep.subr.mxu0 0.0
  %6232 = vmatpush1.msra.mxu0 0.0
  %6233 = vmatprep.subr.mxu0 0.0
  %6234 = vmatpush1.msra.mxu0 0.0
  %6235 = vmatprep.subr.mxu0 0.0
  %6236 = vmatpush1.msra.mxu0 0.0
  %6237 = vmatprep.subr.mxu0 0.0
  %6238 = vmatpush1.msra.mxu0 0.0
  %6239 = vmatprep.subr.mxu0 0.0
  %6240 = vmatpush1.msra.mxu0 0.0
  %6241 = vmatprep.subr.mxu0 0.0
  %6242 = vmatpush1.msra.mxu0 0.0
  %6243 = vmatprep.subr.mxu0 0.0
  %6244 = vmatpush1.msra.mxu0 0.0
  %6245 = vmatprep.subr.mxu0 0.0
  %6246 = vmatpush1.msra.mxu0 0.0
  %6247 = vmatprep.subr.mxu0 0.0
  %6248 = vmatpush1.msra.mxu0 0.0
  %6249 = vmatprep.subr.mxu0 0.0
  %6250 = vmatpush1.msra.mxu0 0.0
  %6251 = vmatprep.subr.mxu0 0.0
  %6252 = vmatpush1.msra.mxu0 0.0
  %6253 = vmatprep.subr.mxu0 0.0
  %6254 = vmatpush1.msra.mxu0 0.0
  %6255 = vmatprep.subr.mxu0 0.0
  %6256 = vmatpush1.msra.mxu0 0.0
  %6257 = vmatprep.subr.mxu0 0.0
  %6258 = vmatpush1.msra.mxu0 0.0
  %6259 = vmatprep.subr.mxu0 0.0
  %6260 = vmatpush1.msra.mxu0 0.0
  %6261 = vmatprep.subr.mxu0 0.0
  %6262 = vmatpush1.msra.mxu0 0.0
  %6263 = vmatprep.subr.mxu0 0.0
  %6264 = vmatpush1.msra.mxu0 0.0
  %6265 = vmatprep.subr.mxu0 0.0
  %6266 = vmatpush1.msra.mxu0 0.0
  %6267 = vmatprep.subr.mxu0 0.0
  %6268 = vmatpush1.msra.mxu0 0.0
  %6269 = vmatprep.subr.mxu0 0.0
  %6270 = vmatpush1.msra.mxu0 0.0
  %6271 = vmatprep.subr.mxu0 0.0
  %6272 = vmatpush1.msra.mxu0 0.0
  %6273 = vmatprep.subr.mxu0 0.0
  %6274 = vmatpush1.msra.mxu0 0.0
  %6275 = vmatprep.subr.mxu0 0.0
  %6276 = vmatpush1.msra.mxu0 0.0
  %6277 = vmatprep.subr.mxu0 0.0
  %6278 = vmatpush1.msra.mxu0 0.0
  %6279 = vmatprep.mubr.f32.mxu0 0.0
  %6280 = vmatmul.mubr.f32.gmra.mrb[0].mxu0 %v6213
  %v6281 = vpop.f32.mrb[0].mxu0
  %v6282 = vadd.f32 0.0, %v6281
  %v6283 = vpop.f32.mrb[0].mxu0
  %6284 = vdwg.mxu0
  %v6285 = vadd.f32 %v5882, %v6282
  %v6286 = vsel %vm1348, %v4993, 0
  %6288 = vmatprep.subr.mxu0 0.0
  %6289 = vmatpush1.msra.mxu0 %v31
  %6290 = vmatprep.subr.mxu0 0.0
  %6291 = vmatpush1.msra.mxu0 %v32
  %6292 = vmatprep.subr.mxu0 0.0
  %6293 = vmatpush1.msra.mxu0 %v33
  %6294 = vmatprep.subr.mxu0 0.0
  %6295 = vmatpush1.msra.mxu0 %v34
  %6296 = vmatprep.subr.mxu0 0.0
  %6297 = vmatpush1.msra.mxu0 0.0
  %6298 = vmatprep.subr.mxu0 0.0
  %6299 = vmatpush1.msra.mxu0 0.0
  %6300 = vmatprep.subr.mxu0 0.0
  %6301 = vmatpush1.msra.mxu0 0.0
  %6302 = vmatprep.subr.mxu0 0.0
  %6303 = vmatpush1.msra.mxu0 0.0
  %6304 = vmatprep.subr.mxu0 0.0
  %6305 = vmatpush1.msra.mxu0 0.0
  %6306 = vmatprep.subr.mxu0 0.0
  %6307 = vmatpush1.msra.mxu0 0.0
  %6308 = vmatprep.subr.mxu0 0.0
  %6309 = vmatpush1.msra.mxu0 0.0
  %6310 = vmatprep.subr.mxu0 0.0
  %6311 = vmatpush1.msra.mxu0 0.0
  %6312 = vmatprep.subr.mxu0 0.0
  %6313 = vmatpush1.msra.mxu0 0.0
  %6314 = vmatprep.subr.mxu0 0.0
  %6315 = vmatpush1.msra.mxu0 0.0
  %6316 = vmatprep.subr.mxu0 0.0
  %6317 = vmatpush1.msra.mxu0 0.0
  %6318 = vmatprep.subr.mxu0 0.0
  %6319 = vmatpush1.msra.mxu0 0.0
  %6320 = vmatprep.subr.mxu0 0.0
  %6321 = vmatpush1.msra.mxu0 0.0
  %6322 = vmatprep.subr.mxu0 0.0
  %6323 = vmatpush1.msra.mxu0 0.0
  %6324 = vmatprep.subr.mxu0 0.0
  %6325 = vmatpush1.msra.mxu0 0.0
  %6326 = vmatprep.subr.mxu0 0.0
  %6327 = vmatpush1.msra.mxu0 0.0
  %6328 = vmatprep.subr.mxu0 0.0
  %6329 = vmatpush1.msra.mxu0 0.0
  %6330 = vmatprep.subr.mxu0 0.0
  %6331 = vmatpush1.msra.mxu0 0.0
  %6332 = vmatprep.subr.mxu0 0.0
  %6333 = vmatpush1.msra.mxu0 0.0
  %6334 = vmatprep.subr.mxu0 0.0
  %6335 = vmatpush1.msra.mxu0 0.0
  %6336 = vmatprep.subr.mxu0 0.0
  %6337 = vmatpush1.msra.mxu0 0.0
  %6338 = vmatprep.subr.mxu0 0.0
  %6339 = vmatpush1.msra.mxu0 0.0
  %6340 = vmatprep.subr.mxu0 0.0
  %6341 = vmatpush1.msra.mxu0 0.0
  %6342 = vmatprep.subr.mxu0 0.0
  %6343 = vmatpush1.msra.mxu0 0.0
  %6344 = vmatprep.subr.mxu0 0.0
  %6345 = vmatpush1.msra.mxu0 0.0
  %6346 = vmatprep.subr.mxu0 0.0
  %6347 = vmatpush1.msra.mxu0 0.0
  %6348 = vmatprep.subr.mxu0 0.0
  %6349 = vmatpush1.msra.mxu0 0.0
  %6350 = vmatprep.subr.mxu0 0.0
  %6351 = vmatpush1.msra.mxu0 0.0
  %6352 = vmatprep.mubr.f32.mxu0 0.0
  %6353 = vmatmul.mubr.f32.gmra.mrb[0].mxu0 %v6286
  %v6354 = vpop.f32.mrb[0].mxu0
  %v6355 = vadd.f32 0.0, %v6354
  %v6356 = vpop.f32.mrb[0].mxu0
  %6357 = vdwg.mxu0
  %v6359 = vsel %vm1421, %v6285, 0
  %6361 = vmatprep.subr.mxu0 0.0
  %6362 = vmatpush1.msra.mxu0 %v29
  %6363 = vmatprep.subr.mxu0 0.0
  %6364 = vmatpush1.msra.mxu0 %v30
  %6365 = vmatprep.subr.mxu0 0.0
  %6366 = vmatpush1.msra.mxu0 0.0
  %6367 = vmatprep.subr.mxu0 0.0
  %6368 = vmatpush1.msra.mxu0 0.0
  %6369 = vmatprep.subr.mxu0 0.0
  %6370 = vmatpush1.msra.mxu0 0.0
  %6371 = vmatprep.subr.mxu0 0.0
  %6372 = vmatpush1.msra.mxu0 0.0
  %6373 = vmatprep.subr.mxu0 0.0
  %6374 = vmatpush1.msra.mxu0 0.0
  %6375 = vmatprep.subr.mxu0 0.0
  %6376 = vmatpush1.msra.mxu0 0.0
  %6377 = vmatprep.subr.mxu0 0.0
  %6378 = vmatpush1.msra.mxu0 0.0
  %6379 = vmatprep.subr.mxu0 0.0
  %6380 = vmatpush1.msra.mxu0 0.0
  %6381 = vmatprep.subr.mxu0 0.0
  %6382 = vmatpush1.msra.mxu0 0.0
  %6383 = vmatprep.subr.mxu0 0.0
  %6384 = vmatpush1.msra.mxu0 0.0
  %6385 = vmatprep.subr.mxu0 0.0
  %6386 = vmatpush1.msra.mxu0 0.0
  %6387 = vmatprep.subr.mxu0 0.0
  %6388 = vmatpush1.msra.mxu0 0.0
  %6389 = vmatprep.subr.mxu0 0.0
  %6390 = vmatpush1.msra.mxu0 0.0
  %6391 = vmatprep.subr.mxu0 0.0
  %6392 = vmatpush1.msra.mxu0 0.0
  %6393 = vmatprep.subr.mxu0 0.0
  %6394 = vmatpush1.msra.mxu0 0.0
  %6395 = vmatprep.subr.mxu0 0.0
  %6396 = vmatpush1.msra.mxu0 0.0
  %6397 = vmatprep.subr.mxu0 0.0
  %6398 = vmatpush1.msra.mxu0 0.0
  %6399 = vmatprep.subr.mxu0 0.0
  %6400 = vmatpush1.msra.mxu0 0.0
  %6401 = vmatprep.subr.mxu0 0.0
  %6402 = vmatpush1.msra.mxu0 0.0
  %6403 = vmatprep.subr.mxu0 0.0
  %6404 = vmatpush1.msra.mxu0 0.0
  %6405 = vmatprep.subr.mxu0 0.0
  %6406 = vmatpush1.msra.mxu0 0.0
  %6407 = vmatprep.subr.mxu0 0.0
  %6408 = vmatpush1.msra.mxu0 0.0
  %6409 = vmatprep.subr.mxu0 0.0
  %6410 = vmatpush1.msra.mxu0 0.0
  %6411 = vmatprep.subr.mxu0 0.0
  %6412 = vmatpush1.msra.mxu0 0.0
  %6413 = vmatprep.subr.mxu0 0.0
  %6414 = vmatpush1.msra.mxu0 0.0
  %6415 = vmatprep.subr.mxu0 0.0
  %6416 = vmatpush1.msra.mxu0 0.0
  %6417 = vmatprep.subr.mxu0 0.0
  %6418 = vmatpush1.msra.mxu0 0.0
  %6419 = vmatprep.subr.mxu0 0.0
  %6420 = vmatpush1.msra.mxu0 0.0
  %6421 = vmatprep.subr.mxu0 0.0
  %6422 = vmatpush1.msra.mxu0 0.0
  %6423 = vmatprep.subr.mxu0 0.0
  %6424 = vmatpush1.msra.mxu0 0.0
  %6425 = vmatprep.mubr.f32.mxu0 0.0
  %6426 = vmatmul.mubr.f32.gmra.mrb[0].mxu0 %v6359
  %v6427 = vpop.f32.mrb[0].mxu0
  %v6428 = vadd.f32 %v6355, %v6427
  %v6429 = vpop.f32.mrb[0].mxu0
  %6430 = vdwg.mxu0
  %v6431 = vadd.f32 %v6428, %v35
  %v6432 = vxor.u32 %v6431, 2147483648
  %v6433 = vmul.f32 %v6432, 1.442695
  %v6434 = vpow.pop %v6433
  %v6435 = vadd.f32 %v6434, 1.0
  %v6436 = vrcp.pop %v6435
  %v6437 = vmul.f32 1.0, %v6436
  %6439 = vrot.lane.b32.xlu0 %v6437, 96
  %v6440 = vpop.permute.xlu0 %6439
  %v6442 = vmul.f32 %v6431, %v6440
  %v6443 = vsel %vm1507, %v6442, 0.0
  %6444 = vadd.xlane.f32.xlu0 %v6443
  %v6445 = vpop.xlane.xlu0 %6444
  %v6446 = vmul.f32 %v6445, %v1511
  %v6447 = vsub.f32 %v6442, %v6446
  %v6448 = vmul.f32 %v6447, %v6447
  %v6449 = vsel %vm1507, %v6448, 0.0
  %6450 = vadd.xlane.f32.xlu0 %v6449
  %v6451 = vpop.xlane.xlu0 %6450
  %v6452 = vmul.f32 %v6451, %v1511
  %v6453 = vadd.f32 %v6452, 1e-05
  %v6454 = vrsqrt.pop %v6453
  %v6455 = vmul.f32 %v6447, %v6454
  %v6456 = vmul.f32 %v6455, %v36
  %v6457 = vadd.f32 %v6456, %v37
  %6459 = vrot.lane.b32.xlu0 %v4827, 96
  %v6460 = vpop.permute.xlu0 %6459
  %6461 = vrot.lane.b32.xlu0 %v4834, 96
  %v6462 = vpop.permute.xlu0 %6461
  %v6463 = vsel %vm1537, %v6460, %v6462
  %6467 = vrot.lane.b32.xlu0 %v6457, 96
  %v6468 = vpop.permute.xlu0 %6467
  %v6470 = vsel %vm1537, %v6462, %v6468
  %6471 = vmatprep.subr.mxu0 %v39
  %6472 = vmatpush1.msra.mxu0 %v38
  %6473 = vmatprep.subr.mxu0 %v41
  %6474 = vmatpush1.msra.mxu0 %v40
  %6475 = vmatprep.subr.mxu0 %v43
  %6476 = vmatpush1.msra.mxu0 %v42
  %6477 = vmatprep.subr.mxu0 %v45
  %6478 = vmatpush1.msra.mxu0 %v44
  %6479 = vmatprep.subr.mxu0 %v47
  %6480 = vmatpush1.msra.mxu0 %v46
  %6481 = vmatprep.subr.mxu0 %v49
  %6482 = vmatpush1.msra.mxu0 %v48
  %6483 = vmatprep.subr.mxu0 %v51
  %6484 = vmatpush1.msra.mxu0 %v50
  %6485 = vmatprep.subr.mxu0 %v53
  %6486 = vmatpush1.msra.mxu0 %v52
  %6487 = vmatprep.subr.mxu0 %v55
  %6488 = vmatpush1.msra.mxu0 %v54
  %6489 = vmatprep.subr.mxu0 %v57
  %6490 = vmatpush1.msra.mxu0 %v56
  %6491 = vmatprep.subr.mxu0 %v59
  %6492 = vmatpush1.msra.mxu0 %v58
  %6493 = vmatprep.subr.mxu0 %v61
  %6494 = vmatpush1.msra.mxu0 %v60
  %6495 = vmatprep.subr.mxu0 %v63
  %6496 = vmatpush1.msra.mxu0 %v62
  %6497 = vmatprep.subr.mxu0 %v65
  %6498 = vmatpush1.msra.mxu0 %v64
  %6499 = vmatprep.subr.mxu0 %v67
  %6500 = vmatpush1.msra.mxu0 %v66
  %6501 = vmatprep.subr.mxu0 %v69
  %6502 = vmatpush1.msra.mxu0 %v68
  %6503 = vmatprep.subr.mxu0 %v71
  %6504 = vmatpush1.msra.mxu0 %v70
  %6505 = vmatprep.subr.mxu0 %v73
  %6506 = vmatpush1.msra.mxu0 %v72
  %6507 = vmatprep.subr.mxu0 %v75
  %6508 = vmatpush1.msra.mxu0 %v74
  %6509 = vmatprep.subr.mxu0 %v77
  %6510 = vmatpush1.msra.mxu0 %v76
  %6511 = vmatprep.subr.mxu0 %v79
  %6512 = vmatpush1.msra.mxu0 %v78
  %6513 = vmatprep.subr.mxu0 %v81
  %6514 = vmatpush1.msra.mxu0 %v80
  %6515 = vmatprep.subr.mxu0 %v83
  %6516 = vmatpush1.msra.mxu0 %v82
  %6517 = vmatprep.subr.mxu0 %v85
  %6518 = vmatpush1.msra.mxu0 %v84
  %6519 = vmatprep.subr.mxu0 %v87
  %6520 = vmatpush1.msra.mxu0 %v86
  %6521 = vmatprep.subr.mxu0 %v89
  %6522 = vmatpush1.msra.mxu0 %v88
  %6523 = vmatprep.subr.mxu0 %v91
  %6524 = vmatpush1.msra.mxu0 %v90
  %6525 = vmatprep.subr.mxu0 %v93
  %6526 = vmatpush1.msra.mxu0 %v92
  %6527 = vmatprep.subr.mxu0 %v95
  %6528 = vmatpush1.msra.mxu0 %v94
  %6529 = vmatprep.subr.mxu0 %v97
  %6530 = vmatpush1.msra.mxu0 %v96
  %6531 = vmatprep.subr.mxu0 %v99
  %6532 = vmatpush1.msra.mxu0 %v98
  %6533 = vmatprep.subr.mxu0 %v101
  %6534 = vmatpush1.msra.mxu0 %v100
  %6535 = vmatprep.mubr.f32.mxu0 %v6470
  %6536 = vmatmul.mubr.f32.gmra.mrb[0].mxu0 %v6463
  %v6537 = vpop.f32.mrb[0].mxu0
  %v6538 = vadd.f32 %v1550, %v6537
  %v6539 = vpop.f32.mrb[0].mxu0
  %v6540 = vadd.f32 %v1554, %v6539
  %6541 = vdwg.mxu0
  %v6542 = vxor.u32 %v6540, 2147483648
  %v6543 = vmul.f32 %v6542, 1.442695
  %v6544 = vpow.pop %v6543
  %v6545 = vadd.f32 %v6544, 1.0
  %v6546 = vrcp.pop %v6545
  %v6547 = vmul.f32 1.0, %v6546
  %v6548 = vmul.f32 %v6538, %v6547
  %6549 = vmatprep.subr.mxu0 0.0
  %6550 = vmatpush1.msra.mxu0 %v104
  %6551 = vmatprep.subr.mxu0 0.0
  %6552 = vmatpush1.msra.mxu0 %v105
  %6553 = vmatprep.subr.mxu0 0.0
  %6554 = vmatpush1.msra.mxu0 %v106
  %6555 = vmatprep.subr.mxu0 0.0
  %6556 = vmatpush1.msra.mxu0 %v107
  %6557 = vmatprep.subr.mxu0 0.0
  %6558 = vmatpush1.msra.mxu0 %v108
  %6559 = vmatprep.subr.mxu0 0.0
  %6560 = vmatpush1.msra.mxu0 %v109
  %6561 = vmatprep.subr.mxu0 0.0
  %6562 = vmatpush1.msra.mxu0 %v110
  %6563 = vmatprep.subr.mxu0 0.0
  %6564 = vmatpush1.msra.mxu0 %v111
  %6565 = vmatprep.subr.mxu0 0.0
  %6566 = vmatpush1.msra.mxu0 %v112
  %6567 = vmatprep.subr.mxu0 0.0
  %6568 = vmatpush1.msra.mxu0 %v113
  %6569 = vmatprep.subr.mxu0 0.0
  %6570 = vmatpush1.msra.mxu0 %v114
  %6571 = vmatprep.subr.mxu0 0.0
  %6572 = vmatpush1.msra.mxu0 %v115
  %6573 = vmatprep.subr.mxu0 0.0
  %6574 = vmatpush1.msra.mxu0 %v116
  %6575 = vmatprep.subr.mxu0 0.0
  %6576 = vmatpush1.msra.mxu0 %v117
  %6577 = vmatprep.subr.mxu0 0.0
  %6578 = vmatpush1.msra.mxu0 %v118
  %6579 = vmatprep.subr.mxu0 0.0
  %6580 = vmatpush1.msra.mxu0 %v119
  %6581 = vmatprep.subr.mxu0 0.0
  %6582 = vmatpush1.msra.mxu0 0.0
  %6583 = vmatprep.subr.mxu0 0.0
  %6584 = vmatpush1.msra.mxu0 0.0
  %6585 = vmatprep.subr.mxu0 0.0
  %6586 = vmatpush1.msra.mxu0 0.0
  %6587 = vmatprep.subr.mxu0 0.0
  %6588 = vmatpush1.msra.mxu0 0.0
  %6589 = vmatprep.subr.mxu0 0.0
  %6590 = vmatpush1.msra.mxu0 0.0
  %6591 = vmatprep.subr.mxu0 0.0
  %6592 = vmatpush1.msra.mxu0 0.0
  %6593 = vmatprep.subr.mxu0 0.0
  %6594 = vmatpush1.msra.mxu0 0.0
  %6595 = vmatprep.subr.mxu0 0.0
  %6596 = vmatpush1.msra.mxu0 0.0
  %6597 = vmatprep.subr.mxu0 0.0
  %6598 = vmatpush1.msra.mxu0 0.0
  %6599 = vmatprep.subr.mxu0 0.0
  %6600 = vmatpush1.msra.mxu0 0.0
  %6601 = vmatprep.subr.mxu0 0.0
  %6602 = vmatpush1.msra.mxu0 0.0
  %6603 = vmatprep.subr.mxu0 0.0
  %6604 = vmatpush1.msra.mxu0 0.0
  %6605 = vmatprep.subr.mxu0 0.0
  %6606 = vmatpush1.msra.mxu0 0.0
  %6607 = vmatprep.subr.mxu0 0.0
  %6608 = vmatpush1.msra.mxu0 0.0
  %6609 = vmatprep.subr.mxu0 0.0
  %6610 = vmatpush1.msra.mxu0 0.0
  %6611 = vmatprep.subr.mxu0 0.0
  %6612 = vmatpush1.msra.mxu0 0.0
  %6613 = vmatprep.mubr.f32.mxu0 0.0
  %6614 = vmatmul.mubr.f32.gmra.mrb[0].mxu0 %v6548
  %v6615 = vpop.f32.mrb[0].mxu0
  %v6616 = vadd.f32 %v120, %v6615
  %v6617 = vpop.f32.mrb[0].mxu0
  %6618 = vdwg.mxu0
  %v6619 = vxor.u32 %v6616, 2147483648
  %v6620 = vmul.f32 %v6619, 1.442695
  %v6621 = vpow.pop %v6620
  %v6622 = vadd.f32 %v6621, 1.0
  %v6623 = vrcp.pop %v6622
  %v6624 = vmul.f32 1.0, %v6623
  %6626 = vrot.lane.b32.xlu0 %v6624, 96
  %v6627 = vpop.permute.xlu0 %6626
  %v6629 = vmul.f32 %v6616, %v6627
  %v6631 = vsel %vm134, %v6629, 0
  %6633 = vmatprep.subr.mxu0 0.0
  %6634 = vmatpush1.msra.mxu0 %v16
  %6635 = vmatprep.subr.mxu0 0.0
  %6636 = vmatpush1.msra.mxu0 0.0
  %6637 = vmatprep.subr.mxu0 0.0
  %6638 = vmatpush1.msra.mxu0 0.0
  %6639 = vmatprep.subr.mxu0 0.0
  %6640 = vmatpush1.msra.mxu0 0.0
  %6641 = vmatprep.subr.mxu0 0.0
  %6642 = vmatpush1.msra.mxu0 0.0
  %6643 = vmatprep.subr.mxu0 0.0
  %6644 = vmatpush1.msra.mxu0 0.0
  %6645 = vmatprep.subr.mxu0 0.0
  %6646 = vmatpush1.msra.mxu0 0.0
  %6647 = vmatprep.subr.mxu0 0.0
  %6648 = vmatpush1.msra.mxu0 0.0
  %6649 = vmatprep.subr.mxu0 0.0
  %6650 = vmatpush1.msra.mxu0 0.0
  %6651 = vmatprep.subr.mxu0 0.0
  %6652 = vmatpush1.msra.mxu0 0.0
  %6653 = vmatprep.subr.mxu0 0.0
  %6654 = vmatpush1.msra.mxu0 0.0
  %6655 = vmatprep.subr.mxu0 0.0
  %6656 = vmatpush1.msra.mxu0 0.0
  %6657 = vmatprep.subr.mxu0 0.0
  %6658 = vmatpush1.msra.mxu0 0.0
  %6659 = vmatprep.subr.mxu0 0.0
  %6660 = vmatpush1.msra.mxu0 0.0
  %6661 = vmatprep.subr.mxu0 0.0
  %6662 = vmatpush1.msra.mxu0 0.0
  %6663 = vmatprep.subr.mxu0 0.0
  %6664 = vmatpush1.msra.mxu0 0.0
  %6665 = vmatprep.subr.mxu0 0.0
  %6666 = vmatpush1.msra.mxu0 0.0
  %6667 = vmatprep.subr.mxu0 0.0
  %6668 = vmatpush1.msra.mxu0 0.0
  %6669 = vmatprep.subr.mxu0 0.0
  %6670 = vmatpush1.msra.mxu0 0.0
  %6671 = vmatprep.subr.mxu0 0.0
  %6672 = vmatpush1.msra.mxu0 0.0
  %6673 = vmatprep.subr.mxu0 0.0
  %6674 = vmatpush1.msra.mxu0 0.0
  %6675 = vmatprep.subr.mxu0 0.0
  %6676 = vmatpush1.msra.mxu0 0.0
  %6677 = vmatprep.subr.mxu0 0.0
  %6678 = vmatpush1.msra.mxu0 0.0
  %6679 = vmatprep.subr.mxu0 0.0
  %6680 = vmatpush1.msra.mxu0 0.0
  %6681 = vmatprep.subr.mxu0 0.0
  %6682 = vmatpush1.msra.mxu0 0.0
  %6683 = vmatprep.subr.mxu0 0.0
  %6684 = vmatpush1.msra.mxu0 0.0
  %6685 = vmatprep.subr.mxu0 0.0
  %6686 = vmatpush1.msra.mxu0 0.0
  %6687 = vmatprep.subr.mxu0 0.0
  %6688 = vmatpush1.msra.mxu0 0.0
  %6689 = vmatprep.subr.mxu0 0.0
  %6690 = vmatpush1.msra.mxu0 0.0
  %6691 = vmatprep.subr.mxu0 0.0
  %6692 = vmatpush1.msra.mxu0 0.0
  %6693 = vmatprep.subr.mxu0 0.0
  %6694 = vmatpush1.msra.mxu0 0.0
  %6695 = vmatprep.subr.mxu0 0.0
  %6696 = vmatpush1.msra.mxu0 0.0
  %6697 = vmatprep.mubr.f32.mxu0 0.0
  %6698 = vmatmul.mubr.f32.gmra.mrb[0].mxu0 %v6631
  %v6699 = vpop.f32.mrb[0].mxu0
  %v6700 = vadd.f32 0.0, %v6699
  %v6701 = vpop.f32.mrb[0].mxu0
  %6702 = vdwg.mxu0
  %6703 = vmatprep.subr.mxu0 0.0
  %6704 = vmatpush1.msra.mxu0 %v17
  %6705 = vmatprep.subr.mxu0 0.0
  %6706 = vmatpush1.msra.mxu0 0.0
  %6707 = vmatprep.subr.mxu0 0.0
  %6708 = vmatpush1.msra.mxu0 0.0
  %6709 = vmatprep.subr.mxu0 0.0
  %6710 = vmatpush1.msra.mxu0 0.0
  %6711 = vmatprep.subr.mxu0 0.0
  %6712 = vmatpush1.msra.mxu0 0.0
  %6713 = vmatprep.subr.mxu0 0.0
  %6714 = vmatpush1.msra.mxu0 0.0
  %6715 = vmatprep.subr.mxu0 0.0
  %6716 = vmatpush1.msra.mxu0 0.0
  %6717 = vmatprep.subr.mxu0 0.0
  %6718 = vmatpush1.msra.mxu0 0.0
  %6719 = vmatprep.subr.mxu0 0.0
  %6720 = vmatpush1.msra.mxu0 0.0
  %6721 = vmatprep.subr.mxu0 0.0
  %6722 = vmatpush1.msra.mxu0 0.0
  %6723 = vmatprep.subr.mxu0 0.0
  %6724 = vmatpush1.msra.mxu0 0.0
  %6725 = vmatprep.subr.mxu0 0.0
  %6726 = vmatpush1.msra.mxu0 0.0
  %6727 = vmatprep.subr.mxu0 0.0
  %6728 = vmatpush1.msra.mxu0 0.0
  %6729 = vmatprep.subr.mxu0 0.0
  %6730 = vmatpush1.msra.mxu0 0.0
  %6731 = vmatprep.subr.mxu0 0.0
  %6732 = vmatpush1.msra.mxu0 0.0
  %6733 = vmatprep.subr.mxu0 0.0
  %6734 = vmatpush1.msra.mxu0 0.0
  %6735 = vmatprep.subr.mxu0 0.0
  %6736 = vmatpush1.msra.mxu0 0.0
  %6737 = vmatprep.subr.mxu0 0.0
  %6738 = vmatpush1.msra.mxu0 0.0
  %6739 = vmatprep.subr.mxu0 0.0
  %6740 = vmatpush1.msra.mxu0 0.0
  %6741 = vmatprep.subr.mxu0 0.0
  %6742 = vmatpush1.msra.mxu0 0.0
  %6743 = vmatprep.subr.mxu0 0.0
  %6744 = vmatpush1.msra.mxu0 0.0
  %6745 = vmatprep.subr.mxu0 0.0
  %6746 = vmatpush1.msra.mxu0 0.0
  %6747 = vmatprep.subr.mxu0 0.0
  %6748 = vmatpush1.msra.mxu0 0.0
  %6749 = vmatprep.subr.mxu0 0.0
  %6750 = vmatpush1.msra.mxu0 0.0
  %6751 = vmatprep.subr.mxu0 0.0
  %6752 = vmatpush1.msra.mxu0 0.0
  %6753 = vmatprep.subr.mxu0 0.0
  %6754 = vmatpush1.msra.mxu0 0.0
  %6755 = vmatprep.subr.mxu0 0.0
  %6756 = vmatpush1.msra.mxu0 0.0
  %6757 = vmatprep.subr.mxu0 0.0
  %6758 = vmatpush1.msra.mxu0 0.0
  %6759 = vmatprep.subr.mxu0 0.0
  %6760 = vmatpush1.msra.mxu0 0.0
  %6761 = vmatprep.subr.mxu0 0.0
  %6762 = vmatpush1.msra.mxu0 0.0
  %6763 = vmatprep.subr.mxu0 0.0
  %6764 = vmatpush1.msra.mxu0 0.0
  %6765 = vmatprep.subr.mxu0 0.0
  %6766 = vmatpush1.msra.mxu0 0.0
  %6767 = vmatprep.mubr.f32.mxu0 0.0
  %6768 = vmatmul.mubr.f32.gmra.mrb[0].mxu0 %v6631
  %v6769 = vpop.f32.mrb[0].mxu0
  %v6770 = vadd.f32 0.0, %v6769
  %v6771 = vpop.f32.mrb[0].mxu0
  %6772 = vdwg.mxu0
  %v6773 = vmul.f32 %v6700, %v6770
  %v6774 = vmul.f32 %v19, %v5139
  %v6775 = vadd.f32 %v6774, %v6773
  %v6776 = vmul.f32 %v19, %v5141
  %v6777 = vadd.f32 %v6776, 1.0
  %v6778 = vrsqrt.pop %v6777
  %v6779 = vmul.f32 %v6775, %v6778
  %v6781 = vsel %vm429, %v6779, 0
  %6783 = vmatprep.subr.mxu0 0.0
  %6784 = vmatpush1.msra.mxu0 %v121
  %6785 = vmatprep.subr.mxu0 0.0
  %6786 = vmatpush1.msra.mxu0 %v122
  %6787 = vmatprep.subr.mxu0 0.0
  %6788 = vmatpush1.msra.mxu0 %v123
  %6789 = vmatprep.subr.mxu0 0.0
  %6790 = vmatpush1.msra.mxu0 %v124
  %6791 = vmatprep.subr.mxu0 0.0
  %6792 = vmatpush1.msra.mxu0 %v1869
  %6793 = vmatprep.subr.mxu0 0.0
  %6794 = vmatpush1.msra.mxu0 0.0
  %6795 = vmatprep.subr.mxu0 0.0
  %6796 = vmatpush1.msra.mxu0 0.0
  %6797 = vmatprep.subr.mxu0 0.0
  %6798 = vmatpush1.msra.mxu0 0.0
  %6799 = vmatprep.subr.mxu0 0.0
  %6800 = vmatpush1.msra.mxu0 0.0
  %6801 = vmatprep.subr.mxu0 0.0
  %6802 = vmatpush1.msra.mxu0 0.0
  %6803 = vmatprep.subr.mxu0 0.0
  %6804 = vmatpush1.msra.mxu0 0.0
  %6805 = vmatprep.subr.mxu0 0.0
  %6806 = vmatpush1.msra.mxu0 0.0
  %6807 = vmatprep.subr.mxu0 0.0
  %6808 = vmatpush1.msra.mxu0 0.0
  %6809 = vmatprep.subr.mxu0 0.0
  %6810 = vmatpush1.msra.mxu0 0.0
  %6811 = vmatprep.subr.mxu0 0.0
  %6812 = vmatpush1.msra.mxu0 0.0
  %6813 = vmatprep.subr.mxu0 0.0
  %6814 = vmatpush1.msra.mxu0 0.0
  %6815 = vmatprep.subr.mxu0 0.0
  %6816 = vmatpush1.msra.mxu0 0.0
  %6817 = vmatprep.subr.mxu0 0.0
  %6818 = vmatpush1.msra.mxu0 0.0
  %6819 = vmatprep.subr.mxu0 0.0
  %6820 = vmatpush1.msra.mxu0 0.0
  %6821 = vmatprep.subr.mxu0 0.0
  %6822 = vmatpush1.msra.mxu0 0.0
  %6823 = vmatprep.subr.mxu0 0.0
  %6824 = vmatpush1.msra.mxu0 0.0
  %6825 = vmatprep.subr.mxu0 0.0
  %6826 = vmatpush1.msra.mxu0 0.0
  %6827 = vmatprep.subr.mxu0 0.0
  %6828 = vmatpush1.msra.mxu0 0.0
  %6829 = vmatprep.subr.mxu0 0.0
  %6830 = vmatpush1.msra.mxu0 0.0
  %6831 = vmatprep.subr.mxu0 0.0
  %6832 = vmatpush1.msra.mxu0 0.0
  %6833 = vmatprep.subr.mxu0 0.0
  %6834 = vmatpush1.msra.mxu0 0.0
  %6835 = vmatprep.subr.mxu0 0.0
  %6836 = vmatpush1.msra.mxu0 0.0
  %6837 = vmatprep.subr.mxu0 0.0
  %6838 = vmatpush1.msra.mxu0 0.0
  %6839 = vmatprep.subr.mxu0 0.0
  %6840 = vmatpush1.msra.mxu0 0.0
  %6841 = vmatprep.subr.mxu0 0.0
  %6842 = vmatpush1.msra.mxu0 0.0
  %6843 = vmatprep.subr.mxu0 0.0
  %6844 = vmatpush1.msra.mxu0 0.0
  %6845 = vmatprep.subr.mxu0 0.0
  %6846 = vmatpush1.msra.mxu0 0.0
  %6847 = vmatprep.mubr.f32.mxu0 0.0
  %6848 = vmatmul.mubr.f32.gmra.mrb[0].mxu0 %v6781
  %v6849 = vpop.f32.mrb[0].mxu0
  %v6850 = vadd.f32 %v126, %v6849
  %v6851 = vpop.f32.mrb[0].mxu0
  %6852 = vdwg.mxu0
  %v6853 = vsel %vm1941, %v6850, -inf
  %6854 = vmax.xlane.f32.xlu0 %v6853
  %v6855 = vpop.xlane.xlu0 %6854
  %v6856 = vsub.f32 %v6850, %v6855
  %v6857 = vmul.f32 %v6856, 1.442695
  %v6858 = vpow.pop %v6857
  %v6859 = vsel %vm1941, %v6858, 0.0
  %6860 = vadd.xlane.f32.xlu0 %v6859
  %v6861 = vpop.xlane.xlu0 %6860
  %v6862 = vrcp.pop %v6861
  %v6863 = vmul.f32 %v6858, %v6862
  %v6864 = vlog2.pop %v6861
  %v6865 = vmul.f32 %v6864, 0.6931472
  %v6866 = vsub.f32 %v6856, %v6865
  %v6867 = vmul.f32 %v6863, %v6866
  %v6868 = vsel %vm1941, %v6867, 0.0
  %6869 = vadd.xlane.f32.xlu0 %v6868
  %v6870 = vpop.xlane.xlu0 %6869
  %v6871 = vsub.f32 0.0, %v6870
  %v6872 = vmul.f32 %v6871, 0.4342945
  %v6873 = vsub.f32 1.0, %v6872
  %v6874 = vsel %vm1963, %v6872, %v6873
  %6876 = vrot.lane.b32.xlu0 %v6874, 10
  %v6877 = vpop.permute.xlu0 %6876
  %v6879 = vsel %vm1969, %v6850, %v6877
  %v6880 = vsel %vm1971, %v6879, 0.0
  %6882 = vrot.lane.b32.xlu0 %v3608, 32
  %v6883 = vpop.permute.xlu0 %6882
  %6886 = vrot.lane.b32.xlu0 %v5244, 64
  %v6887 = vpop.permute.xlu0 %6886
  %6890 = vrot.lane.b32.xlu0 %v6880, 96
  %v6891 = vpop.permute.xlu0 %6890
  %v6893 = vsel %vm1348, %v1972, %v6883
  %vm6894 = vcmask 523264
  %v6895 = vsel %vm6894, %v6893, %v6887
  %v6896 = vsel %vm1537, %v6895, %v6891
  %6897 = vst [vmem:[%s3] sm:$0x3] %v6896
  // Predicated region
  $region14: #{ctm_forward_pallas.1} parent=0 // pred_check
    _
  $region15: #{ctm_forward_pallas.1} parent=0 // pred_check_branch
    %6899 = sbr.rel (0) target = $region17
  $region16: #{ctm_forward_pallas.1} parent=0 // pred_region
    _
  $region17: #{ctm_forward_pallas.1} parent=0 // pred_fallthru
    _
  // Predicated region
  $region18: #{ctm_forward_pallas.1} parent=0 // pred_check
    _
  $region19: #{ctm_forward_pallas.1} parent=0 // pred_check_branch
    %6901 = sbr.rel (0) target = $region21
  $region20: #{ctm_forward_pallas.1} parent=0 // pred_region
    _
  $region21: #{ctm_forward_pallas.1} parent=0 // pred_fallthru
    _

</llo_original>
